<compile_context>
chip_gen: v7x
topology: tpu7x:2x2x1
jax: 0.10.0
libtpu: 0.0.40
codegen_flags: <defaults>
</compile_context>

<pallas_src>
import jax
import jax.numpy as jnp
from jax.experimental import pallas as pl
from jax.experimental.pallas import tpu as pltpu

EPS = 1e-5


def make_resblock_kernel(H, W, C):
    HW = H * W

    def kernel(x_ref, mask_ref, w1_ref, b1_ref, w2_ref, b2_ref, o_ref):
        # x_ref   : (1, C, HW)  input; channels on sublanes, pixels on lanes
        # mask_ref: (9, HW)     0/1 validity mask per conv tap (handles zero padding)
        # w*_ref  : (9*C, C)    row = tap*C + cout, col = cin   (tap = ky*3 + kx)
        # b*_ref  : (C, 1)
        # o_ref   : (1, C, HW)
        x2d = x_ref[0]                 # (C, HW)
        masks = mask_ref[...]          # (9, HW)
        w1 = w1_ref[...]
        w2 = w2_ref[...]
        b1 = b1_ref[...]               # (C, 1)
        b2 = b2_ref[...]

        def conv3x3(h, w_all, bias):
            acc = jnp.zeros((C, HW), jnp.float32)
            for dy in range(3):
                for dx in range(3):
                    tap = dy * 3 + dx
                    delta = (dy - 1) * W + (dx - 1)      # flat-index offset of tap
                    if delta == 0:
                        shifted = h
                    else:
                        # shifted[:, p] = h[:, (p + delta) % HW]; wrapped lanes are
                        # exactly the out-of-image ones and get zeroed by the mask.
                        shifted = pltpu.roll(h, (-delta) % HW, axis=1)
                    shifted = shifted * masks[tap:tap + 1, :]   # zero-pad boundary
                    w_tap = w_all[tap * C:(tap + 1) * C, :]     # (Cout, Cin)
                    acc = acc + jnp.dot(
                        w_tap, shifted,
                        preferred_element_type=jnp.float32,
                        precision=jax.lax.Precision.HIGHEST)
            return acc + bias                                   # bias lane-broadcast

        def instnorm(h):
            # per-channel biased mean/var over H*W (nn.InstanceNorm2d defaults),
            # computed as dense lane-axis reductions.
            mean = jnp.mean(h, axis=1, keepdims=True)           # (C, 1)
            d = h - mean
            var = jnp.mean(d * d, axis=1, keepdims=True)
            return d * jax.lax.rsqrt(var + EPS)

        h1 = jnp.maximum(instnorm(conv3x3(x2d, w1, b1)), 0.0)   # conv1 -> IN -> ReLU
        h2 = instnorm(conv3x3(h1, w2, b2))                      # conv2 -> IN
        o_ref[0] = x2d + h2                                     # residual add

    return kernel


def _tap_masks(H, W):
    """(9, H*W) f32 0/1 masks: tap (ky,kx) is valid where the shifted pixel is in-bounds."""
    p = jnp.arange(H * W, dtype=jnp.int32)
    y = p // W
    x = p % W
    rows = []
    for dy in range(3):
        for dx in range(3):
            oy, ox = dy - 1, dx - 1
            ok = (y + oy >= 0) & (y + oy < H) & (x + ox >= 0) & (x + ox < W)
            rows.append(ok)
    return jnp.stack(rows, axis=0).astype(jnp.float32)


def resblock_pallas(x_nchw, w1, b1, w2, b2):
    """x_nchw: (N, C, H, W); w*: (Cout, Cin, 3, 3) PyTorch OIHW; b*: (C,)."""
    N, C, H, W = x_nchw.shape
    HW = H * W

    x2 = x_nchw.reshape(N, C, HW).astype(jnp.float32)           # pure reshape, no transpose
    masks = _tap_masks(H, W)                                    # (9, HW)

    # OIHW -> (ky, kx, Cout, Cin) -> (9*Cout, Cin): row = tap*C + cout, col = cin
    w1k = jnp.transpose(w1, (2, 3, 0, 1)).reshape(9 * C, C).astype(jnp.float32)
    w2k = jnp.transpose(w2, (2, 3, 0, 1)).reshape(9 * C, C).astype(jnp.float32)
    b1k = b1.reshape(C, 1).astype(jnp.float32)
    b2k = b2.reshape(C, 1).astype(jnp.float32)

    kernel = make_resblock_kernel(H, W, C)

    out = pl.pallas_call(
        kernel,
        out_shape=jax.ShapeDtypeStruct((N, C, HW), jnp.float32),
        grid_spec=pltpu.PrefetchScalarGridSpec(
            num_scalar_prefetch=0,
            grid=(N,),
            in_specs=[
                pl.BlockSpec((1, C, HW), lambda n: (n, 0, 0)),   # x (per-batch block)
                pl.BlockSpec((9, HW),    lambda n: (0, 0)),      # tap masks (resident)
                pl.BlockSpec((9 * C, C), lambda n: (0, 0)),      # w1
                pl.BlockSpec((C, 1),     lambda n: (0, 0)),      # b1
                pl.BlockSpec((9 * C, C), lambda n: (0, 0)),      # w2
                pl.BlockSpec((C, 1),     lambda n: (0, 0)),      # b2
            ],
            out_specs=pl.BlockSpec((1, C, HW), lambda n: (n, 0, 0)),
        ),
        compiler_params=pltpu.CompilerParams(
            dimension_semantics=("parallel",)),                  # keeps v7x's 2 TCs busy
    )(x2, masks, w1k, b1k, w2k, b2k)

    return out.reshape(N, C, H, W)


def resblock_ref(x, w1, b1, w2, b2):
    """Pure-JAX reference (NCHW), mirrors the PyTorch module."""
    def conv(h, w, b):
        y = jax.lax.conv_general_dilated(
            h, w, window_strides=(1, 1), padding="SAME",
            dimension_numbers=("NCHW", "OIHW", "NCHW"),
            precision=jax.lax.Precision.HIGHEST)
        return y + b[None, :, None, None]

    def inorm(h):
        m = jnp.mean(h, axis=(2, 3), keepdims=True)
        v = jnp.mean((h - m) ** 2, axis=(2, 3), keepdims=True)
        return (h - m) / jnp.sqrt(v + EPS)

    h = jnp.maximum(inorm(conv(x, w1, b1)), 0.0)
    h = inorm(conv(h, w2, b2))
    return x + h


if __name__ == "__main__":
    N, C, H, W = 2, 4, 16, 16
    key = jax.random.PRNGKey(0)
    kx, k1, k2, k3, k4 = jax.random.split(key, 5)

    x  = jax.random.normal(kx, (N, C, H, W), jnp.float32)
    w1 = jax.random.normal(k1, (C, C, 3, 3), jnp.float32) * 0.2
    b1 = jax.random.normal(k2, (C,), jnp.float32) * 0.1
    w2 = jax.random.normal(k3, (C, C, 3, 3), jnp.float32) * 0.2
    b2 = jax.random.normal(k4, (C,), jnp.float32) * 0.1

    out = jax.block_until_ready(resblock_pallas(x, w1, b1, w2, b2))
    ref = jax.block_until_ready(resblock_ref(x, w1, b1, w2, b2))

    assert out.shape == x.shape
    if not jnp.allclose(out, ref, atol=2e-3, rtol=2e-3):
        raise AssertionError(
            "mismatch vs reference, max abs err = %g"
            % float(jnp.max(jnp.abs(out - ref))))
    print("KERNEL_OK")
</pallas_src>

<mosaic_0001>
module attributes {stable_mosaic.version = 11 : i64} {
  func.func @kernel(%arg0: i32, %arg1: memref<1x4x256xf32, #tpu.memory_space<vmem>>, %arg2: memref<9x256xf32, #tpu.memory_space<vmem>>, %arg3: memref<36x4xf32, #tpu.memory_space<vmem>>, %arg4: memref<4x1xf32, #tpu.memory_space<vmem>>, %arg5: memref<36x4xf32, #tpu.memory_space<vmem>>, %arg6: memref<4x1xf32, #tpu.memory_space<vmem>>, %arg7: memref<1x4x256xf32, #tpu.memory_space<vmem>>) attributes {dimension_semantics = [#tpu.dimension_semantics<parallel>], iteration_bounds = array<i64: 2>, scalar_prefetch = 0 : i64, scratch_operands = 0 : i64, tpu.core_type = #tpu.core_type<tc>, window_params = [{transform_indices = @transform_0, window_bounds = array<i64: 1, 4, 256>}, {pipeline_mode = #tpu.pipeline_mode<synchronous>, transform_indices = @transform_1, window_bounds = array<i64: 9, 256>}, {pipeline_mode = #tpu.pipeline_mode<synchronous>, transform_indices = @transform_2, window_bounds = array<i64: 36, 4>}, {pipeline_mode = #tpu.pipeline_mode<synchronous>, transform_indices = @transform_3, window_bounds = array<i64: 4, 1>}, {pipeline_mode = #tpu.pipeline_mode<synchronous>, transform_indices = @transform_4, window_bounds = array<i64: 36, 4>}, {pipeline_mode = #tpu.pipeline_mode<synchronous>, transform_indices = @transform_5, window_bounds = array<i64: 4, 1>}, {transform_indices = @transform_6, window_bounds = array<i64: 1, 4, 256>}]} {
    %c0 = arith.constant 0 : index
    %c0_0 = arith.constant 0 : index
    %c0_1 = arith.constant 0 : index
    %0 = vector.load %arg1[%c0, %c0_0, %c0_1] : memref<1x4x256xf32, #tpu.memory_space<vmem>>, vector<1x4x256xf32>
    %1 = vector.shape_cast %0 : vector<1x4x256xf32> to vector<4x256xf32>
    %c0_2 = arith.constant 0 : index
    %c0_3 = arith.constant 0 : index
    %2 = vector.load %arg2[%c0_2, %c0_3] : memref<9x256xf32, #tpu.memory_space<vmem>>, vector<9x256xf32>
    %c0_4 = arith.constant 0 : index
    %c0_5 = arith.constant 0 : index
    %3 = vector.load %arg3[%c0_4, %c0_5] : memref<36x4xf32, #tpu.memory_space<vmem>>, vector<36x4xf32>
    %c0_6 = arith.constant 0 : index
    %c0_7 = arith.constant 0 : index
    %4 = vector.load %arg5[%c0_6, %c0_7] : memref<36x4xf32, #tpu.memory_space<vmem>>, vector<36x4xf32>
    %c0_8 = arith.constant 0 : index
    %c0_9 = arith.constant 0 : index
    %5 = vector.load %arg4[%c0_8, %c0_9] : memref<4x1xf32, #tpu.memory_space<vmem>>, vector<4x1xf32>
    %c0_10 = arith.constant 0 : index
    %c0_11 = arith.constant 0 : index
    %6 = vector.load %arg6[%c0_10, %c0_11] : memref<4x1xf32, #tpu.memory_space<vmem>>, vector<4x1xf32>
    %cst = arith.constant 0.000000e+00 : f32
    %7 = vector.broadcast %cst : f32 to vector<4x256xf32>
    %c17_i32 = arith.constant 17 : i32
    %8 = tpu.dynamic_rotate %1 by %c17_i32 dim 1 : vector<4x256xf32>, i32 -> vector<4x256xf32>
    %9 = vector.extract_strided_slice %2 {offsets = [0, 0], sizes = [1, 256], strides = [1, 1]} : vector<9x256xf32> to vector<1x256xf32>
    %10 = vector.broadcast %9 : vector<1x256xf32> to vector<4x256xf32>
    %11 = arith.mulf %8, %10 : vector<4x256xf32>
    %12 = vector.extract_strided_slice %3 {offsets = [0, 0], sizes = [4, 4], strides = [1, 1]} : vector<36x4xf32> to vector<4x4xf32>
    %cst_12 = arith.constant dense<0.000000e+00> : vector<4x256xf32>
    %13 = tpu.matmul %12, %11, %cst_12 {dimension_numbers = #tpu.dot_dimension_numbers<[1], [0], [0], [1], [0, 0, 1, 1], [], []>, precision = #tpu.contract_precision<fp32>} : vector<4x4xf32>, vector<4x256xf32>, vector<4x256xf32> -> vector<4x256xf32>
    %14 = arith.addf %7, %13 : vector<4x256xf32>
    %c16_i32 = arith.constant 16 : i32
    %15 = tpu.dynamic_rotate %1 by %c16_i32 dim 1 : vector<4x256xf32>, i32 -> vector<4x256xf32>
    %16 = vector.extract_strided_slice %2 {offsets = [1, 0], sizes = [1, 256], strides = [1, 1]} : vector<9x256xf32> to vector<1x256xf32>
    %17 = vector.broadcast %16 : vector<1x256xf32> to vector<4x256xf32>
    %18 = arith.mulf %15, %17 : vector<4x256xf32>
    %19 = vector.extract_strided_slice %3 {offsets = [4, 0], sizes = [4, 4], strides = [1, 1]} : vector<36x4xf32> to vector<4x4xf32>
    %cst_13 = arith.constant dense<0.000000e+00> : vector<4x256xf32>
    %20 = tpu.matmul %19, %18, %cst_13 {dimension_numbers = #tpu.dot_dimension_numbers<[1], [0], [0], [1], [0, 0, 1, 1], [], []>, precision = #tpu.contract_precision<fp32>} : vector<4x4xf32>, vector<4x256xf32>, vector<4x256xf32> -> vector<4x256xf32>
    %21 = arith.addf %14, %20 : vector<4x256xf32>
    %c15_i32 = arith.constant 15 : i32
    %22 = tpu.dynamic_rotate %1 by %c15_i32 dim 1 : vector<4x256xf32>, i32 -> vector<4x256xf32>
    %23 = vector.extract_strided_slice %2 {offsets = [2, 0], sizes = [1, 256], strides = [1, 1]} : vector<9x256xf32> to vector<1x256xf32>
    %24 = vector.broadcast %23 : vector<1x256xf32> to vector<4x256xf32>
    %25 = arith.mulf %22, %24 : vector<4x256xf32>
    %26 = vector.extract_strided_slice %3 {offsets = [8, 0], sizes = [4, 4], strides = [1, 1]} : vector<36x4xf32> to vector<4x4xf32>
    %cst_14 = arith.constant dense<0.000000e+00> : vector<4x256xf32>
    %27 = tpu.matmul %26, %25, %cst_14 {dimension_numbers = #tpu.dot_dimension_numbers<[1], [0], [0], [1], [0, 0, 1, 1], [], []>, precision = #tpu.contract_precision<fp32>} : vector<4x4xf32>, vector<4x256xf32>, vector<4x256xf32> -> vector<4x256xf32>
    %28 = arith.addf %21, %27 : vector<4x256xf32>
    %c1_i32 = arith.constant 1 : i32
    %29 = tpu.dynamic_rotate %1 by %c1_i32 dim 1 : vector<4x256xf32>, i32 -> vector<4x256xf32>
    %30 = vector.extract_strided_slice %2 {offsets = [3, 0], sizes = [1, 256], strides = [1, 1]} : vector<9x256xf32> to vector<1x256xf32>
    %31 = vector.broadcast %30 : vector<1x256xf32> to vector<4x256xf32>
    %32 = arith.mulf %29, %31 : vector<4x256xf32>
    %33 = vector.extract_strided_slice %3 {offsets = [12, 0], sizes = [4, 4], strides = [1, 1]} : vector<36x4xf32> to vector<4x4xf32>
    %cst_15 = arith.constant dense<0.000000e+00> : vector<4x256xf32>
    %34 = tpu.matmul %33, %32, %cst_15 {dimension_numbers = #tpu.dot_dimension_numbers<[1], [0], [0], [1], [0, 0, 1, 1], [], []>, precision = #tpu.contract_precision<fp32>} : vector<4x4xf32>, vector<4x256xf32>, vector<4x256xf32> -> vector<4x256xf32>
    %35 = arith.addf %28, %34 : vector<4x256xf32>
    %36 = vector.extract_strided_slice %2 {offsets = [4, 0], sizes = [1, 256], strides = [1, 1]} : vector<9x256xf32> to vector<1x256xf32>
    %37 = vector.broadcast %36 : vector<1x256xf32> to vector<4x256xf32>
    %38 = arith.mulf %1, %37 : vector<4x256xf32>
    %39 = vector.extract_strided_slice %3 {offsets = [16, 0], sizes = [4, 4], strides = [1, 1]} : vector<36x4xf32> to vector<4x4xf32>
    %cst_16 = arith.constant dense<0.000000e+00> : vector<4x256xf32>
    %40 = tpu.matmul %39, %38, %cst_16 {dimension_numbers = #tpu.dot_dimension_numbers<[1], [0], [0], [1], [0, 0, 1, 1], [], []>, precision = #tpu.contract_precision<fp32>} : vector<4x4xf32>, vector<4x256xf32>, vector<4x256xf32> -> vector<4x256xf32>
    %41 = arith.addf %35, %40 : vector<4x256xf32>
    %c255_i32 = arith.constant 255 : i32
    %42 = tpu.dynamic_rotate %1 by %c255_i32 dim 1 : vector<4x256xf32>, i32 -> vector<4x256xf32>
    %43 = vector.extract_strided_slice %2 {offsets = [5, 0], sizes = [1, 256], strides = [1, 1]} : vector<9x256xf32> to vector<1x256xf32>
    %44 = vector.broadcast %43 : vector<1x256xf32> to vector<4x256xf32>
    %45 = arith.mulf %42, %44 : vector<4x256xf32>
    %46 = vector.extract_strided_slice %3 {offsets = [20, 0], sizes = [4, 4], strides = [1, 1]} : vector<36x4xf32> to vector<4x4xf32>
    %cst_17 = arith.constant dense<0.000000e+00> : vector<4x256xf32>
    %47 = tpu.matmul %46, %45, %cst_17 {dimension_numbers = #tpu.dot_dimension_numbers<[1], [0], [0], [1], [0, 0, 1, 1], [], []>, precision = #tpu.contract_precision<fp32>} : vector<4x4xf32>, vector<4x256xf32>, vector<4x256xf32> -> vector<4x256xf32>
    %48 = arith.addf %41, %47 : vector<4x256xf32>
    %c241_i32 = arith.constant 241 : i32
    %49 = tpu.dynamic_rotate %1 by %c241_i32 dim 1 : vector<4x256xf32>, i32 -> vector<4x256xf32>
    %50 = vector.extract_strided_slice %2 {offsets = [6, 0], sizes = [1, 256], strides = [1, 1]} : vector<9x256xf32> to vector<1x256xf32>
    %51 = vector.broadcast %50 : vector<1x256xf32> to vector<4x256xf32>
    %52 = arith.mulf %49, %51 : vector<4x256xf32>
    %53 = vector.extract_strided_slice %3 {offsets = [24, 0], sizes = [4, 4], strides = [1, 1]} : vector<36x4xf32> to vector<4x4xf32>
    %cst_18 = arith.constant dense<0.000000e+00> : vector<4x256xf32>
    %54 = tpu.matmul %53, %52, %cst_18 {dimension_numbers = #tpu.dot_dimension_numbers<[1], [0], [0], [1], [0, 0, 1, 1], [], []>, precision = #tpu.contract_precision<fp32>} : vector<4x4xf32>, vector<4x256xf32>, vector<4x256xf32> -> vector<4x256xf32>
    %55 = arith.addf %48, %54 : vector<4x256xf32>
    %c240_i32 = arith.constant 240 : i32
    %56 = tpu.dynamic_rotate %1 by %c240_i32 dim 1 : vector<4x256xf32>, i32 -> vector<4x256xf32>
    %57 = vector.extract_strided_slice %2 {offsets = [7, 0], sizes = [1, 256], strides = [1, 1]} : vector<9x256xf32> to vector<1x256xf32>
    %58 = vector.broadcast %57 : vector<1x256xf32> to vector<4x256xf32>
    %59 = arith.mulf %56, %58 : vector<4x256xf32>
    %60 = vector.extract_strided_slice %3 {offsets = [28, 0], sizes = [4, 4], strides = [1, 1]} : vector<36x4xf32> to vector<4x4xf32>
    %cst_19 = arith.constant dense<0.000000e+00> : vector<4x256xf32>
    %61 = tpu.matmul %60, %59, %cst_19 {dimension_numbers = #tpu.dot_dimension_numbers<[1], [0], [0], [1], [0, 0, 1, 1], [], []>, precision = #tpu.contract_precision<fp32>} : vector<4x4xf32>, vector<4x256xf32>, vector<4x256xf32> -> vector<4x256xf32>
    %62 = arith.addf %55, %61 : vector<4x256xf32>
    %c239_i32 = arith.constant 239 : i32
    %63 = tpu.dynamic_rotate %1 by %c239_i32 dim 1 : vector<4x256xf32>, i32 -> vector<4x256xf32>
    %64 = vector.extract_strided_slice %2 {offsets = [8, 0], sizes = [1, 256], strides = [1, 1]} : vector<9x256xf32> to vector<1x256xf32>
    %65 = vector.broadcast %64 : vector<1x256xf32> to vector<4x256xf32>
    %66 = arith.mulf %63, %65 : vector<4x256xf32>
    %67 = vector.extract_strided_slice %3 {offsets = [32, 0], sizes = [4, 4], strides = [1, 1]} : vector<36x4xf32> to vector<4x4xf32>
    %cst_20 = arith.constant dense<0.000000e+00> : vector<4x256xf32>
    %68 = tpu.matmul %67, %66, %cst_20 {dimension_numbers = #tpu.dot_dimension_numbers<[1], [0], [0], [1], [0, 0, 1, 1], [], []>, precision = #tpu.contract_precision<fp32>} : vector<4x4xf32>, vector<4x256xf32>, vector<4x256xf32> -> vector<4x256xf32>
    %69 = arith.addf %62, %68 : vector<4x256xf32>
    %70 = vector.broadcast %5 : vector<4x1xf32> to vector<4x256xf32>
    %71 = arith.addf %69, %70 : vector<4x256xf32>
    %cst_21 = arith.constant dense<0.000000e+00> : vector<4xf32>
    %72 = vector.multi_reduction <add>, %71, %cst_21 [1] : vector<4x256xf32> to vector<4xf32>
    %73 = vector.shape_cast %72 : vector<4xf32> to vector<4x1xf32>
    %cst_22 = arith.constant 2.560000e+02 : f32
    %74 = vector.broadcast %cst_22 : f32 to vector<4x1xf32>
    %75 = arith.divf %73, %74 : vector<4x1xf32>
    %76 = vector.broadcast %75 : vector<4x1xf32> to vector<4x256xf32>
    %77 = arith.subf %71, %76 : vector<4x256xf32>
    %78 = arith.mulf %77, %77 : vector<4x256xf32>
    %cst_23 = arith.constant dense<0.000000e+00> : vector<4xf32>
    %79 = vector.multi_reduction <add>, %78, %cst_23 [1] : vector<4x256xf32> to vector<4xf32>
    %80 = vector.shape_cast %79 : vector<4xf32> to vector<4x1xf32>
    %cst_24 = arith.constant 2.560000e+02 : f32
    %81 = vector.broadcast %cst_24 : f32 to vector<4x1xf32>
    %82 = arith.divf %80, %81 : vector<4x1xf32>
    %cst_25 = arith.constant 9.99999974E-6 : f32
    %83 = vector.broadcast %cst_25 : f32 to vector<4x1xf32>
    %84 = arith.addf %82, %83 : vector<4x1xf32>
    %85 = math.rsqrt %84 : vector<4x1xf32>
    %86 = vector.broadcast %85 : vector<4x1xf32> to vector<4x256xf32>
    %87 = arith.mulf %77, %86 : vector<4x256xf32>
    %cst_26 = arith.constant 0.000000e+00 : f32
    %88 = vector.broadcast %cst_26 : f32 to vector<4x256xf32>
    %89 = arith.maximumf %87, %88 : vector<4x256xf32>
    %cst_27 = arith.constant 0.000000e+00 : f32
    %90 = vector.broadcast %cst_27 : f32 to vector<4x256xf32>
    %c17_i32_28 = arith.constant 17 : i32
    %91 = tpu.dynamic_rotate %89 by %c17_i32_28 dim 1 : vector<4x256xf32>, i32 -> vector<4x256xf32>
    %92 = vector.extract_strided_slice %2 {offsets = [0, 0], sizes = [1, 256], strides = [1, 1]} : vector<9x256xf32> to vector<1x256xf32>
    %93 = vector.broadcast %92 : vector<1x256xf32> to vector<4x256xf32>
    %94 = arith.mulf %91, %93 : vector<4x256xf32>
    %95 = vector.extract_strided_slice %4 {offsets = [0, 0], sizes = [4, 4], strides = [1, 1]} : vector<36x4xf32> to vector<4x4xf32>
    %cst_29 = arith.constant dense<0.000000e+00> : vector<4x256xf32>
    %96 = tpu.matmul %95, %94, %cst_29 {dimension_numbers = #tpu.dot_dimension_numbers<[1], [0], [0], [1], [0, 0, 1, 1], [], []>, precision = #tpu.contract_precision<fp32>} : vector<4x4xf32>, vector<4x256xf32>, vector<4x256xf32> -> vector<4x256xf32>
    %97 = arith.addf %90, %96 : vector<4x256xf32>
    %c16_i32_30 = arith.constant 16 : i32
    %98 = tpu.dynamic_rotate %89 by %c16_i32_30 dim 1 : vector<4x256xf32>, i32 -> vector<4x256xf32>
    %99 = vector.extract_strided_slice %2 {offsets = [1, 0], sizes = [1, 256], strides = [1, 1]} : vector<9x256xf32> to vector<1x256xf32>
    %100 = vector.broadcast %99 : vector<1x256xf32> to vector<4x256xf32>
    %101 = arith.mulf %98, %100 : vector<4x256xf32>
    %102 = vector.extract_strided_slice %4 {offsets = [4, 0], sizes = [4, 4], strides = [1, 1]} : vector<36x4xf32> to vector<4x4xf32>
    %cst_31 = arith.constant dense<0.000000e+00> : vector<4x256xf32>
    %103 = tpu.matmul %102, %101, %cst_31 {dimension_numbers = #tpu.dot_dimension_numbers<[1], [0], [0], [1], [0, 0, 1, 1], [], []>, precision = #tpu.contract_precision<fp32>} : vector<4x4xf32>, vector<4x256xf32>, vector<4x256xf32> -> vector<4x256xf32>
    %104 = arith.addf %97, %103 : vector<4x256xf32>
    %c15_i32_32 = arith.constant 15 : i32
    %105 = tpu.dynamic_rotate %89 by %c15_i32_32 dim 1 : vector<4x256xf32>, i32 -> vector<4x256xf32>
    %106 = vector.extract_strided_slice %2 {offsets = [2, 0], sizes = [1, 256], strides = [1, 1]} : vector<9x256xf32> to vector<1x256xf32>
    %107 = vector.broadcast %106 : vector<1x256xf32> to vector<4x256xf32>
    %108 = arith.mulf %105, %107 : vector<4x256xf32>
    %109 = vector.extract_strided_slice %4 {offsets = [8, 0], sizes = [4, 4], strides = [1, 1]} : vector<36x4xf32> to vector<4x4xf32>
    %cst_33 = arith.constant dense<0.000000e+00> : vector<4x256xf32>
    %110 = tpu.matmul %109, %108, %cst_33 {dimension_numbers = #tpu.dot_dimension_numbers<[1], [0], [0], [1], [0, 0, 1, 1], [], []>, precision = #tpu.contract_precision<fp32>} : vector<4x4xf32>, vector<4x256xf32>, vector<4x256xf32> -> vector<4x256xf32>
    %111 = arith.addf %104, %110 : vector<4x256xf32>
    %c1_i32_34 = arith.constant 1 : i32
    %112 = tpu.dynamic_rotate %89 by %c1_i32_34 dim 1 : vector<4x256xf32>, i32 -> vector<4x256xf32>
    %113 = vector.extract_strided_slice %2 {offsets = [3, 0], sizes = [1, 256], strides = [1, 1]} : vector<9x256xf32> to vector<1x256xf32>
    %114 = vector.broadcast %113 : vector<1x256xf32> to vector<4x256xf32>
    %115 = arith.mulf %112, %114 : vector<4x256xf32>
    %116 = vector.extract_strided_slice %4 {offsets = [12, 0], sizes = [4, 4], strides = [1, 1]} : vector<36x4xf32> to vector<4x4xf32>
    %cst_35 = arith.constant dense<0.000000e+00> : vector<4x256xf32>
    %117 = tpu.matmul %116, %115, %cst_35 {dimension_numbers = #tpu.dot_dimension_numbers<[1], [0], [0], [1], [0, 0, 1, 1], [], []>, precision = #tpu.contract_precision<fp32>} : vector<4x4xf32>, vector<4x256xf32>, vector<4x256xf32> -> vector<4x256xf32>
    %118 = arith.addf %111, %117 : vector<4x256xf32>
    %119 = vector.extract_strided_slice %2 {offsets = [4, 0], sizes = [1, 256], strides = [1, 1]} : vector<9x256xf32> to vector<1x256xf32>
    %120 = vector.broadcast %119 : vector<1x256xf32> to vector<4x256xf32>
    %121 = arith.mulf %89, %120 : vector<4x256xf32>
    %122 = vector.extract_strided_slice %4 {offsets = [16, 0], sizes = [4, 4], strides = [1, 1]} : vector<36x4xf32> to vector<4x4xf32>
    %cst_36 = arith.constant dense<0.000000e+00> : vector<4x256xf32>
    %123 = tpu.matmul %122, %121, %cst_36 {dimension_numbers = #tpu.dot_dimension_numbers<[1], [0], [0], [1], [0, 0, 1, 1], [], []>, precision = #tpu.contract_precision<fp32>} : vector<4x4xf32>, vector<4x256xf32>, vector<4x256xf32> -> vector<4x256xf32>
    %124 = arith.addf %118, %123 : vector<4x256xf32>
    %c255_i32_37 = arith.constant 255 : i32
    %125 = tpu.dynamic_rotate %89 by %c255_i32_37 dim 1 : vector<4x256xf32>, i32 -> vector<4x256xf32>
    %126 = vector.extract_strided_slice %2 {offsets = [5, 0], sizes = [1, 256], strides = [1, 1]} : vector<9x256xf32> to vector<1x256xf32>
    %127 = vector.broadcast %126 : vector<1x256xf32> to vector<4x256xf32>
    %128 = arith.mulf %125, %127 : vector<4x256xf32>
    %129 = vector.extract_strided_slice %4 {offsets = [20, 0], sizes = [4, 4], strides = [1, 1]} : vector<36x4xf32> to vector<4x4xf32>
    %cst_38 = arith.constant dense<0.000000e+00> : vector<4x256xf32>
    %130 = tpu.matmul %129, %128, %cst_38 {dimension_numbers = #tpu.dot_dimension_numbers<[1], [0], [0], [1], [0, 0, 1, 1], [], []>, precision = #tpu.contract_precision<fp32>} : vector<4x4xf32>, vector<4x256xf32>, vector<4x256xf32> -> vector<4x256xf32>
    %131 = arith.addf %124, %130 : vector<4x256xf32>
    %c241_i32_39 = arith.constant 241 : i32
    %132 = tpu.dynamic_rotate %89 by %c241_i32_39 dim 1 : vector<4x256xf32>, i32 -> vector<4x256xf32>
    %133 = vector.extract_strided_slice %2 {offsets = [6, 0], sizes = [1, 256], strides = [1, 1]} : vector<9x256xf32> to vector<1x256xf32>
    %134 = vector.broadcast %133 : vector<1x256xf32> to vector<4x256xf32>
    %135 = arith.mulf %132, %134 : vector<4x256xf32>
    %136 = vector.extract_strided_slice %4 {offsets = [24, 0], sizes = [4, 4], strides = [1, 1]} : vector<36x4xf32> to vector<4x4xf32>
    %cst_40 = arith.constant dense<0.000000e+00> : vector<4x256xf32>
    %137 = tpu.matmul %136, %135, %cst_40 {dimension_numbers = #tpu.dot_dimension_numbers<[1], [0], [0], [1], [0, 0, 1, 1], [], []>, precision = #tpu.contract_precision<fp32>} : vector<4x4xf32>, vector<4x256xf32>, vector<4x256xf32> -> vector<4x256xf32>
    %138 = arith.addf %131, %137 : vector<4x256xf32>
    %c240_i32_41 = arith.constant 240 : i32
    %139 = tpu.dynamic_rotate %89 by %c240_i32_41 dim 1 : vector<4x256xf32>, i32 -> vector<4x256xf32>
    %140 = vector.extract_strided_slice %2 {offsets = [7, 0], sizes = [1, 256], strides = [1, 1]} : vector<9x256xf32> to vector<1x256xf32>
    %141 = vector.broadcast %140 : vector<1x256xf32> to vector<4x256xf32>
    %142 = arith.mulf %139, %141 : vector<4x256xf32>
    %143 = vector.extract_strided_slice %4 {offsets = [28, 0], sizes = [4, 4], strides = [1, 1]} : vector<36x4xf32> to vector<4x4xf32>
    %cst_42 = arith.constant dense<0.000000e+00> : vector<4x256xf32>
    %144 = tpu.matmul %143, %142, %cst_42 {dimension_numbers = #tpu.dot_dimension_numbers<[1], [0], [0], [1], [0, 0, 1, 1], [], []>, precision = #tpu.contract_precision<fp32>} : vector<4x4xf32>, vector<4x256xf32>, vector<4x256xf32> -> vector<4x256xf32>
    %145 = arith.addf %138, %144 : vector<4x256xf32>
    %c239_i32_43 = arith.constant 239 : i32
    %146 = tpu.dynamic_rotate %89 by %c239_i32_43 dim 1 : vector<4x256xf32>, i32 -> vector<4x256xf32>
    %147 = vector.extract_strided_slice %2 {offsets = [8, 0], sizes = [1, 256], strides = [1, 1]} : vector<9x256xf32> to vector<1x256xf32>
    %148 = vector.broadcast %147 : vector<1x256xf32> to vector<4x256xf32>
    %149 = arith.mulf %146, %148 : vector<4x256xf32>
    %150 = vector.extract_strided_slice %4 {offsets = [32, 0], sizes = [4, 4], strides = [1, 1]} : vector<36x4xf32> to vector<4x4xf32>
    %cst_44 = arith.constant dense<0.000000e+00> : vector<4x256xf32>
    %151 = tpu.matmul %150, %149, %cst_44 {dimension_numbers = #tpu.dot_dimension_numbers<[1], [0], [0], [1], [0, 0, 1, 1], [], []>, precision = #tpu.contract_precision<fp32>} : vector<4x4xf32>, vector<4x256xf32>, vector<4x256xf32> -> vector<4x256xf32>
    %152 = arith.addf %145, %151 : vector<4x256xf32>
    %153 = vector.broadcast %6 : vector<4x1xf32> to vector<4x256xf32>
    %154 = arith.addf %152, %153 : vector<4x256xf32>
    %cst_45 = arith.constant dense<0.000000e+00> : vector<4xf32>
    %155 = vector.multi_reduction <add>, %154, %cst_45 [1] : vector<4x256xf32> to vector<4xf32>
    %156 = vector.shape_cast %155 : vector<4xf32> to vector<4x1xf32>
    %cst_46 = arith.constant 2.560000e+02 : f32
    %157 = vector.broadcast %cst_46 : f32 to vector<4x1xf32>
    %158 = arith.divf %156, %157 : vector<4x1xf32>
    %159 = vector.broadcast %158 : vector<4x1xf32> to vector<4x256xf32>
    %160 = arith.subf %154, %159 : vector<4x256xf32>
    %161 = arith.mulf %160, %160 : vector<4x256xf32>
    %cst_47 = arith.constant dense<0.000000e+00> : vector<4xf32>
    %162 = vector.multi_reduction <add>, %161, %cst_47 [1] : vector<4x256xf32> to vector<4xf32>
    %163 = vector.shape_cast %162 : vector<4xf32> to vector<4x1xf32>
    %cst_48 = arith.constant 2.560000e+02 : f32
    %164 = vector.broadcast %cst_48 : f32 to vector<4x1xf32>
    %165 = arith.divf %163, %164 : vector<4x1xf32>
    %cst_49 = arith.constant 9.99999974E-6 : f32
    %166 = vector.broadcast %cst_49 : f32 to vector<4x1xf32>
    %167 = arith.addf %165, %166 : vector<4x1xf32>
    %168 = math.rsqrt %167 : vector<4x1xf32>
    %169 = vector.broadcast %168 : vector<4x1xf32> to vector<4x256xf32>
    %170 = arith.mulf %160, %169 : vector<4x256xf32>
    %171 = arith.addf %1, %170 : vector<4x256xf32>
    %c0_50 = arith.constant 0 : index
    %c0_51 = arith.constant 0 : index
    %c0_52 = arith.constant 0 : index
    %172 = vector.load %arg7[%c0_50, %c0_51, %c0_52] : memref<1x4x256xf32, #tpu.memory_space<vmem>>, vector<1x4x256xf32>
    %173 = vector.shape_cast %172 : vector<1x4x256xf32> to vector<4x256xf32>
    %174 = vector.shape_cast %171 : vector<4x256xf32> to vector<1x4x256xf32>
    tpu.vector_store %arg7[%c0_50, %c0_51, %c0_52], %174 {strides = array<i32>} : memref<1x4x256xf32, #tpu.memory_space<vmem>>, vector<1x4x256xf32>,
    return
  }
  func.func @transform_0(%arg0: i32) -> (i32, i32, i32) {
    %c0_i32 = arith.constant 0 : i32
    %c0_i32_0 = arith.constant 0 : i32
    %c0_i32_1 = arith.constant 0 : i32
    return %arg0, %c0_i32, %c0_i32_0 : i32, i32, i32
  }
  func.func @transform_1(%arg0: i32) -> (i32, i32) {
    %c0_i32 = arith.constant 0 : i32
    %c0_i32_0 = arith.constant 0 : i32
    %c0_i32_1 = arith.constant 0 : i32
    return %c0_i32, %c0_i32_0 : i32, i32
  }
  func.func @transform_2(%arg0: i32) -> (i32, i32) {
    %c0_i32 = arith.constant 0 : i32
    %c0_i32_0 = arith.constant 0 : i32
    %c0_i32_1 = arith.constant 0 : i32
    return %c0_i32, %c0_i32_0 : i32, i32
  }
  func.func @transform_3(%arg0: i32) -> (i32, i32) {
    %c0_i32 = arith.constant 0 : i32
    %c0_i32_0 = arith.constant 0 : i32
    %c0_i32_1 = arith.constant 0 : i32
    return %c0_i32, %c0_i32_0 : i32, i32
  }
  func.func @transform_4(%arg0: i32) -> (i32, i32) {
    %c0_i32 = arith.constant 0 : i32
    %c0_i32_0 = arith.constant 0 : i32
    %c0_i32_1 = arith.constant 0 : i32
    return %c0_i32, %c0_i32_0 : i32, i32
  }
  func.func @transform_5(%arg0: i32) -> (i32, i32) {
    %c0_i32 = arith.constant 0 : i32
    %c0_i32_0 = arith.constant 0 : i32
    %c0_i32_1 = arith.constant 0 : i32
    return %c0_i32, %c0_i32_0 : i32, i32
  }
  func.func @transform_6(%arg0: i32) -> (i32, i32, i32) {
    %c0_i32 = arith.constant 0 : i32
    %c0_i32_0 = arith.constant 0 : i32
    %c0_i32_1 = arith.constant 0 : i32
    return %arg0, %c0_i32, %c0_i32_0 : i32, i32, i32
  }
}

</mosaic_0001>

<llo_original>
// kernel: tpu_custom_call.1
$region0: #{tpu_custom_call.1}
  #allocation0 [shape = 'u32[]', space=smem, size = 0x4, offset = 0x4, fixed_abs, tag = 'smem constant byte address 0x4 - core index']
  #allocation1 [shape = 'u32[144,128]{1,0:T(1,128)}', space=vmem, size = 0x12000, scoped, tag = 'internal scratch']
  %s0 = inlined_call_operand.vmem [shape: f32[2,4,256], index: 0, kind: input, shape index: {}]
  %s1 = inlined_call_operand.vmem [shape: f32[9,256], index: 1, kind: input, shape index: {}]
  %s2 = inlined_call_operand.vmem [shape: f32[36,4], index: 2, kind: input, shape index: {}]
  %s3 = inlined_call_operand.vmem [shape: f32[4,1], index: 3, kind: input, shape index: {}]
  %s4 = inlined_call_operand.vmem [shape: f32[36,4], index: 4, kind: input, shape index: {}]
  %s5 = inlined_call_operand.vmem [shape: f32[4,1], index: 5, kind: input, shape index: {}]
  %s6 = inlined_call_operand.hbm [shape: f32[2,4,256], index: 6, kind: output, shape index: {}]
  %s7 = sld [smem:[#allocation0]]
  $region57: #{tpu_custom_call.1} parent=0
    _
  %s9 = ssub.s32 1, %s7
  %s10 = scalar_select 0, %s9, %s7
  $region1: #{tpu_custom_call.1} parent=0
    #allocation2 [shape = 'u8[8192]{0}', space=vmem, size = 0x2000, scoped, tag = 'output window, operand 0']
    #allocation3 [shape = 's32[2]{0}', space=sflag, size = 0x8, scoped, tag = 'scoped memory for tpu_custom_call.1']
    %11 = vsyncpa [#allocation3], 0
    %s12 = scalar_lea.sflag [#allocation3], 1
    %13 = vsyncpa %s12, 0
    loop: start=0, step=1, limit=4
    $region2: #{tpu_custom_call.1} parent=1 // loop_pre_header
      _
    $region3: #{tpu_custom_call.1} parent=1 // loop_header
      %s15 = sphi 0, %s19
      %p16 = scmp.ge.s32.totalorder %s15, 4
      %s25 = sphi 0, %s27
      %s28 = sphi 0, %s25
      %s29 = sphi 0, %s28
      %s45 = sphi 0, %s29
      %s49 = sphi 0, %s49
      %s51 = sphi 0, %s49
      %s52 = sphi 0, %s51
      %s66 = sphi 0, %s52
      %s70 = sphi 0, %s70
      %s72 = sphi 0, %s70
      %s73 = sphi 0, %s72
      %s87 = sphi 0, %s73
      %s91 = sphi 0, %s91
      %s93 = sphi 0, %s91
      %s94 = sphi 0, %s93
      %s108 = sphi 0, %s94
      %s112 = sphi 0, %s112
      %s114 = sphi 0, %s112
      %s115 = sphi 0, %s114
      %s129 = sphi 0, %s115
      %s133 = sphi 0, %s133
      %s135 = sphi 0, %s133
      %s136 = sphi 0, %s135
      %s150 = sphi 0, %s136
      %s156 = sphi 0, %s158
      %s159 = sphi 0, %s156
      %s160 = sphi 0, %s159
      %s176 = sphi 0, %s160
    $region4: #{tpu_custom_call.1} parent=1 // loop_header_branch
      %18 = sbr.rel (%p16) target = $region8
    $region5: #{tpu_custom_call.1} parent=1 // loop_body
      %s20 = ssub.s32 %s15, 1
      %s21 = ssub.s32 %s15, 2
      %s22 = sadd.s32 %s15, 1
      %s23 = ssub.s32 %s15, %s22
      %p24 = scmp.eq.s32.totalorder %s23, 0
      %s26 = sadd.s32 %s25, 1
      %s27 = scalar_select %p24, %s25, %s26
      %p30 = pneg %p24
      %p31 = scmp.eq.s32.totalorder %s15, 1
      %p32 = por %p30, %p31
      %p33 = scmp.ne.s32.totalorder %s25, %s28
      %p34 = scmp.eq.s32.totalorder %s15, 0
      %p35 = por %p33, %p34
      %p36 = scmp.ne.s32.totalorder %s25, %s28
      %p37 = scmp.eq.s32.totalorder %s20, 1
      %p38 = por %p36, %p37
      %p39 = scmp.ne.s32.totalorder %s28, %s29
      %p40 = scmp.eq.s32.totalorder %s20, 0
      %p41 = por %p39, %p40
      %p42 = scmp.ne.s32.totalorder %s28, %s29
      %p43 = scmp.eq.s32.totalorder %s21, 1
      %p44 = por %p42, %p43
      %p46 = scmp.ne.s32.totalorder %s29, %s45
      %p47 = scmp.eq.s32.totalorder %s21, 0
      %p48 = por %p46, %p47
      %s50 = sadd.s32 %s49, 1
      %p53 = scmp.eq.s32.totalorder %s15, 1
      %p54 = scmp.ne.s32.totalorder %s49, %s51
      %p55 = scmp.eq.s32.totalorder %s15, 0
      %p56 = por %p54, %p55
      %p57 = scmp.ne.s32.totalorder %s49, %s51
      %p58 = scmp.eq.s32.totalorder %s20, 1
      %p59 = por %p57, %p58
      %p60 = scmp.ne.s32.totalorder %s51, %s52
      %p61 = scmp.eq.s32.totalorder %s20, 0
      %p62 = por %p60, %p61
      %p63 = scmp.ne.s32.totalorder %s51, %s52
      %p64 = scmp.eq.s32.totalorder %s21, 1
      %p65 = por %p63, %p64
      %p67 = scmp.ne.s32.totalorder %s52, %s66
      %p68 = scmp.eq.s32.totalorder %s21, 0
      %p69 = por %p67, %p68
      %s71 = sadd.s32 %s70, 1
      %p74 = scmp.eq.s32.totalorder %s15, 1
      %p75 = scmp.ne.s32.totalorder %s70, %s72
      %p76 = scmp.eq.s32.totalorder %s15, 0
      %p77 = por %p75, %p76
      %p78 = scmp.ne.s32.totalorder %s70, %s72
      %p79 = scmp.eq.s32.totalorder %s20, 1
      %p80 = por %p78, %p79
      %p81 = scmp.ne.s32.totalorder %s72, %s73
      %p82 = scmp.eq.s32.totalorder %s20, 0
      %p83 = por %p81, %p82
      %p84 = scmp.ne.s32.totalorder %s72, %s73
      %p85 = scmp.eq.s32.totalorder %s21, 1
      %p86 = por %p84, %p85
      %p88 = scmp.ne.s32.totalorder %s73, %s87
      %p89 = scmp.eq.s32.totalorder %s21, 0
      %p90 = por %p88, %p89
      %s92 = sadd.s32 %s91, 1
      %p95 = scmp.eq.s32.totalorder %s15, 1
      %p96 = scmp.ne.s32.totalorder %s91, %s93
      %p97 = scmp.eq.s32.totalorder %s15, 0
      %p98 = por %p96, %p97
      %p99 = scmp.ne.s32.totalorder %s91, %s93
      %p100 = scmp.eq.s32.totalorder %s20, 1
      %p101 = por %p99, %p100
      %p102 = scmp.ne.s32.totalorder %s93, %s94
      %p103 = scmp.eq.s32.totalorder %s20, 0
      %p104 = por %p102, %p103
      %p105 = scmp.ne.s32.totalorder %s93, %s94
      %p106 = scmp.eq.s32.totalorder %s21, 1
      %p107 = por %p105, %p106
      %p109 = scmp.ne.s32.totalorder %s94, %s108
      %p110 = scmp.eq.s32.totalorder %s21, 0
      %p111 = por %p109, %p110
      %s113 = sadd.s32 %s112, 1
      %p116 = scmp.eq.s32.totalorder %s15, 1
      %p117 = scmp.ne.s32.totalorder %s112, %s114
      %p118 = scmp.eq.s32.totalorder %s15, 0
      %p119 = por %p117, %p118
      %p120 = scmp.ne.s32.totalorder %s112, %s114
      %p121 = scmp.eq.s32.totalorder %s20, 1
      %p122 = por %p120, %p121
      %p123 = scmp.ne.s32.totalorder %s114, %s115
      %p124 = scmp.eq.s32.totalorder %s20, 0
      %p125 = por %p123, %p124
      %p126 = scmp.ne.s32.totalorder %s114, %s115
      %p127 = scmp.eq.s32.totalorder %s21, 1
      %p128 = por %p126, %p127
      %p130 = scmp.ne.s32.totalorder %s115, %s129
      %p131 = scmp.eq.s32.totalorder %s21, 0
      %p132 = por %p130, %p131
      %s134 = sadd.s32 %s133, 1
      %p137 = scmp.eq.s32.totalorder %s15, 1
      %p138 = scmp.ne.s32.totalorder %s133, %s135
      %p139 = scmp.eq.s32.totalorder %s15, 0
      %p140 = por %p138, %p139
      %p141 = scmp.ne.s32.totalorder %s133, %s135
      %p142 = scmp.eq.s32.totalorder %s20, 1
      %p143 = por %p141, %p142
      %p144 = scmp.ne.s32.totalorder %s135, %s136
      %p145 = scmp.eq.s32.totalorder %s20, 0
      %p146 = por %p144, %p145
      %p147 = scmp.ne.s32.totalorder %s135, %s136
      %p148 = scmp.eq.s32.totalorder %s21, 1
      %p149 = por %p147, %p148
      %p151 = scmp.ne.s32.totalorder %s136, %s150
      %p152 = scmp.eq.s32.totalorder %s21, 0
      %p153 = por %p151, %p152
      %s154 = ssub.s32 %s15, %s22
      %p155 = scmp.eq.s32.totalorder %s154, 0
      %s157 = sadd.s32 %s156, 1
      %s158 = scalar_select %p155, %s156, %s157
      %p161 = pneg %p155
      %p162 = scmp.eq.s32.totalorder %s15, 1
      %p163 = por %p161, %p162
      %p164 = scmp.ne.s32.totalorder %s156, %s159
      %p165 = scmp.eq.s32.totalorder %s15, 0
      %p166 = por %p164, %p165
      %p167 = scmp.ne.s32.totalorder %s156, %s159
      %p168 = scmp.eq.s32.totalorder %s20, 1
      %p169 = por %p167, %p168
      %p170 = scmp.ne.s32.totalorder %s159, %s160
      %p171 = scmp.eq.s32.totalorder %s20, 0
      %p172 = por %p170, %p171
      %p173 = scmp.ne.s32.totalorder %s159, %s160
      %p174 = scmp.eq.s32.totalorder %s21, 1
      %p175 = por %p173, %p174
      %p177 = scmp.ne.s32.totalorder %s160, %s176
      %p178 = scmp.eq.s32.totalorder %s21, 0
      %p179 = por %p177, %p178
      %p180 = scmp.le.s32.totalorder 1, %s15
      %p181 = scmp.lt.s32.totalorder %s15, 3
      %p182 = pnand %p180, %p181
      %p183 = pneg %p182
      // Predicated region
      $region9: #{tpu_custom_call.1} parent=5 // pred_check
        _
      $region10: #{tpu_custom_call.1} parent=5 // pred_check_branch
        %185 = sbr.rel (%p182) target = $region12
      $region11: #{tpu_custom_call.1} parent=5 // pred_region
        %s186 = ssub.s32 %s15, 1
        // Predicated region
        $region13: #{tpu_custom_call.1} parent=11 // pred_check
          %p187 = pneg %p62
        $region14: #{tpu_custom_call.1} parent=11 // pred_check_branch
          %189 = sbr.rel (%p187) target = $region16
        $region15: #{tpu_custom_call.1} parent=11 // pred_region
          _
        $region16: #{tpu_custom_call.1} parent=11 // pred_fallthru
          _
        // Predicated region
        $region17: #{tpu_custom_call.1} parent=11 // pred_check
          %p190 = pneg %p83
        $region18: #{tpu_custom_call.1} parent=11 // pred_check_branch
          %192 = sbr.rel (%p190) target = $region20
        $region19: #{tpu_custom_call.1} parent=11 // pred_region
          _
        $region20: #{tpu_custom_call.1} parent=11 // pred_fallthru
          _
        // Predicated region
        $region21: #{tpu_custom_call.1} parent=11 // pred_check
          %p193 = pneg %p104
        $region22: #{tpu_custom_call.1} parent=11 // pred_check_branch
          %195 = sbr.rel (%p193) target = $region24
        $region23: #{tpu_custom_call.1} parent=11 // pred_region
          _
        $region24: #{tpu_custom_call.1} parent=11 // pred_fallthru
          _
        // Predicated region
        $region25: #{tpu_custom_call.1} parent=11 // pred_check
          %p196 = pneg %p125
        $region26: #{tpu_custom_call.1} parent=11 // pred_check_branch
          %198 = sbr.rel (%p196) target = $region28
        $region27: #{tpu_custom_call.1} parent=11 // pred_region
          _
        $region28: #{tpu_custom_call.1} parent=11 // pred_fallthru
          _
        // Predicated region
        $region29: #{tpu_custom_call.1} parent=11 // pred_check
          %p199 = pneg %p146
        $region30: #{tpu_custom_call.1} parent=11 // pred_check_branch
          %201 = sbr.rel (%p199) target = $region32
        $region31: #{tpu_custom_call.1} parent=11 // pred_region
          _
        $region32: #{tpu_custom_call.1} parent=11 // pred_fallthru
          _
      $region12: #{tpu_custom_call.1} parent=5 // pred_fallthru
        _
      %p202 = scmp.lt.s32.totalorder %s15, 2
      // Predicated region
      $region33: #{tpu_custom_call.1} parent=5 // pred_check
        %p203 = pneg %p202
      $region34: #{tpu_custom_call.1} parent=5 // pred_check_branch
        %205 = sbr.rel (%p203) target = $region36
      $region35: #{tpu_custom_call.1} parent=5 // pred_region
        // Predicated region
        $region37: #{tpu_custom_call.1} parent=35 // pred_check
          %p206 = pneg %p35
        $region38: #{tpu_custom_call.1} parent=35 // pred_check_branch
          %208 = sbr.rel (%p206) target = $region40
        $region39: #{tpu_custom_call.1} parent=35 // pred_region
          %p209 = scmp.lt.s32.totalorder %s15, 1
          %s210 = scalar_select %p209, %s15, 1
          %s211 = smul.addr %s210, 2
          %s212 = smul.addr %s211, 4
          %s213 = scalar_lea.vmem %s0, %s212
        $region40: #{tpu_custom_call.1} parent=35 // pred_fallthru
          _
      $region36: #{tpu_custom_call.1} parent=5 // pred_fallthru
        _
      %p214 = scmp.le.s32.totalorder 1, %s15
      %p215 = scmp.lt.s32.totalorder %s15, 3
      %p216 = pnand %p214, %p215
      %p217 = pneg %p216
      // Predicated region
      $region41: #{tpu_custom_call.1} parent=5 // pred_check
        _
      $region42: #{tpu_custom_call.1} parent=5 // pred_check_branch
        %219 = sbr.rel (%p216) target = $region44
      $region43: #{tpu_custom_call.1} parent=5 // pred_region
        %s220 = ssub.s32 %s15, 1
        %p221 = scmp.lt.s32.totalorder %s20, 1
        %s222 = scalar_select %p221, %s20, 1
        %s223 = smul.addr %s222, 2
        %s224 = smul.addr %s223, 4
        %s225 = scalar_lea.vmem %s0, %s224
        %p226 = pneg %p41
        %p227 = pneg %p38
        %p228 = pneg %p62
        %p229 = pneg %p59
        %p230 = pneg %p83
        %p231 = pneg %p80
        %p232 = pneg %p104
        %p233 = pneg %p101
        %p234 = pneg %p125
        %p235 = pneg %p122
        %p236 = pneg %p146
        %p237 = pneg %p143
        %p238 = pneg %p172
        %p239 = pneg %p169
        %s240 = sand.u32 %s159, 1
        %s241 = scalar_lea.sflag [#allocation3], %s240
        %s242 = sand.u32 %s159, 1
        %s243 = smul.addr %s242, 8
        %s244 = scalar_lea.vmem [#allocation2], %s243
        %p245 = scmp.lt.s32.totalorder %s20, 1
        %s246 = scalar_select %p245, %s20, 1
        %s247 = smul.addr %s246, 2
        %s248 = smul.addr %s247, 4
        %s249 = scalar_lea.vmem %s0, %s248
        %v250 = vld [vmem:[%s249] sm:$0xff]
        %v251 = vld [vmem:[%s1] sm:$0xff]
        %v252 = vld [vmem:[%s1 + $0x8] sm:$0xff]
        %v253 = vld [vmem:[%s1 + $0x10] sm:$0x1]
        %v254 = vld [vmem:[%s1 + $0x18] sm:$0x1]
        %v255 = vld [vmem:[%s2] sm:$0xff]
        %v256 = vld [vmem:[%s2 + $0x8] sm:$0xff]
        %v257 = vld [vmem:[%s2 + $0x10] sm:$0xff]
        %v258 = vld [vmem:[%s2 + $0x18] sm:$0xff]
        %v259 = vld [vmem:[%s2 + $0x20] sm:$0xf]
        %v260 = vld [vmem:[%s4] sm:$0xff]
        %v261 = vld [vmem:[%s4 + $0x8] sm:$0xff]
        %v262 = vld [vmem:[%s4 + $0x10] sm:$0xff]
        %v263 = vld [vmem:[%s4 + $0x18] sm:$0xff]
        %v264 = vld [vmem:[%s4 + $0x20] sm:$0xf]
        %v265 = vld [vmem:[%s3] sm:$0xf]
        %v266 = vld [vmem:[%s5] sm:$0xf]
        %v268 = vcombine.high %v250, %v250
        %270 = vrot.lane.b32.xlu0 %v250, 17
        %v271 = vpop.permute.xlu0 %270
        %272 = vrot.lane.b32.xlu0 %v268, 17
        %v273 = vpop.permute.xlu0 %272
        %v274 = vlaneseq
        %v275 = vand.u32 %v274, 127
        %vm276 = vcmp.lt.s32.totalorder %v275, 17
        %v277 = vsel %vm276, %v271, %v273
        %v278 = vsel %vm276, %v273, %v271
        %v279 = vlaneseq
        %v280 = vshrl.u32 %v279, 7
        %v281 = vsub.s32 0, %v280
        %v282 = vrot.slane %v251, %v281
        %v283 = vlaneseq
        %v284 = vshrl.u32 %v283, 7
        %v285 = vsub.s32 0, %v284
        %v286 = vrot.slane %v252, %v285
        %v287 = vmul.f32 %v278, %v282
        %v288 = vmul.f32 %v277, %v286
        %289 = vrot.lane.b32.xlu0 %v250, 16
        %v290 = vpop.permute.xlu0 %289
        %291 = vrot.lane.b32.xlu0 %v268, 16
        %v292 = vpop.permute.xlu0 %291
        %vm293 = vcmp.lt.s32.totalorder %v275, 16
        %v294 = vsel %vm293, %v290, %v292
        %v295 = vsel %vm293, %v292, %v290
        %v296 = vlaneseq
        %v297 = vshrl.u32 %v296, 7
        %v298 = vsub.s32 1, %v297
        %v299 = vrot.slane %v251, %v298
        %v300 = vlaneseq
        %v301 = vshrl.u32 %v300, 7
        %v302 = vsub.s32 1, %v301
        %v303 = vrot.slane %v252, %v302
        %v304 = vmul.f32 %v295, %v299
        %v305 = vmul.f32 %v294, %v303
        %v307 = vrot.slane %v255, 4
        %vm308 = vcmask 31744
        %v309 = vsel %vm308, %v307, 0
        %vm311 = vcmask 1043456
        %v313 = vsel %vm311, %v304, 0
        %v316 = vsel %vm311, %v305, 0
        %v318 = vand.u32 %v316, 4294901760
        %319 = vmatprep.subr.mxu0 %v318
        %v320 = vand.u32 %v313, 4294901760
        %321 = vmatpush1.msra.mxu0 %v320
        %322 = vmatprep.subr.mxu0 0.0
        %323 = vmatpush1.msra.mxu0 0.0
        %324 = vmatprep.subr.mxu0 0.0
        %325 = vmatpush1.msra.mxu0 0.0
        %326 = vmatprep.subr.mxu0 0.0
        %327 = vmatpush1.msra.mxu0 0.0
        %328 = vmatprep.subr.mxu0 0.0
        %329 = vmatpush1.msra.mxu0 0.0
        %330 = vmatprep.subr.mxu0 0.0
        %331 = vmatpush1.msra.mxu0 0.0
        %332 = vmatprep.subr.mxu0 0.0
        %333 = vmatpush1.msra.mxu0 0.0
        %334 = vmatprep.subr.mxu0 0.0
        %335 = vmatpush1.msra.mxu0 0.0
        %336 = vmatprep.subr.mxu0 0.0
        %337 = vmatpush1.msra.mxu0 0.0
        %338 = vmatprep.subr.mxu0 0.0
        %339 = vmatpush1.msra.mxu0 0.0
        %340 = vmatprep.subr.mxu0 0.0
        %341 = vmatpush1.msra.mxu0 0.0
        %342 = vmatprep.subr.mxu0 0.0
        %343 = vmatpush1.msra.mxu0 0.0
        %344 = vmatprep.subr.mxu0 0.0
        %345 = vmatpush1.msra.mxu0 0.0
        %346 = vmatprep.subr.mxu0 0.0
        %347 = vmatpush1.msra.mxu0 0.0
        %348 = vmatprep.subr.mxu0 0.0
        %349 = vmatpush1.msra.mxu0 0.0
        %350 = vmatprep.subr.mxu0 0.0
        %351 = vmatpush1.msra.mxu0 0.0
        %352 = vmatprep.subr.mxu0 0.0
        %353 = vmatpush1.msra.mxu0 0.0
        %354 = vmatprep.subr.mxu0 0.0
        %355 = vmatpush1.msra.mxu0 0.0
        %356 = vmatprep.subr.mxu0 0.0
        %357 = vmatpush1.msra.mxu0 0.0
        %358 = vmatprep.subr.mxu0 0.0
        %359 = vmatpush1.msra.mxu0 0.0
        %360 = vmatprep.subr.mxu0 0.0
        %361 = vmatpush1.msra.mxu0 0.0
        %362 = vmatprep.subr.mxu0 0.0
        %363 = vmatpush1.msra.mxu0 0.0
        %364 = vmatprep.subr.mxu0 0.0
        %365 = vmatpush1.msra.mxu0 0.0
        %366 = vmatprep.subr.mxu0 0.0
        %367 = vmatpush1.msra.mxu0 0.0
        %368 = vmatprep.subr.mxu0 0.0
        %369 = vmatpush1.msra.mxu0 0.0
        %370 = vmatprep.subr.mxu0 0.0
        %371 = vmatpush1.msra.mxu0 0.0
        %372 = vmatprep.subr.mxu0 0.0
        %373 = vmatpush1.msra.mxu0 0.0
        %374 = vmatprep.subr.mxu0 0.0
        %375 = vmatpush1.msra.mxu0 0.0
        %376 = vmatprep.subr.mxu0 0.0
        %377 = vmatpush1.msra.mxu0 0.0
        %378 = vmatprep.subr.mxu0 0.0
        %379 = vmatpush1.msra.mxu0 0.0
        %380 = vmatprep.subr.mxu0 0.0
        %381 = vmatpush1.msra.mxu0 0.0
        %382 = vmatprep.subr.mxu0 0.0
        %383 = vmatpush1.msra.mxu0 0.0
        %384 = vmatprep.mubr.f32.mxu0 0.0
        %v385 = vand.u32 %v309, 4294901760
        %v386 = vsub.f32 %v309, %v385
        %v387 = vand.u32 %v386, 4294901760
        %v388 = vsub.f32 %v386, %v387
        %v389 = vand.u32 %v388, 4294901760
        %390 = vmatmul.mubr.f32.gmra.mrb[0].mxu0 %v389
        %v391 = vpop.f32.mrb[0].mxu0
        %v392 = vadd.f32 0.0, %v391
        %v393 = vpop.f32.mrb[0].mxu0
        %v394 = vadd.f32 0.0, %v393
        %395 = vdwg.mxu0
        %v396 = vand.u32 %v316, 4294901760
        %v397 = vsub.f32 %v316, %v396
        %v398 = vand.u32 %v397, 4294901760
        %v399 = vsub.f32 %v397, %v398
        %v400 = vand.u32 %v399, 4294901760
        %401 = vmatprep.subr.mxu0 %v400
        %v402 = vand.u32 %v313, 4294901760
        %v403 = vsub.f32 %v313, %v402
        %v404 = vand.u32 %v403, 4294901760
        %v405 = vsub.f32 %v403, %v404
        %v406 = vand.u32 %v405, 4294901760
        %407 = vmatpush1.msra.mxu0 %v406
        %408 = vmatprep.subr.mxu0 0.0
        %409 = vmatpush1.msra.mxu0 0.0
        %410 = vmatprep.subr.mxu0 0.0
        %411 = vmatpush1.msra.mxu0 0.0
        %412 = vmatprep.subr.mxu0 0.0
        %413 = vmatpush1.msra.mxu0 0.0
        %414 = vmatprep.subr.mxu0 0.0
        %415 = vmatpush1.msra.mxu0 0.0
        %416 = vmatprep.subr.mxu0 0.0
        %417 = vmatpush1.msra.mxu0 0.0
        %418 = vmatprep.subr.mxu0 0.0
        %419 = vmatpush1.msra.mxu0 0.0
        %420 = vmatprep.subr.mxu0 0.0
        %421 = vmatpush1.msra.mxu0 0.0
        %422 = vmatprep.subr.mxu0 0.0
        %423 = vmatpush1.msra.mxu0 0.0
        %424 = vmatprep.subr.mxu0 0.0
        %425 = vmatpush1.msra.mxu0 0.0
        %426 = vmatprep.subr.mxu0 0.0
        %427 = vmatpush1.msra.mxu0 0.0
        %428 = vmatprep.subr.mxu0 0.0
        %429 = vmatpush1.msra.mxu0 0.0
        %430 = vmatprep.subr.mxu0 0.0
        %431 = vmatpush1.msra.mxu0 0.0
        %432 = vmatprep.subr.mxu0 0.0
        %433 = vmatpush1.msra.mxu0 0.0
        %434 = vmatprep.subr.mxu0 0.0
        %435 = vmatpush1.msra.mxu0 0.0
        %436 = vmatprep.subr.mxu0 0.0
        %437 = vmatpush1.msra.mxu0 0.0
        %438 = vmatprep.subr.mxu0 0.0
        %439 = vmatpush1.msra.mxu0 0.0
        %440 = vmatprep.subr.mxu0 0.0
        %441 = vmatpush1.msra.mxu0 0.0
        %442 = vmatprep.subr.mxu0 0.0
        %443 = vmatpush1.msra.mxu0 0.0
        %444 = vmatprep.subr.mxu0 0.0
        %445 = vmatpush1.msra.mxu0 0.0
        %446 = vmatprep.subr.mxu0 0.0
        %447 = vmatpush1.msra.mxu0 0.0
        %448 = vmatprep.subr.mxu0 0.0
        %449 = vmatpush1.msra.mxu0 0.0
        %450 = vmatprep.subr.mxu0 0.0
        %451 = vmatpush1.msra.mxu0 0.0
        %452 = vmatprep.subr.mxu0 0.0
        %453 = vmatpush1.msra.mxu0 0.0
        %454 = vmatprep.subr.mxu0 0.0
        %455 = vmatpush1.msra.mxu0 0.0
        %456 = vmatprep.subr.mxu0 0.0
        %457 = vmatpush1.msra.mxu0 0.0
        %458 = vmatprep.subr.mxu0 0.0
        %459 = vmatpush1.msra.mxu0 0.0
        %460 = vmatprep.subr.mxu0 0.0
        %461 = vmatpush1.msra.mxu0 0.0
        %462 = vmatprep.subr.mxu0 0.0
        %463 = vmatpush1.msra.mxu0 0.0
        %464 = vmatprep.subr.mxu0 0.0
        %465 = vmatpush1.msra.mxu0 0.0
        %466 = vmatprep.subr.mxu0 0.0
        %467 = vmatpush1.msra.mxu0 0.0
        %468 = vmatprep.subr.mxu0 0.0
        %469 = vmatpush1.msra.mxu0 0.0
        %470 = vmatprep.mubr.f32.mxu0 0.0
        %v471 = vand.u32 %v309, 4294901760
        %472 = vmatmul.mubr.f32.gmra.mrb[0].mxu0 %v471
        %v473 = vpop.f32.mrb[0].mxu0
        %v474 = vadd.f32 %v392, %v473
        %v475 = vpop.f32.mrb[0].mxu0
        %v476 = vadd.f32 %v394, %v475
        %477 = vdwg.mxu0
        %v478 = vand.u32 %v316, 4294901760
        %v479 = vsub.f32 %v316, %v478
        %480 = vmatprep.subr.mxu0 %v479
        %v481 = vand.u32 %v313, 4294901760
        %v482 = vsub.f32 %v313, %v481
        %483 = vmatpush1.msra.mxu0 %v482
        %484 = vmatprep.subr.mxu0 0.0
        %485 = vmatpush1.msra.mxu0 0.0
        %486 = vmatprep.subr.mxu0 0.0
        %487 = vmatpush1.msra.mxu0 0.0
        %488 = vmatprep.subr.mxu0 0.0
        %489 = vmatpush1.msra.mxu0 0.0
        %490 = vmatprep.subr.mxu0 0.0
        %491 = vmatpush1.msra.mxu0 0.0
        %492 = vmatprep.subr.mxu0 0.0
        %493 = vmatpush1.msra.mxu0 0.0
        %494 = vmatprep.subr.mxu0 0.0
        %495 = vmatpush1.msra.mxu0 0.0
        %496 = vmatprep.subr.mxu0 0.0
        %497 = vmatpush1.msra.mxu0 0.0
        %498 = vmatprep.subr.mxu0 0.0
        %499 = vmatpush1.msra.mxu0 0.0
        %500 = vmatprep.subr.mxu0 0.0
        %501 = vmatpush1.msra.mxu0 0.0
        %502 = vmatprep.subr.mxu0 0.0
        %503 = vmatpush1.msra.mxu0 0.0
        %504 = vmatprep.subr.mxu0 0.0
        %505 = vmatpush1.msra.mxu0 0.0
        %506 = vmatprep.subr.mxu0 0.0
        %507 = vmatpush1.msra.mxu0 0.0
        %508 = vmatprep.subr.mxu0 0.0
        %509 = vmatpush1.msra.mxu0 0.0
        %510 = vmatprep.subr.mxu0 0.0
        %511 = vmatpush1.msra.mxu0 0.0
        %512 = vmatprep.subr.mxu0 0.0
        %513 = vmatpush1.msra.mxu0 0.0
        %514 = vmatprep.subr.mxu0 0.0
        %515 = vmatpush1.msra.mxu0 0.0
        %516 = vmatprep.subr.mxu0 0.0
        %517 = vmatpush1.msra.mxu0 0.0
        %518 = vmatprep.subr.mxu0 0.0
        %519 = vmatpush1.msra.mxu0 0.0
        %520 = vmatprep.subr.mxu0 0.0
        %521 = vmatpush1.msra.mxu0 0.0
        %522 = vmatprep.subr.mxu0 0.0
        %523 = vmatpush1.msra.mxu0 0.0
        %524 = vmatprep.subr.mxu0 0.0
        %525 = vmatpush1.msra.mxu0 0.0
        %526 = vmatprep.subr.mxu0 0.0
        %527 = vmatpush1.msra.mxu0 0.0
        %528 = vmatprep.subr.mxu0 0.0
        %529 = vmatpush1.msra.mxu0 0.0
        %530 = vmatprep.subr.mxu0 0.0
        %531 = vmatpush1.msra.mxu0 0.0
        %532 = vmatprep.subr.mxu0 0.0
        %533 = vmatpush1.msra.mxu0 0.0
        %534 = vmatprep.subr.mxu0 0.0
        %535 = vmatpush1.msra.mxu0 0.0
        %536 = vmatprep.subr.mxu0 0.0
        %537 = vmatpush1.msra.mxu0 0.0
        %538 = vmatprep.subr.mxu0 0.0
        %539 = vmatpush1.msra.mxu0 0.0
        %540 = vmatprep.subr.mxu0 0.0
        %541 = vmatpush1.msra.mxu0 0.0
        %542 = vmatprep.subr.mxu0 0.0
        %543 = vmatpush1.msra.mxu0 0.0
        %544 = vmatprep.subr.mxu0 0.0
        %545 = vmatpush1.msra.mxu0 0.0
        %546 = vmatprep.mubr.f32.mxu0 0.0
        %v547 = vand.u32 %v309, 4294901760
        %v548 = vsub.f32 %v309, %v547
        %549 = vmatmul.mubr.f32.gmra.mrb[0].mxu0 %v548
        %v550 = vpop.f32.mrb[0].mxu0
        %v551 = vadd.f32 %v474, %v550
        %v552 = vpop.f32.mrb[0].mxu0
        %v553 = vadd.f32 %v476, %v552
        %554 = vdwg.mxu0
        %v555 = vand.u32 %v316, 4294901760
        %556 = vmatprep.subr.mxu0 %v555
        %v557 = vand.u32 %v313, 4294901760
        %558 = vmatpush1.msra.mxu0 %v557
        %559 = vmatprep.subr.mxu0 0.0
        %560 = vmatpush1.msra.mxu0 0.0
        %561 = vmatprep.subr.mxu0 0.0
        %562 = vmatpush1.msra.mxu0 0.0
        %563 = vmatprep.subr.mxu0 0.0
        %564 = vmatpush1.msra.mxu0 0.0
        %565 = vmatprep.subr.mxu0 0.0
        %566 = vmatpush1.msra.mxu0 0.0
        %567 = vmatprep.subr.mxu0 0.0
        %568 = vmatpush1.msra.mxu0 0.0
        %569 = vmatprep.subr.mxu0 0.0
        %570 = vmatpush1.msra.mxu0 0.0
        %571 = vmatprep.subr.mxu0 0.0
        %572 = vmatpush1.msra.mxu0 0.0
        %573 = vmatprep.subr.mxu0 0.0
        %574 = vmatpush1.msra.mxu0 0.0
        %575 = vmatprep.subr.mxu0 0.0
        %576 = vmatpush1.msra.mxu0 0.0
        %577 = vmatprep.subr.mxu0 0.0
        %578 = vmatpush1.msra.mxu0 0.0
        %579 = vmatprep.subr.mxu0 0.0
        %580 = vmatpush1.msra.mxu0 0.0
        %581 = vmatprep.subr.mxu0 0.0
        %582 = vmatpush1.msra.mxu0 0.0
        %583 = vmatprep.subr.mxu0 0.0
        %584 = vmatpush1.msra.mxu0 0.0
        %585 = vmatprep.subr.mxu0 0.0
        %586 = vmatpush1.msra.mxu0 0.0
        %587 = vmatprep.subr.mxu0 0.0
        %588 = vmatpush1.msra.mxu0 0.0
        %589 = vmatprep.subr.mxu0 0.0
        %590 = vmatpush1.msra.mxu0 0.0
        %591 = vmatprep.subr.mxu0 0.0
        %592 = vmatpush1.msra.mxu0 0.0
        %593 = vmatprep.subr.mxu0 0.0
        %594 = vmatpush1.msra.mxu0 0.0
        %595 = vmatprep.subr.mxu0 0.0
        %596 = vmatpush1.msra.mxu0 0.0
        %597 = vmatprep.subr.mxu0 0.0
        %598 = vmatpush1.msra.mxu0 0.0
        %599 = vmatprep.subr.mxu0 0.0
        %600 = vmatpush1.msra.mxu0 0.0
        %601 = vmatprep.subr.mxu0 0.0
        %602 = vmatpush1.msra.mxu0 0.0
        %603 = vmatprep.subr.mxu0 0.0
        %604 = vmatpush1.msra.mxu0 0.0
        %605 = vmatprep.subr.mxu0 0.0
        %606 = vmatpush1.msra.mxu0 0.0
        %607 = vmatprep.subr.mxu0 0.0
        %608 = vmatpush1.msra.mxu0 0.0
        %609 = vmatprep.subr.mxu0 0.0
        %610 = vmatpush1.msra.mxu0 0.0
        %611 = vmatprep.subr.mxu0 0.0
        %612 = vmatpush1.msra.mxu0 0.0
        %613 = vmatprep.subr.mxu0 0.0
        %614 = vmatpush1.msra.mxu0 0.0
        %615 = vmatprep.subr.mxu0 0.0
        %616 = vmatpush1.msra.mxu0 0.0
        %617 = vmatprep.subr.mxu0 0.0
        %618 = vmatpush1.msra.mxu0 0.0
        %619 = vmatprep.subr.mxu0 0.0
        %620 = vmatpush1.msra.mxu0 0.0
        %621 = vmatprep.mubr.f32.mxu0 0.0
        %v622 = vand.u32 %v309, 4294901760
        %v623 = vsub.f32 %v309, %v622
        %v624 = vand.u32 %v623, 4294901760
        %625 = vmatmul.mubr.f32.gmra.mrb[0].mxu0 %v624
        %v626 = vpop.f32.mrb[0].mxu0
        %v627 = vadd.f32 %v551, %v626
        %v628 = vpop.f32.mrb[0].mxu0
        %v629 = vadd.f32 %v553, %v628
        %630 = vdwg.mxu0
        %v631 = vand.u32 %v316, 4294901760
        %v632 = vsub.f32 %v316, %v631
        %v633 = vand.u32 %v632, 4294901760
        %634 = vmatprep.subr.mxu0 %v633
        %v635 = vand.u32 %v313, 4294901760
        %v636 = vsub.f32 %v313, %v635
        %v637 = vand.u32 %v636, 4294901760
        %638 = vmatpush1.msra.mxu0 %v637
        %639 = vmatprep.subr.mxu0 0.0
        %640 = vmatpush1.msra.mxu0 0.0
        %641 = vmatprep.subr.mxu0 0.0
        %642 = vmatpush1.msra.mxu0 0.0
        %643 = vmatprep.subr.mxu0 0.0
        %644 = vmatpush1.msra.mxu0 0.0
        %645 = vmatprep.subr.mxu0 0.0
        %646 = vmatpush1.msra.mxu0 0.0
        %647 = vmatprep.subr.mxu0 0.0
        %648 = vmatpush1.msra.mxu0 0.0
        %649 = vmatprep.subr.mxu0 0.0
        %650 = vmatpush1.msra.mxu0 0.0
        %651 = vmatprep.subr.mxu0 0.0
        %652 = vmatpush1.msra.mxu0 0.0
        %653 = vmatprep.subr.mxu0 0.0
        %654 = vmatpush1.msra.mxu0 0.0
        %655 = vmatprep.subr.mxu0 0.0
        %656 = vmatpush1.msra.mxu0 0.0
        %657 = vmatprep.subr.mxu0 0.0
        %658 = vmatpush1.msra.mxu0 0.0
        %659 = vmatprep.subr.mxu0 0.0
        %660 = vmatpush1.msra.mxu0 0.0
        %661 = vmatprep.subr.mxu0 0.0
        %662 = vmatpush1.msra.mxu0 0.0
        %663 = vmatprep.subr.mxu0 0.0
        %664 = vmatpush1.msra.mxu0 0.0
        %665 = vmatprep.subr.mxu0 0.0
        %666 = vmatpush1.msra.mxu0 0.0
        %667 = vmatprep.subr.mxu0 0.0
        %668 = vmatpush1.msra.mxu0 0.0
        %669 = vmatprep.subr.mxu0 0.0
        %670 = vmatpush1.msra.mxu0 0.0
        %671 = vmatprep.subr.mxu0 0.0
        %672 = vmatpush1.msra.mxu0 0.0
        %673 = vmatprep.subr.mxu0 0.0
        %674 = vmatpush1.msra.mxu0 0.0
        %675 = vmatprep.subr.mxu0 0.0
        %676 = vmatpush1.msra.mxu0 0.0
        %677 = vmatprep.subr.mxu0 0.0
        %678 = vmatpush1.msra.mxu0 0.0
        %679 = vmatprep.subr.mxu0 0.0
        %680 = vmatpush1.msra.mxu0 0.0
        %681 = vmatprep.subr.mxu0 0.0
        %682 = vmatpush1.msra.mxu0 0.0
        %683 = vmatprep.subr.mxu0 0.0
        %684 = vmatpush1.msra.mxu0 0.0
        %685 = vmatprep.subr.mxu0 0.0
        %686 = vmatpush1.msra.mxu0 0.0
        %687 = vmatprep.subr.mxu0 0.0
        %688 = vmatpush1.msra.mxu0 0.0
        %689 = vmatprep.subr.mxu0 0.0
        %690 = vmatpush1.msra.mxu0 0.0
        %691 = vmatprep.subr.mxu0 0.0
        %692 = vmatpush1.msra.mxu0 0.0
        %693 = vmatprep.subr.mxu0 0.0
        %694 = vmatpush1.msra.mxu0 0.0
        %695 = vmatprep.subr.mxu0 0.0
        %696 = vmatpush1.msra.mxu0 0.0
        %697 = vmatprep.subr.mxu0 0.0
        %698 = vmatpush1.msra.mxu0 0.0
        %699 = vmatprep.subr.mxu0 0.0
        %700 = vmatpush1.msra.mxu0 0.0
        %701 = vmatprep.mubr.f32.mxu0 0.0
        %v702 = vand.u32 %v309, 4294901760
        %703 = vmatmul.mubr.f32.gmra.mrb[0].mxu0 %v702
        %v704 = vpop.f32.mrb[0].mxu0
        %v705 = vadd.f32 %v627, %v704
        %v706 = vpop.f32.mrb[0].mxu0
        %v707 = vadd.f32 %v629, %v706
        %708 = vdwg.mxu0
        %v709 = vand.u32 %v316, 4294901760
        %710 = vmatprep.subr.mxu0 %v709
        %v711 = vand.u32 %v313, 4294901760
        %712 = vmatpush1.msra.mxu0 %v711
        %713 = vmatprep.subr.mxu0 0.0
        %714 = vmatpush1.msra.mxu0 0.0
        %715 = vmatprep.subr.mxu0 0.0
        %716 = vmatpush1.msra.mxu0 0.0
        %717 = vmatprep.subr.mxu0 0.0
        %718 = vmatpush1.msra.mxu0 0.0
        %719 = vmatprep.subr.mxu0 0.0
        %720 = vmatpush1.msra.mxu0 0.0
        %721 = vmatprep.subr.mxu0 0.0
        %722 = vmatpush1.msra.mxu0 0.0
        %723 = vmatprep.subr.mxu0 0.0
        %724 = vmatpush1.msra.mxu0 0.0
        %725 = vmatprep.subr.mxu0 0.0
        %726 = vmatpush1.msra.mxu0 0.0
        %727 = vmatprep.subr.mxu0 0.0
        %728 = vmatpush1.msra.mxu0 0.0
        %729 = vmatprep.subr.mxu0 0.0
        %730 = vmatpush1.msra.mxu0 0.0
        %731 = vmatprep.subr.mxu0 0.0
        %732 = vmatpush1.msra.mxu0 0.0
        %733 = vmatprep.subr.mxu0 0.0
        %734 = vmatpush1.msra.mxu0 0.0
        %735 = vmatprep.subr.mxu0 0.0
        %736 = vmatpush1.msra.mxu0 0.0
        %737 = vmatprep.subr.mxu0 0.0
        %738 = vmatpush1.msra.mxu0 0.0
        %739 = vmatprep.subr.mxu0 0.0
        %740 = vmatpush1.msra.mxu0 0.0
        %741 = vmatprep.subr.mxu0 0.0
        %742 = vmatpush1.msra.mxu0 0.0
        %743 = vmatprep.subr.mxu0 0.0
        %744 = vmatpush1.msra.mxu0 0.0
        %745 = vmatprep.subr.mxu0 0.0
        %746 = vmatpush1.msra.mxu0 0.0
        %747 = vmatprep.subr.mxu0 0.0
        %748 = vmatpush1.msra.mxu0 0.0
        %749 = vmatprep.subr.mxu0 0.0
        %750 = vmatpush1.msra.mxu0 0.0
        %751 = vmatprep.subr.mxu0 0.0
        %752 = vmatpush1.msra.mxu0 0.0
        %753 = vmatprep.subr.mxu0 0.0
        %754 = vmatpush1.msra.mxu0 0.0
        %755 = vmatprep.subr.mxu0 0.0
        %756 = vmatpush1.msra.mxu0 0.0
        %757 = vmatprep.subr.mxu0 0.0
        %758 = vmatpush1.msra.mxu0 0.0
        %759 = vmatprep.subr.mxu0 0.0
        %760 = vmatpush1.msra.mxu0 0.0
        %761 = vmatprep.subr.mxu0 0.0
        %762 = vmatpush1.msra.mxu0 0.0
        %763 = vmatprep.subr.mxu0 0.0
        %764 = vmatpush1.msra.mxu0 0.0
        %765 = vmatprep.subr.mxu0 0.0
        %766 = vmatpush1.msra.mxu0 0.0
        %767 = vmatprep.subr.mxu0 0.0
        %768 = vmatpush1.msra.mxu0 0.0
        %769 = vmatprep.subr.mxu0 0.0
        %770 = vmatpush1.msra.mxu0 0.0
        %771 = vmatprep.subr.mxu0 0.0
        %772 = vmatpush1.msra.mxu0 0.0
        %773 = vmatprep.subr.mxu0 0.0
        %774 = vmatpush1.msra.mxu0 0.0
        %775 = vmatprep.mubr.f32.mxu0 0.0
        %v776 = vand.u32 %v309, 4294901760
        %777 = vmatmul.mubr.f32.gmra.mrb[0].mxu0 %v776
        %v778 = vpop.f32.mrb[0].mxu0
        %v779 = vadd.f32 %v705, %v778
        %v780 = vpop.f32.mrb[0].mxu0
        %v781 = vadd.f32 %v707, %v780
        %782 = vdwg.mxu0
        %v783 = vsel %vm308, %v255, 0
        %v786 = vsel %vm311, %v287, 0
        %v789 = vsel %vm311, %v288, 0
        %v791 = vand.u32 %v789, 4294901760
        %792 = vmatprep.subr.mxu0 %v791
        %v793 = vand.u32 %v786, 4294901760
        %794 = vmatpush1.msra.mxu0 %v793
        %795 = vmatprep.subr.mxu0 0.0
        %796 = vmatpush1.msra.mxu0 0.0
        %797 = vmatprep.subr.mxu0 0.0
        %798 = vmatpush1.msra.mxu0 0.0
        %799 = vmatprep.subr.mxu0 0.0
        %800 = vmatpush1.msra.mxu0 0.0
        %801 = vmatprep.subr.mxu0 0.0
        %802 = vmatpush1.msra.mxu0 0.0
        %803 = vmatprep.subr.mxu0 0.0
        %804 = vmatpush1.msra.mxu0 0.0
        %805 = vmatprep.subr.mxu0 0.0
        %806 = vmatpush1.msra.mxu0 0.0
        %807 = vmatprep.subr.mxu0 0.0
        %808 = vmatpush1.msra.mxu0 0.0
        %809 = vmatprep.subr.mxu0 0.0
        %810 = vmatpush1.msra.mxu0 0.0
        %811 = vmatprep.subr.mxu0 0.0
        %812 = vmatpush1.msra.mxu0 0.0
        %813 = vmatprep.subr.mxu0 0.0
        %814 = vmatpush1.msra.mxu0 0.0
        %815 = vmatprep.subr.mxu0 0.0
        %816 = vmatpush1.msra.mxu0 0.0
        %817 = vmatprep.subr.mxu0 0.0
        %818 = vmatpush1.msra.mxu0 0.0
        %819 = vmatprep.subr.mxu0 0.0
        %820 = vmatpush1.msra.mxu0 0.0
        %821 = vmatprep.subr.mxu0 0.0
        %822 = vmatpush1.msra.mxu0 0.0
        %823 = vmatprep.subr.mxu0 0.0
        %824 = vmatpush1.msra.mxu0 0.0
        %825 = vmatprep.subr.mxu0 0.0
        %826 = vmatpush1.msra.mxu0 0.0
        %827 = vmatprep.subr.mxu0 0.0
        %828 = vmatpush1.msra.mxu0 0.0
        %829 = vmatprep.subr.mxu0 0.0
        %830 = vmatpush1.msra.mxu0 0.0
        %831 = vmatprep.subr.mxu0 0.0
        %832 = vmatpush1.msra.mxu0 0.0
        %833 = vmatprep.subr.mxu0 0.0
        %834 = vmatpush1.msra.mxu0 0.0
        %835 = vmatprep.subr.mxu0 0.0
        %836 = vmatpush1.msra.mxu0 0.0
        %837 = vmatprep.subr.mxu0 0.0
        %838 = vmatpush1.msra.mxu0 0.0
        %839 = vmatprep.subr.mxu0 0.0
        %840 = vmatpush1.msra.mxu0 0.0
        %841 = vmatprep.subr.mxu0 0.0
        %842 = vmatpush1.msra.mxu0 0.0
        %843 = vmatprep.subr.mxu0 0.0
        %844 = vmatpush1.msra.mxu0 0.0
        %845 = vmatprep.subr.mxu0 0.0
        %846 = vmatpush1.msra.mxu0 0.0
        %847 = vmatprep.subr.mxu0 0.0
        %848 = vmatpush1.msra.mxu0 0.0
        %849 = vmatprep.subr.mxu0 0.0
        %850 = vmatpush1.msra.mxu0 0.0
        %851 = vmatprep.subr.mxu0 0.0
        %852 = vmatpush1.msra.mxu0 0.0
        %853 = vmatprep.subr.mxu0 0.0
        %854 = vmatpush1.msra.mxu0 0.0
        %855 = vmatprep.subr.mxu0 0.0
        %856 = vmatpush1.msra.mxu0 0.0
        %857 = vmatprep.mubr.f32.mxu0 0.0
        %v858 = vand.u32 %v783, 4294901760
        %v859 = vsub.f32 %v783, %v858
        %v860 = vand.u32 %v859, 4294901760
        %v861 = vsub.f32 %v859, %v860
        %v862 = vand.u32 %v861, 4294901760
        %863 = vmatmul.mubr.f32.gmra.mrb[0].mxu0 %v862
        %v864 = vpop.f32.mrb[0].mxu0
        %v865 = vadd.f32 %v779, %v864
        %v866 = vpop.f32.mrb[0].mxu0
        %v867 = vadd.f32 %v781, %v866
        %868 = vdwg.mxu0
        %v869 = vand.u32 %v789, 4294901760
        %v870 = vsub.f32 %v789, %v869
        %v871 = vand.u32 %v870, 4294901760
        %v872 = vsub.f32 %v870, %v871
        %v873 = vand.u32 %v872, 4294901760
        %874 = vmatprep.subr.mxu0 %v873
        %v875 = vand.u32 %v786, 4294901760
        %v876 = vsub.f32 %v786, %v875
        %v877 = vand.u32 %v876, 4294901760
        %v878 = vsub.f32 %v876, %v877
        %v879 = vand.u32 %v878, 4294901760
        %880 = vmatpush1.msra.mxu0 %v879
        %881 = vmatprep.subr.mxu0 0.0
        %882 = vmatpush1.msra.mxu0 0.0
        %883 = vmatprep.subr.mxu0 0.0
        %884 = vmatpush1.msra.mxu0 0.0
        %885 = vmatprep.subr.mxu0 0.0
        %886 = vmatpush1.msra.mxu0 0.0
        %887 = vmatprep.subr.mxu0 0.0
        %888 = vmatpush1.msra.mxu0 0.0
        %889 = vmatprep.subr.mxu0 0.0
        %890 = vmatpush1.msra.mxu0 0.0
        %891 = vmatprep.subr.mxu0 0.0
        %892 = vmatpush1.msra.mxu0 0.0
        %893 = vmatprep.subr.mxu0 0.0
        %894 = vmatpush1.msra.mxu0 0.0
        %895 = vmatprep.subr.mxu0 0.0
        %896 = vmatpush1.msra.mxu0 0.0
        %897 = vmatprep.subr.mxu0 0.0
        %898 = vmatpush1.msra.mxu0 0.0
        %899 = vmatprep.subr.mxu0 0.0
        %900 = vmatpush1.msra.mxu0 0.0
        %901 = vmatprep.subr.mxu0 0.0
        %902 = vmatpush1.msra.mxu0 0.0
        %903 = vmatprep.subr.mxu0 0.0
        %904 = vmatpush1.msra.mxu0 0.0
        %905 = vmatprep.subr.mxu0 0.0
        %906 = vmatpush1.msra.mxu0 0.0
        %907 = vmatprep.subr.mxu0 0.0
        %908 = vmatpush1.msra.mxu0 0.0
        %909 = vmatprep.subr.mxu0 0.0
        %910 = vmatpush1.msra.mxu0 0.0
        %911 = vmatprep.subr.mxu0 0.0
        %912 = vmatpush1.msra.mxu0 0.0
        %913 = vmatprep.subr.mxu0 0.0
        %914 = vmatpush1.msra.mxu0 0.0
        %915 = vmatprep.subr.mxu0 0.0
        %916 = vmatpush1.msra.mxu0 0.0
        %917 = vmatprep.subr.mxu0 0.0
        %918 = vmatpush1.msra.mxu0 0.0
        %919 = vmatprep.subr.mxu0 0.0
        %920 = vmatpush1.msra.mxu0 0.0
        %921 = vmatprep.subr.mxu0 0.0
        %922 = vmatpush1.msra.mxu0 0.0
        %923 = vmatprep.subr.mxu0 0.0
        %924 = vmatpush1.msra.mxu0 0.0
        %925 = vmatprep.subr.mxu0 0.0
        %926 = vmatpush1.msra.mxu0 0.0
        %927 = vmatprep.subr.mxu0 0.0
        %928 = vmatpush1.msra.mxu0 0.0
        %929 = vmatprep.subr.mxu0 0.0
        %930 = vmatpush1.msra.mxu0 0.0
        %931 = vmatprep.subr.mxu0 0.0
        %932 = vmatpush1.msra.mxu0 0.0
        %933 = vmatprep.subr.mxu0 0.0
        %934 = vmatpush1.msra.mxu0 0.0
        %935 = vmatprep.subr.mxu0 0.0
        %936 = vmatpush1.msra.mxu0 0.0
        %937 = vmatprep.subr.mxu0 0.0
        %938 = vmatpush1.msra.mxu0 0.0
        %939 = vmatprep.subr.mxu0 0.0
        %940 = vmatpush1.msra.mxu0 0.0
        %941 = vmatprep.subr.mxu0 0.0
        %942 = vmatpush1.msra.mxu0 0.0
        %943 = vmatprep.mubr.f32.mxu0 0.0
        %v944 = vand.u32 %v783, 4294901760
        %945 = vmatmul.mubr.f32.gmra.mrb[0].mxu0 %v944
        %v946 = vpop.f32.mrb[0].mxu0
        %v947 = vadd.f32 %v865, %v946
        %v948 = vpop.f32.mrb[0].mxu0
        %v949 = vadd.f32 %v867, %v948
        %950 = vdwg.mxu0
        %v951 = vand.u32 %v789, 4294901760
        %v952 = vsub.f32 %v789, %v951
        %953 = vmatprep.subr.mxu0 %v952
        %v954 = vand.u32 %v786, 4294901760
        %v955 = vsub.f32 %v786, %v954
        %956 = vmatpush1.msra.mxu0 %v955
        %957 = vmatprep.subr.mxu0 0.0
        %958 = vmatpush1.msra.mxu0 0.0
        %959 = vmatprep.subr.mxu0 0.0
        %960 = vmatpush1.msra.mxu0 0.0
        %961 = vmatprep.subr.mxu0 0.0
        %962 = vmatpush1.msra.mxu0 0.0
        %963 = vmatprep.subr.mxu0 0.0
        %964 = vmatpush1.msra.mxu0 0.0
        %965 = vmatprep.subr.mxu0 0.0
        %966 = vmatpush1.msra.mxu0 0.0
        %967 = vmatprep.subr.mxu0 0.0
        %968 = vmatpush1.msra.mxu0 0.0
        %969 = vmatprep.subr.mxu0 0.0
        %970 = vmatpush1.msra.mxu0 0.0
        %971 = vmatprep.subr.mxu0 0.0
        %972 = vmatpush1.msra.mxu0 0.0
        %973 = vmatprep.subr.mxu0 0.0
        %974 = vmatpush1.msra.mxu0 0.0
        %975 = vmatprep.subr.mxu0 0.0
        %976 = vmatpush1.msra.mxu0 0.0
        %977 = vmatprep.subr.mxu0 0.0
        %978 = vmatpush1.msra.mxu0 0.0
        %979 = vmatprep.subr.mxu0 0.0
        %980 = vmatpush1.msra.mxu0 0.0
        %981 = vmatprep.subr.mxu0 0.0
        %982 = vmatpush1.msra.mxu0 0.0
        %983 = vmatprep.subr.mxu0 0.0
        %984 = vmatpush1.msra.mxu0 0.0
        %985 = vmatprep.subr.mxu0 0.0
        %986 = vmatpush1.msra.mxu0 0.0
        %987 = vmatprep.subr.mxu0 0.0
        %988 = vmatpush1.msra.mxu0 0.0
        %989 = vmatprep.subr.mxu0 0.0
        %990 = vmatpush1.msra.mxu0 0.0
        %991 = vmatprep.subr.mxu0 0.0
        %992 = vmatpush1.msra.mxu0 0.0
        %993 = vmatprep.subr.mxu0 0.0
        %994 = vmatpush1.msra.mxu0 0.0
        %995 = vmatprep.subr.mxu0 0.0
        %996 = vmatpush1.msra.mxu0 0.0
        %997 = vmatprep.subr.mxu0 0.0
        %998 = vmatpush1.msra.mxu0 0.0
        %999 = vmatprep.subr.mxu0 0.0
        %1000 = vmatpush1.msra.mxu0 0.0
        %1001 = vmatprep.subr.mxu0 0.0
        %1002 = vmatpush1.msra.mxu0 0.0
        %1003 = vmatprep.subr.mxu0 0.0
        %1004 = vmatpush1.msra.mxu0 0.0
        %1005 = vmatprep.subr.mxu0 0.0
        %1006 = vmatpush1.msra.mxu0 0.0
        %1007 = vmatprep.subr.mxu0 0.0
        %1008 = vmatpush1.msra.mxu0 0.0
        %1009 = vmatprep.subr.mxu0 0.0
        %1010 = vmatpush1.msra.mxu0 0.0
        %1011 = vmatprep.subr.mxu0 0.0
        %1012 = vmatpush1.msra.mxu0 0.0
        %1013 = vmatprep.subr.mxu0 0.0
        %1014 = vmatpush1.msra.mxu0 0.0
        %1015 = vmatprep.subr.mxu0 0.0
        %1016 = vmatpush1.msra.mxu0 0.0
        %1017 = vmatprep.subr.mxu0 0.0
        %1018 = vmatpush1.msra.mxu0 0.0
        %1019 = vmatprep.mubr.f32.mxu0 0.0
        %v1020 = vand.u32 %v783, 4294901760
        %v1021 = vsub.f32 %v783, %v1020
        %1022 = vmatmul.mubr.f32.gmra.mrb[0].mxu0 %v1021
        %v1023 = vpop.f32.mrb[0].mxu0
        %v1024 = vadd.f32 %v947, %v1023
        %v1025 = vpop.f32.mrb[0].mxu0
        %v1026 = vadd.f32 %v949, %v1025
        %1027 = vdwg.mxu0
        %v1028 = vand.u32 %v789, 4294901760
        %1029 = vmatprep.subr.mxu0 %v1028
        %v1030 = vand.u32 %v786, 4294901760
        %1031 = vmatpush1.msra.mxu0 %v1030
        %1032 = vmatprep.subr.mxu0 0.0
        %1033 = vmatpush1.msra.mxu0 0.0
        %1034 = vmatprep.subr.mxu0 0.0
        %1035 = vmatpush1.msra.mxu0 0.0
        %1036 = vmatprep.subr.mxu0 0.0
        %1037 = vmatpush1.msra.mxu0 0.0
        %1038 = vmatprep.subr.mxu0 0.0
        %1039 = vmatpush1.msra.mxu0 0.0
        %1040 = vmatprep.subr.mxu0 0.0
        %1041 = vmatpush1.msra.mxu0 0.0
        %1042 = vmatprep.subr.mxu0 0.0
        %1043 = vmatpush1.msra.mxu0 0.0
        %1044 = vmatprep.subr.mxu0 0.0
        %1045 = vmatpush1.msra.mxu0 0.0
        %1046 = vmatprep.subr.mxu0 0.0
        %1047 = vmatpush1.msra.mxu0 0.0
        %1048 = vmatprep.subr.mxu0 0.0
        %1049 = vmatpush1.msra.mxu0 0.0
        %1050 = vmatprep.subr.mxu0 0.0
        %1051 = vmatpush1.msra.mxu0 0.0
        %1052 = vmatprep.subr.mxu0 0.0
        %1053 = vmatpush1.msra.mxu0 0.0
        %1054 = vmatprep.subr.mxu0 0.0
        %1055 = vmatpush1.msra.mxu0 0.0
        %1056 = vmatprep.subr.mxu0 0.0
        %1057 = vmatpush1.msra.mxu0 0.0
        %1058 = vmatprep.subr.mxu0 0.0
        %1059 = vmatpush1.msra.mxu0 0.0
        %1060 = vmatprep.subr.mxu0 0.0
        %1061 = vmatpush1.msra.mxu0 0.0
        %1062 = vmatprep.subr.mxu0 0.0
        %1063 = vmatpush1.msra.mxu0 0.0
        %1064 = vmatprep.subr.mxu0 0.0
        %1065 = vmatpush1.msra.mxu0 0.0
        %1066 = vmatprep.subr.mxu0 0.0
        %1067 = vmatpush1.msra.mxu0 0.0
        %1068 = vmatprep.subr.mxu0 0.0
        %1069 = vmatpush1.msra.mxu0 0.0
        %1070 = vmatprep.subr.mxu0 0.0
        %1071 = vmatpush1.msra.mxu0 0.0
        %1072 = vmatprep.subr.mxu0 0.0
        %1073 = vmatpush1.msra.mxu0 0.0
        %1074 = vmatprep.subr.mxu0 0.0
        %1075 = vmatpush1.msra.mxu0 0.0
        %1076 = vmatprep.subr.mxu0 0.0
        %1077 = vmatpush1.msra.mxu0 0.0
        %1078 = vmatprep.subr.mxu0 0.0
        %1079 = vmatpush1.msra.mxu0 0.0
        %1080 = vmatprep.subr.mxu0 0.0
        %1081 = vmatpush1.msra.mxu0 0.0
        %1082 = vmatprep.subr.mxu0 0.0
        %1083 = vmatpush1.msra.mxu0 0.0
        %1084 = vmatprep.subr.mxu0 0.0
        %1085 = vmatpush1.msra.mxu0 0.0
        %1086 = vmatprep.subr.mxu0 0.0
        %1087 = vmatpush1.msra.mxu0 0.0
        %1088 = vmatprep.subr.mxu0 0.0
        %1089 = vmatpush1.msra.mxu0 0.0
        %1090 = vmatprep.subr.mxu0 0.0
        %1091 = vmatpush1.msra.mxu0 0.0
        %1092 = vmatprep.subr.mxu0 0.0
        %1093 = vmatpush1.msra.mxu0 0.0
        %1094 = vmatprep.mubr.f32.mxu0 0.0
        %v1095 = vand.u32 %v783, 4294901760
        %v1096 = vsub.f32 %v783, %v1095
        %v1097 = vand.u32 %v1096, 4294901760
        %1098 = vmatmul.mubr.f32.gmra.mrb[0].mxu0 %v1097
        %v1099 = vpop.f32.mrb[0].mxu0
        %v1100 = vadd.f32 %v1024, %v1099
        %v1101 = vpop.f32.mrb[0].mxu0
        %v1102 = vadd.f32 %v1026, %v1101
        %1103 = vdwg.mxu0
        %v1104 = vand.u32 %v789, 4294901760
        %v1105 = vsub.f32 %v789, %v1104
        %v1106 = vand.u32 %v1105, 4294901760
        %1107 = vmatprep.subr.mxu0 %v1106
        %v1108 = vand.u32 %v786, 4294901760
        %v1109 = vsub.f32 %v786, %v1108
        %v1110 = vand.u32 %v1109, 4294901760
        %1111 = vmatpush1.msra.mxu0 %v1110
        %1112 = vmatprep.subr.mxu0 0.0
        %1113 = vmatpush1.msra.mxu0 0.0
        %1114 = vmatprep.subr.mxu0 0.0
        %1115 = vmatpush1.msra.mxu0 0.0
        %1116 = vmatprep.subr.mxu0 0.0
        %1117 = vmatpush1.msra.mxu0 0.0
        %1118 = vmatprep.subr.mxu0 0.0
        %1119 = vmatpush1.msra.mxu0 0.0
        %1120 = vmatprep.subr.mxu0 0.0
        %1121 = vmatpush1.msra.mxu0 0.0
        %1122 = vmatprep.subr.mxu0 0.0
        %1123 = vmatpush1.msra.mxu0 0.0
        %1124 = vmatprep.subr.mxu0 0.0
        %1125 = vmatpush1.msra.mxu0 0.0
        %1126 = vmatprep.subr.mxu0 0.0
        %1127 = vmatpush1.msra.mxu0 0.0
        %1128 = vmatprep.subr.mxu0 0.0
        %1129 = vmatpush1.msra.mxu0 0.0
        %1130 = vmatprep.subr.mxu0 0.0
        %1131 = vmatpush1.msra.mxu0 0.0
        %1132 = vmatprep.subr.mxu0 0.0
        %1133 = vmatpush1.msra.mxu0 0.0
        %1134 = vmatprep.subr.mxu0 0.0
        %1135 = vmatpush1.msra.mxu0 0.0
        %1136 = vmatprep.subr.mxu0 0.0
        %1137 = vmatpush1.msra.mxu0 0.0
        %1138 = vmatprep.subr.mxu0 0.0
        %1139 = vmatpush1.msra.mxu0 0.0
        %1140 = vmatprep.subr.mxu0 0.0
        %1141 = vmatpush1.msra.mxu0 0.0
        %1142 = vmatprep.subr.mxu0 0.0
        %1143 = vmatpush1.msra.mxu0 0.0
        %1144 = vmatprep.subr.mxu0 0.0
        %1145 = vmatpush1.msra.mxu0 0.0
        %1146 = vmatprep.subr.mxu0 0.0
        %1147 = vmatpush1.msra.mxu0 0.0
        %1148 = vmatprep.subr.mxu0 0.0
        %1149 = vmatpush1.msra.mxu0 0.0
        %1150 = vmatprep.subr.mxu0 0.0
        %1151 = vmatpush1.msra.mxu0 0.0
        %1152 = vmatprep.subr.mxu0 0.0
        %1153 = vmatpush1.msra.mxu0 0.0
        %1154 = vmatprep.subr.mxu0 0.0
        %1155 = vmatpush1.msra.mxu0 0.0
        %1156 = vmatprep.subr.mxu0 0.0
        %1157 = vmatpush1.msra.mxu0 0.0
        %1158 = vmatprep.subr.mxu0 0.0
        %1159 = vmatpush1.msra.mxu0 0.0
        %1160 = vmatprep.subr.mxu0 0.0
        %1161 = vmatpush1.msra.mxu0 0.0
        %1162 = vmatprep.subr.mxu0 0.0
        %1163 = vmatpush1.msra.mxu0 0.0
        %1164 = vmatprep.subr.mxu0 0.0
        %1165 = vmatpush1.msra.mxu0 0.0
        %1166 = vmatprep.subr.mxu0 0.0
        %1167 = vmatpush1.msra.mxu0 0.0
        %1168 = vmatprep.subr.mxu0 0.0
        %1169 = vmatpush1.msra.mxu0 0.0
        %1170 = vmatprep.subr.mxu0 0.0
        %1171 = vmatpush1.msra.mxu0 0.0
        %1172 = vmatprep.subr.mxu0 0.0
        %1173 = vmatpush1.msra.mxu0 0.0
        %1174 = vmatprep.mubr.f32.mxu0 0.0
        %v1175 = vand.u32 %v783, 4294901760
        %1176 = vmatmul.mubr.f32.gmra.mrb[0].mxu0 %v1175
        %v1177 = vpop.f32.mrb[0].mxu0
        %v1178 = vadd.f32 %v1100, %v1177
        %v1179 = vpop.f32.mrb[0].mxu0
        %v1180 = vadd.f32 %v1102, %v1179
        %1181 = vdwg.mxu0
        %v1182 = vand.u32 %v789, 4294901760
        %1183 = vmatprep.subr.mxu0 %v1182
        %v1184 = vand.u32 %v786, 4294901760
        %1185 = vmatpush1.msra.mxu0 %v1184
        %1186 = vmatprep.subr.mxu0 0.0
        %1187 = vmatpush1.msra.mxu0 0.0
        %1188 = vmatprep.subr.mxu0 0.0
        %1189 = vmatpush1.msra.mxu0 0.0
        %1190 = vmatprep.subr.mxu0 0.0
        %1191 = vmatpush1.msra.mxu0 0.0
        %1192 = vmatprep.subr.mxu0 0.0
        %1193 = vmatpush1.msra.mxu0 0.0
        %1194 = vmatprep.subr.mxu0 0.0
        %1195 = vmatpush1.msra.mxu0 0.0
        %1196 = vmatprep.subr.mxu0 0.0
        %1197 = vmatpush1.msra.mxu0 0.0
        %1198 = vmatprep.subr.mxu0 0.0
        %1199 = vmatpush1.msra.mxu0 0.0
        %1200 = vmatprep.subr.mxu0 0.0
        %1201 = vmatpush1.msra.mxu0 0.0
        %1202 = vmatprep.subr.mxu0 0.0
        %1203 = vmatpush1.msra.mxu0 0.0
        %1204 = vmatprep.subr.mxu0 0.0
        %1205 = vmatpush1.msra.mxu0 0.0
        %1206 = vmatprep.subr.mxu0 0.0
        %1207 = vmatpush1.msra.mxu0 0.0
        %1208 = vmatprep.subr.mxu0 0.0
        %1209 = vmatpush1.msra.mxu0 0.0
        %1210 = vmatprep.subr.mxu0 0.0
        %1211 = vmatpush1.msra.mxu0 0.0
        %1212 = vmatprep.subr.mxu0 0.0
        %1213 = vmatpush1.msra.mxu0 0.0
        %1214 = vmatprep.subr.mxu0 0.0
        %1215 = vmatpush1.msra.mxu0 0.0
        %1216 = vmatprep.subr.mxu0 0.0
        %1217 = vmatpush1.msra.mxu0 0.0
        %1218 = vmatprep.subr.mxu0 0.0
        %1219 = vmatpush1.msra.mxu0 0.0
        %1220 = vmatprep.subr.mxu0 0.0
        %1221 = vmatpush1.msra.mxu0 0.0
        %1222 = vmatprep.subr.mxu0 0.0
        %1223 = vmatpush1.msra.mxu0 0.0
        %1224 = vmatprep.subr.mxu0 0.0
        %1225 = vmatpush1.msra.mxu0 0.0
        %1226 = vmatprep.subr.mxu0 0.0
        %1227 = vmatpush1.msra.mxu0 0.0
        %1228 = vmatprep.subr.mxu0 0.0
        %1229 = vmatpush1.msra.mxu0 0.0
        %1230 = vmatprep.subr.mxu0 0.0
        %1231 = vmatpush1.msra.mxu0 0.0
        %1232 = vmatprep.subr.mxu0 0.0
        %1233 = vmatpush1.msra.mxu0 0.0
        %1234 = vmatprep.subr.mxu0 0.0
        %1235 = vmatpush1.msra.mxu0 0.0
        %1236 = vmatprep.subr.mxu0 0.0
        %1237 = vmatpush1.msra.mxu0 0.0
        %1238 = vmatprep.subr.mxu0 0.0
        %1239 = vmatpush1.msra.mxu0 0.0
        %1240 = vmatprep.subr.mxu0 0.0
        %1241 = vmatpush1.msra.mxu0 0.0
        %1242 = vmatprep.subr.mxu0 0.0
        %1243 = vmatpush1.msra.mxu0 0.0
        %1244 = vmatprep.subr.mxu0 0.0
        %1245 = vmatpush1.msra.mxu0 0.0
        %1246 = vmatprep.subr.mxu0 0.0
        %1247 = vmatpush1.msra.mxu0 0.0
        %1248 = vmatprep.mubr.f32.mxu0 0.0
        %v1249 = vand.u32 %v783, 4294901760
        %1250 = vmatmul.mubr.f32.gmra.mrb[0].mxu0 %v1249
        %v1251 = vpop.f32.mrb[0].mxu0
        %v1252 = vadd.f32 %v1178, %v1251
        %v1253 = vpop.f32.mrb[0].mxu0
        %v1254 = vadd.f32 %v1180, %v1253
        %1255 = vdwg.mxu0
        %1256 = vrot.lane.b32.xlu0 %v250, 15
        %v1257 = vpop.permute.xlu0 %1256
        %1258 = vrot.lane.b32.xlu0 %v268, 15
        %v1259 = vpop.permute.xlu0 %1258
        %vm1260 = vcmp.lt.s32.totalorder %v275, 15
        %v1261 = vsel %vm1260, %v1257, %v1259
        %v1262 = vsel %vm1260, %v1259, %v1257
        %v1263 = vlaneseq
        %v1264 = vshrl.u32 %v1263, 7
        %v1265 = vsub.s32 2, %v1264
        %v1266 = vrot.slane %v251, %v1265
        %v1267 = vlaneseq
        %v1268 = vshrl.u32 %v1267, 7
        %v1269 = vsub.s32 2, %v1268
        %v1270 = vrot.slane %v252, %v1269
        %v1271 = vmul.f32 %v1262, %v1266
        %v1272 = vmul.f32 %v1261, %v1270
        %v1274 = vsel %vm308, %v256, 0
        %v1277 = vsel %vm311, %v1271, 0
        %v1280 = vsel %vm311, %v1272, 0
        %v1282 = vand.u32 %v1280, 4294901760
        %1283 = vmatprep.subr.mxu0 %v1282
        %v1284 = vand.u32 %v1277, 4294901760
        %1285 = vmatpush1.msra.mxu0 %v1284
        %1286 = vmatprep.subr.mxu0 0.0
        %1287 = vmatpush1.msra.mxu0 0.0
        %1288 = vmatprep.subr.mxu0 0.0
        %1289 = vmatpush1.msra.mxu0 0.0
        %1290 = vmatprep.subr.mxu0 0.0
        %1291 = vmatpush1.msra.mxu0 0.0
        %1292 = vmatprep.subr.mxu0 0.0
        %1293 = vmatpush1.msra.mxu0 0.0
        %1294 = vmatprep.subr.mxu0 0.0
        %1295 = vmatpush1.msra.mxu0 0.0
        %1296 = vmatprep.subr.mxu0 0.0
        %1297 = vmatpush1.msra.mxu0 0.0
        %1298 = vmatprep.subr.mxu0 0.0
        %1299 = vmatpush1.msra.mxu0 0.0
        %1300 = vmatprep.subr.mxu0 0.0
        %1301 = vmatpush1.msra.mxu0 0.0
        %1302 = vmatprep.subr.mxu0 0.0
        %1303 = vmatpush1.msra.mxu0 0.0
        %1304 = vmatprep.subr.mxu0 0.0
        %1305 = vmatpush1.msra.mxu0 0.0
        %1306 = vmatprep.subr.mxu0 0.0
        %1307 = vmatpush1.msra.mxu0 0.0
        %1308 = vmatprep.subr.mxu0 0.0
        %1309 = vmatpush1.msra.mxu0 0.0
        %1310 = vmatprep.subr.mxu0 0.0
        %1311 = vmatpush1.msra.mxu0 0.0
        %1312 = vmatprep.subr.mxu0 0.0
        %1313 = vmatpush1.msra.mxu0 0.0
        %1314 = vmatprep.subr.mxu0 0.0
        %1315 = vmatpush1.msra.mxu0 0.0
        %1316 = vmatprep.subr.mxu0 0.0
        %1317 = vmatpush1.msra.mxu0 0.0
        %1318 = vmatprep.subr.mxu0 0.0
        %1319 = vmatpush1.msra.mxu0 0.0
        %1320 = vmatprep.subr.mxu0 0.0
        %1321 = vmatpush1.msra.mxu0 0.0
        %1322 = vmatprep.subr.mxu0 0.0
        %1323 = vmatpush1.msra.mxu0 0.0
        %1324 = vmatprep.subr.mxu0 0.0
        %1325 = vmatpush1.msra.mxu0 0.0
        %1326 = vmatprep.subr.mxu0 0.0
        %1327 = vmatpush1.msra.mxu0 0.0
        %1328 = vmatprep.subr.mxu0 0.0
        %1329 = vmatpush1.msra.mxu0 0.0
        %1330 = vmatprep.subr.mxu0 0.0
        %1331 = vmatpush1.msra.mxu0 0.0
        %1332 = vmatprep.subr.mxu0 0.0
        %1333 = vmatpush1.msra.mxu0 0.0
        %1334 = vmatprep.subr.mxu0 0.0
        %1335 = vmatpush1.msra.mxu0 0.0
        %1336 = vmatprep.subr.mxu0 0.0
        %1337 = vmatpush1.msra.mxu0 0.0
        %1338 = vmatprep.subr.mxu0 0.0
        %1339 = vmatpush1.msra.mxu0 0.0
        %1340 = vmatprep.subr.mxu0 0.0
        %1341 = vmatpush1.msra.mxu0 0.0
        %1342 = vmatprep.subr.mxu0 0.0
        %1343 = vmatpush1.msra.mxu0 0.0
        %1344 = vmatprep.subr.mxu0 0.0
        %1345 = vmatpush1.msra.mxu0 0.0
        %1346 = vmatprep.subr.mxu0 0.0
        %1347 = vmatpush1.msra.mxu0 0.0
        %1348 = vmatprep.mubr.f32.mxu0 0.0
        %v1349 = vand.u32 %v1274, 4294901760
        %v1350 = vsub.f32 %v1274, %v1349
        %v1351 = vand.u32 %v1350, 4294901760
        %v1352 = vsub.f32 %v1350, %v1351
        %v1353 = vand.u32 %v1352, 4294901760
        %1354 = vmatmul.mubr.f32.gmra.mrb[0].mxu0 %v1353
        %v1355 = vpop.f32.mrb[0].mxu0
        %v1356 = vadd.f32 0.0, %v1355
        %v1357 = vpop.f32.mrb[0].mxu0
        %v1358 = vadd.f32 0.0, %v1357
        %1359 = vdwg.mxu0
        %v1360 = vand.u32 %v1280, 4294901760
        %v1361 = vsub.f32 %v1280, %v1360
        %v1362 = vand.u32 %v1361, 4294901760
        %v1363 = vsub.f32 %v1361, %v1362
        %v1364 = vand.u32 %v1363, 4294901760
        %1365 = vmatprep.subr.mxu0 %v1364
        %v1366 = vand.u32 %v1277, 4294901760
        %v1367 = vsub.f32 %v1277, %v1366
        %v1368 = vand.u32 %v1367, 4294901760
        %v1369 = vsub.f32 %v1367, %v1368
        %v1370 = vand.u32 %v1369, 4294901760
        %1371 = vmatpush1.msra.mxu0 %v1370
        %1372 = vmatprep.subr.mxu0 0.0
        %1373 = vmatpush1.msra.mxu0 0.0
        %1374 = vmatprep.subr.mxu0 0.0
        %1375 = vmatpush1.msra.mxu0 0.0
        %1376 = vmatprep.subr.mxu0 0.0
        %1377 = vmatpush1.msra.mxu0 0.0
        %1378 = vmatprep.subr.mxu0 0.0
        %1379 = vmatpush1.msra.mxu0 0.0
        %1380 = vmatprep.subr.mxu0 0.0
        %1381 = vmatpush1.msra.mxu0 0.0
        %1382 = vmatprep.subr.mxu0 0.0
        %1383 = vmatpush1.msra.mxu0 0.0
        %1384 = vmatprep.subr.mxu0 0.0
        %1385 = vmatpush1.msra.mxu0 0.0
        %1386 = vmatprep.subr.mxu0 0.0
        %1387 = vmatpush1.msra.mxu0 0.0
        %1388 = vmatprep.subr.mxu0 0.0
        %1389 = vmatpush1.msra.mxu0 0.0
        %1390 = vmatprep.subr.mxu0 0.0
        %1391 = vmatpush1.msra.mxu0 0.0
        %1392 = vmatprep.subr.mxu0 0.0
        %1393 = vmatpush1.msra.mxu0 0.0
        %1394 = vmatprep.subr.mxu0 0.0
        %1395 = vmatpush1.msra.mxu0 0.0
        %1396 = vmatprep.subr.mxu0 0.0
        %1397 = vmatpush1.msra.mxu0 0.0
        %1398 = vmatprep.subr.mxu0 0.0
        %1399 = vmatpush1.msra.mxu0 0.0
        %1400 = vmatprep.subr.mxu0 0.0
        %1401 = vmatpush1.msra.mxu0 0.0
        %1402 = vmatprep.subr.mxu0 0.0
        %1403 = vmatpush1.msra.mxu0 0.0
        %1404 = vmatprep.subr.mxu0 0.0
        %1405 = vmatpush1.msra.mxu0 0.0
        %1406 = vmatprep.subr.mxu0 0.0
        %1407 = vmatpush1.msra.mxu0 0.0
        %1408 = vmatprep.subr.mxu0 0.0
        %1409 = vmatpush1.msra.mxu0 0.0
        %1410 = vmatprep.subr.mxu0 0.0
        %1411 = vmatpush1.msra.mxu0 0.0
        %1412 = vmatprep.subr.mxu0 0.0
        %1413 = vmatpush1.msra.mxu0 0.0
        %1414 = vmatprep.subr.mxu0 0.0
        %1415 = vmatpush1.msra.mxu0 0.0
        %1416 = vmatprep.subr.mxu0 0.0
        %1417 = vmatpush1.msra.mxu0 0.0
        %1418 = vmatprep.subr.mxu0 0.0
        %1419 = vmatpush1.msra.mxu0 0.0
        %1420 = vmatprep.subr.mxu0 0.0
        %1421 = vmatpush1.msra.mxu0 0.0
        %1422 = vmatprep.subr.mxu0 0.0
        %1423 = vmatpush1.msra.mxu0 0.0
        %1424 = vmatprep.subr.mxu0 0.0
        %1425 = vmatpush1.msra.mxu0 0.0
        %1426 = vmatprep.subr.mxu0 0.0
        %1427 = vmatpush1.msra.mxu0 0.0
        %1428 = vmatprep.subr.mxu0 0.0
        %1429 = vmatpush1.msra.mxu0 0.0
        %1430 = vmatprep.subr.mxu0 0.0
        %1431 = vmatpush1.msra.mxu0 0.0
        %1432 = vmatprep.subr.mxu0 0.0
        %1433 = vmatpush1.msra.mxu0 0.0
        %1434 = vmatprep.mubr.f32.mxu0 0.0
        %v1435 = vand.u32 %v1274, 4294901760
        %1436 = vmatmul.mubr.f32.gmra.mrb[0].mxu0 %v1435
        %v1437 = vpop.f32.mrb[0].mxu0
        %v1438 = vadd.f32 %v1356, %v1437
        %v1439 = vpop.f32.mrb[0].mxu0
        %v1440 = vadd.f32 %v1358, %v1439
        %1441 = vdwg.mxu0
        %v1442 = vand.u32 %v1280, 4294901760
        %v1443 = vsub.f32 %v1280, %v1442
        %1444 = vmatprep.subr.mxu0 %v1443
        %v1445 = vand.u32 %v1277, 4294901760
        %v1446 = vsub.f32 %v1277, %v1445
        %1447 = vmatpush1.msra.mxu0 %v1446
        %1448 = vmatprep.subr.mxu0 0.0
        %1449 = vmatpush1.msra.mxu0 0.0
        %1450 = vmatprep.subr.mxu0 0.0
        %1451 = vmatpush1.msra.mxu0 0.0
        %1452 = vmatprep.subr.mxu0 0.0
        %1453 = vmatpush1.msra.mxu0 0.0
        %1454 = vmatprep.subr.mxu0 0.0
        %1455 = vmatpush1.msra.mxu0 0.0
        %1456 = vmatprep.subr.mxu0 0.0
        %1457 = vmatpush1.msra.mxu0 0.0
        %1458 = vmatprep.subr.mxu0 0.0
        %1459 = vmatpush1.msra.mxu0 0.0
        %1460 = vmatprep.subr.mxu0 0.0
        %1461 = vmatpush1.msra.mxu0 0.0
        %1462 = vmatprep.subr.mxu0 0.0
        %1463 = vmatpush1.msra.mxu0 0.0
        %1464 = vmatprep.subr.mxu0 0.0
        %1465 = vmatpush1.msra.mxu0 0.0
        %1466 = vmatprep.subr.mxu0 0.0
        %1467 = vmatpush1.msra.mxu0 0.0
        %1468 = vmatprep.subr.mxu0 0.0
        %1469 = vmatpush1.msra.mxu0 0.0
        %1470 = vmatprep.subr.mxu0 0.0
        %1471 = vmatpush1.msra.mxu0 0.0
        %1472 = vmatprep.subr.mxu0 0.0
        %1473 = vmatpush1.msra.mxu0 0.0
        %1474 = vmatprep.subr.mxu0 0.0
        %1475 = vmatpush1.msra.mxu0 0.0
        %1476 = vmatprep.subr.mxu0 0.0
        %1477 = vmatpush1.msra.mxu0 0.0
        %1478 = vmatprep.subr.mxu0 0.0
        %1479 = vmatpush1.msra.mxu0 0.0
        %1480 = vmatprep.subr.mxu0 0.0
        %1481 = vmatpush1.msra.mxu0 0.0
        %1482 = vmatprep.subr.mxu0 0.0
        %1483 = vmatpush1.msra.mxu0 0.0
        %1484 = vmatprep.subr.mxu0 0.0
        %1485 = vmatpush1.msra.mxu0 0.0
        %1486 = vmatprep.subr.mxu0 0.0
        %1487 = vmatpush1.msra.mxu0 0.0
        %1488 = vmatprep.subr.mxu0 0.0
        %1489 = vmatpush1.msra.mxu0 0.0
        %1490 = vmatprep.subr.mxu0 0.0
        %1491 = vmatpush1.msra.mxu0 0.0
        %1492 = vmatprep.subr.mxu0 0.0
        %1493 = vmatpush1.msra.mxu0 0.0
        %1494 = vmatprep.subr.mxu0 0.0
        %1495 = vmatpush1.msra.mxu0 0.0
        %1496 = vmatprep.subr.mxu0 0.0
        %1497 = vmatpush1.msra.mxu0 0.0
        %1498 = vmatprep.subr.mxu0 0.0
        %1499 = vmatpush1.msra.mxu0 0.0
        %1500 = vmatprep.subr.mxu0 0.0
        %1501 = vmatpush1.msra.mxu0 0.0
        %1502 = vmatprep.subr.mxu0 0.0
        %1503 = vmatpush1.msra.mxu0 0.0
        %1504 = vmatprep.subr.mxu0 0.0
        %1505 = vmatpush1.msra.mxu0 0.0
        %1506 = vmatprep.subr.mxu0 0.0
        %1507 = vmatpush1.msra.mxu0 0.0
        %1508 = vmatprep.subr.mxu0 0.0
        %1509 = vmatpush1.msra.mxu0 0.0
        %1510 = vmatprep.mubr.f32.mxu0 0.0
        %v1511 = vand.u32 %v1274, 4294901760
        %v1512 = vsub.f32 %v1274, %v1511
        %1513 = vmatmul.mubr.f32.gmra.mrb[0].mxu0 %v1512
        %v1514 = vpop.f32.mrb[0].mxu0
        %v1515 = vadd.f32 %v1438, %v1514
        %v1516 = vpop.f32.mrb[0].mxu0
        %v1517 = vadd.f32 %v1440, %v1516
        %1518 = vdwg.mxu0
        %v1519 = vand.u32 %v1280, 4294901760
        %1520 = vmatprep.subr.mxu0 %v1519
        %v1521 = vand.u32 %v1277, 4294901760
        %1522 = vmatpush1.msra.mxu0 %v1521
        %1523 = vmatprep.subr.mxu0 0.0
        %1524 = vmatpush1.msra.mxu0 0.0
        %1525 = vmatprep.subr.mxu0 0.0
        %1526 = vmatpush1.msra.mxu0 0.0
        %1527 = vmatprep.subr.mxu0 0.0
        %1528 = vmatpush1.msra.mxu0 0.0
        %1529 = vmatprep.subr.mxu0 0.0
        %1530 = vmatpush1.msra.mxu0 0.0
        %1531 = vmatprep.subr.mxu0 0.0
        %1532 = vmatpush1.msra.mxu0 0.0
        %1533 = vmatprep.subr.mxu0 0.0
        %1534 = vmatpush1.msra.mxu0 0.0
        %1535 = vmatprep.subr.mxu0 0.0
        %1536 = vmatpush1.msra.mxu0 0.0
        %1537 = vmatprep.subr.mxu0 0.0
        %1538 = vmatpush1.msra.mxu0 0.0
        %1539 = vmatprep.subr.mxu0 0.0
        %1540 = vmatpush1.msra.mxu0 0.0
        %1541 = vmatprep.subr.mxu0 0.0
        %1542 = vmatpush1.msra.mxu0 0.0
        %1543 = vmatprep.subr.mxu0 0.0
        %1544 = vmatpush1.msra.mxu0 0.0
        %1545 = vmatprep.subr.mxu0 0.0
        %1546 = vmatpush1.msra.mxu0 0.0
        %1547 = vmatprep.subr.mxu0 0.0
        %1548 = vmatpush1.msra.mxu0 0.0
        %1549 = vmatprep.subr.mxu0 0.0
        %1550 = vmatpush1.msra.mxu0 0.0
        %1551 = vmatprep.subr.mxu0 0.0
        %1552 = vmatpush1.msra.mxu0 0.0
        %1553 = vmatprep.subr.mxu0 0.0
        %1554 = vmatpush1.msra.mxu0 0.0
        %1555 = vmatprep.subr.mxu0 0.0
        %1556 = vmatpush1.msra.mxu0 0.0
        %1557 = vmatprep.subr.mxu0 0.0
        %1558 = vmatpush1.msra.mxu0 0.0
        %1559 = vmatprep.subr.mxu0 0.0
        %1560 = vmatpush1.msra.mxu0 0.0
        %1561 = vmatprep.subr.mxu0 0.0
        %1562 = vmatpush1.msra.mxu0 0.0
        %1563 = vmatprep.subr.mxu0 0.0
        %1564 = vmatpush1.msra.mxu0 0.0
        %1565 = vmatprep.subr.mxu0 0.0
        %1566 = vmatpush1.msra.mxu0 0.0
        %1567 = vmatprep.subr.mxu0 0.0
        %1568 = vmatpush1.msra.mxu0 0.0
        %1569 = vmatprep.subr.mxu0 0.0
        %1570 = vmatpush1.msra.mxu0 0.0
        %1571 = vmatprep.subr.mxu0 0.0
        %1572 = vmatpush1.msra.mxu0 0.0
        %1573 = vmatprep.subr.mxu0 0.0
        %1574 = vmatpush1.msra.mxu0 0.0
        %1575 = vmatprep.subr.mxu0 0.0
        %1576 = vmatpush1.msra.mxu0 0.0
        %1577 = vmatprep.subr.mxu0 0.0
        %1578 = vmatpush1.msra.mxu0 0.0
        %1579 = vmatprep.subr.mxu0 0.0
        %1580 = vmatpush1.msra.mxu0 0.0
        %1581 = vmatprep.subr.mxu0 0.0
        %1582 = vmatpush1.msra.mxu0 0.0
        %1583 = vmatprep.subr.mxu0 0.0
        %1584 = vmatpush1.msra.mxu0 0.0
        %1585 = vmatprep.mubr.f32.mxu0 0.0
        %v1586 = vand.u32 %v1274, 4294901760
        %v1587 = vsub.f32 %v1274, %v1586
        %v1588 = vand.u32 %v1587, 4294901760
        %1589 = vmatmul.mubr.f32.gmra.mrb[0].mxu0 %v1588
        %v1590 = vpop.f32.mrb[0].mxu0
        %v1591 = vadd.f32 %v1515, %v1590
        %v1592 = vpop.f32.mrb[0].mxu0
        %v1593 = vadd.f32 %v1517, %v1592
        %1594 = vdwg.mxu0
        %v1595 = vand.u32 %v1280, 4294901760
        %v1596 = vsub.f32 %v1280, %v1595
        %v1597 = vand.u32 %v1596, 4294901760
        %1598 = vmatprep.subr.mxu0 %v1597
        %v1599 = vand.u32 %v1277, 4294901760
        %v1600 = vsub.f32 %v1277, %v1599
        %v1601 = vand.u32 %v1600, 4294901760
        %1602 = vmatpush1.msra.mxu0 %v1601
        %1603 = vmatprep.subr.mxu0 0.0
        %1604 = vmatpush1.msra.mxu0 0.0
        %1605 = vmatprep.subr.mxu0 0.0
        %1606 = vmatpush1.msra.mxu0 0.0
        %1607 = vmatprep.subr.mxu0 0.0
        %1608 = vmatpush1.msra.mxu0 0.0
        %1609 = vmatprep.subr.mxu0 0.0
        %1610 = vmatpush1.msra.mxu0 0.0
        %1611 = vmatprep.subr.mxu0 0.0
        %1612 = vmatpush1.msra.mxu0 0.0
        %1613 = vmatprep.subr.mxu0 0.0
        %1614 = vmatpush1.msra.mxu0 0.0
        %1615 = vmatprep.subr.mxu0 0.0
        %1616 = vmatpush1.msra.mxu0 0.0
        %1617 = vmatprep.subr.mxu0 0.0
        %1618 = vmatpush1.msra.mxu0 0.0
        %1619 = vmatprep.subr.mxu0 0.0
        %1620 = vmatpush1.msra.mxu0 0.0
        %1621 = vmatprep.subr.mxu0 0.0
        %1622 = vmatpush1.msra.mxu0 0.0
        %1623 = vmatprep.subr.mxu0 0.0
        %1624 = vmatpush1.msra.mxu0 0.0
        %1625 = vmatprep.subr.mxu0 0.0
        %1626 = vmatpush1.msra.mxu0 0.0
        %1627 = vmatprep.subr.mxu0 0.0
        %1628 = vmatpush1.msra.mxu0 0.0
        %1629 = vmatprep.subr.mxu0 0.0
        %1630 = vmatpush1.msra.mxu0 0.0
        %1631 = vmatprep.subr.mxu0 0.0
        %1632 = vmatpush1.msra.mxu0 0.0
        %1633 = vmatprep.subr.mxu0 0.0
        %1634 = vmatpush1.msra.mxu0 0.0
        %1635 = vmatprep.subr.mxu0 0.0
        %1636 = vmatpush1.msra.mxu0 0.0
        %1637 = vmatprep.subr.mxu0 0.0
        %1638 = vmatpush1.msra.mxu0 0.0
        %1639 = vmatprep.subr.mxu0 0.0
        %1640 = vmatpush1.msra.mxu0 0.0
        %1641 = vmatprep.subr.mxu0 0.0
        %1642 = vmatpush1.msra.mxu0 0.0
        %1643 = vmatprep.subr.mxu0 0.0
        %1644 = vmatpush1.msra.mxu0 0.0
        %1645 = vmatprep.subr.mxu0 0.0
        %1646 = vmatpush1.msra.mxu0 0.0
        %1647 = vmatprep.subr.mxu0 0.0
        %1648 = vmatpush1.msra.mxu0 0.0
        %1649 = vmatprep.subr.mxu0 0.0
        %1650 = vmatpush1.msra.mxu0 0.0
        %1651 = vmatprep.subr.mxu0 0.0
        %1652 = vmatpush1.msra.mxu0 0.0
        %1653 = vmatprep.subr.mxu0 0.0
        %1654 = vmatpush1.msra.mxu0 0.0
        %1655 = vmatprep.subr.mxu0 0.0
        %1656 = vmatpush1.msra.mxu0 0.0
        %1657 = vmatprep.subr.mxu0 0.0
        %1658 = vmatpush1.msra.mxu0 0.0
        %1659 = vmatprep.subr.mxu0 0.0
        %1660 = vmatpush1.msra.mxu0 0.0
        %1661 = vmatprep.subr.mxu0 0.0
        %1662 = vmatpush1.msra.mxu0 0.0
        %1663 = vmatprep.subr.mxu0 0.0
        %1664 = vmatpush1.msra.mxu0 0.0
        %1665 = vmatprep.mubr.f32.mxu0 0.0
        %v1666 = vand.u32 %v1274, 4294901760
        %1667 = vmatmul.mubr.f32.gmra.mrb[0].mxu0 %v1666
        %v1668 = vpop.f32.mrb[0].mxu0
        %v1669 = vadd.f32 %v1591, %v1668
        %v1670 = vpop.f32.mrb[0].mxu0
        %v1671 = vadd.f32 %v1593, %v1670
        %1672 = vdwg.mxu0
        %v1673 = vand.u32 %v1280, 4294901760
        %1674 = vmatprep.subr.mxu0 %v1673
        %v1675 = vand.u32 %v1277, 4294901760
        %1676 = vmatpush1.msra.mxu0 %v1675
        %1677 = vmatprep.subr.mxu0 0.0
        %1678 = vmatpush1.msra.mxu0 0.0
        %1679 = vmatprep.subr.mxu0 0.0
        %1680 = vmatpush1.msra.mxu0 0.0
        %1681 = vmatprep.subr.mxu0 0.0
        %1682 = vmatpush1.msra.mxu0 0.0
        %1683 = vmatprep.subr.mxu0 0.0
        %1684 = vmatpush1.msra.mxu0 0.0
        %1685 = vmatprep.subr.mxu0 0.0
        %1686 = vmatpush1.msra.mxu0 0.0
        %1687 = vmatprep.subr.mxu0 0.0
        %1688 = vmatpush1.msra.mxu0 0.0
        %1689 = vmatprep.subr.mxu0 0.0
        %1690 = vmatpush1.msra.mxu0 0.0
        %1691 = vmatprep.subr.mxu0 0.0
        %1692 = vmatpush1.msra.mxu0 0.0
        %1693 = vmatprep.subr.mxu0 0.0
        %1694 = vmatpush1.msra.mxu0 0.0
        %1695 = vmatprep.subr.mxu0 0.0
        %1696 = vmatpush1.msra.mxu0 0.0
        %1697 = vmatprep.subr.mxu0 0.0
        %1698 = vmatpush1.msra.mxu0 0.0
        %1699 = vmatprep.subr.mxu0 0.0
        %1700 = vmatpush1.msra.mxu0 0.0
        %1701 = vmatprep.subr.mxu0 0.0
        %1702 = vmatpush1.msra.mxu0 0.0
        %1703 = vmatprep.subr.mxu0 0.0
        %1704 = vmatpush1.msra.mxu0 0.0
        %1705 = vmatprep.subr.mxu0 0.0
        %1706 = vmatpush1.msra.mxu0 0.0
        %1707 = vmatprep.subr.mxu0 0.0
        %1708 = vmatpush1.msra.mxu0 0.0
        %1709 = vmatprep.subr.mxu0 0.0
        %1710 = vmatpush1.msra.mxu0 0.0
        %1711 = vmatprep.subr.mxu0 0.0
        %1712 = vmatpush1.msra.mxu0 0.0
        %1713 = vmatprep.subr.mxu0 0.0
        %1714 = vmatpush1.msra.mxu0 0.0
        %1715 = vmatprep.subr.mxu0 0.0
        %1716 = vmatpush1.msra.mxu0 0.0
        %1717 = vmatprep.subr.mxu0 0.0
        %1718 = vmatpush1.msra.mxu0 0.0
        %1719 = vmatprep.subr.mxu0 0.0
        %1720 = vmatpush1.msra.mxu0 0.0
        %1721 = vmatprep.subr.mxu0 0.0
        %1722 = vmatpush1.msra.mxu0 0.0
        %1723 = vmatprep.subr.mxu0 0.0
        %1724 = vmatpush1.msra.mxu0 0.0
        %1725 = vmatprep.subr.mxu0 0.0
        %1726 = vmatpush1.msra.mxu0 0.0
        %1727 = vmatprep.subr.mxu0 0.0
        %1728 = vmatpush1.msra.mxu0 0.0
        %1729 = vmatprep.subr.mxu0 0.0
        %1730 = vmatpush1.msra.mxu0 0.0
        %1731 = vmatprep.subr.mxu0 0.0
        %1732 = vmatpush1.msra.mxu0 0.0
        %1733 = vmatprep.subr.mxu0 0.0
        %1734 = vmatpush1.msra.mxu0 0.0
        %1735 = vmatprep.subr.mxu0 0.0
        %1736 = vmatpush1.msra.mxu0 0.0
        %1737 = vmatprep.subr.mxu0 0.0
        %1738 = vmatpush1.msra.mxu0 0.0
        %1739 = vmatprep.mubr.f32.mxu0 0.0
        %v1740 = vand.u32 %v1274, 4294901760
        %1741 = vmatmul.mubr.f32.gmra.mrb[0].mxu0 %v1740
        %v1742 = vpop.f32.mrb[0].mxu0
        %v1743 = vadd.f32 %v1669, %v1742
        %v1744 = vpop.f32.mrb[0].mxu0
        %v1745 = vadd.f32 %v1671, %v1744
        %1746 = vdwg.mxu0
        %v1747 = vadd.f32 %v1252, %v1743
        %v1748 = vadd.f32 %v1254, %v1745
        %1749 = vrot.lane.b32.xlu0 %v250, 1
        %v1750 = vpop.permute.xlu0 %1749
        %1751 = vrot.lane.b32.xlu0 %v268, 1
        %v1752 = vpop.permute.xlu0 %1751
        %vm1753 = vcmp.lt.s32.totalorder %v275, 1
        %v1754 = vsel %vm1753, %v1750, %v1752
        %v1755 = vsel %vm1753, %v1752, %v1750
        %v1756 = vlaneseq
        %v1757 = vshrl.u32 %v1756, 7
        %v1758 = vsub.s32 3, %v1757
        %v1759 = vrot.slane %v251, %v1758
        %v1760 = vlaneseq
        %v1761 = vshrl.u32 %v1760, 7
        %v1762 = vsub.s32 3, %v1761
        %v1763 = vrot.slane %v252, %v1762
        %v1764 = vmul.f32 %v1755, %v1759
        %v1765 = vmul.f32 %v1754, %v1763
        %v1766 = vrot.slane %v256, 4
        %v1767 = vsel %vm308, %v1766, 0
        %v1770 = vsel %vm311, %v1764, 0
        %v1773 = vsel %vm311, %v1765, 0
        %v1775 = vand.u32 %v1773, 4294901760
        %1776 = vmatprep.subr.mxu0 %v1775
        %v1777 = vand.u32 %v1770, 4294901760
        %1778 = vmatpush1.msra.mxu0 %v1777
        %1779 = vmatprep.subr.mxu0 0.0
        %1780 = vmatpush1.msra.mxu0 0.0
        %1781 = vmatprep.subr.mxu0 0.0
        %1782 = vmatpush1.msra.mxu0 0.0
        %1783 = vmatprep.subr.mxu0 0.0
        %1784 = vmatpush1.msra.mxu0 0.0
        %1785 = vmatprep.subr.mxu0 0.0
        %1786 = vmatpush1.msra.mxu0 0.0
        %1787 = vmatprep.subr.mxu0 0.0
        %1788 = vmatpush1.msra.mxu0 0.0
        %1789 = vmatprep.subr.mxu0 0.0
        %1790 = vmatpush1.msra.mxu0 0.0
        %1791 = vmatprep.subr.mxu0 0.0
        %1792 = vmatpush1.msra.mxu0 0.0
        %1793 = vmatprep.subr.mxu0 0.0
        %1794 = vmatpush1.msra.mxu0 0.0
        %1795 = vmatprep.subr.mxu0 0.0
        %1796 = vmatpush1.msra.mxu0 0.0
        %1797 = vmatprep.subr.mxu0 0.0
        %1798 = vmatpush1.msra.mxu0 0.0
        %1799 = vmatprep.subr.mxu0 0.0
        %1800 = vmatpush1.msra.mxu0 0.0
        %1801 = vmatprep.subr.mxu0 0.0
        %1802 = vmatpush1.msra.mxu0 0.0
        %1803 = vmatprep.subr.mxu0 0.0
        %1804 = vmatpush1.msra.mxu0 0.0
        %1805 = vmatprep.subr.mxu0 0.0
        %1806 = vmatpush1.msra.mxu0 0.0
        %1807 = vmatprep.subr.mxu0 0.0
        %1808 = vmatpush1.msra.mxu0 0.0
        %1809 = vmatprep.subr.mxu0 0.0
        %1810 = vmatpush1.msra.mxu0 0.0
        %1811 = vmatprep.subr.mxu0 0.0
        %1812 = vmatpush1.msra.mxu0 0.0
        %1813 = vmatprep.subr.mxu0 0.0
        %1814 = vmatpush1.msra.mxu0 0.0
        %1815 = vmatprep.subr.mxu0 0.0
        %1816 = vmatpush1.msra.mxu0 0.0
        %1817 = vmatprep.subr.mxu0 0.0
        %1818 = vmatpush1.msra.mxu0 0.0
        %1819 = vmatprep.subr.mxu0 0.0
        %1820 = vmatpush1.msra.mxu0 0.0
        %1821 = vmatprep.subr.mxu0 0.0
        %1822 = vmatpush1.msra.mxu0 0.0
        %1823 = vmatprep.subr.mxu0 0.0
        %1824 = vmatpush1.msra.mxu0 0.0
        %1825 = vmatprep.subr.mxu0 0.0
        %1826 = vmatpush1.msra.mxu0 0.0
        %1827 = vmatprep.subr.mxu0 0.0
        %1828 = vmatpush1.msra.mxu0 0.0
        %1829 = vmatprep.subr.mxu0 0.0
        %1830 = vmatpush1.msra.mxu0 0.0
        %1831 = vmatprep.subr.mxu0 0.0
        %1832 = vmatpush1.msra.mxu0 0.0
        %1833 = vmatprep.subr.mxu0 0.0
        %1834 = vmatpush1.msra.mxu0 0.0
        %1835 = vmatprep.subr.mxu0 0.0
        %1836 = vmatpush1.msra.mxu0 0.0
        %1837 = vmatprep.subr.mxu0 0.0
        %1838 = vmatpush1.msra.mxu0 0.0
        %1839 = vmatprep.subr.mxu0 0.0
        %1840 = vmatpush1.msra.mxu0 0.0
        %1841 = vmatprep.mubr.f32.mxu0 0.0
        %v1842 = vand.u32 %v1767, 4294901760
        %v1843 = vsub.f32 %v1767, %v1842
        %v1844 = vand.u32 %v1843, 4294901760
        %v1845 = vsub.f32 %v1843, %v1844
        %v1846 = vand.u32 %v1845, 4294901760
        %1847 = vmatmul.mubr.f32.gmra.mrb[0].mxu0 %v1846
        %v1848 = vpop.f32.mrb[0].mxu0
        %v1849 = vadd.f32 0.0, %v1848
        %v1850 = vpop.f32.mrb[0].mxu0
        %v1851 = vadd.f32 0.0, %v1850
        %1852 = vdwg.mxu0
        %v1853 = vand.u32 %v1773, 4294901760
        %v1854 = vsub.f32 %v1773, %v1853
        %v1855 = vand.u32 %v1854, 4294901760
        %v1856 = vsub.f32 %v1854, %v1855
        %v1857 = vand.u32 %v1856, 4294901760
        %1858 = vmatprep.subr.mxu0 %v1857
        %v1859 = vand.u32 %v1770, 4294901760
        %v1860 = vsub.f32 %v1770, %v1859
        %v1861 = vand.u32 %v1860, 4294901760
        %v1862 = vsub.f32 %v1860, %v1861
        %v1863 = vand.u32 %v1862, 4294901760
        %1864 = vmatpush1.msra.mxu0 %v1863
        %1865 = vmatprep.subr.mxu0 0.0
        %1866 = vmatpush1.msra.mxu0 0.0
        %1867 = vmatprep.subr.mxu0 0.0
        %1868 = vmatpush1.msra.mxu0 0.0
        %1869 = vmatprep.subr.mxu0 0.0
        %1870 = vmatpush1.msra.mxu0 0.0
        %1871 = vmatprep.subr.mxu0 0.0
        %1872 = vmatpush1.msra.mxu0 0.0
        %1873 = vmatprep.subr.mxu0 0.0
        %1874 = vmatpush1.msra.mxu0 0.0
        %1875 = vmatprep.subr.mxu0 0.0
        %1876 = vmatpush1.msra.mxu0 0.0
        %1877 = vmatprep.subr.mxu0 0.0
        %1878 = vmatpush1.msra.mxu0 0.0
        %1879 = vmatprep.subr.mxu0 0.0
        %1880 = vmatpush1.msra.mxu0 0.0
        %1881 = vmatprep.subr.mxu0 0.0
        %1882 = vmatpush1.msra.mxu0 0.0
        %1883 = vmatprep.subr.mxu0 0.0
        %1884 = vmatpush1.msra.mxu0 0.0
        %1885 = vmatprep.subr.mxu0 0.0
        %1886 = vmatpush1.msra.mxu0 0.0
        %1887 = vmatprep.subr.mxu0 0.0
        %1888 = vmatpush1.msra.mxu0 0.0
        %1889 = vmatprep.subr.mxu0 0.0
        %1890 = vmatpush1.msra.mxu0 0.0
        %1891 = vmatprep.subr.mxu0 0.0
        %1892 = vmatpush1.msra.mxu0 0.0
        %1893 = vmatprep.subr.mxu0 0.0
        %1894 = vmatpush1.msra.mxu0 0.0
        %1895 = vmatprep.subr.mxu0 0.0
        %1896 = vmatpush1.msra.mxu0 0.0
        %1897 = vmatprep.subr.mxu0 0.0
        %1898 = vmatpush1.msra.mxu0 0.0
        %1899 = vmatprep.subr.mxu0 0.0
        %1900 = vmatpush1.msra.mxu0 0.0
        %1901 = vmatprep.subr.mxu0 0.0
        %1902 = vmatpush1.msra.mxu0 0.0
        %1903 = vmatprep.subr.mxu0 0.0
        %1904 = vmatpush1.msra.mxu0 0.0
        %1905 = vmatprep.subr.mxu0 0.0
        %1906 = vmatpush1.msra.mxu0 0.0
        %1907 = vmatprep.subr.mxu0 0.0
        %1908 = vmatpush1.msra.mxu0 0.0
        %1909 = vmatprep.subr.mxu0 0.0
        %1910 = vmatpush1.msra.mxu0 0.0
        %1911 = vmatprep.subr.mxu0 0.0
        %1912 = vmatpush1.msra.mxu0 0.0
        %1913 = vmatprep.subr.mxu0 0.0
        %1914 = vmatpush1.msra.mxu0 0.0
        %1915 = vmatprep.subr.mxu0 0.0
        %1916 = vmatpush1.msra.mxu0 0.0
        %1917 = vmatprep.subr.mxu0 0.0
        %1918 = vmatpush1.msra.mxu0 0.0
        %1919 = vmatprep.subr.mxu0 0.0
        %1920 = vmatpush1.msra.mxu0 0.0
        %1921 = vmatprep.subr.mxu0 0.0
        %1922 = vmatpush1.msra.mxu0 0.0
        %1923 = vmatprep.subr.mxu0 0.0
        %1924 = vmatpush1.msra.mxu0 0.0
        %1925 = vmatprep.subr.mxu0 0.0
        %1926 = vmatpush1.msra.mxu0 0.0
        %1927 = vmatprep.mubr.f32.mxu0 0.0
        %v1928 = vand.u32 %v1767, 4294901760
        %1929 = vmatmul.mubr.f32.gmra.mrb[0].mxu0 %v1928
        %v1930 = vpop.f32.mrb[0].mxu0
        %v1931 = vadd.f32 %v1849, %v1930
        %v1932 = vpop.f32.mrb[0].mxu0
        %v1933 = vadd.f32 %v1851, %v1932
        %1934 = vdwg.mxu0
        %v1935 = vand.u32 %v1773, 4294901760
        %v1936 = vsub.f32 %v1773, %v1935
        %1937 = vmatprep.subr.mxu0 %v1936
        %v1938 = vand.u32 %v1770, 4294901760
        %v1939 = vsub.f32 %v1770, %v1938
        %1940 = vmatpush1.msra.mxu0 %v1939
        %1941 = vmatprep.subr.mxu0 0.0
        %1942 = vmatpush1.msra.mxu0 0.0
        %1943 = vmatprep.subr.mxu0 0.0
        %1944 = vmatpush1.msra.mxu0 0.0
        %1945 = vmatprep.subr.mxu0 0.0
        %1946 = vmatpush1.msra.mxu0 0.0
        %1947 = vmatprep.subr.mxu0 0.0
        %1948 = vmatpush1.msra.mxu0 0.0
        %1949 = vmatprep.subr.mxu0 0.0
        %1950 = vmatpush1.msra.mxu0 0.0
        %1951 = vmatprep.subr.mxu0 0.0
        %1952 = vmatpush1.msra.mxu0 0.0
        %1953 = vmatprep.subr.mxu0 0.0
        %1954 = vmatpush1.msra.mxu0 0.0
        %1955 = vmatprep.subr.mxu0 0.0
        %1956 = vmatpush1.msra.mxu0 0.0
        %1957 = vmatprep.subr.mxu0 0.0
        %1958 = vmatpush1.msra.mxu0 0.0
        %1959 = vmatprep.subr.mxu0 0.0
        %1960 = vmatpush1.msra.mxu0 0.0
        %1961 = vmatprep.subr.mxu0 0.0
        %1962 = vmatpush1.msra.mxu0 0.0
        %1963 = vmatprep.subr.mxu0 0.0
        %1964 = vmatpush1.msra.mxu0 0.0
        %1965 = vmatprep.subr.mxu0 0.0
        %1966 = vmatpush1.msra.mxu0 0.0
        %1967 = vmatprep.subr.mxu0 0.0
        %1968 = vmatpush1.msra.mxu0 0.0
        %1969 = vmatprep.subr.mxu0 0.0
        %1970 = vmatpush1.msra.mxu0 0.0
        %1971 = vmatprep.subr.mxu0 0.0
        %1972 = vmatpush1.msra.mxu0 0.0
        %1973 = vmatprep.subr.mxu0 0.0
        %1974 = vmatpush1.msra.mxu0 0.0
        %1975 = vmatprep.subr.mxu0 0.0
        %1976 = vmatpush1.msra.mxu0 0.0
        %1977 = vmatprep.subr.mxu0 0.0
        %1978 = vmatpush1.msra.mxu0 0.0
        %1979 = vmatprep.subr.mxu0 0.0
        %1980 = vmatpush1.msra.mxu0 0.0
        %1981 = vmatprep.subr.mxu0 0.0
        %1982 = vmatpush1.msra.mxu0 0.0
        %1983 = vmatprep.subr.mxu0 0.0
        %1984 = vmatpush1.msra.mxu0 0.0
        %1985 = vmatprep.subr.mxu0 0.0
        %1986 = vmatpush1.msra.mxu0 0.0
        %1987 = vmatprep.subr.mxu0 0.0
        %1988 = vmatpush1.msra.mxu0 0.0
        %1989 = vmatprep.subr.mxu0 0.0
        %1990 = vmatpush1.msra.mxu0 0.0
        %1991 = vmatprep.subr.mxu0 0.0
        %1992 = vmatpush1.msra.mxu0 0.0
        %1993 = vmatprep.subr.mxu0 0.0
        %1994 = vmatpush1.msra.mxu0 0.0
        %1995 = vmatprep.subr.mxu0 0.0
        %1996 = vmatpush1.msra.mxu0 0.0
        %1997 = vmatprep.subr.mxu0 0.0
        %1998 = vmatpush1.msra.mxu0 0.0
        %1999 = vmatprep.subr.mxu0 0.0
        %2000 = vmatpush1.msra.mxu0 0.0
        %2001 = vmatprep.subr.mxu0 0.0
        %2002 = vmatpush1.msra.mxu0 0.0
        %2003 = vmatprep.mubr.f32.mxu0 0.0
        %v2004 = vand.u32 %v1767, 4294901760
        %v2005 = vsub.f32 %v1767, %v2004
        %2006 = vmatmul.mubr.f32.gmra.mrb[0].mxu0 %v2005
        %v2007 = vpop.f32.mrb[0].mxu0
        %v2008 = vadd.f32 %v1931, %v2007
        %v2009 = vpop.f32.mrb[0].mxu0
        %v2010 = vadd.f32 %v1933, %v2009
        %2011 = vdwg.mxu0
        %v2012 = vand.u32 %v1773, 4294901760
        %2013 = vmatprep.subr.mxu0 %v2012
        %v2014 = vand.u32 %v1770, 4294901760
        %2015 = vmatpush1.msra.mxu0 %v2014
        %2016 = vmatprep.subr.mxu0 0.0
        %2017 = vmatpush1.msra.mxu0 0.0
        %2018 = vmatprep.subr.mxu0 0.0
        %2019 = vmatpush1.msra.mxu0 0.0
        %2020 = vmatprep.subr.mxu0 0.0
        %2021 = vmatpush1.msra.mxu0 0.0
        %2022 = vmatprep.subr.mxu0 0.0
        %2023 = vmatpush1.msra.mxu0 0.0
        %2024 = vmatprep.subr.mxu0 0.0
        %2025 = vmatpush1.msra.mxu0 0.0
        %2026 = vmatprep.subr.mxu0 0.0
        %2027 = vmatpush1.msra.mxu0 0.0
        %2028 = vmatprep.subr.mxu0 0.0
        %2029 = vmatpush1.msra.mxu0 0.0
        %2030 = vmatprep.subr.mxu0 0.0
        %2031 = vmatpush1.msra.mxu0 0.0
        %2032 = vmatprep.subr.mxu0 0.0
        %2033 = vmatpush1.msra.mxu0 0.0
        %2034 = vmatprep.subr.mxu0 0.0
        %2035 = vmatpush1.msra.mxu0 0.0
        %2036 = vmatprep.subr.mxu0 0.0
        %2037 = vmatpush1.msra.mxu0 0.0
        %2038 = vmatprep.subr.mxu0 0.0
        %2039 = vmatpush1.msra.mxu0 0.0
        %2040 = vmatprep.subr.mxu0 0.0
        %2041 = vmatpush1.msra.mxu0 0.0
        %2042 = vmatprep.subr.mxu0 0.0
        %2043 = vmatpush1.msra.mxu0 0.0
        %2044 = vmatprep.subr.mxu0 0.0
        %2045 = vmatpush1.msra.mxu0 0.0
        %2046 = vmatprep.subr.mxu0 0.0
        %2047 = vmatpush1.msra.mxu0 0.0
        %2048 = vmatprep.subr.mxu0 0.0
        %2049 = vmatpush1.msra.mxu0 0.0
        %2050 = vmatprep.subr.mxu0 0.0
        %2051 = vmatpush1.msra.mxu0 0.0
        %2052 = vmatprep.subr.mxu0 0.0
        %2053 = vmatpush1.msra.mxu0 0.0
        %2054 = vmatprep.subr.mxu0 0.0
        %2055 = vmatpush1.msra.mxu0 0.0
        %2056 = vmatprep.subr.mxu0 0.0
        %2057 = vmatpush1.msra.mxu0 0.0
        %2058 = vmatprep.subr.mxu0 0.0
        %2059 = vmatpush1.msra.mxu0 0.0
        %2060 = vmatprep.subr.mxu0 0.0
        %2061 = vmatpush1.msra.mxu0 0.0
        %2062 = vmatprep.subr.mxu0 0.0
        %2063 = vmatpush1.msra.mxu0 0.0
        %2064 = vmatprep.subr.mxu0 0.0
        %2065 = vmatpush1.msra.mxu0 0.0
        %2066 = vmatprep.subr.mxu0 0.0
        %2067 = vmatpush1.msra.mxu0 0.0
        %2068 = vmatprep.subr.mxu0 0.0
        %2069 = vmatpush1.msra.mxu0 0.0
        %2070 = vmatprep.subr.mxu0 0.0
        %2071 = vmatpush1.msra.mxu0 0.0
        %2072 = vmatprep.subr.mxu0 0.0
        %2073 = vmatpush1.msra.mxu0 0.0
        %2074 = vmatprep.subr.mxu0 0.0
        %2075 = vmatpush1.msra.mxu0 0.0
        %2076 = vmatprep.subr.mxu0 0.0
        %2077 = vmatpush1.msra.mxu0 0.0
        %2078 = vmatprep.mubr.f32.mxu0 0.0
        %v2079 = vand.u32 %v1767, 4294901760
        %v2080 = vsub.f32 %v1767, %v2079
        %v2081 = vand.u32 %v2080, 4294901760
        %2082 = vmatmul.mubr.f32.gmra.mrb[0].mxu0 %v2081
        %v2083 = vpop.f32.mrb[0].mxu0
        %v2084 = vadd.f32 %v2008, %v2083
        %v2085 = vpop.f32.mrb[0].mxu0
        %v2086 = vadd.f32 %v2010, %v2085
        %2087 = vdwg.mxu0
        %v2088 = vand.u32 %v1773, 4294901760
        %v2089 = vsub.f32 %v1773, %v2088
        %v2090 = vand.u32 %v2089, 4294901760
        %2091 = vmatprep.subr.mxu0 %v2090
        %v2092 = vand.u32 %v1770, 4294901760
        %v2093 = vsub.f32 %v1770, %v2092
        %v2094 = vand.u32 %v2093, 4294901760
        %2095 = vmatpush1.msra.mxu0 %v2094
        %2096 = vmatprep.subr.mxu0 0.0
        %2097 = vmatpush1.msra.mxu0 0.0
        %2098 = vmatprep.subr.mxu0 0.0
        %2099 = vmatpush1.msra.mxu0 0.0
        %2100 = vmatprep.subr.mxu0 0.0
        %2101 = vmatpush1.msra.mxu0 0.0
        %2102 = vmatprep.subr.mxu0 0.0
        %2103 = vmatpush1.msra.mxu0 0.0
        %2104 = vmatprep.subr.mxu0 0.0
        %2105 = vmatpush1.msra.mxu0 0.0
        %2106 = vmatprep.subr.mxu0 0.0
        %2107 = vmatpush1.msra.mxu0 0.0
        %2108 = vmatprep.subr.mxu0 0.0
        %2109 = vmatpush1.msra.mxu0 0.0
        %2110 = vmatprep.subr.mxu0 0.0
        %2111 = vmatpush1.msra.mxu0 0.0
        %2112 = vmatprep.subr.mxu0 0.0
        %2113 = vmatpush1.msra.mxu0 0.0
        %2114 = vmatprep.subr.mxu0 0.0
        %2115 = vmatpush1.msra.mxu0 0.0
        %2116 = vmatprep.subr.mxu0 0.0
        %2117 = vmatpush1.msra.mxu0 0.0
        %2118 = vmatprep.subr.mxu0 0.0
        %2119 = vmatpush1.msra.mxu0 0.0
        %2120 = vmatprep.subr.mxu0 0.0
        %2121 = vmatpush1.msra.mxu0 0.0
        %2122 = vmatprep.subr.mxu0 0.0
        %2123 = vmatpush1.msra.mxu0 0.0
        %2124 = vmatprep.subr.mxu0 0.0
        %2125 = vmatpush1.msra.mxu0 0.0
        %2126 = vmatprep.subr.mxu0 0.0
        %2127 = vmatpush1.msra.mxu0 0.0
        %2128 = vmatprep.subr.mxu0 0.0
        %2129 = vmatpush1.msra.mxu0 0.0
        %2130 = vmatprep.subr.mxu0 0.0
        %2131 = vmatpush1.msra.mxu0 0.0
        %2132 = vmatprep.subr.mxu0 0.0
        %2133 = vmatpush1.msra.mxu0 0.0
        %2134 = vmatprep.subr.mxu0 0.0
        %2135 = vmatpush1.msra.mxu0 0.0
        %2136 = vmatprep.subr.mxu0 0.0
        %2137 = vmatpush1.msra.mxu0 0.0
        %2138 = vmatprep.subr.mxu0 0.0
        %2139 = vmatpush1.msra.mxu0 0.0
        %2140 = vmatprep.subr.mxu0 0.0
        %2141 = vmatpush1.msra.mxu0 0.0
        %2142 = vmatprep.subr.mxu0 0.0
        %2143 = vmatpush1.msra.mxu0 0.0
        %2144 = vmatprep.subr.mxu0 0.0
        %2145 = vmatpush1.msra.mxu0 0.0
        %2146 = vmatprep.subr.mxu0 0.0
        %2147 = vmatpush1.msra.mxu0 0.0
        %2148 = vmatprep.subr.mxu0 0.0
        %2149 = vmatpush1.msra.mxu0 0.0
        %2150 = vmatprep.subr.mxu0 0.0
        %2151 = vmatpush1.msra.mxu0 0.0
        %2152 = vmatprep.subr.mxu0 0.0
        %2153 = vmatpush1.msra.mxu0 0.0
        %2154 = vmatprep.subr.mxu0 0.0
        %2155 = vmatpush1.msra.mxu0 0.0
        %2156 = vmatprep.subr.mxu0 0.0
        %2157 = vmatpush1.msra.mxu0 0.0
        %2158 = vmatprep.mubr.f32.mxu0 0.0
        %v2159 = vand.u32 %v1767, 4294901760
        %2160 = vmatmul.mubr.f32.gmra.mrb[0].mxu0 %v2159
        %v2161 = vpop.f32.mrb[0].mxu0
        %v2162 = vadd.f32 %v2084, %v2161
        %v2163 = vpop.f32.mrb[0].mxu0
        %v2164 = vadd.f32 %v2086, %v2163
        %2165 = vdwg.mxu0
        %v2166 = vand.u32 %v1773, 4294901760
        %2167 = vmatprep.subr.mxu0 %v2166
        %v2168 = vand.u32 %v1770, 4294901760
        %2169 = vmatpush1.msra.mxu0 %v2168
        %2170 = vmatprep.subr.mxu0 0.0
        %2171 = vmatpush1.msra.mxu0 0.0
        %2172 = vmatprep.subr.mxu0 0.0
        %2173 = vmatpush1.msra.mxu0 0.0
        %2174 = vmatprep.subr.mxu0 0.0
        %2175 = vmatpush1.msra.mxu0 0.0
        %2176 = vmatprep.subr.mxu0 0.0
        %2177 = vmatpush1.msra.mxu0 0.0
        %2178 = vmatprep.subr.mxu0 0.0
        %2179 = vmatpush1.msra.mxu0 0.0
        %2180 = vmatprep.subr.mxu0 0.0
        %2181 = vmatpush1.msra.mxu0 0.0
        %2182 = vmatprep.subr.mxu0 0.0
        %2183 = vmatpush1.msra.mxu0 0.0
        %2184 = vmatprep.subr.mxu0 0.0
        %2185 = vmatpush1.msra.mxu0 0.0
        %2186 = vmatprep.subr.mxu0 0.0
        %2187 = vmatpush1.msra.mxu0 0.0
        %2188 = vmatprep.subr.mxu0 0.0
        %2189 = vmatpush1.msra.mxu0 0.0
        %2190 = vmatprep.subr.mxu0 0.0
        %2191 = vmatpush1.msra.mxu0 0.0
        %2192 = vmatprep.subr.mxu0 0.0
        %2193 = vmatpush1.msra.mxu0 0.0
        %2194 = vmatprep.subr.mxu0 0.0
        %2195 = vmatpush1.msra.mxu0 0.0
        %2196 = vmatprep.subr.mxu0 0.0
        %2197 = vmatpush1.msra.mxu0 0.0
        %2198 = vmatprep.subr.mxu0 0.0
        %2199 = vmatpush1.msra.mxu0 0.0
        %2200 = vmatprep.subr.mxu0 0.0
        %2201 = vmatpush1.msra.mxu0 0.0
        %2202 = vmatprep.subr.mxu0 0.0
        %2203 = vmatpush1.msra.mxu0 0.0
        %2204 = vmatprep.subr.mxu0 0.0
        %2205 = vmatpush1.msra.mxu0 0.0
        %2206 = vmatprep.subr.mxu0 0.0
        %2207 = vmatpush1.msra.mxu0 0.0
        %2208 = vmatprep.subr.mxu0 0.0
        %2209 = vmatpush1.msra.mxu0 0.0
        %2210 = vmatprep.subr.mxu0 0.0
        %2211 = vmatpush1.msra.mxu0 0.0
        %2212 = vmatprep.subr.mxu0 0.0
        %2213 = vmatpush1.msra.mxu0 0.0
        %2214 = vmatprep.subr.mxu0 0.0
        %2215 = vmatpush1.msra.mxu0 0.0
        %2216 = vmatprep.subr.mxu0 0.0
        %2217 = vmatpush1.msra.mxu0 0.0
        %2218 = vmatprep.subr.mxu0 0.0
        %2219 = vmatpush1.msra.mxu0 0.0
        %2220 = vmatprep.subr.mxu0 0.0
        %2221 = vmatpush1.msra.mxu0 0.0
        %2222 = vmatprep.subr.mxu0 0.0
        %2223 = vmatpush1.msra.mxu0 0.0
        %2224 = vmatprep.subr.mxu0 0.0
        %2225 = vmatpush1.msra.mxu0 0.0
        %2226 = vmatprep.subr.mxu0 0.0
        %2227 = vmatpush1.msra.mxu0 0.0
        %2228 = vmatprep.subr.mxu0 0.0
        %2229 = vmatpush1.msra.mxu0 0.0
        %2230 = vmatprep.subr.mxu0 0.0
        %2231 = vmatpush1.msra.mxu0 0.0
        %2232 = vmatprep.mubr.f32.mxu0 0.0
        %v2233 = vand.u32 %v1767, 4294901760
        %2234 = vmatmul.mubr.f32.gmra.mrb[0].mxu0 %v2233
        %v2235 = vpop.f32.mrb[0].mxu0
        %v2236 = vadd.f32 %v2162, %v2235
        %v2237 = vpop.f32.mrb[0].mxu0
        %v2238 = vadd.f32 %v2164, %v2237
        %2239 = vdwg.mxu0
        %v2240 = vadd.f32 %v1747, %v2236
        %v2241 = vadd.f32 %v1748, %v2238
        %v2242 = vlaneseq
        %v2243 = vshrl.u32 %v2242, 7
        %v2244 = vsub.s32 4, %v2243
        %v2245 = vrot.slane %v251, %v2244
        %v2246 = vlaneseq
        %v2247 = vshrl.u32 %v2246, 7
        %v2248 = vsub.s32 4, %v2247
        %v2249 = vrot.slane %v252, %v2248
        %v2252 = vcombine.low %v2245, %v2249
        %v2254 = vmul.f32 %v250, %v2252
        %v2256 = vcombine.high %v2254, %v2254
        %v2258 = vsel %vm308, %v257, 0
        %v2260 = vsel %vm311, %v2254, 0
        %v2262 = vsel %vm311, %v2256, 0
        %v2264 = vand.u32 %v2262, 4294901760
        %2265 = vmatprep.subr.mxu0 %v2264
        %v2266 = vand.u32 %v2260, 4294901760
        %2267 = vmatpush1.msra.mxu0 %v2266
        %2268 = vmatprep.subr.mxu0 0.0
        %2269 = vmatpush1.msra.mxu0 0.0
        %2270 = vmatprep.subr.mxu0 0.0
        %2271 = vmatpush1.msra.mxu0 0.0
        %2272 = vmatprep.subr.mxu0 0.0
        %2273 = vmatpush1.msra.mxu0 0.0
        %2274 = vmatprep.subr.mxu0 0.0
        %2275 = vmatpush1.msra.mxu0 0.0
        %2276 = vmatprep.subr.mxu0 0.0
        %2277 = vmatpush1.msra.mxu0 0.0
        %2278 = vmatprep.subr.mxu0 0.0
        %2279 = vmatpush1.msra.mxu0 0.0
        %2280 = vmatprep.subr.mxu0 0.0
        %2281 = vmatpush1.msra.mxu0 0.0
        %2282 = vmatprep.subr.mxu0 0.0
        %2283 = vmatpush1.msra.mxu0 0.0
        %2284 = vmatprep.subr.mxu0 0.0
        %2285 = vmatpush1.msra.mxu0 0.0
        %2286 = vmatprep.subr.mxu0 0.0
        %2287 = vmatpush1.msra.mxu0 0.0
        %2288 = vmatprep.subr.mxu0 0.0
        %2289 = vmatpush1.msra.mxu0 0.0
        %2290 = vmatprep.subr.mxu0 0.0
        %2291 = vmatpush1.msra.mxu0 0.0
        %2292 = vmatprep.subr.mxu0 0.0
        %2293 = vmatpush1.msra.mxu0 0.0
        %2294 = vmatprep.subr.mxu0 0.0
        %2295 = vmatpush1.msra.mxu0 0.0
        %2296 = vmatprep.subr.mxu0 0.0
        %2297 = vmatpush1.msra.mxu0 0.0
        %2298 = vmatprep.subr.mxu0 0.0
        %2299 = vmatpush1.msra.mxu0 0.0
        %2300 = vmatprep.subr.mxu0 0.0
        %2301 = vmatpush1.msra.mxu0 0.0
        %2302 = vmatprep.subr.mxu0 0.0
        %2303 = vmatpush1.msra.mxu0 0.0
        %2304 = vmatprep.subr.mxu0 0.0
        %2305 = vmatpush1.msra.mxu0 0.0
        %2306 = vmatprep.subr.mxu0 0.0
        %2307 = vmatpush1.msra.mxu0 0.0
        %2308 = vmatprep.subr.mxu0 0.0
        %2309 = vmatpush1.msra.mxu0 0.0
        %2310 = vmatprep.subr.mxu0 0.0
        %2311 = vmatpush1.msra.mxu0 0.0
        %2312 = vmatprep.subr.mxu0 0.0
        %2313 = vmatpush1.msra.mxu0 0.0
        %2314 = vmatprep.subr.mxu0 0.0
        %2315 = vmatpush1.msra.mxu0 0.0
        %2316 = vmatprep.subr.mxu0 0.0
        %2317 = vmatpush1.msra.mxu0 0.0
        %2318 = vmatprep.subr.mxu0 0.0
        %2319 = vmatpush1.msra.mxu0 0.0
        %2320 = vmatprep.subr.mxu0 0.0
        %2321 = vmatpush1.msra.mxu0 0.0
        %2322 = vmatprep.subr.mxu0 0.0
        %2323 = vmatpush1.msra.mxu0 0.0
        %2324 = vmatprep.subr.mxu0 0.0
        %2325 = vmatpush1.msra.mxu0 0.0
        %2326 = vmatprep.subr.mxu0 0.0
        %2327 = vmatpush1.msra.mxu0 0.0
        %2328 = vmatprep.subr.mxu0 0.0
        %2329 = vmatpush1.msra.mxu0 0.0
        %2330 = vmatprep.mubr.f32.mxu0 0.0
        %v2331 = vand.u32 %v2258, 4294901760
        %v2332 = vsub.f32 %v2258, %v2331
        %v2333 = vand.u32 %v2332, 4294901760
        %v2334 = vsub.f32 %v2332, %v2333
        %v2335 = vand.u32 %v2334, 4294901760
        %2336 = vmatmul.mubr.f32.gmra.mrb[0].mxu0 %v2335
        %v2337 = vpop.f32.mrb[0].mxu0
        %v2338 = vadd.f32 0.0, %v2337
        %v2339 = vpop.f32.mrb[0].mxu0
        %v2340 = vadd.f32 0.0, %v2339
        %2341 = vdwg.mxu0
        %v2342 = vand.u32 %v2262, 4294901760
        %v2343 = vsub.f32 %v2262, %v2342
        %v2344 = vand.u32 %v2343, 4294901760
        %v2345 = vsub.f32 %v2343, %v2344
        %v2346 = vand.u32 %v2345, 4294901760
        %2347 = vmatprep.subr.mxu0 %v2346
        %v2348 = vand.u32 %v2260, 4294901760
        %v2349 = vsub.f32 %v2260, %v2348
        %v2350 = vand.u32 %v2349, 4294901760
        %v2351 = vsub.f32 %v2349, %v2350
        %v2352 = vand.u32 %v2351, 4294901760
        %2353 = vmatpush1.msra.mxu0 %v2352
        %2354 = vmatprep.subr.mxu0 0.0
        %2355 = vmatpush1.msra.mxu0 0.0
        %2356 = vmatprep.subr.mxu0 0.0
        %2357 = vmatpush1.msra.mxu0 0.0
        %2358 = vmatprep.subr.mxu0 0.0
        %2359 = vmatpush1.msra.mxu0 0.0
        %2360 = vmatprep.subr.mxu0 0.0
        %2361 = vmatpush1.msra.mxu0 0.0
        %2362 = vmatprep.subr.mxu0 0.0
        %2363 = vmatpush1.msra.mxu0 0.0
        %2364 = vmatprep.subr.mxu0 0.0
        %2365 = vmatpush1.msra.mxu0 0.0
        %2366 = vmatprep.subr.mxu0 0.0
        %2367 = vmatpush1.msra.mxu0 0.0
        %2368 = vmatprep.subr.mxu0 0.0
        %2369 = vmatpush1.msra.mxu0 0.0
        %2370 = vmatprep.subr.mxu0 0.0
        %2371 = vmatpush1.msra.mxu0 0.0
        %2372 = vmatprep.subr.mxu0 0.0
        %2373 = vmatpush1.msra.mxu0 0.0
        %2374 = vmatprep.subr.mxu0 0.0
        %2375 = vmatpush1.msra.mxu0 0.0
        %2376 = vmatprep.subr.mxu0 0.0
        %2377 = vmatpush1.msra.mxu0 0.0
        %2378 = vmatprep.subr.mxu0 0.0
        %2379 = vmatpush1.msra.mxu0 0.0
        %2380 = vmatprep.subr.mxu0 0.0
        %2381 = vmatpush1.msra.mxu0 0.0
        %2382 = vmatprep.subr.mxu0 0.0
        %2383 = vmatpush1.msra.mxu0 0.0
        %2384 = vmatprep.subr.mxu0 0.0
        %2385 = vmatpush1.msra.mxu0 0.0
        %2386 = vmatprep.subr.mxu0 0.0
        %2387 = vmatpush1.msra.mxu0 0.0
        %2388 = vmatprep.subr.mxu0 0.0
        %2389 = vmatpush1.msra.mxu0 0.0
        %2390 = vmatprep.subr.mxu0 0.0
        %2391 = vmatpush1.msra.mxu0 0.0
        %2392 = vmatprep.subr.mxu0 0.0
        %2393 = vmatpush1.msra.mxu0 0.0
        %2394 = vmatprep.subr.mxu0 0.0
        %2395 = vmatpush1.msra.mxu0 0.0
        %2396 = vmatprep.subr.mxu0 0.0
        %2397 = vmatpush1.msra.mxu0 0.0
        %2398 = vmatprep.subr.mxu0 0.0
        %2399 = vmatpush1.msra.mxu0 0.0
        %2400 = vmatprep.subr.mxu0 0.0
        %2401 = vmatpush1.msra.mxu0 0.0
        %2402 = vmatprep.subr.mxu0 0.0
        %2403 = vmatpush1.msra.mxu0 0.0
        %2404 = vmatprep.subr.mxu0 0.0
        %2405 = vmatpush1.msra.mxu0 0.0
        %2406 = vmatprep.subr.mxu0 0.0
        %2407 = vmatpush1.msra.mxu0 0.0
        %2408 = vmatprep.subr.mxu0 0.0
        %2409 = vmatpush1.msra.mxu0 0.0
        %2410 = vmatprep.subr.mxu0 0.0
        %2411 = vmatpush1.msra.mxu0 0.0
        %2412 = vmatprep.subr.mxu0 0.0
        %2413 = vmatpush1.msra.mxu0 0.0
        %2414 = vmatprep.subr.mxu0 0.0
        %2415 = vmatpush1.msra.mxu0 0.0
        %2416 = vmatprep.mubr.f32.mxu0 0.0
        %v2417 = vand.u32 %v2258, 4294901760
        %2418 = vmatmul.mubr.f32.gmra.mrb[0].mxu0 %v2417
        %v2419 = vpop.f32.mrb[0].mxu0
        %v2420 = vadd.f32 %v2338, %v2419
        %v2421 = vpop.f32.mrb[0].mxu0
        %v2422 = vadd.f32 %v2340, %v2421
        %2423 = vdwg.mxu0
        %v2424 = vand.u32 %v2262, 4294901760
        %v2425 = vsub.f32 %v2262, %v2424
        %2426 = vmatprep.subr.mxu0 %v2425
        %v2427 = vand.u32 %v2260, 4294901760
        %v2428 = vsub.f32 %v2260, %v2427
        %2429 = vmatpush1.msra.mxu0 %v2428
        %2430 = vmatprep.subr.mxu0 0.0
        %2431 = vmatpush1.msra.mxu0 0.0
        %2432 = vmatprep.subr.mxu0 0.0
        %2433 = vmatpush1.msra.mxu0 0.0
        %2434 = vmatprep.subr.mxu0 0.0
        %2435 = vmatpush1.msra.mxu0 0.0
        %2436 = vmatprep.subr.mxu0 0.0
        %2437 = vmatpush1.msra.mxu0 0.0
        %2438 = vmatprep.subr.mxu0 0.0
        %2439 = vmatpush1.msra.mxu0 0.0
        %2440 = vmatprep.subr.mxu0 0.0
        %2441 = vmatpush1.msra.mxu0 0.0
        %2442 = vmatprep.subr.mxu0 0.0
        %2443 = vmatpush1.msra.mxu0 0.0
        %2444 = vmatprep.subr.mxu0 0.0
        %2445 = vmatpush1.msra.mxu0 0.0
        %2446 = vmatprep.subr.mxu0 0.0
        %2447 = vmatpush1.msra.mxu0 0.0
        %2448 = vmatprep.subr.mxu0 0.0
        %2449 = vmatpush1.msra.mxu0 0.0
        %2450 = vmatprep.subr.mxu0 0.0
        %2451 = vmatpush1.msra.mxu0 0.0
        %2452 = vmatprep.subr.mxu0 0.0
        %2453 = vmatpush1.msra.mxu0 0.0
        %2454 = vmatprep.subr.mxu0 0.0
        %2455 = vmatpush1.msra.mxu0 0.0
        %2456 = vmatprep.subr.mxu0 0.0
        %2457 = vmatpush1.msra.mxu0 0.0
        %2458 = vmatprep.subr.mxu0 0.0
        %2459 = vmatpush1.msra.mxu0 0.0
        %2460 = vmatprep.subr.mxu0 0.0
        %2461 = vmatpush1.msra.mxu0 0.0
        %2462 = vmatprep.subr.mxu0 0.0
        %2463 = vmatpush1.msra.mxu0 0.0
        %2464 = vmatprep.subr.mxu0 0.0
        %2465 = vmatpush1.msra.mxu0 0.0
        %2466 = vmatprep.subr.mxu0 0.0
        %2467 = vmatpush1.msra.mxu0 0.0
        %2468 = vmatprep.subr.mxu0 0.0
        %2469 = vmatpush1.msra.mxu0 0.0
        %2470 = vmatprep.subr.mxu0 0.0
        %2471 = vmatpush1.msra.mxu0 0.0
        %2472 = vmatprep.subr.mxu0 0.0
        %2473 = vmatpush1.msra.mxu0 0.0
        %2474 = vmatprep.subr.mxu0 0.0
        %2475 = vmatpush1.msra.mxu0 0.0
        %2476 = vmatprep.subr.mxu0 0.0
        %2477 = vmatpush1.msra.mxu0 0.0
        %2478 = vmatprep.subr.mxu0 0.0
        %2479 = vmatpush1.msra.mxu0 0.0
        %2480 = vmatprep.subr.mxu0 0.0
        %2481 = vmatpush1.msra.mxu0 0.0
        %2482 = vmatprep.subr.mxu0 0.0
        %2483 = vmatpush1.msra.mxu0 0.0
        %2484 = vmatprep.subr.mxu0 0.0
        %2485 = vmatpush1.msra.mxu0 0.0
        %2486 = vmatprep.subr.mxu0 0.0
        %2487 = vmatpush1.msra.mxu0 0.0
        %2488 = vmatprep.subr.mxu0 0.0
        %2489 = vmatpush1.msra.mxu0 0.0
        %2490 = vmatprep.subr.mxu0 0.0
        %2491 = vmatpush1.msra.mxu0 0.0
        %2492 = vmatprep.mubr.f32.mxu0 0.0
        %v2493 = vand.u32 %v2258, 4294901760
        %v2494 = vsub.f32 %v2258, %v2493
        %2495 = vmatmul.mubr.f32.gmra.mrb[0].mxu0 %v2494
        %v2496 = vpop.f32.mrb[0].mxu0
        %v2497 = vadd.f32 %v2420, %v2496
        %v2498 = vpop.f32.mrb[0].mxu0
        %v2499 = vadd.f32 %v2422, %v2498
        %2500 = vdwg.mxu0
        %v2501 = vand.u32 %v2262, 4294901760
        %2502 = vmatprep.subr.mxu0 %v2501
        %v2503 = vand.u32 %v2260, 4294901760
        %2504 = vmatpush1.msra.mxu0 %v2503
        %2505 = vmatprep.subr.mxu0 0.0
        %2506 = vmatpush1.msra.mxu0 0.0
        %2507 = vmatprep.subr.mxu0 0.0
        %2508 = vmatpush1.msra.mxu0 0.0
        %2509 = vmatprep.subr.mxu0 0.0
        %2510 = vmatpush1.msra.mxu0 0.0
        %2511 = vmatprep.subr.mxu0 0.0
        %2512 = vmatpush1.msra.mxu0 0.0
        %2513 = vmatprep.subr.mxu0 0.0
        %2514 = vmatpush1.msra.mxu0 0.0
        %2515 = vmatprep.subr.mxu0 0.0
        %2516 = vmatpush1.msra.mxu0 0.0
        %2517 = vmatprep.subr.mxu0 0.0
        %2518 = vmatpush1.msra.mxu0 0.0
        %2519 = vmatprep.subr.mxu0 0.0
        %2520 = vmatpush1.msra.mxu0 0.0
        %2521 = vmatprep.subr.mxu0 0.0
        %2522 = vmatpush1.msra.mxu0 0.0
        %2523 = vmatprep.subr.mxu0 0.0
        %2524 = vmatpush1.msra.mxu0 0.0
        %2525 = vmatprep.subr.mxu0 0.0
        %2526 = vmatpush1.msra.mxu0 0.0
        %2527 = vmatprep.subr.mxu0 0.0
        %2528 = vmatpush1.msra.mxu0 0.0
        %2529 = vmatprep.subr.mxu0 0.0
        %2530 = vmatpush1.msra.mxu0 0.0
        %2531 = vmatprep.subr.mxu0 0.0
        %2532 = vmatpush1.msra.mxu0 0.0
        %2533 = vmatprep.subr.mxu0 0.0
        %2534 = vmatpush1.msra.mxu0 0.0
        %2535 = vmatprep.subr.mxu0 0.0
        %2536 = vmatpush1.msra.mxu0 0.0
        %2537 = vmatprep.subr.mxu0 0.0
        %2538 = vmatpush1.msra.mxu0 0.0
        %2539 = vmatprep.subr.mxu0 0.0
        %2540 = vmatpush1.msra.mxu0 0.0
        %2541 = vmatprep.subr.mxu0 0.0
        %2542 = vmatpush1.msra.mxu0 0.0
        %2543 = vmatprep.subr.mxu0 0.0
        %2544 = vmatpush1.msra.mxu0 0.0
        %2545 = vmatprep.subr.mxu0 0.0
        %2546 = vmatpush1.msra.mxu0 0.0
        %2547 = vmatprep.subr.mxu0 0.0
        %2548 = vmatpush1.msra.mxu0 0.0
        %2549 = vmatprep.subr.mxu0 0.0
        %2550 = vmatpush1.msra.mxu0 0.0
        %2551 = vmatprep.subr.mxu0 0.0
        %2552 = vmatpush1.msra.mxu0 0.0
        %2553 = vmatprep.subr.mxu0 0.0
        %2554 = vmatpush1.msra.mxu0 0.0
        %2555 = vmatprep.subr.mxu0 0.0
        %2556 = vmatpush1.msra.mxu0 0.0
        %2557 = vmatprep.subr.mxu0 0.0
        %2558 = vmatpush1.msra.mxu0 0.0
        %2559 = vmatprep.subr.mxu0 0.0
        %2560 = vmatpush1.msra.mxu0 0.0
        %2561 = vmatprep.subr.mxu0 0.0
        %2562 = vmatpush1.msra.mxu0 0.0
        %2563 = vmatprep.subr.mxu0 0.0
        %2564 = vmatpush1.msra.mxu0 0.0
        %2565 = vmatprep.subr.mxu0 0.0
        %2566 = vmatpush1.msra.mxu0 0.0
        %2567 = vmatprep.mubr.f32.mxu0 0.0
        %v2568 = vand.u32 %v2258, 4294901760
        %v2569 = vsub.f32 %v2258, %v2568
        %v2570 = vand.u32 %v2569, 4294901760
        %2571 = vmatmul.mubr.f32.gmra.mrb[0].mxu0 %v2570
        %v2572 = vpop.f32.mrb[0].mxu0
        %v2573 = vadd.f32 %v2497, %v2572
        %v2574 = vpop.f32.mrb[0].mxu0
        %v2575 = vadd.f32 %v2499, %v2574
        %2576 = vdwg.mxu0
        %v2577 = vand.u32 %v2262, 4294901760
        %v2578 = vsub.f32 %v2262, %v2577
        %v2579 = vand.u32 %v2578, 4294901760
        %2580 = vmatprep.subr.mxu0 %v2579
        %v2581 = vand.u32 %v2260, 4294901760
        %v2582 = vsub.f32 %v2260, %v2581
        %v2583 = vand.u32 %v2582, 4294901760
        %2584 = vmatpush1.msra.mxu0 %v2583
        %2585 = vmatprep.subr.mxu0 0.0
        %2586 = vmatpush1.msra.mxu0 0.0
        %2587 = vmatprep.subr.mxu0 0.0
        %2588 = vmatpush1.msra.mxu0 0.0
        %2589 = vmatprep.subr.mxu0 0.0
        %2590 = vmatpush1.msra.mxu0 0.0
        %2591 = vmatprep.subr.mxu0 0.0
        %2592 = vmatpush1.msra.mxu0 0.0
        %2593 = vmatprep.subr.mxu0 0.0
        %2594 = vmatpush1.msra.mxu0 0.0
        %2595 = vmatprep.subr.mxu0 0.0
        %2596 = vmatpush1.msra.mxu0 0.0
        %2597 = vmatprep.subr.mxu0 0.0
        %2598 = vmatpush1.msra.mxu0 0.0
        %2599 = vmatprep.subr.mxu0 0.0
        %2600 = vmatpush1.msra.mxu0 0.0
        %2601 = vmatprep.subr.mxu0 0.0
        %2602 = vmatpush1.msra.mxu0 0.0
        %2603 = vmatprep.subr.mxu0 0.0
        %2604 = vmatpush1.msra.mxu0 0.0
        %2605 = vmatprep.subr.mxu0 0.0
        %2606 = vmatpush1.msra.mxu0 0.0
        %2607 = vmatprep.subr.mxu0 0.0
        %2608 = vmatpush1.msra.mxu0 0.0
        %2609 = vmatprep.subr.mxu0 0.0
        %2610 = vmatpush1.msra.mxu0 0.0
        %2611 = vmatprep.subr.mxu0 0.0
        %2612 = vmatpush1.msra.mxu0 0.0
        %2613 = vmatprep.subr.mxu0 0.0
        %2614 = vmatpush1.msra.mxu0 0.0
        %2615 = vmatprep.subr.mxu0 0.0
        %2616 = vmatpush1.msra.mxu0 0.0
        %2617 = vmatprep.subr.mxu0 0.0
        %2618 = vmatpush1.msra.mxu0 0.0
        %2619 = vmatprep.subr.mxu0 0.0
        %2620 = vmatpush1.msra.mxu0 0.0
        %2621 = vmatprep.subr.mxu0 0.0
        %2622 = vmatpush1.msra.mxu0 0.0
        %2623 = vmatprep.subr.mxu0 0.0
        %2624 = vmatpush1.msra.mxu0 0.0
        %2625 = vmatprep.subr.mxu0 0.0
        %2626 = vmatpush1.msra.mxu0 0.0
        %2627 = vmatprep.subr.mxu0 0.0
        %2628 = vmatpush1.msra.mxu0 0.0
        %2629 = vmatprep.subr.mxu0 0.0
        %2630 = vmatpush1.msra.mxu0 0.0
        %2631 = vmatprep.subr.mxu0 0.0
        %2632 = vmatpush1.msra.mxu0 0.0
        %2633 = vmatprep.subr.mxu0 0.0
        %2634 = vmatpush1.msra.mxu0 0.0
        %2635 = vmatprep.subr.mxu0 0.0
        %2636 = vmatpush1.msra.mxu0 0.0
        %2637 = vmatprep.subr.mxu0 0.0
        %2638 = vmatpush1.msra.mxu0 0.0
        %2639 = vmatprep.subr.mxu0 0.0
        %2640 = vmatpush1.msra.mxu0 0.0
        %2641 = vmatprep.subr.mxu0 0.0
        %2642 = vmatpush1.msra.mxu0 0.0
        %2643 = vmatprep.subr.mxu0 0.0
        %2644 = vmatpush1.msra.mxu0 0.0
        %2645 = vmatprep.subr.mxu0 0.0
        %2646 = vmatpush1.msra.mxu0 0.0
        %2647 = vmatprep.mubr.f32.mxu0 0.0
        %v2648 = vand.u32 %v2258, 4294901760
        %2649 = vmatmul.mubr.f32.gmra.mrb[0].mxu0 %v2648
        %v2650 = vpop.f32.mrb[0].mxu0
        %v2651 = vadd.f32 %v2573, %v2650
        %v2652 = vpop.f32.mrb[0].mxu0
        %v2653 = vadd.f32 %v2575, %v2652
        %2654 = vdwg.mxu0
        %v2655 = vand.u32 %v2262, 4294901760
        %2656 = vmatprep.subr.mxu0 %v2655
        %v2657 = vand.u32 %v2260, 4294901760
        %2658 = vmatpush1.msra.mxu0 %v2657
        %2659 = vmatprep.subr.mxu0 0.0
        %2660 = vmatpush1.msra.mxu0 0.0
        %2661 = vmatprep.subr.mxu0 0.0
        %2662 = vmatpush1.msra.mxu0 0.0
        %2663 = vmatprep.subr.mxu0 0.0
        %2664 = vmatpush1.msra.mxu0 0.0
        %2665 = vmatprep.subr.mxu0 0.0
        %2666 = vmatpush1.msra.mxu0 0.0
        %2667 = vmatprep.subr.mxu0 0.0
        %2668 = vmatpush1.msra.mxu0 0.0
        %2669 = vmatprep.subr.mxu0 0.0
        %2670 = vmatpush1.msra.mxu0 0.0
        %2671 = vmatprep.subr.mxu0 0.0
        %2672 = vmatpush1.msra.mxu0 0.0
        %2673 = vmatprep.subr.mxu0 0.0
        %2674 = vmatpush1.msra.mxu0 0.0
        %2675 = vmatprep.subr.mxu0 0.0
        %2676 = vmatpush1.msra.mxu0 0.0
        %2677 = vmatprep.subr.mxu0 0.0
        %2678 = vmatpush1.msra.mxu0 0.0
        %2679 = vmatprep.subr.mxu0 0.0
        %2680 = vmatpush1.msra.mxu0 0.0
        %2681 = vmatprep.subr.mxu0 0.0
        %2682 = vmatpush1.msra.mxu0 0.0
        %2683 = vmatprep.subr.mxu0 0.0
        %2684 = vmatpush1.msra.mxu0 0.0
        %2685 = vmatprep.subr.mxu0 0.0
        %2686 = vmatpush1.msra.mxu0 0.0
        %2687 = vmatprep.subr.mxu0 0.0
        %2688 = vmatpush1.msra.mxu0 0.0
        %2689 = vmatprep.subr.mxu0 0.0
        %2690 = vmatpush1.msra.mxu0 0.0
        %2691 = vmatprep.subr.mxu0 0.0
        %2692 = vmatpush1.msra.mxu0 0.0
        %2693 = vmatprep.subr.mxu0 0.0
        %2694 = vmatpush1.msra.mxu0 0.0
        %2695 = vmatprep.subr.mxu0 0.0
        %2696 = vmatpush1.msra.mxu0 0.0
        %2697 = vmatprep.subr.mxu0 0.0
        %2698 = vmatpush1.msra.mxu0 0.0
        %2699 = vmatprep.subr.mxu0 0.0
        %2700 = vmatpush1.msra.mxu0 0.0
        %2701 = vmatprep.subr.mxu0 0.0
        %2702 = vmatpush1.msra.mxu0 0.0
        %2703 = vmatprep.subr.mxu0 0.0
        %2704 = vmatpush1.msra.mxu0 0.0
        %2705 = vmatprep.subr.mxu0 0.0
        %2706 = vmatpush1.msra.mxu0 0.0
        %2707 = vmatprep.subr.mxu0 0.0
        %2708 = vmatpush1.msra.mxu0 0.0
        %2709 = vmatprep.subr.mxu0 0.0
        %2710 = vmatpush1.msra.mxu0 0.0
        %2711 = vmatprep.subr.mxu0 0.0
        %2712 = vmatpush1.msra.mxu0 0.0
        %2713 = vmatprep.subr.mxu0 0.0
        %2714 = vmatpush1.msra.mxu0 0.0
        %2715 = vmatprep.subr.mxu0 0.0
        %2716 = vmatpush1.msra.mxu0 0.0
        %2717 = vmatprep.subr.mxu0 0.0
        %2718 = vmatpush1.msra.mxu0 0.0
        %2719 = vmatprep.subr.mxu0 0.0
        %2720 = vmatpush1.msra.mxu0 0.0
        %2721 = vmatprep.mubr.f32.mxu0 0.0
        %v2722 = vand.u32 %v2258, 4294901760
        %2723 = vmatmul.mubr.f32.gmra.mrb[0].mxu0 %v2722
        %v2724 = vpop.f32.mrb[0].mxu0
        %v2725 = vadd.f32 %v2651, %v2724
        %v2726 = vpop.f32.mrb[0].mxu0
        %v2727 = vadd.f32 %v2653, %v2726
        %2728 = vdwg.mxu0
        %v2729 = vadd.f32 %v2240, %v2725
        %v2730 = vadd.f32 %v2241, %v2727
        %2731 = vrot.lane.b32.xlu0 %v250, 127
        %v2732 = vpop.permute.xlu0 %2731
        %2733 = vrot.lane.b32.xlu0 %v268, 127
        %v2734 = vpop.permute.xlu0 %2733
        %vm2735 = vcmp.lt.s32.totalorder %v275, 127
        %v2736 = vsel %vm2735, %v2732, %v2734
        %v2737 = vsel %vm2735, %v2734, %v2732
        %v2738 = vlaneseq
        %v2739 = vshrl.u32 %v2738, 7
        %v2740 = vsub.s32 5, %v2739
        %v2741 = vrot.slane %v251, %v2740
        %v2742 = vlaneseq
        %v2743 = vshrl.u32 %v2742, 7
        %v2744 = vsub.s32 5, %v2743
        %v2745 = vrot.slane %v252, %v2744
        %v2746 = vmul.f32 %v2736, %v2741
        %v2747 = vmul.f32 %v2737, %v2745
        %v2748 = vrot.slane %v257, 4
        %v2749 = vsel %vm308, %v2748, 0
        %v2752 = vsel %vm311, %v2746, 0
        %v2755 = vsel %vm311, %v2747, 0
        %v2757 = vand.u32 %v2755, 4294901760
        %2758 = vmatprep.subr.mxu0 %v2757
        %v2759 = vand.u32 %v2752, 4294901760
        %2760 = vmatpush1.msra.mxu0 %v2759
        %2761 = vmatprep.subr.mxu0 0.0
        %2762 = vmatpush1.msra.mxu0 0.0
        %2763 = vmatprep.subr.mxu0 0.0
        %2764 = vmatpush1.msra.mxu0 0.0
        %2765 = vmatprep.subr.mxu0 0.0
        %2766 = vmatpush1.msra.mxu0 0.0
        %2767 = vmatprep.subr.mxu0 0.0
        %2768 = vmatpush1.msra.mxu0 0.0
        %2769 = vmatprep.subr.mxu0 0.0
        %2770 = vmatpush1.msra.mxu0 0.0
        %2771 = vmatprep.subr.mxu0 0.0
        %2772 = vmatpush1.msra.mxu0 0.0
        %2773 = vmatprep.subr.mxu0 0.0
        %2774 = vmatpush1.msra.mxu0 0.0
        %2775 = vmatprep.subr.mxu0 0.0
        %2776 = vmatpush1.msra.mxu0 0.0
        %2777 = vmatprep.subr.mxu0 0.0
        %2778 = vmatpush1.msra.mxu0 0.0
        %2779 = vmatprep.subr.mxu0 0.0
        %2780 = vmatpush1.msra.mxu0 0.0
        %2781 = vmatprep.subr.mxu0 0.0
        %2782 = vmatpush1.msra.mxu0 0.0
        %2783 = vmatprep.subr.mxu0 0.0
        %2784 = vmatpush1.msra.mxu0 0.0
        %2785 = vmatprep.subr.mxu0 0.0
        %2786 = vmatpush1.msra.mxu0 0.0
        %2787 = vmatprep.subr.mxu0 0.0
        %2788 = vmatpush1.msra.mxu0 0.0
        %2789 = vmatprep.subr.mxu0 0.0
        %2790 = vmatpush1.msra.mxu0 0.0
        %2791 = vmatprep.subr.mxu0 0.0
        %2792 = vmatpush1.msra.mxu0 0.0
        %2793 = vmatprep.subr.mxu0 0.0
        %2794 = vmatpush1.msra.mxu0 0.0
        %2795 = vmatprep.subr.mxu0 0.0
        %2796 = vmatpush1.msra.mxu0 0.0
        %2797 = vmatprep.subr.mxu0 0.0
        %2798 = vmatpush1.msra.mxu0 0.0
        %2799 = vmatprep.subr.mxu0 0.0
        %2800 = vmatpush1.msra.mxu0 0.0
        %2801 = vmatprep.subr.mxu0 0.0
        %2802 = vmatpush1.msra.mxu0 0.0
        %2803 = vmatprep.subr.mxu0 0.0
        %2804 = vmatpush1.msra.mxu0 0.0
        %2805 = vmatprep.subr.mxu0 0.0
        %2806 = vmatpush1.msra.mxu0 0.0
        %2807 = vmatprep.subr.mxu0 0.0
        %2808 = vmatpush1.msra.mxu0 0.0
        %2809 = vmatprep.subr.mxu0 0.0
        %2810 = vmatpush1.msra.mxu0 0.0
        %2811 = vmatprep.subr.mxu0 0.0
        %2812 = vmatpush1.msra.mxu0 0.0
        %2813 = vmatprep.subr.mxu0 0.0
        %2814 = vmatpush1.msra.mxu0 0.0
        %2815 = vmatprep.subr.mxu0 0.0
        %2816 = vmatpush1.msra.mxu0 0.0
        %2817 = vmatprep.subr.mxu0 0.0
        %2818 = vmatpush1.msra.mxu0 0.0
        %2819 = vmatprep.subr.mxu0 0.0
        %2820 = vmatpush1.msra.mxu0 0.0
        %2821 = vmatprep.subr.mxu0 0.0
        %2822 = vmatpush1.msra.mxu0 0.0
        %2823 = vmatprep.mubr.f32.mxu0 0.0
        %v2824 = vand.u32 %v2749, 4294901760
        %v2825 = vsub.f32 %v2749, %v2824
        %v2826 = vand.u32 %v2825, 4294901760
        %v2827 = vsub.f32 %v2825, %v2826
        %v2828 = vand.u32 %v2827, 4294901760
        %2829 = vmatmul.mubr.f32.gmra.mrb[0].mxu0 %v2828
        %v2830 = vpop.f32.mrb[0].mxu0
        %v2831 = vadd.f32 0.0, %v2830
        %v2832 = vpop.f32.mrb[0].mxu0
        %v2833 = vadd.f32 0.0, %v2832
        %2834 = vdwg.mxu0
        %v2835 = vand.u32 %v2755, 4294901760
        %v2836 = vsub.f32 %v2755, %v2835
        %v2837 = vand.u32 %v2836, 4294901760
        %v2838 = vsub.f32 %v2836, %v2837
        %v2839 = vand.u32 %v2838, 4294901760
        %2840 = vmatprep.subr.mxu0 %v2839
        %v2841 = vand.u32 %v2752, 4294901760
        %v2842 = vsub.f32 %v2752, %v2841
        %v2843 = vand.u32 %v2842, 4294901760
        %v2844 = vsub.f32 %v2842, %v2843
        %v2845 = vand.u32 %v2844, 4294901760
        %2846 = vmatpush1.msra.mxu0 %v2845
        %2847 = vmatprep.subr.mxu0 0.0
        %2848 = vmatpush1.msra.mxu0 0.0
        %2849 = vmatprep.subr.mxu0 0.0
        %2850 = vmatpush1.msra.mxu0 0.0
        %2851 = vmatprep.subr.mxu0 0.0
        %2852 = vmatpush1.msra.mxu0 0.0
        %2853 = vmatprep.subr.mxu0 0.0
        %2854 = vmatpush1.msra.mxu0 0.0
        %2855 = vmatprep.subr.mxu0 0.0
        %2856 = vmatpush1.msra.mxu0 0.0
        %2857 = vmatprep.subr.mxu0 0.0
        %2858 = vmatpush1.msra.mxu0 0.0
        %2859 = vmatprep.subr.mxu0 0.0
        %2860 = vmatpush1.msra.mxu0 0.0
        %2861 = vmatprep.subr.mxu0 0.0
        %2862 = vmatpush1.msra.mxu0 0.0
        %2863 = vmatprep.subr.mxu0 0.0
        %2864 = vmatpush1.msra.mxu0 0.0
        %2865 = vmatprep.subr.mxu0 0.0
        %2866 = vmatpush1.msra.mxu0 0.0
        %2867 = vmatprep.subr.mxu0 0.0
        %2868 = vmatpush1.msra.mxu0 0.0
        %2869 = vmatprep.subr.mxu0 0.0
        %2870 = vmatpush1.msra.mxu0 0.0
        %2871 = vmatprep.subr.mxu0 0.0
        %2872 = vmatpush1.msra.mxu0 0.0
        %2873 = vmatprep.subr.mxu0 0.0
        %2874 = vmatpush1.msra.mxu0 0.0
        %2875 = vmatprep.subr.mxu0 0.0
        %2876 = vmatpush1.msra.mxu0 0.0
        %2877 = vmatprep.subr.mxu0 0.0
        %2878 = vmatpush1.msra.mxu0 0.0
        %2879 = vmatprep.subr.mxu0 0.0
        %2880 = vmatpush1.msra.mxu0 0.0
        %2881 = vmatprep.subr.mxu0 0.0
        %2882 = vmatpush1.msra.mxu0 0.0
        %2883 = vmatprep.subr.mxu0 0.0
        %2884 = vmatpush1.msra.mxu0 0.0
        %2885 = vmatprep.subr.mxu0 0.0
        %2886 = vmatpush1.msra.mxu0 0.0
        %2887 = vmatprep.subr.mxu0 0.0
        %2888 = vmatpush1.msra.mxu0 0.0
        %2889 = vmatprep.subr.mxu0 0.0
        %2890 = vmatpush1.msra.mxu0 0.0
        %2891 = vmatprep.subr.mxu0 0.0
        %2892 = vmatpush1.msra.mxu0 0.0
        %2893 = vmatprep.subr.mxu0 0.0
        %2894 = vmatpush1.msra.mxu0 0.0
        %2895 = vmatprep.subr.mxu0 0.0
        %2896 = vmatpush1.msra.mxu0 0.0
        %2897 = vmatprep.subr.mxu0 0.0
        %2898 = vmatpush1.msra.mxu0 0.0
        %2899 = vmatprep.subr.mxu0 0.0
        %2900 = vmatpush1.msra.mxu0 0.0
        %2901 = vmatprep.subr.mxu0 0.0
        %2902 = vmatpush1.msra.mxu0 0.0
        %2903 = vmatprep.subr.mxu0 0.0
        %2904 = vmatpush1.msra.mxu0 0.0
        %2905 = vmatprep.subr.mxu0 0.0
        %2906 = vmatpush1.msra.mxu0 0.0
        %2907 = vmatprep.subr.mxu0 0.0
        %2908 = vmatpush1.msra.mxu0 0.0
        %2909 = vmatprep.mubr.f32.mxu0 0.0
        %v2910 = vand.u32 %v2749, 4294901760
        %2911 = vmatmul.mubr.f32.gmra.mrb[0].mxu0 %v2910
        %v2912 = vpop.f32.mrb[0].mxu0
        %v2913 = vadd.f32 %v2831, %v2912
        %v2914 = vpop.f32.mrb[0].mxu0
        %v2915 = vadd.f32 %v2833, %v2914
        %2916 = vdwg.mxu0
        %v2917 = vand.u32 %v2755, 4294901760
        %v2918 = vsub.f32 %v2755, %v2917
        %2919 = vmatprep.subr.mxu0 %v2918
        %v2920 = vand.u32 %v2752, 4294901760
        %v2921 = vsub.f32 %v2752, %v2920
        %2922 = vmatpush1.msra.mxu0 %v2921
        %2923 = vmatprep.subr.mxu0 0.0
        %2924 = vmatpush1.msra.mxu0 0.0
        %2925 = vmatprep.subr.mxu0 0.0
        %2926 = vmatpush1.msra.mxu0 0.0
        %2927 = vmatprep.subr.mxu0 0.0
        %2928 = vmatpush1.msra.mxu0 0.0
        %2929 = vmatprep.subr.mxu0 0.0
        %2930 = vmatpush1.msra.mxu0 0.0
        %2931 = vmatprep.subr.mxu0 0.0
        %2932 = vmatpush1.msra.mxu0 0.0
        %2933 = vmatprep.subr.mxu0 0.0
        %2934 = vmatpush1.msra.mxu0 0.0
        %2935 = vmatprep.subr.mxu0 0.0
        %2936 = vmatpush1.msra.mxu0 0.0
        %2937 = vmatprep.subr.mxu0 0.0
        %2938 = vmatpush1.msra.mxu0 0.0
        %2939 = vmatprep.subr.mxu0 0.0
        %2940 = vmatpush1.msra.mxu0 0.0
        %2941 = vmatprep.subr.mxu0 0.0
        %2942 = vmatpush1.msra.mxu0 0.0
        %2943 = vmatprep.subr.mxu0 0.0
        %2944 = vmatpush1.msra.mxu0 0.0
        %2945 = vmatprep.subr.mxu0 0.0
        %2946 = vmatpush1.msra.mxu0 0.0
        %2947 = vmatprep.subr.mxu0 0.0
        %2948 = vmatpush1.msra.mxu0 0.0
        %2949 = vmatprep.subr.mxu0 0.0
        %2950 = vmatpush1.msra.mxu0 0.0
        %2951 = vmatprep.subr.mxu0 0.0
        %2952 = vmatpush1.msra.mxu0 0.0
        %2953 = vmatprep.subr.mxu0 0.0
        %2954 = vmatpush1.msra.mxu0 0.0
        %2955 = vmatprep.subr.mxu0 0.0
        %2956 = vmatpush1.msra.mxu0 0.0
        %2957 = vmatprep.subr.mxu0 0.0
        %2958 = vmatpush1.msra.mxu0 0.0
        %2959 = vmatprep.subr.mxu0 0.0
        %2960 = vmatpush1.msra.mxu0 0.0
        %2961 = vmatprep.subr.mxu0 0.0
        %2962 = vmatpush1.msra.mxu0 0.0
        %2963 = vmatprep.subr.mxu0 0.0
        %2964 = vmatpush1.msra.mxu0 0.0
        %2965 = vmatprep.subr.mxu0 0.0
        %2966 = vmatpush1.msra.mxu0 0.0
        %2967 = vmatprep.subr.mxu0 0.0
        %2968 = vmatpush1.msra.mxu0 0.0
        %2969 = vmatprep.subr.mxu0 0.0
        %2970 = vmatpush1.msra.mxu0 0.0
        %2971 = vmatprep.subr.mxu0 0.0
        %2972 = vmatpush1.msra.mxu0 0.0
        %2973 = vmatprep.subr.mxu0 0.0
        %2974 = vmatpush1.msra.mxu0 0.0
        %2975 = vmatprep.subr.mxu0 0.0
        %2976 = vmatpush1.msra.mxu0 0.0
        %2977 = vmatprep.subr.mxu0 0.0
        %2978 = vmatpush1.msra.mxu0 0.0
        %2979 = vmatprep.subr.mxu0 0.0
        %2980 = vmatpush1.msra.mxu0 0.0
        %2981 = vmatprep.subr.mxu0 0.0
        %2982 = vmatpush1.msra.mxu0 0.0
        %2983 = vmatprep.subr.mxu0 0.0
        %2984 = vmatpush1.msra.mxu0 0.0
        %2985 = vmatprep.mubr.f32.mxu0 0.0
        %v2986 = vand.u32 %v2749, 4294901760
        %v2987 = vsub.f32 %v2749, %v2986
        %2988 = vmatmul.mubr.f32.gmra.mrb[0].mxu0 %v2987
        %v2989 = vpop.f32.mrb[0].mxu0
        %v2990 = vadd.f32 %v2913, %v2989
        %v2991 = vpop.f32.mrb[0].mxu0
        %v2992 = vadd.f32 %v2915, %v2991
        %2993 = vdwg.mxu0
        %v2994 = vand.u32 %v2755, 4294901760
        %2995 = vmatprep.subr.mxu0 %v2994
        %v2996 = vand.u32 %v2752, 4294901760
        %2997 = vmatpush1.msra.mxu0 %v2996
        %2998 = vmatprep.subr.mxu0 0.0
        %2999 = vmatpush1.msra.mxu0 0.0
        %3000 = vmatprep.subr.mxu0 0.0
        %3001 = vmatpush1.msra.mxu0 0.0
        %3002 = vmatprep.subr.mxu0 0.0
        %3003 = vmatpush1.msra.mxu0 0.0
        %3004 = vmatprep.subr.mxu0 0.0
        %3005 = vmatpush1.msra.mxu0 0.0
        %3006 = vmatprep.subr.mxu0 0.0
        %3007 = vmatpush1.msra.mxu0 0.0
        %3008 = vmatprep.subr.mxu0 0.0
        %3009 = vmatpush1.msra.mxu0 0.0
        %3010 = vmatprep.subr.mxu0 0.0
        %3011 = vmatpush1.msra.mxu0 0.0
        %3012 = vmatprep.subr.mxu0 0.0
        %3013 = vmatpush1.msra.mxu0 0.0
        %3014 = vmatprep.subr.mxu0 0.0
        %3015 = vmatpush1.msra.mxu0 0.0
        %3016 = vmatprep.subr.mxu0 0.0
        %3017 = vmatpush1.msra.mxu0 0.0
        %3018 = vmatprep.subr.mxu0 0.0
        %3019 = vmatpush1.msra.mxu0 0.0
        %3020 = vmatprep.subr.mxu0 0.0
        %3021 = vmatpush1.msra.mxu0 0.0
        %3022 = vmatprep.subr.mxu0 0.0
        %3023 = vmatpush1.msra.mxu0 0.0
        %3024 = vmatprep.subr.mxu0 0.0
        %3025 = vmatpush1.msra.mxu0 0.0
        %3026 = vmatprep.subr.mxu0 0.0
        %3027 = vmatpush1.msra.mxu0 0.0
        %3028 = vmatprep.subr.mxu0 0.0
        %3029 = vmatpush1.msra.mxu0 0.0
        %3030 = vmatprep.subr.mxu0 0.0
        %3031 = vmatpush1.msra.mxu0 0.0
        %3032 = vmatprep.subr.mxu0 0.0
        %3033 = vmatpush1.msra.mxu0 0.0
        %3034 = vmatprep.subr.mxu0 0.0
        %3035 = vmatpush1.msra.mxu0 0.0
        %3036 = vmatprep.subr.mxu0 0.0
        %3037 = vmatpush1.msra.mxu0 0.0
        %3038 = vmatprep.subr.mxu0 0.0
        %3039 = vmatpush1.msra.mxu0 0.0
        %3040 = vmatprep.subr.mxu0 0.0
        %3041 = vmatpush1.msra.mxu0 0.0
        %3042 = vmatprep.subr.mxu0 0.0
        %3043 = vmatpush1.msra.mxu0 0.0
        %3044 = vmatprep.subr.mxu0 0.0
        %3045 = vmatpush1.msra.mxu0 0.0
        %3046 = vmatprep.subr.mxu0 0.0
        %3047 = vmatpush1.msra.mxu0 0.0
        %3048 = vmatprep.subr.mxu0 0.0
        %3049 = vmatpush1.msra.mxu0 0.0
        %3050 = vmatprep.subr.mxu0 0.0
        %3051 = vmatpush1.msra.mxu0 0.0
        %3052 = vmatprep.subr.mxu0 0.0
        %3053 = vmatpush1.msra.mxu0 0.0
        %3054 = vmatprep.subr.mxu0 0.0
        %3055 = vmatpush1.msra.mxu0 0.0
        %3056 = vmatprep.subr.mxu0 0.0
        %3057 = vmatpush1.msra.mxu0 0.0
        %3058 = vmatprep.subr.mxu0 0.0
        %3059 = vmatpush1.msra.mxu0 0.0
        %3060 = vmatprep.mubr.f32.mxu0 0.0
        %v3061 = vand.u32 %v2749, 4294901760
        %v3062 = vsub.f32 %v2749, %v3061
        %v3063 = vand.u32 %v3062, 4294901760
        %3064 = vmatmul.mubr.f32.gmra.mrb[0].mxu0 %v3063
        %v3065 = vpop.f32.mrb[0].mxu0
        %v3066 = vadd.f32 %v2990, %v3065
        %v3067 = vpop.f32.mrb[0].mxu0
        %v3068 = vadd.f32 %v2992, %v3067
        %3069 = vdwg.mxu0
        %v3070 = vand.u32 %v2755, 4294901760
        %v3071 = vsub.f32 %v2755, %v3070
        %v3072 = vand.u32 %v3071, 4294901760
        %3073 = vmatprep.subr.mxu0 %v3072
        %v3074 = vand.u32 %v2752, 4294901760
        %v3075 = vsub.f32 %v2752, %v3074
        %v3076 = vand.u32 %v3075, 4294901760
        %3077 = vmatpush1.msra.mxu0 %v3076
        %3078 = vmatprep.subr.mxu0 0.0
        %3079 = vmatpush1.msra.mxu0 0.0
        %3080 = vmatprep.subr.mxu0 0.0
        %3081 = vmatpush1.msra.mxu0 0.0
        %3082 = vmatprep.subr.mxu0 0.0
        %3083 = vmatpush1.msra.mxu0 0.0
        %3084 = vmatprep.subr.mxu0 0.0
        %3085 = vmatpush1.msra.mxu0 0.0
        %3086 = vmatprep.subr.mxu0 0.0
        %3087 = vmatpush1.msra.mxu0 0.0
        %3088 = vmatprep.subr.mxu0 0.0
        %3089 = vmatpush1.msra.mxu0 0.0
        %3090 = vmatprep.subr.mxu0 0.0
        %3091 = vmatpush1.msra.mxu0 0.0
        %3092 = vmatprep.subr.mxu0 0.0
        %3093 = vmatpush1.msra.mxu0 0.0
        %3094 = vmatprep.subr.mxu0 0.0
        %3095 = vmatpush1.msra.mxu0 0.0
        %3096 = vmatprep.subr.mxu0 0.0
        %3097 = vmatpush1.msra.mxu0 0.0
        %3098 = vmatprep.subr.mxu0 0.0
        %3099 = vmatpush1.msra.mxu0 0.0
        %3100 = vmatprep.subr.mxu0 0.0
        %3101 = vmatpush1.msra.mxu0 0.0
        %3102 = vmatprep.subr.mxu0 0.0
        %3103 = vmatpush1.msra.mxu0 0.0
        %3104 = vmatprep.subr.mxu0 0.0
        %3105 = vmatpush1.msra.mxu0 0.0
        %3106 = vmatprep.subr.mxu0 0.0
        %3107 = vmatpush1.msra.mxu0 0.0
        %3108 = vmatprep.subr.mxu0 0.0
        %3109 = vmatpush1.msra.mxu0 0.0
        %3110 = vmatprep.subr.mxu0 0.0
        %3111 = vmatpush1.msra.mxu0 0.0
        %3112 = vmatprep.subr.mxu0 0.0
        %3113 = vmatpush1.msra.mxu0 0.0
        %3114 = vmatprep.subr.mxu0 0.0
        %3115 = vmatpush1.msra.mxu0 0.0
        %3116 = vmatprep.subr.mxu0 0.0
        %3117 = vmatpush1.msra.mxu0 0.0
        %3118 = vmatprep.subr.mxu0 0.0
        %3119 = vmatpush1.msra.mxu0 0.0
        %3120 = vmatprep.subr.mxu0 0.0
        %3121 = vmatpush1.msra.mxu0 0.0
        %3122 = vmatprep.subr.mxu0 0.0
        %3123 = vmatpush1.msra.mxu0 0.0
        %3124 = vmatprep.subr.mxu0 0.0
        %3125 = vmatpush1.msra.mxu0 0.0
        %3126 = vmatprep.subr.mxu0 0.0
        %3127 = vmatpush1.msra.mxu0 0.0
        %3128 = vmatprep.subr.mxu0 0.0
        %3129 = vmatpush1.msra.mxu0 0.0
        %3130 = vmatprep.subr.mxu0 0.0
        %3131 = vmatpush1.msra.mxu0 0.0
        %3132 = vmatprep.subr.mxu0 0.0
        %3133 = vmatpush1.msra.mxu0 0.0
        %3134 = vmatprep.subr.mxu0 0.0
        %3135 = vmatpush1.msra.mxu0 0.0
        %3136 = vmatprep.subr.mxu0 0.0
        %3137 = vmatpush1.msra.mxu0 0.0
        %3138 = vmatprep.subr.mxu0 0.0
        %3139 = vmatpush1.msra.mxu0 0.0
        %3140 = vmatprep.mubr.f32.mxu0 0.0
        %v3141 = vand.u32 %v2749, 4294901760
        %3142 = vmatmul.mubr.f32.gmra.mrb[0].mxu0 %v3141
        %v3143 = vpop.f32.mrb[0].mxu0
        %v3144 = vadd.f32 %v3066, %v3143
        %v3145 = vpop.f32.mrb[0].mxu0
        %v3146 = vadd.f32 %v3068, %v3145
        %3147 = vdwg.mxu0
        %v3148 = vand.u32 %v2755, 4294901760
        %3149 = vmatprep.subr.mxu0 %v3148
        %v3150 = vand.u32 %v2752, 4294901760
        %3151 = vmatpush1.msra.mxu0 %v3150
        %3152 = vmatprep.subr.mxu0 0.0
        %3153 = vmatpush1.msra.mxu0 0.0
        %3154 = vmatprep.subr.mxu0 0.0
        %3155 = vmatpush1.msra.mxu0 0.0
        %3156 = vmatprep.subr.mxu0 0.0
        %3157 = vmatpush1.msra.mxu0 0.0
        %3158 = vmatprep.subr.mxu0 0.0
        %3159 = vmatpush1.msra.mxu0 0.0
        %3160 = vmatprep.subr.mxu0 0.0
        %3161 = vmatpush1.msra.mxu0 0.0
        %3162 = vmatprep.subr.mxu0 0.0
        %3163 = vmatpush1.msra.mxu0 0.0
        %3164 = vmatprep.subr.mxu0 0.0
        %3165 = vmatpush1.msra.mxu0 0.0
        %3166 = vmatprep.subr.mxu0 0.0
        %3167 = vmatpush1.msra.mxu0 0.0
        %3168 = vmatprep.subr.mxu0 0.0
        %3169 = vmatpush1.msra.mxu0 0.0
        %3170 = vmatprep.subr.mxu0 0.0
        %3171 = vmatpush1.msra.mxu0 0.0
        %3172 = vmatprep.subr.mxu0 0.0
        %3173 = vmatpush1.msra.mxu0 0.0
        %3174 = vmatprep.subr.mxu0 0.0
        %3175 = vmatpush1.msra.mxu0 0.0
        %3176 = vmatprep.subr.mxu0 0.0
        %3177 = vmatpush1.msra.mxu0 0.0
        %3178 = vmatprep.subr.mxu0 0.0
        %3179 = vmatpush1.msra.mxu0 0.0
        %3180 = vmatprep.subr.mxu0 0.0
        %3181 = vmatpush1.msra.mxu0 0.0
        %3182 = vmatprep.subr.mxu0 0.0
        %3183 = vmatpush1.msra.mxu0 0.0
        %3184 = vmatprep.subr.mxu0 0.0
        %3185 = vmatpush1.msra.mxu0 0.0
        %3186 = vmatprep.subr.mxu0 0.0
        %3187 = vmatpush1.msra.mxu0 0.0
        %3188 = vmatprep.subr.mxu0 0.0
        %3189 = vmatpush1.msra.mxu0 0.0
        %3190 = vmatprep.subr.mxu0 0.0
        %3191 = vmatpush1.msra.mxu0 0.0
        %3192 = vmatprep.subr.mxu0 0.0
        %3193 = vmatpush1.msra.mxu0 0.0
        %3194 = vmatprep.subr.mxu0 0.0
        %3195 = vmatpush1.msra.mxu0 0.0
        %3196 = vmatprep.subr.mxu0 0.0
        %3197 = vmatpush1.msra.mxu0 0.0
        %3198 = vmatprep.subr.mxu0 0.0
        %3199 = vmatpush1.msra.mxu0 0.0
        %3200 = vmatprep.subr.mxu0 0.0
        %3201 = vmatpush1.msra.mxu0 0.0
        %3202 = vmatprep.subr.mxu0 0.0
        %3203 = vmatpush1.msra.mxu0 0.0
        %3204 = vmatprep.subr.mxu0 0.0
        %3205 = vmatpush1.msra.mxu0 0.0
        %3206 = vmatprep.subr.mxu0 0.0
        %3207 = vmatpush1.msra.mxu0 0.0
        %3208 = vmatprep.subr.mxu0 0.0
        %3209 = vmatpush1.msra.mxu0 0.0
        %3210 = vmatprep.subr.mxu0 0.0
        %3211 = vmatpush1.msra.mxu0 0.0
        %3212 = vmatprep.subr.mxu0 0.0
        %3213 = vmatpush1.msra.mxu0 0.0
        %3214 = vmatprep.mubr.f32.mxu0 0.0
        %v3215 = vand.u32 %v2749, 4294901760
        %3216 = vmatmul.mubr.f32.gmra.mrb[0].mxu0 %v3215
        %v3217 = vpop.f32.mrb[0].mxu0
        %v3218 = vadd.f32 %v3144, %v3217
        %v3219 = vpop.f32.mrb[0].mxu0
        %v3220 = vadd.f32 %v3146, %v3219
        %3221 = vdwg.mxu0
        %v3222 = vadd.f32 %v2729, %v3218
        %v3223 = vadd.f32 %v2730, %v3220
        %3224 = vrot.lane.b32.xlu0 %v250, 113
        %v3225 = vpop.permute.xlu0 %3224
        %3226 = vrot.lane.b32.xlu0 %v268, 113
        %v3227 = vpop.permute.xlu0 %3226
        %vm3228 = vcmp.lt.s32.totalorder %v275, 113
        %v3229 = vsel %vm3228, %v3225, %v3227
        %v3230 = vsel %vm3228, %v3227, %v3225
        %v3231 = vlaneseq
        %v3232 = vshrl.u32 %v3231, 7
        %v3233 = vsub.s32 6, %v3232
        %v3234 = vrot.slane %v251, %v3233
        %v3235 = vlaneseq
        %v3236 = vshrl.u32 %v3235, 7
        %v3237 = vsub.s32 6, %v3236
        %v3238 = vrot.slane %v252, %v3237
        %v3239 = vmul.f32 %v3229, %v3234
        %v3240 = vmul.f32 %v3230, %v3238
        %v3242 = vsel %vm308, %v258, 0
        %v3245 = vsel %vm311, %v3239, 0
        %v3248 = vsel %vm311, %v3240, 0
        %v3250 = vand.u32 %v3248, 4294901760
        %3251 = vmatprep.subr.mxu0 %v3250
        %v3252 = vand.u32 %v3245, 4294901760
        %3253 = vmatpush1.msra.mxu0 %v3252
        %3254 = vmatprep.subr.mxu0 0.0
        %3255 = vmatpush1.msra.mxu0 0.0
        %3256 = vmatprep.subr.mxu0 0.0
        %3257 = vmatpush1.msra.mxu0 0.0
        %3258 = vmatprep.subr.mxu0 0.0
        %3259 = vmatpush1.msra.mxu0 0.0
        %3260 = vmatprep.subr.mxu0 0.0
        %3261 = vmatpush1.msra.mxu0 0.0
        %3262 = vmatprep.subr.mxu0 0.0
        %3263 = vmatpush1.msra.mxu0 0.0
        %3264 = vmatprep.subr.mxu0 0.0
        %3265 = vmatpush1.msra.mxu0 0.0
        %3266 = vmatprep.subr.mxu0 0.0
        %3267 = vmatpush1.msra.mxu0 0.0
        %3268 = vmatprep.subr.mxu0 0.0
        %3269 = vmatpush1.msra.mxu0 0.0
        %3270 = vmatprep.subr.mxu0 0.0
        %3271 = vmatpush1.msra.mxu0 0.0
        %3272 = vmatprep.subr.mxu0 0.0
        %3273 = vmatpush1.msra.mxu0 0.0
        %3274 = vmatprep.subr.mxu0 0.0
        %3275 = vmatpush1.msra.mxu0 0.0
        %3276 = vmatprep.subr.mxu0 0.0
        %3277 = vmatpush1.msra.mxu0 0.0
        %3278 = vmatprep.subr.mxu0 0.0
        %3279 = vmatpush1.msra.mxu0 0.0
        %3280 = vmatprep.subr.mxu0 0.0
        %3281 = vmatpush1.msra.mxu0 0.0
        %3282 = vmatprep.subr.mxu0 0.0
        %3283 = vmatpush1.msra.mxu0 0.0
        %3284 = vmatprep.subr.mxu0 0.0
        %3285 = vmatpush1.msra.mxu0 0.0
        %3286 = vmatprep.subr.mxu0 0.0
        %3287 = vmatpush1.msra.mxu0 0.0
        %3288 = vmatprep.subr.mxu0 0.0
        %3289 = vmatpush1.msra.mxu0 0.0
        %3290 = vmatprep.subr.mxu0 0.0
        %3291 = vmatpush1.msra.mxu0 0.0
        %3292 = vmatprep.subr.mxu0 0.0
        %3293 = vmatpush1.msra.mxu0 0.0
        %3294 = vmatprep.subr.mxu0 0.0
        %3295 = vmatpush1.msra.mxu0 0.0
        %3296 = vmatprep.subr.mxu0 0.0
        %3297 = vmatpush1.msra.mxu0 0.0
        %3298 = vmatprep.subr.mxu0 0.0
        %3299 = vmatpush1.msra.mxu0 0.0
        %3300 = vmatprep.subr.mxu0 0.0
        %3301 = vmatpush1.msra.mxu0 0.0
        %3302 = vmatprep.subr.mxu0 0.0
        %3303 = vmatpush1.msra.mxu0 0.0
        %3304 = vmatprep.subr.mxu0 0.0
        %3305 = vmatpush1.msra.mxu0 0.0
        %3306 = vmatprep.subr.mxu0 0.0
        %3307 = vmatpush1.msra.mxu0 0.0
        %3308 = vmatprep.subr.mxu0 0.0
        %3309 = vmatpush1.msra.mxu0 0.0
        %3310 = vmatprep.subr.mxu0 0.0
        %3311 = vmatpush1.msra.mxu0 0.0
        %3312 = vmatprep.subr.mxu0 0.0
        %3313 = vmatpush1.msra.mxu0 0.0
        %3314 = vmatprep.subr.mxu0 0.0
        %3315 = vmatpush1.msra.mxu0 0.0
        %3316 = vmatprep.mubr.f32.mxu0 0.0
        %v3317 = vand.u32 %v3242, 4294901760
        %v3318 = vsub.f32 %v3242, %v3317
        %v3319 = vand.u32 %v3318, 4294901760
        %v3320 = vsub.f32 %v3318, %v3319
        %v3321 = vand.u32 %v3320, 4294901760
        %3322 = vmatmul.mubr.f32.gmra.mrb[0].mxu0 %v3321
        %v3323 = vpop.f32.mrb[0].mxu0
        %v3324 = vadd.f32 0.0, %v3323
        %v3325 = vpop.f32.mrb[0].mxu0
        %v3326 = vadd.f32 0.0, %v3325
        %3327 = vdwg.mxu0
        %v3328 = vand.u32 %v3248, 4294901760
        %v3329 = vsub.f32 %v3248, %v3328
        %v3330 = vand.u32 %v3329, 4294901760
        %v3331 = vsub.f32 %v3329, %v3330
        %v3332 = vand.u32 %v3331, 4294901760
        %3333 = vmatprep.subr.mxu0 %v3332
        %v3334 = vand.u32 %v3245, 4294901760
        %v3335 = vsub.f32 %v3245, %v3334
        %v3336 = vand.u32 %v3335, 4294901760
        %v3337 = vsub.f32 %v3335, %v3336
        %v3338 = vand.u32 %v3337, 4294901760
        %3339 = vmatpush1.msra.mxu0 %v3338
        %3340 = vmatprep.subr.mxu0 0.0
        %3341 = vmatpush1.msra.mxu0 0.0
        %3342 = vmatprep.subr.mxu0 0.0
        %3343 = vmatpush1.msra.mxu0 0.0
        %3344 = vmatprep.subr.mxu0 0.0
        %3345 = vmatpush1.msra.mxu0 0.0
        %3346 = vmatprep.subr.mxu0 0.0
        %3347 = vmatpush1.msra.mxu0 0.0
        %3348 = vmatprep.subr.mxu0 0.0
        %3349 = vmatpush1.msra.mxu0 0.0
        %3350 = vmatprep.subr.mxu0 0.0
        %3351 = vmatpush1.msra.mxu0 0.0
        %3352 = vmatprep.subr.mxu0 0.0
        %3353 = vmatpush1.msra.mxu0 0.0
        %3354 = vmatprep.subr.mxu0 0.0
        %3355 = vmatpush1.msra.mxu0 0.0
        %3356 = vmatprep.subr.mxu0 0.0
        %3357 = vmatpush1.msra.mxu0 0.0
        %3358 = vmatprep.subr.mxu0 0.0
        %3359 = vmatpush1.msra.mxu0 0.0
        %3360 = vmatprep.subr.mxu0 0.0
        %3361 = vmatpush1.msra.mxu0 0.0
        %3362 = vmatprep.subr.mxu0 0.0
        %3363 = vmatpush1.msra.mxu0 0.0
        %3364 = vmatprep.subr.mxu0 0.0
        %3365 = vmatpush1.msra.mxu0 0.0
        %3366 = vmatprep.subr.mxu0 0.0
        %3367 = vmatpush1.msra.mxu0 0.0
        %3368 = vmatprep.subr.mxu0 0.0
        %3369 = vmatpush1.msra.mxu0 0.0
        %3370 = vmatprep.subr.mxu0 0.0
        %3371 = vmatpush1.msra.mxu0 0.0
        %3372 = vmatprep.subr.mxu0 0.0
        %3373 = vmatpush1.msra.mxu0 0.0
        %3374 = vmatprep.subr.mxu0 0.0
        %3375 = vmatpush1.msra.mxu0 0.0
        %3376 = vmatprep.subr.mxu0 0.0
        %3377 = vmatpush1.msra.mxu0 0.0
        %3378 = vmatprep.subr.mxu0 0.0
        %3379 = vmatpush1.msra.mxu0 0.0
        %3380 = vmatprep.subr.mxu0 0.0
        %3381 = vmatpush1.msra.mxu0 0.0
        %3382 = vmatprep.subr.mxu0 0.0
        %3383 = vmatpush1.msra.mxu0 0.0
        %3384 = vmatprep.subr.mxu0 0.0
        %3385 = vmatpush1.msra.mxu0 0.0
        %3386 = vmatprep.subr.mxu0 0.0
        %3387 = vmatpush1.msra.mxu0 0.0
        %3388 = vmatprep.subr.mxu0 0.0
        %3389 = vmatpush1.msra.mxu0 0.0
        %3390 = vmatprep.subr.mxu0 0.0
        %3391 = vmatpush1.msra.mxu0 0.0
        %3392 = vmatprep.subr.mxu0 0.0
        %3393 = vmatpush1.msra.mxu0 0.0
        %3394 = vmatprep.subr.mxu0 0.0
        %3395 = vmatpush1.msra.mxu0 0.0
        %3396 = vmatprep.subr.mxu0 0.0
        %3397 = vmatpush1.msra.mxu0 0.0
        %3398 = vmatprep.subr.mxu0 0.0
        %3399 = vmatpush1.msra.mxu0 0.0
        %3400 = vmatprep.subr.mxu0 0.0
        %3401 = vmatpush1.msra.mxu0 0.0
        %3402 = vmatprep.mubr.f32.mxu0 0.0
        %v3403 = vand.u32 %v3242, 4294901760
        %3404 = vmatmul.mubr.f32.gmra.mrb[0].mxu0 %v3403
        %v3405 = vpop.f32.mrb[0].mxu0
        %v3406 = vadd.f32 %v3324, %v3405
        %v3407 = vpop.f32.mrb[0].mxu0
        %v3408 = vadd.f32 %v3326, %v3407
        %3409 = vdwg.mxu0
        %v3410 = vand.u32 %v3248, 4294901760
        %v3411 = vsub.f32 %v3248, %v3410
        %3412 = vmatprep.subr.mxu0 %v3411
        %v3413 = vand.u32 %v3245, 4294901760
        %v3414 = vsub.f32 %v3245, %v3413
        %3415 = vmatpush1.msra.mxu0 %v3414
        %3416 = vmatprep.subr.mxu0 0.0
        %3417 = vmatpush1.msra.mxu0 0.0
        %3418 = vmatprep.subr.mxu0 0.0
        %3419 = vmatpush1.msra.mxu0 0.0
        %3420 = vmatprep.subr.mxu0 0.0
        %3421 = vmatpush1.msra.mxu0 0.0
        %3422 = vmatprep.subr.mxu0 0.0
        %3423 = vmatpush1.msra.mxu0 0.0
        %3424 = vmatprep.subr.mxu0 0.0
        %3425 = vmatpush1.msra.mxu0 0.0
        %3426 = vmatprep.subr.mxu0 0.0
        %3427 = vmatpush1.msra.mxu0 0.0
        %3428 = vmatprep.subr.mxu0 0.0
        %3429 = vmatpush1.msra.mxu0 0.0
        %3430 = vmatprep.subr.mxu0 0.0
        %3431 = vmatpush1.msra.mxu0 0.0
        %3432 = vmatprep.subr.mxu0 0.0
        %3433 = vmatpush1.msra.mxu0 0.0
        %3434 = vmatprep.subr.mxu0 0.0
        %3435 = vmatpush1.msra.mxu0 0.0
        %3436 = vmatprep.subr.mxu0 0.0
        %3437 = vmatpush1.msra.mxu0 0.0
        %3438 = vmatprep.subr.mxu0 0.0
        %3439 = vmatpush1.msra.mxu0 0.0
        %3440 = vmatprep.subr.mxu0 0.0
        %3441 = vmatpush1.msra.mxu0 0.0
        %3442 = vmatprep.subr.mxu0 0.0
        %3443 = vmatpush1.msra.mxu0 0.0
        %3444 = vmatprep.subr.mxu0 0.0
        %3445 = vmatpush1.msra.mxu0 0.0
        %3446 = vmatprep.subr.mxu0 0.0
        %3447 = vmatpush1.msra.mxu0 0.0
        %3448 = vmatprep.subr.mxu0 0.0
        %3449 = vmatpush1.msra.mxu0 0.0
        %3450 = vmatprep.subr.mxu0 0.0
        %3451 = vmatpush1.msra.mxu0 0.0
        %3452 = vmatprep.subr.mxu0 0.0
        %3453 = vmatpush1.msra.mxu0 0.0
        %3454 = vmatprep.subr.mxu0 0.0
        %3455 = vmatpush1.msra.mxu0 0.0
        %3456 = vmatprep.subr.mxu0 0.0
        %3457 = vmatpush1.msra.mxu0 0.0
        %3458 = vmatprep.subr.mxu0 0.0
        %3459 = vmatpush1.msra.mxu0 0.0
        %3460 = vmatprep.subr.mxu0 0.0
        %3461 = vmatpush1.msra.mxu0 0.0
        %3462 = vmatprep.subr.mxu0 0.0
        %3463 = vmatpush1.msra.mxu0 0.0
        %3464 = vmatprep.subr.mxu0 0.0
        %3465 = vmatpush1.msra.mxu0 0.0
        %3466 = vmatprep.subr.mxu0 0.0
        %3467 = vmatpush1.msra.mxu0 0.0
        %3468 = vmatprep.subr.mxu0 0.0
        %3469 = vmatpush1.msra.mxu0 0.0
        %3470 = vmatprep.subr.mxu0 0.0
        %3471 = vmatpush1.msra.mxu0 0.0
        %3472 = vmatprep.subr.mxu0 0.0
        %3473 = vmatpush1.msra.mxu0 0.0
        %3474 = vmatprep.subr.mxu0 0.0
        %3475 = vmatpush1.msra.mxu0 0.0
        %3476 = vmatprep.subr.mxu0 0.0
        %3477 = vmatpush1.msra.mxu0 0.0
        %3478 = vmatprep.mubr.f32.mxu0 0.0
        %v3479 = vand.u32 %v3242, 4294901760
        %v3480 = vsub.f32 %v3242, %v3479
        %3481 = vmatmul.mubr.f32.gmra.mrb[0].mxu0 %v3480
        %v3482 = vpop.f32.mrb[0].mxu0
        %v3483 = vadd.f32 %v3406, %v3482
        %v3484 = vpop.f32.mrb[0].mxu0
        %v3485 = vadd.f32 %v3408, %v3484
        %3486 = vdwg.mxu0
        %v3487 = vand.u32 %v3248, 4294901760
        %3488 = vmatprep.subr.mxu0 %v3487
        %v3489 = vand.u32 %v3245, 4294901760
        %3490 = vmatpush1.msra.mxu0 %v3489
        %3491 = vmatprep.subr.mxu0 0.0
        %3492 = vmatpush1.msra.mxu0 0.0
        %3493 = vmatprep.subr.mxu0 0.0
        %3494 = vmatpush1.msra.mxu0 0.0
        %3495 = vmatprep.subr.mxu0 0.0
        %3496 = vmatpush1.msra.mxu0 0.0
        %3497 = vmatprep.subr.mxu0 0.0
        %3498 = vmatpush1.msra.mxu0 0.0
        %3499 = vmatprep.subr.mxu0 0.0
        %3500 = vmatpush1.msra.mxu0 0.0
        %3501 = vmatprep.subr.mxu0 0.0
        %3502 = vmatpush1.msra.mxu0 0.0
        %3503 = vmatprep.subr.mxu0 0.0
        %3504 = vmatpush1.msra.mxu0 0.0
        %3505 = vmatprep.subr.mxu0 0.0
        %3506 = vmatpush1.msra.mxu0 0.0
        %3507 = vmatprep.subr.mxu0 0.0
        %3508 = vmatpush1.msra.mxu0 0.0
        %3509 = vmatprep.subr.mxu0 0.0
        %3510 = vmatpush1.msra.mxu0 0.0
        %3511 = vmatprep.subr.mxu0 0.0
        %3512 = vmatpush1.msra.mxu0 0.0
        %3513 = vmatprep.subr.mxu0 0.0
        %3514 = vmatpush1.msra.mxu0 0.0
        %3515 = vmatprep.subr.mxu0 0.0
        %3516 = vmatpush1.msra.mxu0 0.0
        %3517 = vmatprep.subr.mxu0 0.0
        %3518 = vmatpush1.msra.mxu0 0.0
        %3519 = vmatprep.subr.mxu0 0.0
        %3520 = vmatpush1.msra.mxu0 0.0
        %3521 = vmatprep.subr.mxu0 0.0
        %3522 = vmatpush1.msra.mxu0 0.0
        %3523 = vmatprep.subr.mxu0 0.0
        %3524 = vmatpush1.msra.mxu0 0.0
        %3525 = vmatprep.subr.mxu0 0.0
        %3526 = vmatpush1.msra.mxu0 0.0
        %3527 = vmatprep.subr.mxu0 0.0
        %3528 = vmatpush1.msra.mxu0 0.0
        %3529 = vmatprep.subr.mxu0 0.0
        %3530 = vmatpush1.msra.mxu0 0.0
        %3531 = vmatprep.subr.mxu0 0.0
        %3532 = vmatpush1.msra.mxu0 0.0
        %3533 = vmatprep.subr.mxu0 0.0
        %3534 = vmatpush1.msra.mxu0 0.0
        %3535 = vmatprep.subr.mxu0 0.0
        %3536 = vmatpush1.msra.mxu0 0.0
        %3537 = vmatprep.subr.mxu0 0.0
        %3538 = vmatpush1.msra.mxu0 0.0
        %3539 = vmatprep.subr.mxu0 0.0
        %3540 = vmatpush1.msra.mxu0 0.0
        %3541 = vmatprep.subr.mxu0 0.0
        %3542 = vmatpush1.msra.mxu0 0.0
        %3543 = vmatprep.subr.mxu0 0.0
        %3544 = vmatpush1.msra.mxu0 0.0
        %3545 = vmatprep.subr.mxu0 0.0
        %3546 = vmatpush1.msra.mxu0 0.0
        %3547 = vmatprep.subr.mxu0 0.0
        %3548 = vmatpush1.msra.mxu0 0.0
        %3549 = vmatprep.subr.mxu0 0.0
        %3550 = vmatpush1.msra.mxu0 0.0
        %3551 = vmatprep.subr.mxu0 0.0
        %3552 = vmatpush1.msra.mxu0 0.0
        %3553 = vmatprep.mubr.f32.mxu0 0.0
        %v3554 = vand.u32 %v3242, 4294901760
        %v3555 = vsub.f32 %v3242, %v3554
        %v3556 = vand.u32 %v3555, 4294901760
        %3557 = vmatmul.mubr.f32.gmra.mrb[0].mxu0 %v3556
        %v3558 = vpop.f32.mrb[0].mxu0
        %v3559 = vadd.f32 %v3483, %v3558
        %v3560 = vpop.f32.mrb[0].mxu0
        %v3561 = vadd.f32 %v3485, %v3560
        %3562 = vdwg.mxu0
        %v3563 = vand.u32 %v3248, 4294901760
        %v3564 = vsub.f32 %v3248, %v3563
        %v3565 = vand.u32 %v3564, 4294901760
        %3566 = vmatprep.subr.mxu0 %v3565
        %v3567 = vand.u32 %v3245, 4294901760
        %v3568 = vsub.f32 %v3245, %v3567
        %v3569 = vand.u32 %v3568, 4294901760
        %3570 = vmatpush1.msra.mxu0 %v3569
        %3571 = vmatprep.subr.mxu0 0.0
        %3572 = vmatpush1.msra.mxu0 0.0
        %3573 = vmatprep.subr.mxu0 0.0
        %3574 = vmatpush1.msra.mxu0 0.0
        %3575 = vmatprep.subr.mxu0 0.0
        %3576 = vmatpush1.msra.mxu0 0.0
        %3577 = vmatprep.subr.mxu0 0.0
        %3578 = vmatpush1.msra.mxu0 0.0
        %3579 = vmatprep.subr.mxu0 0.0
        %3580 = vmatpush1.msra.mxu0 0.0
        %3581 = vmatprep.subr.mxu0 0.0
        %3582 = vmatpush1.msra.mxu0 0.0
        %3583 = vmatprep.subr.mxu0 0.0
        %3584 = vmatpush1.msra.mxu0 0.0
        %3585 = vmatprep.subr.mxu0 0.0
        %3586 = vmatpush1.msra.mxu0 0.0
        %3587 = vmatprep.subr.mxu0 0.0
        %3588 = vmatpush1.msra.mxu0 0.0
        %3589 = vmatprep.subr.mxu0 0.0
        %3590 = vmatpush1.msra.mxu0 0.0
        %3591 = vmatprep.subr.mxu0 0.0
        %3592 = vmatpush1.msra.mxu0 0.0
        %3593 = vmatprep.subr.mxu0 0.0
        %3594 = vmatpush1.msra.mxu0 0.0
        %3595 = vmatprep.subr.mxu0 0.0
        %3596 = vmatpush1.msra.mxu0 0.0
        %3597 = vmatprep.subr.mxu0 0.0
        %3598 = vmatpush1.msra.mxu0 0.0
        %3599 = vmatprep.subr.mxu0 0.0
        %3600 = vmatpush1.msra.mxu0 0.0
        %3601 = vmatprep.subr.mxu0 0.0
        %3602 = vmatpush1.msra.mxu0 0.0
        %3603 = vmatprep.subr.mxu0 0.0
        %3604 = vmatpush1.msra.mxu0 0.0
        %3605 = vmatprep.subr.mxu0 0.0
        %3606 = vmatpush1.msra.mxu0 0.0
        %3607 = vmatprep.subr.mxu0 0.0
        %3608 = vmatpush1.msra.mxu0 0.0
        %3609 = vmatprep.subr.mxu0 0.0
        %3610 = vmatpush1.msra.mxu0 0.0
        %3611 = vmatprep.subr.mxu0 0.0
        %3612 = vmatpush1.msra.mxu0 0.0
        %3613 = vmatprep.subr.mxu0 0.0
        %3614 = vmatpush1.msra.mxu0 0.0
        %3615 = vmatprep.subr.mxu0 0.0
        %3616 = vmatpush1.msra.mxu0 0.0
        %3617 = vmatprep.subr.mxu0 0.0
        %3618 = vmatpush1.msra.mxu0 0.0
        %3619 = vmatprep.subr.mxu0 0.0
        %3620 = vmatpush1.msra.mxu0 0.0
        %3621 = vmatprep.subr.mxu0 0.0
        %3622 = vmatpush1.msra.mxu0 0.0
        %3623 = vmatprep.subr.mxu0 0.0
        %3624 = vmatpush1.msra.mxu0 0.0
        %3625 = vmatprep.subr.mxu0 0.0
        %3626 = vmatpush1.msra.mxu0 0.0
        %3627 = vmatprep.subr.mxu0 0.0
        %3628 = vmatpush1.msra.mxu0 0.0
        %3629 = vmatprep.subr.mxu0 0.0
        %3630 = vmatpush1.msra.mxu0 0.0
        %3631 = vmatprep.subr.mxu0 0.0
        %3632 = vmatpush1.msra.mxu0 0.0
        %3633 = vmatprep.mubr.f32.mxu0 0.0
        %v3634 = vand.u32 %v3242, 4294901760
        %3635 = vmatmul.mubr.f32.gmra.mrb[0].mxu0 %v3634
        %v3636 = vpop.f32.mrb[0].mxu0
        %v3637 = vadd.f32 %v3559, %v3636
        %v3638 = vpop.f32.mrb[0].mxu0
        %v3639 = vadd.f32 %v3561, %v3638
        %3640 = vdwg.mxu0
        %v3641 = vand.u32 %v3248, 4294901760
        %3642 = vmatprep.subr.mxu0 %v3641
        %v3643 = vand.u32 %v3245, 4294901760
        %3644 = vmatpush1.msra.mxu0 %v3643
        %3645 = vmatprep.subr.mxu0 0.0
        %3646 = vmatpush1.msra.mxu0 0.0
        %3647 = vmatprep.subr.mxu0 0.0
        %3648 = vmatpush1.msra.mxu0 0.0
        %3649 = vmatprep.subr.mxu0 0.0
        %3650 = vmatpush1.msra.mxu0 0.0
        %3651 = vmatprep.subr.mxu0 0.0
        %3652 = vmatpush1.msra.mxu0 0.0
        %3653 = vmatprep.subr.mxu0 0.0
        %3654 = vmatpush1.msra.mxu0 0.0
        %3655 = vmatprep.subr.mxu0 0.0
        %3656 = vmatpush1.msra.mxu0 0.0
        %3657 = vmatprep.subr.mxu0 0.0
        %3658 = vmatpush1.msra.mxu0 0.0
        %3659 = vmatprep.subr.mxu0 0.0
        %3660 = vmatpush1.msra.mxu0 0.0
        %3661 = vmatprep.subr.mxu0 0.0
        %3662 = vmatpush1.msra.mxu0 0.0
        %3663 = vmatprep.subr.mxu0 0.0
        %3664 = vmatpush1.msra.mxu0 0.0
        %3665 = vmatprep.subr.mxu0 0.0
        %3666 = vmatpush1.msra.mxu0 0.0
        %3667 = vmatprep.subr.mxu0 0.0
        %3668 = vmatpush1.msra.mxu0 0.0
        %3669 = vmatprep.subr.mxu0 0.0
        %3670 = vmatpush1.msra.mxu0 0.0
        %3671 = vmatprep.subr.mxu0 0.0
        %3672 = vmatpush1.msra.mxu0 0.0
        %3673 = vmatprep.subr.mxu0 0.0
        %3674 = vmatpush1.msra.mxu0 0.0
        %3675 = vmatprep.subr.mxu0 0.0
        %3676 = vmatpush1.msra.mxu0 0.0
        %3677 = vmatprep.subr.mxu0 0.0
        %3678 = vmatpush1.msra.mxu0 0.0
        %3679 = vmatprep.subr.mxu0 0.0
        %3680 = vmatpush1.msra.mxu0 0.0
        %3681 = vmatprep.subr.mxu0 0.0
        %3682 = vmatpush1.msra.mxu0 0.0
        %3683 = vmatprep.subr.mxu0 0.0
        %3684 = vmatpush1.msra.mxu0 0.0
        %3685 = vmatprep.subr.mxu0 0.0
        %3686 = vmatpush1.msra.mxu0 0.0
        %3687 = vmatprep.subr.mxu0 0.0
        %3688 = vmatpush1.msra.mxu0 0.0
        %3689 = vmatprep.subr.mxu0 0.0
        %3690 = vmatpush1.msra.mxu0 0.0
        %3691 = vmatprep.subr.mxu0 0.0
        %3692 = vmatpush1.msra.mxu0 0.0
        %3693 = vmatprep.subr.mxu0 0.0
        %3694 = vmatpush1.msra.mxu0 0.0
        %3695 = vmatprep.subr.mxu0 0.0
        %3696 = vmatpush1.msra.mxu0 0.0
        %3697 = vmatprep.subr.mxu0 0.0
        %3698 = vmatpush1.msra.mxu0 0.0
        %3699 = vmatprep.subr.mxu0 0.0
        %3700 = vmatpush1.msra.mxu0 0.0
        %3701 = vmatprep.subr.mxu0 0.0
        %3702 = vmatpush1.msra.mxu0 0.0
        %3703 = vmatprep.subr.mxu0 0.0
        %3704 = vmatpush1.msra.mxu0 0.0
        %3705 = vmatprep.subr.mxu0 0.0
        %3706 = vmatpush1.msra.mxu0 0.0
        %3707 = vmatprep.mubr.f32.mxu0 0.0
        %v3708 = vand.u32 %v3242, 4294901760
        %3709 = vmatmul.mubr.f32.gmra.mrb[0].mxu0 %v3708
        %v3710 = vpop.f32.mrb[0].mxu0
        %v3711 = vadd.f32 %v3637, %v3710
        %v3712 = vpop.f32.mrb[0].mxu0
        %v3713 = vadd.f32 %v3639, %v3712
        %3714 = vdwg.mxu0
        %v3715 = vadd.f32 %v3222, %v3711
        %v3716 = vadd.f32 %v3223, %v3713
        %3717 = vrot.lane.b32.xlu0 %v250, 112
        %v3718 = vpop.permute.xlu0 %3717
        %3719 = vrot.lane.b32.xlu0 %v268, 112
        %v3720 = vpop.permute.xlu0 %3719
        %vm3721 = vcmp.lt.s32.totalorder %v275, 112
        %v3722 = vsel %vm3721, %v3718, %v3720
        %v3723 = vsel %vm3721, %v3720, %v3718
        %v3724 = vlaneseq
        %v3725 = vshrl.u32 %v3724, 7
        %v3726 = vsub.s32 7, %v3725
        %v3727 = vrot.slane %v251, %v3726
        %v3728 = vlaneseq
        %v3729 = vshrl.u32 %v3728, 7
        %v3730 = vsub.s32 7, %v3729
        %v3731 = vrot.slane %v252, %v3730
        %v3732 = vmul.f32 %v3722, %v3727
        %v3733 = vmul.f32 %v3723, %v3731
        %v3734 = vrot.slane %v258, 4
        %v3735 = vsel %vm308, %v3734, 0
        %v3738 = vsel %vm311, %v3732, 0
        %v3741 = vsel %vm311, %v3733, 0
        %v3743 = vand.u32 %v3741, 4294901760
        %3744 = vmatprep.subr.mxu0 %v3743
        %v3745 = vand.u32 %v3738, 4294901760
        %3746 = vmatpush1.msra.mxu0 %v3745
        %3747 = vmatprep.subr.mxu0 0.0
        %3748 = vmatpush1.msra.mxu0 0.0
        %3749 = vmatprep.subr.mxu0 0.0
        %3750 = vmatpush1.msra.mxu0 0.0
        %3751 = vmatprep.subr.mxu0 0.0
        %3752 = vmatpush1.msra.mxu0 0.0
        %3753 = vmatprep.subr.mxu0 0.0
        %3754 = vmatpush1.msra.mxu0 0.0
        %3755 = vmatprep.subr.mxu0 0.0
        %3756 = vmatpush1.msra.mxu0 0.0
        %3757 = vmatprep.subr.mxu0 0.0
        %3758 = vmatpush1.msra.mxu0 0.0
        %3759 = vmatprep.subr.mxu0 0.0
        %3760 = vmatpush1.msra.mxu0 0.0
        %3761 = vmatprep.subr.mxu0 0.0
        %3762 = vmatpush1.msra.mxu0 0.0
        %3763 = vmatprep.subr.mxu0 0.0
        %3764 = vmatpush1.msra.mxu0 0.0
        %3765 = vmatprep.subr.mxu0 0.0
        %3766 = vmatpush1.msra.mxu0 0.0
        %3767 = vmatprep.subr.mxu0 0.0
        %3768 = vmatpush1.msra.mxu0 0.0
        %3769 = vmatprep.subr.mxu0 0.0
        %3770 = vmatpush1.msra.mxu0 0.0
        %3771 = vmatprep.subr.mxu0 0.0
        %3772 = vmatpush1.msra.mxu0 0.0
        %3773 = vmatprep.subr.mxu0 0.0
        %3774 = vmatpush1.msra.mxu0 0.0
        %3775 = vmatprep.subr.mxu0 0.0
        %3776 = vmatpush1.msra.mxu0 0.0
        %3777 = vmatprep.subr.mxu0 0.0
        %3778 = vmatpush1.msra.mxu0 0.0
        %3779 = vmatprep.subr.mxu0 0.0
        %3780 = vmatpush1.msra.mxu0 0.0
        %3781 = vmatprep.subr.mxu0 0.0
        %3782 = vmatpush1.msra.mxu0 0.0
        %3783 = vmatprep.subr.mxu0 0.0
        %3784 = vmatpush1.msra.mxu0 0.0
        %3785 = vmatprep.subr.mxu0 0.0
        %3786 = vmatpush1.msra.mxu0 0.0
        %3787 = vmatprep.subr.mxu0 0.0
        %3788 = vmatpush1.msra.mxu0 0.0
        %3789 = vmatprep.subr.mxu0 0.0
        %3790 = vmatpush1.msra.mxu0 0.0
        %3791 = vmatprep.subr.mxu0 0.0
        %3792 = vmatpush1.msra.mxu0 0.0
        %3793 = vmatprep.subr.mxu0 0.0
        %3794 = vmatpush1.msra.mxu0 0.0
        %3795 = vmatprep.subr.mxu0 0.0
        %3796 = vmatpush1.msra.mxu0 0.0
        %3797 = vmatprep.subr.mxu0 0.0
        %3798 = vmatpush1.msra.mxu0 0.0
        %3799 = vmatprep.subr.mxu0 0.0
        %3800 = vmatpush1.msra.mxu0 0.0
        %3801 = vmatprep.subr.mxu0 0.0
        %3802 = vmatpush1.msra.mxu0 0.0
        %3803 = vmatprep.subr.mxu0 0.0
        %3804 = vmatpush1.msra.mxu0 0.0
        %3805 = vmatprep.subr.mxu0 0.0
        %3806 = vmatpush1.msra.mxu0 0.0
        %3807 = vmatprep.subr.mxu0 0.0
        %3808 = vmatpush1.msra.mxu0 0.0
        %3809 = vmatprep.mubr.f32.mxu0 0.0
        %v3810 = vand.u32 %v3735, 4294901760
        %v3811 = vsub.f32 %v3735, %v3810
        %v3812 = vand.u32 %v3811, 4294901760
        %v3813 = vsub.f32 %v3811, %v3812
        %v3814 = vand.u32 %v3813, 4294901760
        %3815 = vmatmul.mubr.f32.gmra.mrb[0].mxu0 %v3814
        %v3816 = vpop.f32.mrb[0].mxu0
        %v3817 = vadd.f32 0.0, %v3816
        %v3818 = vpop.f32.mrb[0].mxu0
        %v3819 = vadd.f32 0.0, %v3818
        %3820 = vdwg.mxu0
        %v3821 = vand.u32 %v3741, 4294901760
        %v3822 = vsub.f32 %v3741, %v3821
        %v3823 = vand.u32 %v3822, 4294901760
        %v3824 = vsub.f32 %v3822, %v3823
        %v3825 = vand.u32 %v3824, 4294901760
        %3826 = vmatprep.subr.mxu0 %v3825
        %v3827 = vand.u32 %v3738, 4294901760
        %v3828 = vsub.f32 %v3738, %v3827
        %v3829 = vand.u32 %v3828, 4294901760
        %v3830 = vsub.f32 %v3828, %v3829
        %v3831 = vand.u32 %v3830, 4294901760
        %3832 = vmatpush1.msra.mxu0 %v3831
        %3833 = vmatprep.subr.mxu0 0.0
        %3834 = vmatpush1.msra.mxu0 0.0
        %3835 = vmatprep.subr.mxu0 0.0
        %3836 = vmatpush1.msra.mxu0 0.0
        %3837 = vmatprep.subr.mxu0 0.0
        %3838 = vmatpush1.msra.mxu0 0.0
        %3839 = vmatprep.subr.mxu0 0.0
        %3840 = vmatpush1.msra.mxu0 0.0
        %3841 = vmatprep.subr.mxu0 0.0
        %3842 = vmatpush1.msra.mxu0 0.0
        %3843 = vmatprep.subr.mxu0 0.0
        %3844 = vmatpush1.msra.mxu0 0.0
        %3845 = vmatprep.subr.mxu0 0.0
        %3846 = vmatpush1.msra.mxu0 0.0
        %3847 = vmatprep.subr.mxu0 0.0
        %3848 = vmatpush1.msra.mxu0 0.0
        %3849 = vmatprep.subr.mxu0 0.0
        %3850 = vmatpush1.msra.mxu0 0.0
        %3851 = vmatprep.subr.mxu0 0.0
        %3852 = vmatpush1.msra.mxu0 0.0
        %3853 = vmatprep.subr.mxu0 0.0
        %3854 = vmatpush1.msra.mxu0 0.0
        %3855 = vmatprep.subr.mxu0 0.0
        %3856 = vmatpush1.msra.mxu0 0.0
        %3857 = vmatprep.subr.mxu0 0.0
        %3858 = vmatpush1.msra.mxu0 0.0
        %3859 = vmatprep.subr.mxu0 0.0
        %3860 = vmatpush1.msra.mxu0 0.0
        %3861 = vmatprep.subr.mxu0 0.0
        %3862 = vmatpush1.msra.mxu0 0.0
        %3863 = vmatprep.subr.mxu0 0.0
        %3864 = vmatpush1.msra.mxu0 0.0
        %3865 = vmatprep.subr.mxu0 0.0
        %3866 = vmatpush1.msra.mxu0 0.0
        %3867 = vmatprep.subr.mxu0 0.0
        %3868 = vmatpush1.msra.mxu0 0.0
        %3869 = vmatprep.subr.mxu0 0.0
        %3870 = vmatpush1.msra.mxu0 0.0
        %3871 = vmatprep.subr.mxu0 0.0
        %3872 = vmatpush1.msra.mxu0 0.0
        %3873 = vmatprep.subr.mxu0 0.0
        %3874 = vmatpush1.msra.mxu0 0.0
        %3875 = vmatprep.subr.mxu0 0.0
        %3876 = vmatpush1.msra.mxu0 0.0
        %3877 = vmatprep.subr.mxu0 0.0
        %3878 = vmatpush1.msra.mxu0 0.0
        %3879 = vmatprep.subr.mxu0 0.0
        %3880 = vmatpush1.msra.mxu0 0.0
        %3881 = vmatprep.subr.mxu0 0.0
        %3882 = vmatpush1.msra.mxu0 0.0
        %3883 = vmatprep.subr.mxu0 0.0
        %3884 = vmatpush1.msra.mxu0 0.0
        %3885 = vmatprep.subr.mxu0 0.0
        %3886 = vmatpush1.msra.mxu0 0.0
        %3887 = vmatprep.subr.mxu0 0.0
        %3888 = vmatpush1.msra.mxu0 0.0
        %3889 = vmatprep.subr.mxu0 0.0
        %3890 = vmatpush1.msra.mxu0 0.0
        %3891 = vmatprep.subr.mxu0 0.0
        %3892 = vmatpush1.msra.mxu0 0.0
        %3893 = vmatprep.subr.mxu0 0.0
        %3894 = vmatpush1.msra.mxu0 0.0
        %3895 = vmatprep.mubr.f32.mxu0 0.0
        %v3896 = vand.u32 %v3735, 4294901760
        %3897 = vmatmul.mubr.f32.gmra.mrb[0].mxu0 %v3896
        %v3898 = vpop.f32.mrb[0].mxu0
        %v3899 = vadd.f32 %v3817, %v3898
        %v3900 = vpop.f32.mrb[0].mxu0
        %v3901 = vadd.f32 %v3819, %v3900
        %3902 = vdwg.mxu0
        %v3903 = vand.u32 %v3741, 4294901760
        %v3904 = vsub.f32 %v3741, %v3903
        %3905 = vmatprep.subr.mxu0 %v3904
        %v3906 = vand.u32 %v3738, 4294901760
        %v3907 = vsub.f32 %v3738, %v3906
        %3908 = vmatpush1.msra.mxu0 %v3907
        %3909 = vmatprep.subr.mxu0 0.0
        %3910 = vmatpush1.msra.mxu0 0.0
        %3911 = vmatprep.subr.mxu0 0.0
        %3912 = vmatpush1.msra.mxu0 0.0
        %3913 = vmatprep.subr.mxu0 0.0
        %3914 = vmatpush1.msra.mxu0 0.0
        %3915 = vmatprep.subr.mxu0 0.0
        %3916 = vmatpush1.msra.mxu0 0.0
        %3917 = vmatprep.subr.mxu0 0.0
        %3918 = vmatpush1.msra.mxu0 0.0
        %3919 = vmatprep.subr.mxu0 0.0
        %3920 = vmatpush1.msra.mxu0 0.0
        %3921 = vmatprep.subr.mxu0 0.0
        %3922 = vmatpush1.msra.mxu0 0.0
        %3923 = vmatprep.subr.mxu0 0.0
        %3924 = vmatpush1.msra.mxu0 0.0
        %3925 = vmatprep.subr.mxu0 0.0
        %3926 = vmatpush1.msra.mxu0 0.0
        %3927 = vmatprep.subr.mxu0 0.0
        %3928 = vmatpush1.msra.mxu0 0.0
        %3929 = vmatprep.subr.mxu0 0.0
        %3930 = vmatpush1.msra.mxu0 0.0
        %3931 = vmatprep.subr.mxu0 0.0
        %3932 = vmatpush1.msra.mxu0 0.0
        %3933 = vmatprep.subr.mxu0 0.0
        %3934 = vmatpush1.msra.mxu0 0.0
        %3935 = vmatprep.subr.mxu0 0.0
        %3936 = vmatpush1.msra.mxu0 0.0
        %3937 = vmatprep.subr.mxu0 0.0
        %3938 = vmatpush1.msra.mxu0 0.0
        %3939 = vmatprep.subr.mxu0 0.0
        %3940 = vmatpush1.msra.mxu0 0.0
        %3941 = vmatprep.subr.mxu0 0.0
        %3942 = vmatpush1.msra.mxu0 0.0
        %3943 = vmatprep.subr.mxu0 0.0
        %3944 = vmatpush1.msra.mxu0 0.0
        %3945 = vmatprep.subr.mxu0 0.0
        %3946 = vmatpush1.msra.mxu0 0.0
        %3947 = vmatprep.subr.mxu0 0.0
        %3948 = vmatpush1.msra.mxu0 0.0
        %3949 = vmatprep.subr.mxu0 0.0
        %3950 = vmatpush1.msra.mxu0 0.0
        %3951 = vmatprep.subr.mxu0 0.0
        %3952 = vmatpush1.msra.mxu0 0.0
        %3953 = vmatprep.subr.mxu0 0.0
        %3954 = vmatpush1.msra.mxu0 0.0
        %3955 = vmatprep.subr.mxu0 0.0
        %3956 = vmatpush1.msra.mxu0 0.0
        %3957 = vmatprep.subr.mxu0 0.0
        %3958 = vmatpush1.msra.mxu0 0.0
        %3959 = vmatprep.subr.mxu0 0.0
        %3960 = vmatpush1.msra.mxu0 0.0
        %3961 = vmatprep.subr.mxu0 0.0
        %3962 = vmatpush1.msra.mxu0 0.0
        %3963 = vmatprep.subr.mxu0 0.0
        %3964 = vmatpush1.msra.mxu0 0.0
        %3965 = vmatprep.subr.mxu0 0.0
        %3966 = vmatpush1.msra.mxu0 0.0
        %3967 = vmatprep.subr.mxu0 0.0
        %3968 = vmatpush1.msra.mxu0 0.0
        %3969 = vmatprep.subr.mxu0 0.0
        %3970 = vmatpush1.msra.mxu0 0.0
        %3971 = vmatprep.mubr.f32.mxu0 0.0
        %v3972 = vand.u32 %v3735, 4294901760
        %v3973 = vsub.f32 %v3735, %v3972
        %3974 = vmatmul.mubr.f32.gmra.mrb[0].mxu0 %v3973
        %v3975 = vpop.f32.mrb[0].mxu0
        %v3976 = vadd.f32 %v3899, %v3975
        %v3977 = vpop.f32.mrb[0].mxu0
        %v3978 = vadd.f32 %v3901, %v3977
        %3979 = vdwg.mxu0
        %v3980 = vand.u32 %v3741, 4294901760
        %3981 = vmatprep.subr.mxu0 %v3980
        %v3982 = vand.u32 %v3738, 4294901760
        %3983 = vmatpush1.msra.mxu0 %v3982
        %3984 = vmatprep.subr.mxu0 0.0
        %3985 = vmatpush1.msra.mxu0 0.0
        %3986 = vmatprep.subr.mxu0 0.0
        %3987 = vmatpush1.msra.mxu0 0.0
        %3988 = vmatprep.subr.mxu0 0.0
        %3989 = vmatpush1.msra.mxu0 0.0
        %3990 = vmatprep.subr.mxu0 0.0
        %3991 = vmatpush1.msra.mxu0 0.0
        %3992 = vmatprep.subr.mxu0 0.0
        %3993 = vmatpush1.msra.mxu0 0.0
        %3994 = vmatprep.subr.mxu0 0.0
        %3995 = vmatpush1.msra.mxu0 0.0
        %3996 = vmatprep.subr.mxu0 0.0
        %3997 = vmatpush1.msra.mxu0 0.0
        %3998 = vmatprep.subr.mxu0 0.0
        %3999 = vmatpush1.msra.mxu0 0.0
        %4000 = vmatprep.subr.mxu0 0.0
        %4001 = vmatpush1.msra.mxu0 0.0
        %4002 = vmatprep.subr.mxu0 0.0
        %4003 = vmatpush1.msra.mxu0 0.0
        %4004 = vmatprep.subr.mxu0 0.0
        %4005 = vmatpush1.msra.mxu0 0.0
        %4006 = vmatprep.subr.mxu0 0.0
        %4007 = vmatpush1.msra.mxu0 0.0
        %4008 = vmatprep.subr.mxu0 0.0
        %4009 = vmatpush1.msra.mxu0 0.0
        %4010 = vmatprep.subr.mxu0 0.0
        %4011 = vmatpush1.msra.mxu0 0.0
        %4012 = vmatprep.subr.mxu0 0.0
        %4013 = vmatpush1.msra.mxu0 0.0
        %4014 = vmatprep.subr.mxu0 0.0
        %4015 = vmatpush1.msra.mxu0 0.0
        %4016 = vmatprep.subr.mxu0 0.0
        %4017 = vmatpush1.msra.mxu0 0.0
        %4018 = vmatprep.subr.mxu0 0.0
        %4019 = vmatpush1.msra.mxu0 0.0
        %4020 = vmatprep.subr.mxu0 0.0
        %4021 = vmatpush1.msra.mxu0 0.0
        %4022 = vmatprep.subr.mxu0 0.0
        %4023 = vmatpush1.msra.mxu0 0.0
        %4024 = vmatprep.subr.mxu0 0.0
        %4025 = vmatpush1.msra.mxu0 0.0
        %4026 = vmatprep.subr.mxu0 0.0
        %4027 = vmatpush1.msra.mxu0 0.0
        %4028 = vmatprep.subr.mxu0 0.0
        %4029 = vmatpush1.msra.mxu0 0.0
        %4030 = vmatprep.subr.mxu0 0.0
        %4031 = vmatpush1.msra.mxu0 0.0
        %4032 = vmatprep.subr.mxu0 0.0
        %4033 = vmatpush1.msra.mxu0 0.0
        %4034 = vmatprep.subr.mxu0 0.0
        %4035 = vmatpush1.msra.mxu0 0.0
        %4036 = vmatprep.subr.mxu0 0.0
        %4037 = vmatpush1.msra.mxu0 0.0
        %4038 = vmatprep.subr.mxu0 0.0
        %4039 = vmatpush1.msra.mxu0 0.0
        %4040 = vmatprep.subr.mxu0 0.0
        %4041 = vmatpush1.msra.mxu0 0.0
        %4042 = vmatprep.subr.mxu0 0.0
        %4043 = vmatpush1.msra.mxu0 0.0
        %4044 = vmatprep.subr.mxu0 0.0
        %4045 = vmatpush1.msra.mxu0 0.0
        %4046 = vmatprep.mubr.f32.mxu0 0.0
        %v4047 = vand.u32 %v3735, 4294901760
        %v4048 = vsub.f32 %v3735, %v4047
        %v4049 = vand.u32 %v4048, 4294901760
        %4050 = vmatmul.mubr.f32.gmra.mrb[0].mxu0 %v4049
        %v4051 = vpop.f32.mrb[0].mxu0
        %v4052 = vadd.f32 %v3976, %v4051
        %v4053 = vpop.f32.mrb[0].mxu0
        %v4054 = vadd.f32 %v3978, %v4053
        %4055 = vdwg.mxu0
        %v4056 = vand.u32 %v3741, 4294901760
        %v4057 = vsub.f32 %v3741, %v4056
        %v4058 = vand.u32 %v4057, 4294901760
        %4059 = vmatprep.subr.mxu0 %v4058
        %v4060 = vand.u32 %v3738, 4294901760
        %v4061 = vsub.f32 %v3738, %v4060
        %v4062 = vand.u32 %v4061, 4294901760
        %4063 = vmatpush1.msra.mxu0 %v4062
        %4064 = vmatprep.subr.mxu0 0.0
        %4065 = vmatpush1.msra.mxu0 0.0
        %4066 = vmatprep.subr.mxu0 0.0
        %4067 = vmatpush1.msra.mxu0 0.0
        %4068 = vmatprep.subr.mxu0 0.0
        %4069 = vmatpush1.msra.mxu0 0.0
        %4070 = vmatprep.subr.mxu0 0.0
        %4071 = vmatpush1.msra.mxu0 0.0
        %4072 = vmatprep.subr.mxu0 0.0
        %4073 = vmatpush1.msra.mxu0 0.0
        %4074 = vmatprep.subr.mxu0 0.0
        %4075 = vmatpush1.msra.mxu0 0.0
        %4076 = vmatprep.subr.mxu0 0.0
        %4077 = vmatpush1.msra.mxu0 0.0
        %4078 = vmatprep.subr.mxu0 0.0
        %4079 = vmatpush1.msra.mxu0 0.0
        %4080 = vmatprep.subr.mxu0 0.0
        %4081 = vmatpush1.msra.mxu0 0.0
        %4082 = vmatprep.subr.mxu0 0.0
        %4083 = vmatpush1.msra.mxu0 0.0
        %4084 = vmatprep.subr.mxu0 0.0
        %4085 = vmatpush1.msra.mxu0 0.0
        %4086 = vmatprep.subr.mxu0 0.0
        %4087 = vmatpush1.msra.mxu0 0.0
        %4088 = vmatprep.subr.mxu0 0.0
        %4089 = vmatpush1.msra.mxu0 0.0
        %4090 = vmatprep.subr.mxu0 0.0
        %4091 = vmatpush1.msra.mxu0 0.0
        %4092 = vmatprep.subr.mxu0 0.0
        %4093 = vmatpush1.msra.mxu0 0.0
        %4094 = vmatprep.subr.mxu0 0.0
        %4095 = vmatpush1.msra.mxu0 0.0
        %4096 = vmatprep.subr.mxu0 0.0
        %4097 = vmatpush1.msra.mxu0 0.0
        %4098 = vmatprep.subr.mxu0 0.0
        %4099 = vmatpush1.msra.mxu0 0.0
        %4100 = vmatprep.subr.mxu0 0.0
        %4101 = vmatpush1.msra.mxu0 0.0
        %4102 = vmatprep.subr.mxu0 0.0
        %4103 = vmatpush1.msra.mxu0 0.0
        %4104 = vmatprep.subr.mxu0 0.0
        %4105 = vmatpush1.msra.mxu0 0.0
        %4106 = vmatprep.subr.mxu0 0.0
        %4107 = vmatpush1.msra.mxu0 0.0
        %4108 = vmatprep.subr.mxu0 0.0
        %4109 = vmatpush1.msra.mxu0 0.0
        %4110 = vmatprep.subr.mxu0 0.0
        %4111 = vmatpush1.msra.mxu0 0.0
        %4112 = vmatprep.subr.mxu0 0.0
        %4113 = vmatpush1.msra.mxu0 0.0
        %4114 = vmatprep.subr.mxu0 0.0
        %4115 = vmatpush1.msra.mxu0 0.0
        %4116 = vmatprep.subr.mxu0 0.0
        %4117 = vmatpush1.msra.mxu0 0.0
        %4118 = vmatprep.subr.mxu0 0.0
        %4119 = vmatpush1.msra.mxu0 0.0
        %4120 = vmatprep.subr.mxu0 0.0
        %4121 = vmatpush1.msra.mxu0 0.0
        %4122 = vmatprep.subr.mxu0 0.0
        %4123 = vmatpush1.msra.mxu0 0.0
        %4124 = vmatprep.subr.mxu0 0.0
        %4125 = vmatpush1.msra.mxu0 0.0
        %4126 = vmatprep.mubr.f32.mxu0 0.0
        %v4127 = vand.u32 %v3735, 4294901760
        %4128 = vmatmul.mubr.f32.gmra.mrb[0].mxu0 %v4127
        %v4129 = vpop.f32.mrb[0].mxu0
        %v4130 = vadd.f32 %v4052, %v4129
        %v4131 = vpop.f32.mrb[0].mxu0
        %v4132 = vadd.f32 %v4054, %v4131
        %4133 = vdwg.mxu0
        %v4134 = vand.u32 %v3741, 4294901760
        %4135 = vmatprep.subr.mxu0 %v4134
        %v4136 = vand.u32 %v3738, 4294901760
        %4137 = vmatpush1.msra.mxu0 %v4136
        %4138 = vmatprep.subr.mxu0 0.0
        %4139 = vmatpush1.msra.mxu0 0.0
        %4140 = vmatprep.subr.mxu0 0.0
        %4141 = vmatpush1.msra.mxu0 0.0
        %4142 = vmatprep.subr.mxu0 0.0
        %4143 = vmatpush1.msra.mxu0 0.0
        %4144 = vmatprep.subr.mxu0 0.0
        %4145 = vmatpush1.msra.mxu0 0.0
        %4146 = vmatprep.subr.mxu0 0.0
        %4147 = vmatpush1.msra.mxu0 0.0
        %4148 = vmatprep.subr.mxu0 0.0
        %4149 = vmatpush1.msra.mxu0 0.0
        %4150 = vmatprep.subr.mxu0 0.0
        %4151 = vmatpush1.msra.mxu0 0.0
        %4152 = vmatprep.subr.mxu0 0.0
        %4153 = vmatpush1.msra.mxu0 0.0
        %4154 = vmatprep.subr.mxu0 0.0
        %4155 = vmatpush1.msra.mxu0 0.0
        %4156 = vmatprep.subr.mxu0 0.0
        %4157 = vmatpush1.msra.mxu0 0.0
        %4158 = vmatprep.subr.mxu0 0.0
        %4159 = vmatpush1.msra.mxu0 0.0
        %4160 = vmatprep.subr.mxu0 0.0
        %4161 = vmatpush1.msra.mxu0 0.0
        %4162 = vmatprep.subr.mxu0 0.0
        %4163 = vmatpush1.msra.mxu0 0.0
        %4164 = vmatprep.subr.mxu0 0.0
        %4165 = vmatpush1.msra.mxu0 0.0
        %4166 = vmatprep.subr.mxu0 0.0
        %4167 = vmatpush1.msra.mxu0 0.0
        %4168 = vmatprep.subr.mxu0 0.0
        %4169 = vmatpush1.msra.mxu0 0.0
        %4170 = vmatprep.subr.mxu0 0.0
        %4171 = vmatpush1.msra.mxu0 0.0
        %4172 = vmatprep.subr.mxu0 0.0
        %4173 = vmatpush1.msra.mxu0 0.0
        %4174 = vmatprep.subr.mxu0 0.0
        %4175 = vmatpush1.msra.mxu0 0.0
        %4176 = vmatprep.subr.mxu0 0.0
        %4177 = vmatpush1.msra.mxu0 0.0
        %4178 = vmatprep.subr.mxu0 0.0
        %4179 = vmatpush1.msra.mxu0 0.0
        %4180 = vmatprep.subr.mxu0 0.0
        %4181 = vmatpush1.msra.mxu0 0.0
        %4182 = vmatprep.subr.mxu0 0.0
        %4183 = vmatpush1.msra.mxu0 0.0
        %4184 = vmatprep.subr.mxu0 0.0
        %4185 = vmatpush1.msra.mxu0 0.0
        %4186 = vmatprep.subr.mxu0 0.0
        %4187 = vmatpush1.msra.mxu0 0.0
        %4188 = vmatprep.subr.mxu0 0.0
        %4189 = vmatpush1.msra.mxu0 0.0
        %4190 = vmatprep.subr.mxu0 0.0
        %4191 = vmatpush1.msra.mxu0 0.0
        %4192 = vmatprep.subr.mxu0 0.0
        %4193 = vmatpush1.msra.mxu0 0.0
        %4194 = vmatprep.subr.mxu0 0.0
        %4195 = vmatpush1.msra.mxu0 0.0
        %4196 = vmatprep.subr.mxu0 0.0
        %4197 = vmatpush1.msra.mxu0 0.0
        %4198 = vmatprep.subr.mxu0 0.0
        %4199 = vmatpush1.msra.mxu0 0.0
        %4200 = vmatprep.mubr.f32.mxu0 0.0
        %v4201 = vand.u32 %v3735, 4294901760
        %4202 = vmatmul.mubr.f32.gmra.mrb[0].mxu0 %v4201
        %v4203 = vpop.f32.mrb[0].mxu0
        %v4204 = vadd.f32 %v4130, %v4203
        %v4205 = vpop.f32.mrb[0].mxu0
        %v4206 = vadd.f32 %v4132, %v4205
        %4207 = vdwg.mxu0
        %v4208 = vadd.f32 %v3715, %v4204
        %v4209 = vadd.f32 %v3716, %v4206
        %4210 = vrot.lane.b32.xlu0 %v250, 111
        %v4211 = vpop.permute.xlu0 %4210
        %4212 = vrot.lane.b32.xlu0 %v268, 111
        %v4213 = vpop.permute.xlu0 %4212
        %vm4214 = vcmp.lt.s32.totalorder %v275, 111
        %v4215 = vsel %vm4214, %v4211, %v4213
        %v4216 = vsel %vm4214, %v4213, %v4211
        %v4217 = vlaneseq
        %v4218 = vshrl.u32 %v4217, 7
        %v4219 = vsub.s32 0, %v4218
        %v4220 = vrot.slane %v253, %v4219
        %v4221 = vlaneseq
        %v4222 = vshrl.u32 %v4221, 7
        %v4223 = vsub.s32 0, %v4222
        %v4224 = vrot.slane %v254, %v4223
        %v4225 = vmul.f32 %v4215, %v4220
        %v4226 = vmul.f32 %v4216, %v4224
        %v4228 = vsel %vm308, %v259, 0
        %v4231 = vsel %vm311, %v4225, 0
        %v4234 = vsel %vm311, %v4226, 0
        %v4236 = vand.u32 %v4234, 4294901760
        %4237 = vmatprep.subr.mxu0 %v4236
        %v4238 = vand.u32 %v4231, 4294901760
        %4239 = vmatpush1.msra.mxu0 %v4238
        %4240 = vmatprep.subr.mxu0 0.0
        %4241 = vmatpush1.msra.mxu0 0.0
        %4242 = vmatprep.subr.mxu0 0.0
        %4243 = vmatpush1.msra.mxu0 0.0
        %4244 = vmatprep.subr.mxu0 0.0
        %4245 = vmatpush1.msra.mxu0 0.0
        %4246 = vmatprep.subr.mxu0 0.0
        %4247 = vmatpush1.msra.mxu0 0.0
        %4248 = vmatprep.subr.mxu0 0.0
        %4249 = vmatpush1.msra.mxu0 0.0
        %4250 = vmatprep.subr.mxu0 0.0
        %4251 = vmatpush1.msra.mxu0 0.0
        %4252 = vmatprep.subr.mxu0 0.0
        %4253 = vmatpush1.msra.mxu0 0.0
        %4254 = vmatprep.subr.mxu0 0.0
        %4255 = vmatpush1.msra.mxu0 0.0
        %4256 = vmatprep.subr.mxu0 0.0
        %4257 = vmatpush1.msra.mxu0 0.0
        %4258 = vmatprep.subr.mxu0 0.0
        %4259 = vmatpush1.msra.mxu0 0.0
        %4260 = vmatprep.subr.mxu0 0.0
        %4261 = vmatpush1.msra.mxu0 0.0
        %4262 = vmatprep.subr.mxu0 0.0
        %4263 = vmatpush1.msra.mxu0 0.0
        %4264 = vmatprep.subr.mxu0 0.0
        %4265 = vmatpush1.msra.mxu0 0.0
        %4266 = vmatprep.subr.mxu0 0.0
        %4267 = vmatpush1.msra.mxu0 0.0
        %4268 = vmatprep.subr.mxu0 0.0
        %4269 = vmatpush1.msra.mxu0 0.0
        %4270 = vmatprep.subr.mxu0 0.0
        %4271 = vmatpush1.msra.mxu0 0.0
        %4272 = vmatprep.subr.mxu0 0.0
        %4273 = vmatpush1.msra.mxu0 0.0
        %4274 = vmatprep.subr.mxu0 0.0
        %4275 = vmatpush1.msra.mxu0 0.0
        %4276 = vmatprep.subr.mxu0 0.0
        %4277 = vmatpush1.msra.mxu0 0.0
        %4278 = vmatprep.subr.mxu0 0.0
        %4279 = vmatpush1.msra.mxu0 0.0
        %4280 = vmatprep.subr.mxu0 0.0
        %4281 = vmatpush1.msra.mxu0 0.0
        %4282 = vmatprep.subr.mxu0 0.0
        %4283 = vmatpush1.msra.mxu0 0.0
        %4284 = vmatprep.subr.mxu0 0.0
        %4285 = vmatpush1.msra.mxu0 0.0
        %4286 = vmatprep.subr.mxu0 0.0
        %4287 = vmatpush1.msra.mxu0 0.0
        %4288 = vmatprep.subr.mxu0 0.0
        %4289 = vmatpush1.msra.mxu0 0.0
        %4290 = vmatprep.subr.mxu0 0.0
        %4291 = vmatpush1.msra.mxu0 0.0
        %4292 = vmatprep.subr.mxu0 0.0
        %4293 = vmatpush1.msra.mxu0 0.0
        %4294 = vmatprep.subr.mxu0 0.0
        %4295 = vmatpush1.msra.mxu0 0.0
        %4296 = vmatprep.subr.mxu0 0.0
        %4297 = vmatpush1.msra.mxu0 0.0
        %4298 = vmatprep.subr.mxu0 0.0
        %4299 = vmatpush1.msra.mxu0 0.0
        %4300 = vmatprep.subr.mxu0 0.0
        %4301 = vmatpush1.msra.mxu0 0.0
        %4302 = vmatprep.mubr.f32.mxu0 0.0
        %v4303 = vand.u32 %v4228, 4294901760
        %v4304 = vsub.f32 %v4228, %v4303
        %v4305 = vand.u32 %v4304, 4294901760
        %v4306 = vsub.f32 %v4304, %v4305
        %v4307 = vand.u32 %v4306, 4294901760
        %4308 = vmatmul.mubr.f32.gmra.mrb[0].mxu0 %v4307
        %v4309 = vpop.f32.mrb[0].mxu0
        %v4310 = vadd.f32 0.0, %v4309
        %v4311 = vpop.f32.mrb[0].mxu0
        %v4312 = vadd.f32 0.0, %v4311
        %4313 = vdwg.mxu0
        %v4314 = vand.u32 %v4234, 4294901760
        %v4315 = vsub.f32 %v4234, %v4314
        %v4316 = vand.u32 %v4315, 4294901760
        %v4317 = vsub.f32 %v4315, %v4316
        %v4318 = vand.u32 %v4317, 4294901760
        %4319 = vmatprep.subr.mxu0 %v4318
        %v4320 = vand.u32 %v4231, 4294901760
        %v4321 = vsub.f32 %v4231, %v4320
        %v4322 = vand.u32 %v4321, 4294901760
        %v4323 = vsub.f32 %v4321, %v4322
        %v4324 = vand.u32 %v4323, 4294901760
        %4325 = vmatpush1.msra.mxu0 %v4324
        %4326 = vmatprep.subr.mxu0 0.0
        %4327 = vmatpush1.msra.mxu0 0.0
        %4328 = vmatprep.subr.mxu0 0.0
        %4329 = vmatpush1.msra.mxu0 0.0
        %4330 = vmatprep.subr.mxu0 0.0
        %4331 = vmatpush1.msra.mxu0 0.0
        %4332 = vmatprep.subr.mxu0 0.0
        %4333 = vmatpush1.msra.mxu0 0.0
        %4334 = vmatprep.subr.mxu0 0.0
        %4335 = vmatpush1.msra.mxu0 0.0
        %4336 = vmatprep.subr.mxu0 0.0
        %4337 = vmatpush1.msra.mxu0 0.0
        %4338 = vmatprep.subr.mxu0 0.0
        %4339 = vmatpush1.msra.mxu0 0.0
        %4340 = vmatprep.subr.mxu0 0.0
        %4341 = vmatpush1.msra.mxu0 0.0
        %4342 = vmatprep.subr.mxu0 0.0
        %4343 = vmatpush1.msra.mxu0 0.0
        %4344 = vmatprep.subr.mxu0 0.0
        %4345 = vmatpush1.msra.mxu0 0.0
        %4346 = vmatprep.subr.mxu0 0.0
        %4347 = vmatpush1.msra.mxu0 0.0
        %4348 = vmatprep.subr.mxu0 0.0
        %4349 = vmatpush1.msra.mxu0 0.0
        %4350 = vmatprep.subr.mxu0 0.0
        %4351 = vmatpush1.msra.mxu0 0.0
        %4352 = vmatprep.subr.mxu0 0.0
        %4353 = vmatpush1.msra.mxu0 0.0
        %4354 = vmatprep.subr.mxu0 0.0
        %4355 = vmatpush1.msra.mxu0 0.0
        %4356 = vmatprep.subr.mxu0 0.0
        %4357 = vmatpush1.msra.mxu0 0.0
        %4358 = vmatprep.subr.mxu0 0.0
        %4359 = vmatpush1.msra.mxu0 0.0
        %4360 = vmatprep.subr.mxu0 0.0
        %4361 = vmatpush1.msra.mxu0 0.0
        %4362 = vmatprep.subr.mxu0 0.0
        %4363 = vmatpush1.msra.mxu0 0.0
        %4364 = vmatprep.subr.mxu0 0.0
        %4365 = vmatpush1.msra.mxu0 0.0
        %4366 = vmatprep.subr.mxu0 0.0
        %4367 = vmatpush1.msra.mxu0 0.0
        %4368 = vmatprep.subr.mxu0 0.0
        %4369 = vmatpush1.msra.mxu0 0.0
        %4370 = vmatprep.subr.mxu0 0.0
        %4371 = vmatpush1.msra.mxu0 0.0
        %4372 = vmatprep.subr.mxu0 0.0
        %4373 = vmatpush1.msra.mxu0 0.0
        %4374 = vmatprep.subr.mxu0 0.0
        %4375 = vmatpush1.msra.mxu0 0.0
        %4376 = vmatprep.subr.mxu0 0.0
        %4377 = vmatpush1.msra.mxu0 0.0
        %4378 = vmatprep.subr.mxu0 0.0
        %4379 = vmatpush1.msra.mxu0 0.0
        %4380 = vmatprep.subr.mxu0 0.0
        %4381 = vmatpush1.msra.mxu0 0.0
        %4382 = vmatprep.subr.mxu0 0.0
        %4383 = vmatpush1.msra.mxu0 0.0
        %4384 = vmatprep.subr.mxu0 0.0
        %4385 = vmatpush1.msra.mxu0 0.0
        %4386 = vmatprep.subr.mxu0 0.0
        %4387 = vmatpush1.msra.mxu0 0.0
        %4388 = vmatprep.mubr.f32.mxu0 0.0
        %v4389 = vand.u32 %v4228, 4294901760
        %4390 = vmatmul.mubr.f32.gmra.mrb[0].mxu0 %v4389
        %v4391 = vpop.f32.mrb[0].mxu0
        %v4392 = vadd.f32 %v4310, %v4391
        %v4393 = vpop.f32.mrb[0].mxu0
        %v4394 = vadd.f32 %v4312, %v4393
        %4395 = vdwg.mxu0
        %v4396 = vand.u32 %v4234, 4294901760
        %v4397 = vsub.f32 %v4234, %v4396
        %4398 = vmatprep.subr.mxu0 %v4397
        %v4399 = vand.u32 %v4231, 4294901760
        %v4400 = vsub.f32 %v4231, %v4399
        %4401 = vmatpush1.msra.mxu0 %v4400
        %4402 = vmatprep.subr.mxu0 0.0
        %4403 = vmatpush1.msra.mxu0 0.0
        %4404 = vmatprep.subr.mxu0 0.0
        %4405 = vmatpush1.msra.mxu0 0.0
        %4406 = vmatprep.subr.mxu0 0.0
        %4407 = vmatpush1.msra.mxu0 0.0
        %4408 = vmatprep.subr.mxu0 0.0
        %4409 = vmatpush1.msra.mxu0 0.0
        %4410 = vmatprep.subr.mxu0 0.0
        %4411 = vmatpush1.msra.mxu0 0.0
        %4412 = vmatprep.subr.mxu0 0.0
        %4413 = vmatpush1.msra.mxu0 0.0
        %4414 = vmatprep.subr.mxu0 0.0
        %4415 = vmatpush1.msra.mxu0 0.0
        %4416 = vmatprep.subr.mxu0 0.0
        %4417 = vmatpush1.msra.mxu0 0.0
        %4418 = vmatprep.subr.mxu0 0.0
        %4419 = vmatpush1.msra.mxu0 0.0
        %4420 = vmatprep.subr.mxu0 0.0
        %4421 = vmatpush1.msra.mxu0 0.0
        %4422 = vmatprep.subr.mxu0 0.0
        %4423 = vmatpush1.msra.mxu0 0.0
        %4424 = vmatprep.subr.mxu0 0.0
        %4425 = vmatpush1.msra.mxu0 0.0
        %4426 = vmatprep.subr.mxu0 0.0
        %4427 = vmatpush1.msra.mxu0 0.0
        %4428 = vmatprep.subr.mxu0 0.0
        %4429 = vmatpush1.msra.mxu0 0.0
        %4430 = vmatprep.subr.mxu0 0.0
        %4431 = vmatpush1.msra.mxu0 0.0
        %4432 = vmatprep.subr.mxu0 0.0
        %4433 = vmatpush1.msra.mxu0 0.0
        %4434 = vmatprep.subr.mxu0 0.0
        %4435 = vmatpush1.msra.mxu0 0.0
        %4436 = vmatprep.subr.mxu0 0.0
        %4437 = vmatpush1.msra.mxu0 0.0
        %4438 = vmatprep.subr.mxu0 0.0
        %4439 = vmatpush1.msra.mxu0 0.0
        %4440 = vmatprep.subr.mxu0 0.0
        %4441 = vmatpush1.msra.mxu0 0.0
        %4442 = vmatprep.subr.mxu0 0.0
        %4443 = vmatpush1.msra.mxu0 0.0
        %4444 = vmatprep.subr.mxu0 0.0
        %4445 = vmatpush1.msra.mxu0 0.0
        %4446 = vmatprep.subr.mxu0 0.0
        %4447 = vmatpush1.msra.mxu0 0.0
        %4448 = vmatprep.subr.mxu0 0.0
        %4449 = vmatpush1.msra.mxu0 0.0
        %4450 = vmatprep.subr.mxu0 0.0
        %4451 = vmatpush1.msra.mxu0 0.0
        %4452 = vmatprep.subr.mxu0 0.0
        %4453 = vmatpush1.msra.mxu0 0.0
        %4454 = vmatprep.subr.mxu0 0.0
        %4455 = vmatpush1.msra.mxu0 0.0
        %4456 = vmatprep.subr.mxu0 0.0
        %4457 = vmatpush1.msra.mxu0 0.0
        %4458 = vmatprep.subr.mxu0 0.0
        %4459 = vmatpush1.msra.mxu0 0.0
        %4460 = vmatprep.subr.mxu0 0.0
        %4461 = vmatpush1.msra.mxu0 0.0
        %4462 = vmatprep.subr.mxu0 0.0
        %4463 = vmatpush1.msra.mxu0 0.0
        %4464 = vmatprep.mubr.f32.mxu0 0.0
        %v4465 = vand.u32 %v4228, 4294901760
        %v4466 = vsub.f32 %v4228, %v4465
        %4467 = vmatmul.mubr.f32.gmra.mrb[0].mxu0 %v4466
        %v4468 = vpop.f32.mrb[0].mxu0
        %v4469 = vadd.f32 %v4392, %v4468
        %v4470 = vpop.f32.mrb[0].mxu0
        %v4471 = vadd.f32 %v4394, %v4470
        %4472 = vdwg.mxu0
        %v4473 = vand.u32 %v4234, 4294901760
        %4474 = vmatprep.subr.mxu0 %v4473
        %v4475 = vand.u32 %v4231, 4294901760
        %4476 = vmatpush1.msra.mxu0 %v4475
        %4477 = vmatprep.subr.mxu0 0.0
        %4478 = vmatpush1.msra.mxu0 0.0
        %4479 = vmatprep.subr.mxu0 0.0
        %4480 = vmatpush1.msra.mxu0 0.0
        %4481 = vmatprep.subr.mxu0 0.0
        %4482 = vmatpush1.msra.mxu0 0.0
        %4483 = vmatprep.subr.mxu0 0.0
        %4484 = vmatpush1.msra.mxu0 0.0
        %4485 = vmatprep.subr.mxu0 0.0
        %4486 = vmatpush1.msra.mxu0 0.0
        %4487 = vmatprep.subr.mxu0 0.0
        %4488 = vmatpush1.msra.mxu0 0.0
        %4489 = vmatprep.subr.mxu0 0.0
        %4490 = vmatpush1.msra.mxu0 0.0
        %4491 = vmatprep.subr.mxu0 0.0
        %4492 = vmatpush1.msra.mxu0 0.0
        %4493 = vmatprep.subr.mxu0 0.0
        %4494 = vmatpush1.msra.mxu0 0.0
        %4495 = vmatprep.subr.mxu0 0.0
        %4496 = vmatpush1.msra.mxu0 0.0
        %4497 = vmatprep.subr.mxu0 0.0
        %4498 = vmatpush1.msra.mxu0 0.0
        %4499 = vmatprep.subr.mxu0 0.0
        %4500 = vmatpush1.msra.mxu0 0.0
        %4501 = vmatprep.subr.mxu0 0.0
        %4502 = vmatpush1.msra.mxu0 0.0
        %4503 = vmatprep.subr.mxu0 0.0
        %4504 = vmatpush1.msra.mxu0 0.0
        %4505 = vmatprep.subr.mxu0 0.0
        %4506 = vmatpush1.msra.mxu0 0.0
        %4507 = vmatprep.subr.mxu0 0.0
        %4508 = vmatpush1.msra.mxu0 0.0
        %4509 = vmatprep.subr.mxu0 0.0
        %4510 = vmatpush1.msra.mxu0 0.0
        %4511 = vmatprep.subr.mxu0 0.0
        %4512 = vmatpush1.msra.mxu0 0.0
        %4513 = vmatprep.subr.mxu0 0.0
        %4514 = vmatpush1.msra.mxu0 0.0
        %4515 = vmatprep.subr.mxu0 0.0
        %4516 = vmatpush1.msra.mxu0 0.0
        %4517 = vmatprep.subr.mxu0 0.0
        %4518 = vmatpush1.msra.mxu0 0.0
        %4519 = vmatprep.subr.mxu0 0.0
        %4520 = vmatpush1.msra.mxu0 0.0
        %4521 = vmatprep.subr.mxu0 0.0
        %4522 = vmatpush1.msra.mxu0 0.0
        %4523 = vmatprep.subr.mxu0 0.0
        %4524 = vmatpush1.msra.mxu0 0.0
        %4525 = vmatprep.subr.mxu0 0.0
        %4526 = vmatpush1.msra.mxu0 0.0
        %4527 = vmatprep.subr.mxu0 0.0
        %4528 = vmatpush1.msra.mxu0 0.0
        %4529 = vmatprep.subr.mxu0 0.0
        %4530 = vmatpush1.msra.mxu0 0.0
        %4531 = vmatprep.subr.mxu0 0.0
        %4532 = vmatpush1.msra.mxu0 0.0
        %4533 = vmatprep.subr.mxu0 0.0
        %4534 = vmatpush1.msra.mxu0 0.0
        %4535 = vmatprep.subr.mxu0 0.0
        %4536 = vmatpush1.msra.mxu0 0.0
        %4537 = vmatprep.subr.mxu0 0.0
        %4538 = vmatpush1.msra.mxu0 0.0
        %4539 = vmatprep.mubr.f32.mxu0 0.0
        %v4540 = vand.u32 %v4228, 4294901760
        %v4541 = vsub.f32 %v4228, %v4540
        %v4542 = vand.u32 %v4541, 4294901760
        %4543 = vmatmul.mubr.f32.gmra.mrb[0].mxu0 %v4542
        %v4544 = vpop.f32.mrb[0].mxu0
        %v4545 = vadd.f32 %v4469, %v4544
        %v4546 = vpop.f32.mrb[0].mxu0
        %v4547 = vadd.f32 %v4471, %v4546
        %4548 = vdwg.mxu0
        %v4549 = vand.u32 %v4234, 4294901760
        %v4550 = vsub.f32 %v4234, %v4549
        %v4551 = vand.u32 %v4550, 4294901760
        %4552 = vmatprep.subr.mxu0 %v4551
        %v4553 = vand.u32 %v4231, 4294901760
        %v4554 = vsub.f32 %v4231, %v4553
        %v4555 = vand.u32 %v4554, 4294901760
        %4556 = vmatpush1.msra.mxu0 %v4555
        %4557 = vmatprep.subr.mxu0 0.0
        %4558 = vmatpush1.msra.mxu0 0.0
        %4559 = vmatprep.subr.mxu0 0.0
        %4560 = vmatpush1.msra.mxu0 0.0
        %4561 = vmatprep.subr.mxu0 0.0
        %4562 = vmatpush1.msra.mxu0 0.0
        %4563 = vmatprep.subr.mxu0 0.0
        %4564 = vmatpush1.msra.mxu0 0.0
        %4565 = vmatprep.subr.mxu0 0.0
        %4566 = vmatpush1.msra.mxu0 0.0
        %4567 = vmatprep.subr.mxu0 0.0
        %4568 = vmatpush1.msra.mxu0 0.0
        %4569 = vmatprep.subr.mxu0 0.0
        %4570 = vmatpush1.msra.mxu0 0.0
        %4571 = vmatprep.subr.mxu0 0.0
        %4572 = vmatpush1.msra.mxu0 0.0
        %4573 = vmatprep.subr.mxu0 0.0
        %4574 = vmatpush1.msra.mxu0 0.0
        %4575 = vmatprep.subr.mxu0 0.0
        %4576 = vmatpush1.msra.mxu0 0.0
        %4577 = vmatprep.subr.mxu0 0.0
        %4578 = vmatpush1.msra.mxu0 0.0
        %4579 = vmatprep.subr.mxu0 0.0
        %4580 = vmatpush1.msra.mxu0 0.0
        %4581 = vmatprep.subr.mxu0 0.0
        %4582 = vmatpush1.msra.mxu0 0.0
        %4583 = vmatprep.subr.mxu0 0.0
        %4584 = vmatpush1.msra.mxu0 0.0
        %4585 = vmatprep.subr.mxu0 0.0
        %4586 = vmatpush1.msra.mxu0 0.0
        %4587 = vmatprep.subr.mxu0 0.0
        %4588 = vmatpush1.msra.mxu0 0.0
        %4589 = vmatprep.subr.mxu0 0.0
        %4590 = vmatpush1.msra.mxu0 0.0
        %4591 = vmatprep.subr.mxu0 0.0
        %4592 = vmatpush1.msra.mxu0 0.0
        %4593 = vmatprep.subr.mxu0 0.0
        %4594 = vmatpush1.msra.mxu0 0.0
        %4595 = vmatprep.subr.mxu0 0.0
        %4596 = vmatpush1.msra.mxu0 0.0
        %4597 = vmatprep.subr.mxu0 0.0
        %4598 = vmatpush1.msra.mxu0 0.0
        %4599 = vmatprep.subr.mxu0 0.0
        %4600 = vmatpush1.msra.mxu0 0.0
        %4601 = vmatprep.subr.mxu0 0.0
        %4602 = vmatpush1.msra.mxu0 0.0
        %4603 = vmatprep.subr.mxu0 0.0
        %4604 = vmatpush1.msra.mxu0 0.0
        %4605 = vmatprep.subr.mxu0 0.0
        %4606 = vmatpush1.msra.mxu0 0.0
        %4607 = vmatprep.subr.mxu0 0.0
        %4608 = vmatpush1.msra.mxu0 0.0
        %4609 = vmatprep.subr.mxu0 0.0
        %4610 = vmatpush1.msra.mxu0 0.0
        %4611 = vmatprep.subr.mxu0 0.0
        %4612 = vmatpush1.msra.mxu0 0.0
        %4613 = vmatprep.subr.mxu0 0.0
        %4614 = vmatpush1.msra.mxu0 0.0
        %4615 = vmatprep.subr.mxu0 0.0
        %4616 = vmatpush1.msra.mxu0 0.0
        %4617 = vmatprep.subr.mxu0 0.0
        %4618 = vmatpush1.msra.mxu0 0.0
        %4619 = vmatprep.mubr.f32.mxu0 0.0
        %v4620 = vand.u32 %v4228, 4294901760
        %4621 = vmatmul.mubr.f32.gmra.mrb[0].mxu0 %v4620
        %v4622 = vpop.f32.mrb[0].mxu0
        %v4623 = vadd.f32 %v4545, %v4622
        %v4624 = vpop.f32.mrb[0].mxu0
        %v4625 = vadd.f32 %v4547, %v4624
        %4626 = vdwg.mxu0
        %v4627 = vand.u32 %v4234, 4294901760
        %4628 = vmatprep.subr.mxu0 %v4627
        %v4629 = vand.u32 %v4231, 4294901760
        %4630 = vmatpush1.msra.mxu0 %v4629
        %4631 = vmatprep.subr.mxu0 0.0
        %4632 = vmatpush1.msra.mxu0 0.0
        %4633 = vmatprep.subr.mxu0 0.0
        %4634 = vmatpush1.msra.mxu0 0.0
        %4635 = vmatprep.subr.mxu0 0.0
        %4636 = vmatpush1.msra.mxu0 0.0
        %4637 = vmatprep.subr.mxu0 0.0
        %4638 = vmatpush1.msra.mxu0 0.0
        %4639 = vmatprep.subr.mxu0 0.0
        %4640 = vmatpush1.msra.mxu0 0.0
        %4641 = vmatprep.subr.mxu0 0.0
        %4642 = vmatpush1.msra.mxu0 0.0
        %4643 = vmatprep.subr.mxu0 0.0
        %4644 = vmatpush1.msra.mxu0 0.0
        %4645 = vmatprep.subr.mxu0 0.0
        %4646 = vmatpush1.msra.mxu0 0.0
        %4647 = vmatprep.subr.mxu0 0.0
        %4648 = vmatpush1.msra.mxu0 0.0
        %4649 = vmatprep.subr.mxu0 0.0
        %4650 = vmatpush1.msra.mxu0 0.0
        %4651 = vmatprep.subr.mxu0 0.0
        %4652 = vmatpush1.msra.mxu0 0.0
        %4653 = vmatprep.subr.mxu0 0.0
        %4654 = vmatpush1.msra.mxu0 0.0
        %4655 = vmatprep.subr.mxu0 0.0
        %4656 = vmatpush1.msra.mxu0 0.0
        %4657 = vmatprep.subr.mxu0 0.0
        %4658 = vmatpush1.msra.mxu0 0.0
        %4659 = vmatprep.subr.mxu0 0.0
        %4660 = vmatpush1.msra.mxu0 0.0
        %4661 = vmatprep.subr.mxu0 0.0
        %4662 = vmatpush1.msra.mxu0 0.0
        %4663 = vmatprep.subr.mxu0 0.0
        %4664 = vmatpush1.msra.mxu0 0.0
        %4665 = vmatprep.subr.mxu0 0.0
        %4666 = vmatpush1.msra.mxu0 0.0
        %4667 = vmatprep.subr.mxu0 0.0
        %4668 = vmatpush1.msra.mxu0 0.0
        %4669 = vmatprep.subr.mxu0 0.0
        %4670 = vmatpush1.msra.mxu0 0.0
        %4671 = vmatprep.subr.mxu0 0.0
        %4672 = vmatpush1.msra.mxu0 0.0
        %4673 = vmatprep.subr.mxu0 0.0
        %4674 = vmatpush1.msra.mxu0 0.0
        %4675 = vmatprep.subr.mxu0 0.0
        %4676 = vmatpush1.msra.mxu0 0.0
        %4677 = vmatprep.subr.mxu0 0.0
        %4678 = vmatpush1.msra.mxu0 0.0
        %4679 = vmatprep.subr.mxu0 0.0
        %4680 = vmatpush1.msra.mxu0 0.0
        %4681 = vmatprep.subr.mxu0 0.0
        %4682 = vmatpush1.msra.mxu0 0.0
        %4683 = vmatprep.subr.mxu0 0.0
        %4684 = vmatpush1.msra.mxu0 0.0
        %4685 = vmatprep.subr.mxu0 0.0
        %4686 = vmatpush1.msra.mxu0 0.0
        %4687 = vmatprep.subr.mxu0 0.0
        %4688 = vmatpush1.msra.mxu0 0.0
        %4689 = vmatprep.subr.mxu0 0.0
        %4690 = vmatpush1.msra.mxu0 0.0
        %4691 = vmatprep.subr.mxu0 0.0
        %4692 = vmatpush1.msra.mxu0 0.0
        %4693 = vmatprep.mubr.f32.mxu0 0.0
        %v4694 = vand.u32 %v4228, 4294901760
        %4695 = vmatmul.mubr.f32.gmra.mrb[0].mxu0 %v4694
        %v4696 = vpop.f32.mrb[0].mxu0
        %v4697 = vadd.f32 %v4623, %v4696
        %v4698 = vpop.f32.mrb[0].mxu0
        %v4699 = vadd.f32 %v4625, %v4698
        %4700 = vdwg.mxu0
        %v4701 = vadd.f32 %v4208, %v4697
        %v4702 = vadd.f32 %v4209, %v4699
        %4704 = vset.pattern.permute.xlu0 0
        %4705 = vperm.xlu0 %4704, %v265
        %v4706 = vpop.permute.xlu0 %4705
        %v4708 = vadd.f32 %v4701, %v4706
        %v4709 = vadd.f32 %v4702, %v4706
        %v4710 = vsel %vm311, %v4708, 0.0
        %v4711 = vsel %vm311, %v4709, 0.0
        %v4712 = vadd.f32 %v4710, %v4711
        %4713 = vadd.xlane.f32.xlu0 %v4712
        %v4714 = vpop.xlane.xlu0 %4713
        %v4715 = vrcp.pop 256.0
        %v4716 = vmul.f32 %v4714, %v4715
        %v4717 = vsub.f32 %v4708, %v4716
        %v4718 = vsub.f32 %v4709, %v4716
        %v4719 = vmul.f32 %v4717, %v4717
        %v4720 = vmul.f32 %v4718, %v4718
        %v4721 = vsel %vm311, %v4719, 0.0
        %v4722 = vsel %vm311, %v4720, 0.0
        %v4723 = vadd.f32 %v4721, %v4722
        %4724 = vadd.xlane.f32.xlu0 %v4723
        %v4725 = vpop.xlane.xlu0 %4724
        %v4726 = vmul.f32 %v4725, %v4715
        %v4727 = vadd.f32 %v4726, 1e-05
        %v4728 = vrsqrt.pop %v4727
        %v4729 = vmul.f32 %v4717, %v4728
        %v4730 = vmul.f32 %v4718, %v4728
        %v4731 = vmax.f32 %v4729, 0.0
        %v4732 = vmax.f32 %v4730, 0.0
        %4733 = vrot.lane.b32.xlu0 %v4731, 17
        %v4734 = vpop.permute.xlu0 %4733
        %4735 = vrot.lane.b32.xlu0 %v4732, 17
        %v4736 = vpop.permute.xlu0 %4735
        %v4737 = vsel %vm276, %v4734, %v4736
        %v4738 = vsel %vm276, %v4736, %v4734
        %v4739 = vmul.f32 %v4738, %v282
        %v4740 = vmul.f32 %v4737, %v286
        %4741 = vrot.lane.b32.xlu0 %v4731, 16
        %v4742 = vpop.permute.xlu0 %4741
        %4743 = vrot.lane.b32.xlu0 %v4732, 16
        %v4744 = vpop.permute.xlu0 %4743
        %v4745 = vsel %vm293, %v4742, %v4744
        %v4746 = vsel %vm293, %v4744, %v4742
        %v4747 = vmul.f32 %v4746, %v299
        %v4748 = vmul.f32 %v4745, %v303
        %v4750 = vrot.slane %v260, 4
        %v4751 = vsel %vm308, %v4750, 0
        %v4754 = vsel %vm311, %v4747, 0
        %v4757 = vsel %vm311, %v4748, 0
        %v4759 = vand.u32 %v4757, 4294901760
        %4760 = vmatprep.subr.mxu0 %v4759
        %v4761 = vand.u32 %v4754, 4294901760
        %4762 = vmatpush1.msra.mxu0 %v4761
        %4763 = vmatprep.subr.mxu0 0.0
        %4764 = vmatpush1.msra.mxu0 0.0
        %4765 = vmatprep.subr.mxu0 0.0
        %4766 = vmatpush1.msra.mxu0 0.0
        %4767 = vmatprep.subr.mxu0 0.0
        %4768 = vmatpush1.msra.mxu0 0.0
        %4769 = vmatprep.subr.mxu0 0.0
        %4770 = vmatpush1.msra.mxu0 0.0
        %4771 = vmatprep.subr.mxu0 0.0
        %4772 = vmatpush1.msra.mxu0 0.0
        %4773 = vmatprep.subr.mxu0 0.0
        %4774 = vmatpush1.msra.mxu0 0.0
        %4775 = vmatprep.subr.mxu0 0.0
        %4776 = vmatpush1.msra.mxu0 0.0
        %4777 = vmatprep.subr.mxu0 0.0
        %4778 = vmatpush1.msra.mxu0 0.0
        %4779 = vmatprep.subr.mxu0 0.0
        %4780 = vmatpush1.msra.mxu0 0.0
        %4781 = vmatprep.subr.mxu0 0.0
        %4782 = vmatpush1.msra.mxu0 0.0
        %4783 = vmatprep.subr.mxu0 0.0
        %4784 = vmatpush1.msra.mxu0 0.0
        %4785 = vmatprep.subr.mxu0 0.0
        %4786 = vmatpush1.msra.mxu0 0.0
        %4787 = vmatprep.subr.mxu0 0.0
        %4788 = vmatpush1.msra.mxu0 0.0
        %4789 = vmatprep.subr.mxu0 0.0
        %4790 = vmatpush1.msra.mxu0 0.0
        %4791 = vmatprep.subr.mxu0 0.0
        %4792 = vmatpush1.msra.mxu0 0.0
        %4793 = vmatprep.subr.mxu0 0.0
        %4794 = vmatpush1.msra.mxu0 0.0
        %4795 = vmatprep.subr.mxu0 0.0
        %4796 = vmatpush1.msra.mxu0 0.0
        %4797 = vmatprep.subr.mxu0 0.0
        %4798 = vmatpush1.msra.mxu0 0.0
        %4799 = vmatprep.subr.mxu0 0.0
        %4800 = vmatpush1.msra.mxu0 0.0
        %4801 = vmatprep.subr.mxu0 0.0
        %4802 = vmatpush1.msra.mxu0 0.0
        %4803 = vmatprep.subr.mxu0 0.0
        %4804 = vmatpush1.msra.mxu0 0.0
        %4805 = vmatprep.subr.mxu0 0.0
        %4806 = vmatpush1.msra.mxu0 0.0
        %4807 = vmatprep.subr.mxu0 0.0
        %4808 = vmatpush1.msra.mxu0 0.0
        %4809 = vmatprep.subr.mxu0 0.0
        %4810 = vmatpush1.msra.mxu0 0.0
        %4811 = vmatprep.subr.mxu0 0.0
        %4812 = vmatpush1.msra.mxu0 0.0
        %4813 = vmatprep.subr.mxu0 0.0
        %4814 = vmatpush1.msra.mxu0 0.0
        %4815 = vmatprep.subr.mxu0 0.0
        %4816 = vmatpush1.msra.mxu0 0.0
        %4817 = vmatprep.subr.mxu0 0.0
        %4818 = vmatpush1.msra.mxu0 0.0
        %4819 = vmatprep.subr.mxu0 0.0
        %4820 = vmatpush1.msra.mxu0 0.0
        %4821 = vmatprep.subr.mxu0 0.0
        %4822 = vmatpush1.msra.mxu0 0.0
        %4823 = vmatprep.subr.mxu0 0.0
        %4824 = vmatpush1.msra.mxu0 0.0
        %4825 = vmatprep.mubr.f32.mxu0 0.0
        %v4826 = vand.u32 %v4751, 4294901760
        %v4827 = vsub.f32 %v4751, %v4826
        %v4828 = vand.u32 %v4827, 4294901760
        %v4829 = vsub.f32 %v4827, %v4828
        %v4830 = vand.u32 %v4829, 4294901760
        %4831 = vmatmul.mubr.f32.gmra.mrb[0].mxu0 %v4830
        %v4832 = vpop.f32.mrb[0].mxu0
        %v4833 = vadd.f32 0.0, %v4832
        %v4834 = vpop.f32.mrb[0].mxu0
        %v4835 = vadd.f32 0.0, %v4834
        %4836 = vdwg.mxu0
        %v4837 = vand.u32 %v4757, 4294901760
        %v4838 = vsub.f32 %v4757, %v4837
        %v4839 = vand.u32 %v4838, 4294901760
        %v4840 = vsub.f32 %v4838, %v4839
        %v4841 = vand.u32 %v4840, 4294901760
        %4842 = vmatprep.subr.mxu0 %v4841
        %v4843 = vand.u32 %v4754, 4294901760
        %v4844 = vsub.f32 %v4754, %v4843
        %v4845 = vand.u32 %v4844, 4294901760
        %v4846 = vsub.f32 %v4844, %v4845
        %v4847 = vand.u32 %v4846, 4294901760
        %4848 = vmatpush1.msra.mxu0 %v4847
        %4849 = vmatprep.subr.mxu0 0.0
        %4850 = vmatpush1.msra.mxu0 0.0
        %4851 = vmatprep.subr.mxu0 0.0
        %4852 = vmatpush1.msra.mxu0 0.0
        %4853 = vmatprep.subr.mxu0 0.0
        %4854 = vmatpush1.msra.mxu0 0.0
        %4855 = vmatprep.subr.mxu0 0.0
        %4856 = vmatpush1.msra.mxu0 0.0
        %4857 = vmatprep.subr.mxu0 0.0
        %4858 = vmatpush1.msra.mxu0 0.0
        %4859 = vmatprep.subr.mxu0 0.0
        %4860 = vmatpush1.msra.mxu0 0.0
        %4861 = vmatprep.subr.mxu0 0.0
        %4862 = vmatpush1.msra.mxu0 0.0
        %4863 = vmatprep.subr.mxu0 0.0
        %4864 = vmatpush1.msra.mxu0 0.0
        %4865 = vmatprep.subr.mxu0 0.0
        %4866 = vmatpush1.msra.mxu0 0.0
        %4867 = vmatprep.subr.mxu0 0.0
        %4868 = vmatpush1.msra.mxu0 0.0
        %4869 = vmatprep.subr.mxu0 0.0
        %4870 = vmatpush1.msra.mxu0 0.0
        %4871 = vmatprep.subr.mxu0 0.0
        %4872 = vmatpush1.msra.mxu0 0.0
        %4873 = vmatprep.subr.mxu0 0.0
        %4874 = vmatpush1.msra.mxu0 0.0
        %4875 = vmatprep.subr.mxu0 0.0
        %4876 = vmatpush1.msra.mxu0 0.0
        %4877 = vmatprep.subr.mxu0 0.0
        %4878 = vmatpush1.msra.mxu0 0.0
        %4879 = vmatprep.subr.mxu0 0.0
        %4880 = vmatpush1.msra.mxu0 0.0
        %4881 = vmatprep.subr.mxu0 0.0
        %4882 = vmatpush1.msra.mxu0 0.0
        %4883 = vmatprep.subr.mxu0 0.0
        %4884 = vmatpush1.msra.mxu0 0.0
        %4885 = vmatprep.subr.mxu0 0.0
        %4886 = vmatpush1.msra.mxu0 0.0
        %4887 = vmatprep.subr.mxu0 0.0
        %4888 = vmatpush1.msra.mxu0 0.0
        %4889 = vmatprep.subr.mxu0 0.0
        %4890 = vmatpush1.msra.mxu0 0.0
        %4891 = vmatprep.subr.mxu0 0.0
        %4892 = vmatpush1.msra.mxu0 0.0
        %4893 = vmatprep.subr.mxu0 0.0
        %4894 = vmatpush1.msra.mxu0 0.0
        %4895 = vmatprep.subr.mxu0 0.0
        %4896 = vmatpush1.msra.mxu0 0.0
        %4897 = vmatprep.subr.mxu0 0.0
        %4898 = vmatpush1.msra.mxu0 0.0
        %4899 = vmatprep.subr.mxu0 0.0
        %4900 = vmatpush1.msra.mxu0 0.0
        %4901 = vmatprep.subr.mxu0 0.0
        %4902 = vmatpush1.msra.mxu0 0.0
        %4903 = vmatprep.subr.mxu0 0.0
        %4904 = vmatpush1.msra.mxu0 0.0
        %4905 = vmatprep.subr.mxu0 0.0
        %4906 = vmatpush1.msra.mxu0 0.0
        %4907 = vmatprep.subr.mxu0 0.0
        %4908 = vmatpush1.msra.mxu0 0.0
        %4909 = vmatprep.subr.mxu0 0.0
        %4910 = vmatpush1.msra.mxu0 0.0
        %4911 = vmatprep.mubr.f32.mxu0 0.0
        %v4912 = vand.u32 %v4751, 4294901760
        %4913 = vmatmul.mubr.f32.gmra.mrb[0].mxu0 %v4912
        %v4914 = vpop.f32.mrb[0].mxu0
        %v4915 = vadd.f32 %v4833, %v4914
        %v4916 = vpop.f32.mrb[0].mxu0
        %v4917 = vadd.f32 %v4835, %v4916
        %4918 = vdwg.mxu0
        %v4919 = vand.u32 %v4757, 4294901760
        %v4920 = vsub.f32 %v4757, %v4919
        %4921 = vmatprep.subr.mxu0 %v4920
        %v4922 = vand.u32 %v4754, 4294901760
        %v4923 = vsub.f32 %v4754, %v4922
        %4924 = vmatpush1.msra.mxu0 %v4923
        %4925 = vmatprep.subr.mxu0 0.0
        %4926 = vmatpush1.msra.mxu0 0.0
        %4927 = vmatprep.subr.mxu0 0.0
        %4928 = vmatpush1.msra.mxu0 0.0
        %4929 = vmatprep.subr.mxu0 0.0
        %4930 = vmatpush1.msra.mxu0 0.0
        %4931 = vmatprep.subr.mxu0 0.0
        %4932 = vmatpush1.msra.mxu0 0.0
        %4933 = vmatprep.subr.mxu0 0.0
        %4934 = vmatpush1.msra.mxu0 0.0
        %4935 = vmatprep.subr.mxu0 0.0
        %4936 = vmatpush1.msra.mxu0 0.0
        %4937 = vmatprep.subr.mxu0 0.0
        %4938 = vmatpush1.msra.mxu0 0.0
        %4939 = vmatprep.subr.mxu0 0.0
        %4940 = vmatpush1.msra.mxu0 0.0
        %4941 = vmatprep.subr.mxu0 0.0
        %4942 = vmatpush1.msra.mxu0 0.0
        %4943 = vmatprep.subr.mxu0 0.0
        %4944 = vmatpush1.msra.mxu0 0.0
        %4945 = vmatprep.subr.mxu0 0.0
        %4946 = vmatpush1.msra.mxu0 0.0
        %4947 = vmatprep.subr.mxu0 0.0
        %4948 = vmatpush1.msra.mxu0 0.0
        %4949 = vmatprep.subr.mxu0 0.0
        %4950 = vmatpush1.msra.mxu0 0.0
        %4951 = vmatprep.subr.mxu0 0.0
        %4952 = vmatpush1.msra.mxu0 0.0
        %4953 = vmatprep.subr.mxu0 0.0
        %4954 = vmatpush1.msra.mxu0 0.0
        %4955 = vmatprep.subr.mxu0 0.0
        %4956 = vmatpush1.msra.mxu0 0.0
        %4957 = vmatprep.subr.mxu0 0.0
        %4958 = vmatpush1.msra.mxu0 0.0
        %4959 = vmatprep.subr.mxu0 0.0
        %4960 = vmatpush1.msra.mxu0 0.0
        %4961 = vmatprep.subr.mxu0 0.0
        %4962 = vmatpush1.msra.mxu0 0.0
        %4963 = vmatprep.subr.mxu0 0.0
        %4964 = vmatpush1.msra.mxu0 0.0
        %4965 = vmatprep.subr.mxu0 0.0
        %4966 = vmatpush1.msra.mxu0 0.0
        %4967 = vmatprep.subr.mxu0 0.0
        %4968 = vmatpush1.msra.mxu0 0.0
        %4969 = vmatprep.subr.mxu0 0.0
        %4970 = vmatpush1.msra.mxu0 0.0
        %4971 = vmatprep.subr.mxu0 0.0
        %4972 = vmatpush1.msra.mxu0 0.0
        %4973 = vmatprep.subr.mxu0 0.0
        %4974 = vmatpush1.msra.mxu0 0.0
        %4975 = vmatprep.subr.mxu0 0.0
        %4976 = vmatpush1.msra.mxu0 0.0
        %4977 = vmatprep.subr.mxu0 0.0
        %4978 = vmatpush1.msra.mxu0 0.0
        %4979 = vmatprep.subr.mxu0 0.0
        %4980 = vmatpush1.msra.mxu0 0.0
        %4981 = vmatprep.subr.mxu0 0.0
        %4982 = vmatpush1.msra.mxu0 0.0
        %4983 = vmatprep.subr.mxu0 0.0
        %4984 = vmatpush1.msra.mxu0 0.0
        %4985 = vmatprep.subr.mxu0 0.0
        %4986 = vmatpush1.msra.mxu0 0.0
        %4987 = vmatprep.mubr.f32.mxu0 0.0
        %v4988 = vand.u32 %v4751, 4294901760
        %v4989 = vsub.f32 %v4751, %v4988
        %4990 = vmatmul.mubr.f32.gmra.mrb[0].mxu0 %v4989
        %v4991 = vpop.f32.mrb[0].mxu0
        %v4992 = vadd.f32 %v4915, %v4991
        %v4993 = vpop.f32.mrb[0].mxu0
        %v4994 = vadd.f32 %v4917, %v4993
        %4995 = vdwg.mxu0
        %v4996 = vand.u32 %v4757, 4294901760
        %4997 = vmatprep.subr.mxu0 %v4996
        %v4998 = vand.u32 %v4754, 4294901760
        %4999 = vmatpush1.msra.mxu0 %v4998
        %5000 = vmatprep.subr.mxu0 0.0
        %5001 = vmatpush1.msra.mxu0 0.0
        %5002 = vmatprep.subr.mxu0 0.0
        %5003 = vmatpush1.msra.mxu0 0.0
        %5004 = vmatprep.subr.mxu0 0.0
        %5005 = vmatpush1.msra.mxu0 0.0
        %5006 = vmatprep.subr.mxu0 0.0
        %5007 = vmatpush1.msra.mxu0 0.0
        %5008 = vmatprep.subr.mxu0 0.0
        %5009 = vmatpush1.msra.mxu0 0.0
        %5010 = vmatprep.subr.mxu0 0.0
        %5011 = vmatpush1.msra.mxu0 0.0
        %5012 = vmatprep.subr.mxu0 0.0
        %5013 = vmatpush1.msra.mxu0 0.0
        %5014 = vmatprep.subr.mxu0 0.0
        %5015 = vmatpush1.msra.mxu0 0.0
        %5016 = vmatprep.subr.mxu0 0.0
        %5017 = vmatpush1.msra.mxu0 0.0
        %5018 = vmatprep.subr.mxu0 0.0
        %5019 = vmatpush1.msra.mxu0 0.0
        %5020 = vmatprep.subr.mxu0 0.0
        %5021 = vmatpush1.msra.mxu0 0.0
        %5022 = vmatprep.subr.mxu0 0.0
        %5023 = vmatpush1.msra.mxu0 0.0
        %5024 = vmatprep.subr.mxu0 0.0
        %5025 = vmatpush1.msra.mxu0 0.0
        %5026 = vmatprep.subr.mxu0 0.0
        %5027 = vmatpush1.msra.mxu0 0.0
        %5028 = vmatprep.subr.mxu0 0.0
        %5029 = vmatpush1.msra.mxu0 0.0
        %5030 = vmatprep.subr.mxu0 0.0
        %5031 = vmatpush1.msra.mxu0 0.0
        %5032 = vmatprep.subr.mxu0 0.0
        %5033 = vmatpush1.msra.mxu0 0.0
        %5034 = vmatprep.subr.mxu0 0.0
        %5035 = vmatpush1.msra.mxu0 0.0
        %5036 = vmatprep.subr.mxu0 0.0
        %5037 = vmatpush1.msra.mxu0 0.0
        %5038 = vmatprep.subr.mxu0 0.0
        %5039 = vmatpush1.msra.mxu0 0.0
        %5040 = vmatprep.subr.mxu0 0.0
        %5041 = vmatpush1.msra.mxu0 0.0
        %5042 = vmatprep.subr.mxu0 0.0
        %5043 = vmatpush1.msra.mxu0 0.0
        %5044 = vmatprep.subr.mxu0 0.0
        %5045 = vmatpush1.msra.mxu0 0.0
        %5046 = vmatprep.subr.mxu0 0.0
        %5047 = vmatpush1.msra.mxu0 0.0
        %5048 = vmatprep.subr.mxu0 0.0
        %5049 = vmatpush1.msra.mxu0 0.0
        %5050 = vmatprep.subr.mxu0 0.0
        %5051 = vmatpush1.msra.mxu0 0.0
        %5052 = vmatprep.subr.mxu0 0.0
        %5053 = vmatpush1.msra.mxu0 0.0
        %5054 = vmatprep.subr.mxu0 0.0
        %5055 = vmatpush1.msra.mxu0 0.0
        %5056 = vmatprep.subr.mxu0 0.0
        %5057 = vmatpush1.msra.mxu0 0.0
        %5058 = vmatprep.subr.mxu0 0.0
        %5059 = vmatpush1.msra.mxu0 0.0
        %5060 = vmatprep.subr.mxu0 0.0
        %5061 = vmatpush1.msra.mxu0 0.0
        %5062 = vmatprep.mubr.f32.mxu0 0.0
        %v5063 = vand.u32 %v4751, 4294901760
        %v5064 = vsub.f32 %v4751, %v5063
        %v5065 = vand.u32 %v5064, 4294901760
        %5066 = vmatmul.mubr.f32.gmra.mrb[0].mxu0 %v5065
        %v5067 = vpop.f32.mrb[0].mxu0
        %v5068 = vadd.f32 %v4992, %v5067
        %v5069 = vpop.f32.mrb[0].mxu0
        %v5070 = vadd.f32 %v4994, %v5069
        %5071 = vdwg.mxu0
        %v5072 = vand.u32 %v4757, 4294901760
        %v5073 = vsub.f32 %v4757, %v5072
        %v5074 = vand.u32 %v5073, 4294901760
        %5075 = vmatprep.subr.mxu0 %v5074
        %v5076 = vand.u32 %v4754, 4294901760
        %v5077 = vsub.f32 %v4754, %v5076
        %v5078 = vand.u32 %v5077, 4294901760
        %5079 = vmatpush1.msra.mxu0 %v5078
        %5080 = vmatprep.subr.mxu0 0.0
        %5081 = vmatpush1.msra.mxu0 0.0
        %5082 = vmatprep.subr.mxu0 0.0
        %5083 = vmatpush1.msra.mxu0 0.0
        %5084 = vmatprep.subr.mxu0 0.0
        %5085 = vmatpush1.msra.mxu0 0.0
        %5086 = vmatprep.subr.mxu0 0.0
        %5087 = vmatpush1.msra.mxu0 0.0
        %5088 = vmatprep.subr.mxu0 0.0
        %5089 = vmatpush1.msra.mxu0 0.0
        %5090 = vmatprep.subr.mxu0 0.0
        %5091 = vmatpush1.msra.mxu0 0.0
        %5092 = vmatprep.subr.mxu0 0.0
        %5093 = vmatpush1.msra.mxu0 0.0
        %5094 = vmatprep.subr.mxu0 0.0
        %5095 = vmatpush1.msra.mxu0 0.0
        %5096 = vmatprep.subr.mxu0 0.0
        %5097 = vmatpush1.msra.mxu0 0.0
        %5098 = vmatprep.subr.mxu0 0.0
        %5099 = vmatpush1.msra.mxu0 0.0
        %5100 = vmatprep.subr.mxu0 0.0
        %5101 = vmatpush1.msra.mxu0 0.0
        %5102 = vmatprep.subr.mxu0 0.0
        %5103 = vmatpush1.msra.mxu0 0.0
        %5104 = vmatprep.subr.mxu0 0.0
        %5105 = vmatpush1.msra.mxu0 0.0
        %5106 = vmatprep.subr.mxu0 0.0
        %5107 = vmatpush1.msra.mxu0 0.0
        %5108 = vmatprep.subr.mxu0 0.0
        %5109 = vmatpush1.msra.mxu0 0.0
        %5110 = vmatprep.subr.mxu0 0.0
        %5111 = vmatpush1.msra.mxu0 0.0
        %5112 = vmatprep.subr.mxu0 0.0
        %5113 = vmatpush1.msra.mxu0 0.0
        %5114 = vmatprep.subr.mxu0 0.0
        %5115 = vmatpush1.msra.mxu0 0.0
        %5116 = vmatprep.subr.mxu0 0.0
        %5117 = vmatpush1.msra.mxu0 0.0
        %5118 = vmatprep.subr.mxu0 0.0
        %5119 = vmatpush1.msra.mxu0 0.0
        %5120 = vmatprep.subr.mxu0 0.0
        %5121 = vmatpush1.msra.mxu0 0.0
        %5122 = vmatprep.subr.mxu0 0.0
        %5123 = vmatpush1.msra.mxu0 0.0
        %5124 = vmatprep.subr.mxu0 0.0
        %5125 = vmatpush1.msra.mxu0 0.0
        %5126 = vmatprep.subr.mxu0 0.0
        %5127 = vmatpush1.msra.mxu0 0.0
        %5128 = vmatprep.subr.mxu0 0.0
        %5129 = vmatpush1.msra.mxu0 0.0
        %5130 = vmatprep.subr.mxu0 0.0
        %5131 = vmatpush1.msra.mxu0 0.0
        %5132 = vmatprep.subr.mxu0 0.0
        %5133 = vmatpush1.msra.mxu0 0.0
        %5134 = vmatprep.subr.mxu0 0.0
        %5135 = vmatpush1.msra.mxu0 0.0
        %5136 = vmatprep.subr.mxu0 0.0
        %5137 = vmatpush1.msra.mxu0 0.0
        %5138 = vmatprep.subr.mxu0 0.0
        %5139 = vmatpush1.msra.mxu0 0.0
        %5140 = vmatprep.subr.mxu0 0.0
        %5141 = vmatpush1.msra.mxu0 0.0
        %5142 = vmatprep.mubr.f32.mxu0 0.0
        %v5143 = vand.u32 %v4751, 4294901760
        %5144 = vmatmul.mubr.f32.gmra.mrb[0].mxu0 %v5143
        %v5145 = vpop.f32.mrb[0].mxu0
        %v5146 = vadd.f32 %v5068, %v5145
        %v5147 = vpop.f32.mrb[0].mxu0
        %v5148 = vadd.f32 %v5070, %v5147
        %5149 = vdwg.mxu0
        %v5150 = vand.u32 %v4757, 4294901760
        %5151 = vmatprep.subr.mxu0 %v5150
        %v5152 = vand.u32 %v4754, 4294901760
        %5153 = vmatpush1.msra.mxu0 %v5152
        %5154 = vmatprep.subr.mxu0 0.0
        %5155 = vmatpush1.msra.mxu0 0.0
        %5156 = vmatprep.subr.mxu0 0.0
        %5157 = vmatpush1.msra.mxu0 0.0
        %5158 = vmatprep.subr.mxu0 0.0
        %5159 = vmatpush1.msra.mxu0 0.0
        %5160 = vmatprep.subr.mxu0 0.0
        %5161 = vmatpush1.msra.mxu0 0.0
        %5162 = vmatprep.subr.mxu0 0.0
        %5163 = vmatpush1.msra.mxu0 0.0
        %5164 = vmatprep.subr.mxu0 0.0
        %5165 = vmatpush1.msra.mxu0 0.0
        %5166 = vmatprep.subr.mxu0 0.0
        %5167 = vmatpush1.msra.mxu0 0.0
        %5168 = vmatprep.subr.mxu0 0.0
        %5169 = vmatpush1.msra.mxu0 0.0
        %5170 = vmatprep.subr.mxu0 0.0
        %5171 = vmatpush1.msra.mxu0 0.0
        %5172 = vmatprep.subr.mxu0 0.0
        %5173 = vmatpush1.msra.mxu0 0.0
        %5174 = vmatprep.subr.mxu0 0.0
        %5175 = vmatpush1.msra.mxu0 0.0
        %5176 = vmatprep.subr.mxu0 0.0
        %5177 = vmatpush1.msra.mxu0 0.0
        %5178 = vmatprep.subr.mxu0 0.0
        %5179 = vmatpush1.msra.mxu0 0.0
        %5180 = vmatprep.subr.mxu0 0.0
        %5181 = vmatpush1.msra.mxu0 0.0
        %5182 = vmatprep.subr.mxu0 0.0
        %5183 = vmatpush1.msra.mxu0 0.0
        %5184 = vmatprep.subr.mxu0 0.0
        %5185 = vmatpush1.msra.mxu0 0.0
        %5186 = vmatprep.subr.mxu0 0.0
        %5187 = vmatpush1.msra.mxu0 0.0
        %5188 = vmatprep.subr.mxu0 0.0
        %5189 = vmatpush1.msra.mxu0 0.0
        %5190 = vmatprep.subr.mxu0 0.0
        %5191 = vmatpush1.msra.mxu0 0.0
        %5192 = vmatprep.subr.mxu0 0.0
        %5193 = vmatpush1.msra.mxu0 0.0
        %5194 = vmatprep.subr.mxu0 0.0
        %5195 = vmatpush1.msra.mxu0 0.0
        %5196 = vmatprep.subr.mxu0 0.0
        %5197 = vmatpush1.msra.mxu0 0.0
        %5198 = vmatprep.subr.mxu0 0.0
        %5199 = vmatpush1.msra.mxu0 0.0
        %5200 = vmatprep.subr.mxu0 0.0
        %5201 = vmatpush1.msra.mxu0 0.0
        %5202 = vmatprep.subr.mxu0 0.0
        %5203 = vmatpush1.msra.mxu0 0.0
        %5204 = vmatprep.subr.mxu0 0.0
        %5205 = vmatpush1.msra.mxu0 0.0
        %5206 = vmatprep.subr.mxu0 0.0
        %5207 = vmatpush1.msra.mxu0 0.0
        %5208 = vmatprep.subr.mxu0 0.0
        %5209 = vmatpush1.msra.mxu0 0.0
        %5210 = vmatprep.subr.mxu0 0.0
        %5211 = vmatpush1.msra.mxu0 0.0
        %5212 = vmatprep.subr.mxu0 0.0
        %5213 = vmatpush1.msra.mxu0 0.0
        %5214 = vmatprep.subr.mxu0 0.0
        %5215 = vmatpush1.msra.mxu0 0.0
        %5216 = vmatprep.mubr.f32.mxu0 0.0
        %v5217 = vand.u32 %v4751, 4294901760
        %5218 = vmatmul.mubr.f32.gmra.mrb[0].mxu0 %v5217
        %v5219 = vpop.f32.mrb[0].mxu0
        %v5220 = vadd.f32 %v5146, %v5219
        %v5221 = vpop.f32.mrb[0].mxu0
        %v5222 = vadd.f32 %v5148, %v5221
        %5223 = vdwg.mxu0
        %v5224 = vsel %vm308, %v260, 0
        %v5227 = vsel %vm311, %v4739, 0
        %v5230 = vsel %vm311, %v4740, 0
        %v5232 = vand.u32 %v5230, 4294901760
        %5233 = vmatprep.subr.mxu0 %v5232
        %v5234 = vand.u32 %v5227, 4294901760
        %5235 = vmatpush1.msra.mxu0 %v5234
        %5236 = vmatprep.subr.mxu0 0.0
        %5237 = vmatpush1.msra.mxu0 0.0
        %5238 = vmatprep.subr.mxu0 0.0
        %5239 = vmatpush1.msra.mxu0 0.0
        %5240 = vmatprep.subr.mxu0 0.0
        %5241 = vmatpush1.msra.mxu0 0.0
        %5242 = vmatprep.subr.mxu0 0.0
        %5243 = vmatpush1.msra.mxu0 0.0
        %5244 = vmatprep.subr.mxu0 0.0
        %5245 = vmatpush1.msra.mxu0 0.0
        %5246 = vmatprep.subr.mxu0 0.0
        %5247 = vmatpush1.msra.mxu0 0.0
        %5248 = vmatprep.subr.mxu0 0.0
        %5249 = vmatpush1.msra.mxu0 0.0
        %5250 = vmatprep.subr.mxu0 0.0
        %5251 = vmatpush1.msra.mxu0 0.0
        %5252 = vmatprep.subr.mxu0 0.0
        %5253 = vmatpush1.msra.mxu0 0.0
        %5254 = vmatprep.subr.mxu0 0.0
        %5255 = vmatpush1.msra.mxu0 0.0
        %5256 = vmatprep.subr.mxu0 0.0
        %5257 = vmatpush1.msra.mxu0 0.0
        %5258 = vmatprep.subr.mxu0 0.0
        %5259 = vmatpush1.msra.mxu0 0.0
        %5260 = vmatprep.subr.mxu0 0.0
        %5261 = vmatpush1.msra.mxu0 0.0
        %5262 = vmatprep.subr.mxu0 0.0
        %5263 = vmatpush1.msra.mxu0 0.0
        %5264 = vmatprep.subr.mxu0 0.0
        %5265 = vmatpush1.msra.mxu0 0.0
        %5266 = vmatprep.subr.mxu0 0.0
        %5267 = vmatpush1.msra.mxu0 0.0
        %5268 = vmatprep.subr.mxu0 0.0
        %5269 = vmatpush1.msra.mxu0 0.0
        %5270 = vmatprep.subr.mxu0 0.0
        %5271 = vmatpush1.msra.mxu0 0.0
        %5272 = vmatprep.subr.mxu0 0.0
        %5273 = vmatpush1.msra.mxu0 0.0
        %5274 = vmatprep.subr.mxu0 0.0
        %5275 = vmatpush1.msra.mxu0 0.0
        %5276 = vmatprep.subr.mxu0 0.0
        %5277 = vmatpush1.msra.mxu0 0.0
        %5278 = vmatprep.subr.mxu0 0.0
        %5279 = vmatpush1.msra.mxu0 0.0
        %5280 = vmatprep.subr.mxu0 0.0
        %5281 = vmatpush1.msra.mxu0 0.0
        %5282 = vmatprep.subr.mxu0 0.0
        %5283 = vmatpush1.msra.mxu0 0.0
        %5284 = vmatprep.subr.mxu0 0.0
        %5285 = vmatpush1.msra.mxu0 0.0
        %5286 = vmatprep.subr.mxu0 0.0
        %5287 = vmatpush1.msra.mxu0 0.0
        %5288 = vmatprep.subr.mxu0 0.0
        %5289 = vmatpush1.msra.mxu0 0.0
        %5290 = vmatprep.subr.mxu0 0.0
        %5291 = vmatpush1.msra.mxu0 0.0
        %5292 = vmatprep.subr.mxu0 0.0
        %5293 = vmatpush1.msra.mxu0 0.0
        %5294 = vmatprep.subr.mxu0 0.0
        %5295 = vmatpush1.msra.mxu0 0.0
        %5296 = vmatprep.subr.mxu0 0.0
        %5297 = vmatpush1.msra.mxu0 0.0
        %5298 = vmatprep.mubr.f32.mxu0 0.0
        %v5299 = vand.u32 %v5224, 4294901760
        %v5300 = vsub.f32 %v5224, %v5299
        %v5301 = vand.u32 %v5300, 4294901760
        %v5302 = vsub.f32 %v5300, %v5301
        %v5303 = vand.u32 %v5302, 4294901760
        %5304 = vmatmul.mubr.f32.gmra.mrb[0].mxu0 %v5303
        %v5305 = vpop.f32.mrb[0].mxu0
        %v5306 = vadd.f32 %v5220, %v5305
        %v5307 = vpop.f32.mrb[0].mxu0
        %v5308 = vadd.f32 %v5222, %v5307
        %5309 = vdwg.mxu0
        %v5310 = vand.u32 %v5230, 4294901760
        %v5311 = vsub.f32 %v5230, %v5310
        %v5312 = vand.u32 %v5311, 4294901760
        %v5313 = vsub.f32 %v5311, %v5312
        %v5314 = vand.u32 %v5313, 4294901760
        %5315 = vmatprep.subr.mxu0 %v5314
        %v5316 = vand.u32 %v5227, 4294901760
        %v5317 = vsub.f32 %v5227, %v5316
        %v5318 = vand.u32 %v5317, 4294901760
        %v5319 = vsub.f32 %v5317, %v5318
        %v5320 = vand.u32 %v5319, 4294901760
        %5321 = vmatpush1.msra.mxu0 %v5320
        %5322 = vmatprep.subr.mxu0 0.0
        %5323 = vmatpush1.msra.mxu0 0.0
        %5324 = vmatprep.subr.mxu0 0.0
        %5325 = vmatpush1.msra.mxu0 0.0
        %5326 = vmatprep.subr.mxu0 0.0
        %5327 = vmatpush1.msra.mxu0 0.0
        %5328 = vmatprep.subr.mxu0 0.0
        %5329 = vmatpush1.msra.mxu0 0.0
        %5330 = vmatprep.subr.mxu0 0.0
        %5331 = vmatpush1.msra.mxu0 0.0
        %5332 = vmatprep.subr.mxu0 0.0
        %5333 = vmatpush1.msra.mxu0 0.0
        %5334 = vmatprep.subr.mxu0 0.0
        %5335 = vmatpush1.msra.mxu0 0.0
        %5336 = vmatprep.subr.mxu0 0.0
        %5337 = vmatpush1.msra.mxu0 0.0
        %5338 = vmatprep.subr.mxu0 0.0
        %5339 = vmatpush1.msra.mxu0 0.0
        %5340 = vmatprep.subr.mxu0 0.0
        %5341 = vmatpush1.msra.mxu0 0.0
        %5342 = vmatprep.subr.mxu0 0.0
        %5343 = vmatpush1.msra.mxu0 0.0
        %5344 = vmatprep.subr.mxu0 0.0
        %5345 = vmatpush1.msra.mxu0 0.0
        %5346 = vmatprep.subr.mxu0 0.0
        %5347 = vmatpush1.msra.mxu0 0.0
        %5348 = vmatprep.subr.mxu0 0.0
        %5349 = vmatpush1.msra.mxu0 0.0
        %5350 = vmatprep.subr.mxu0 0.0
        %5351 = vmatpush1.msra.mxu0 0.0
        %5352 = vmatprep.subr.mxu0 0.0
        %5353 = vmatpush1.msra.mxu0 0.0
        %5354 = vmatprep.subr.mxu0 0.0
        %5355 = vmatpush1.msra.mxu0 0.0
        %5356 = vmatprep.subr.mxu0 0.0
        %5357 = vmatpush1.msra.mxu0 0.0
        %5358 = vmatprep.subr.mxu0 0.0
        %5359 = vmatpush1.msra.mxu0 0.0
        %5360 = vmatprep.subr.mxu0 0.0
        %5361 = vmatpush1.msra.mxu0 0.0
        %5362 = vmatprep.subr.mxu0 0.0
        %5363 = vmatpush1.msra.mxu0 0.0
        %5364 = vmatprep.subr.mxu0 0.0
        %5365 = vmatpush1.msra.mxu0 0.0
        %5366 = vmatprep.subr.mxu0 0.0
        %5367 = vmatpush1.msra.mxu0 0.0
        %5368 = vmatprep.subr.mxu0 0.0
        %5369 = vmatpush1.msra.mxu0 0.0
        %5370 = vmatprep.subr.mxu0 0.0
        %5371 = vmatpush1.msra.mxu0 0.0
        %5372 = vmatprep.subr.mxu0 0.0
        %5373 = vmatpush1.msra.mxu0 0.0
        %5374 = vmatprep.subr.mxu0 0.0
        %5375 = vmatpush1.msra.mxu0 0.0
        %5376 = vmatprep.subr.mxu0 0.0
        %5377 = vmatpush1.msra.mxu0 0.0
        %5378 = vmatprep.subr.mxu0 0.0
        %5379 = vmatpush1.msra.mxu0 0.0
        %5380 = vmatprep.subr.mxu0 0.0
        %5381 = vmatpush1.msra.mxu0 0.0
        %5382 = vmatprep.subr.mxu0 0.0
        %5383 = vmatpush1.msra.mxu0 0.0
        %5384 = vmatprep.mubr.f32.mxu0 0.0
        %v5385 = vand.u32 %v5224, 4294901760
        %5386 = vmatmul.mubr.f32.gmra.mrb[0].mxu0 %v5385
        %v5387 = vpop.f32.mrb[0].mxu0
        %v5388 = vadd.f32 %v5306, %v5387
        %v5389 = vpop.f32.mrb[0].mxu0
        %v5390 = vadd.f32 %v5308, %v5389
        %5391 = vdwg.mxu0
        %v5392 = vand.u32 %v5230, 4294901760
        %v5393 = vsub.f32 %v5230, %v5392
        %5394 = vmatprep.subr.mxu0 %v5393
        %v5395 = vand.u32 %v5227, 4294901760
        %v5396 = vsub.f32 %v5227, %v5395
        %5397 = vmatpush1.msra.mxu0 %v5396
        %5398 = vmatprep.subr.mxu0 0.0
        %5399 = vmatpush1.msra.mxu0 0.0
        %5400 = vmatprep.subr.mxu0 0.0
        %5401 = vmatpush1.msra.mxu0 0.0
        %5402 = vmatprep.subr.mxu0 0.0
        %5403 = vmatpush1.msra.mxu0 0.0
        %5404 = vmatprep.subr.mxu0 0.0
        %5405 = vmatpush1.msra.mxu0 0.0
        %5406 = vmatprep.subr.mxu0 0.0
        %5407 = vmatpush1.msra.mxu0 0.0
        %5408 = vmatprep.subr.mxu0 0.0
        %5409 = vmatpush1.msra.mxu0 0.0
        %5410 = vmatprep.subr.mxu0 0.0
        %5411 = vmatpush1.msra.mxu0 0.0
        %5412 = vmatprep.subr.mxu0 0.0
        %5413 = vmatpush1.msra.mxu0 0.0
        %5414 = vmatprep.subr.mxu0 0.0
        %5415 = vmatpush1.msra.mxu0 0.0
        %5416 = vmatprep.subr.mxu0 0.0
        %5417 = vmatpush1.msra.mxu0 0.0
        %5418 = vmatprep.subr.mxu0 0.0
        %5419 = vmatpush1.msra.mxu0 0.0
        %5420 = vmatprep.subr.mxu0 0.0
        %5421 = vmatpush1.msra.mxu0 0.0
        %5422 = vmatprep.subr.mxu0 0.0
        %5423 = vmatpush1.msra.mxu0 0.0
        %5424 = vmatprep.subr.mxu0 0.0
        %5425 = vmatpush1.msra.mxu0 0.0
        %5426 = vmatprep.subr.mxu0 0.0
        %5427 = vmatpush1.msra.mxu0 0.0
        %5428 = vmatprep.subr.mxu0 0.0
        %5429 = vmatpush1.msra.mxu0 0.0
        %5430 = vmatprep.subr.mxu0 0.0
        %5431 = vmatpush1.msra.mxu0 0.0
        %5432 = vmatprep.subr.mxu0 0.0
        %5433 = vmatpush1.msra.mxu0 0.0
        %5434 = vmatprep.subr.mxu0 0.0
        %5435 = vmatpush1.msra.mxu0 0.0
        %5436 = vmatprep.subr.mxu0 0.0
        %5437 = vmatpush1.msra.mxu0 0.0
        %5438 = vmatprep.subr.mxu0 0.0
        %5439 = vmatpush1.msra.mxu0 0.0
        %5440 = vmatprep.subr.mxu0 0.0
        %5441 = vmatpush1.msra.mxu0 0.0
        %5442 = vmatprep.subr.mxu0 0.0
        %5443 = vmatpush1.msra.mxu0 0.0
        %5444 = vmatprep.subr.mxu0 0.0
        %5445 = vmatpush1.msra.mxu0 0.0
        %5446 = vmatprep.subr.mxu0 0.0
        %5447 = vmatpush1.msra.mxu0 0.0
        %5448 = vmatprep.subr.mxu0 0.0
        %5449 = vmatpush1.msra.mxu0 0.0
        %5450 = vmatprep.subr.mxu0 0.0
        %5451 = vmatpush1.msra.mxu0 0.0
        %5452 = vmatprep.subr.mxu0 0.0
        %5453 = vmatpush1.msra.mxu0 0.0
        %5454 = vmatprep.subr.mxu0 0.0
        %5455 = vmatpush1.msra.mxu0 0.0
        %5456 = vmatprep.subr.mxu0 0.0
        %5457 = vmatpush1.msra.mxu0 0.0
        %5458 = vmatprep.subr.mxu0 0.0
        %5459 = vmatpush1.msra.mxu0 0.0
        %5460 = vmatprep.mubr.f32.mxu0 0.0
        %v5461 = vand.u32 %v5224, 4294901760
        %v5462 = vsub.f32 %v5224, %v5461
        %5463 = vmatmul.mubr.f32.gmra.mrb[0].mxu0 %v5462
        %v5464 = vpop.f32.mrb[0].mxu0
        %v5465 = vadd.f32 %v5388, %v5464
        %v5466 = vpop.f32.mrb[0].mxu0
        %v5467 = vadd.f32 %v5390, %v5466
        %5468 = vdwg.mxu0
        %v5469 = vand.u32 %v5230, 4294901760
        %5470 = vmatprep.subr.mxu0 %v5469
        %v5471 = vand.u32 %v5227, 4294901760
        %5472 = vmatpush1.msra.mxu0 %v5471
        %5473 = vmatprep.subr.mxu0 0.0
        %5474 = vmatpush1.msra.mxu0 0.0
        %5475 = vmatprep.subr.mxu0 0.0
        %5476 = vmatpush1.msra.mxu0 0.0
        %5477 = vmatprep.subr.mxu0 0.0
        %5478 = vmatpush1.msra.mxu0 0.0
        %5479 = vmatprep.subr.mxu0 0.0
        %5480 = vmatpush1.msra.mxu0 0.0
        %5481 = vmatprep.subr.mxu0 0.0
        %5482 = vmatpush1.msra.mxu0 0.0
        %5483 = vmatprep.subr.mxu0 0.0
        %5484 = vmatpush1.msra.mxu0 0.0
        %5485 = vmatprep.subr.mxu0 0.0
        %5486 = vmatpush1.msra.mxu0 0.0
        %5487 = vmatprep.subr.mxu0 0.0
        %5488 = vmatpush1.msra.mxu0 0.0
        %5489 = vmatprep.subr.mxu0 0.0
        %5490 = vmatpush1.msra.mxu0 0.0
        %5491 = vmatprep.subr.mxu0 0.0
        %5492 = vmatpush1.msra.mxu0 0.0
        %5493 = vmatprep.subr.mxu0 0.0
        %5494 = vmatpush1.msra.mxu0 0.0
        %5495 = vmatprep.subr.mxu0 0.0
        %5496 = vmatpush1.msra.mxu0 0.0
        %5497 = vmatprep.subr.mxu0 0.0
        %5498 = vmatpush1.msra.mxu0 0.0
        %5499 = vmatprep.subr.mxu0 0.0
        %5500 = vmatpush1.msra.mxu0 0.0
        %5501 = vmatprep.subr.mxu0 0.0
        %5502 = vmatpush1.msra.mxu0 0.0
        %5503 = vmatprep.subr.mxu0 0.0
        %5504 = vmatpush1.msra.mxu0 0.0
        %5505 = vmatprep.subr.mxu0 0.0
        %5506 = vmatpush1.msra.mxu0 0.0
        %5507 = vmatprep.subr.mxu0 0.0
        %5508 = vmatpush1.msra.mxu0 0.0
        %5509 = vmatprep.subr.mxu0 0.0
        %5510 = vmatpush1.msra.mxu0 0.0
        %5511 = vmatprep.subr.mxu0 0.0
        %5512 = vmatpush1.msra.mxu0 0.0
        %5513 = vmatprep.subr.mxu0 0.0
        %5514 = vmatpush1.msra.mxu0 0.0
        %5515 = vmatprep.subr.mxu0 0.0
        %5516 = vmatpush1.msra.mxu0 0.0
        %5517 = vmatprep.subr.mxu0 0.0
        %5518 = vmatpush1.msra.mxu0 0.0
        %5519 = vmatprep.subr.mxu0 0.0
        %5520 = vmatpush1.msra.mxu0 0.0
        %5521 = vmatprep.subr.mxu0 0.0
        %5522 = vmatpush1.msra.mxu0 0.0
        %5523 = vmatprep.subr.mxu0 0.0
        %5524 = vmatpush1.msra.mxu0 0.0
        %5525 = vmatprep.subr.mxu0 0.0
        %5526 = vmatpush1.msra.mxu0 0.0
        %5527 = vmatprep.subr.mxu0 0.0
        %5528 = vmatpush1.msra.mxu0 0.0
        %5529 = vmatprep.subr.mxu0 0.0
        %5530 = vmatpush1.msra.mxu0 0.0
        %5531 = vmatprep.subr.mxu0 0.0
        %5532 = vmatpush1.msra.mxu0 0.0
        %5533 = vmatprep.subr.mxu0 0.0
        %5534 = vmatpush1.msra.mxu0 0.0
        %5535 = vmatprep.mubr.f32.mxu0 0.0
        %v5536 = vand.u32 %v5224, 4294901760
        %v5537 = vsub.f32 %v5224, %v5536
        %v5538 = vand.u32 %v5537, 4294901760
        %5539 = vmatmul.mubr.f32.gmra.mrb[0].mxu0 %v5538
        %v5540 = vpop.f32.mrb[0].mxu0
        %v5541 = vadd.f32 %v5465, %v5540
        %v5542 = vpop.f32.mrb[0].mxu0
        %v5543 = vadd.f32 %v5467, %v5542
        %5544 = vdwg.mxu0
        %v5545 = vand.u32 %v5230, 4294901760
        %v5546 = vsub.f32 %v5230, %v5545
        %v5547 = vand.u32 %v5546, 4294901760
        %5548 = vmatprep.subr.mxu0 %v5547
        %v5549 = vand.u32 %v5227, 4294901760
        %v5550 = vsub.f32 %v5227, %v5549
        %v5551 = vand.u32 %v5550, 4294901760
        %5552 = vmatpush1.msra.mxu0 %v5551
        %5553 = vmatprep.subr.mxu0 0.0
        %5554 = vmatpush1.msra.mxu0 0.0
        %5555 = vmatprep.subr.mxu0 0.0
        %5556 = vmatpush1.msra.mxu0 0.0
        %5557 = vmatprep.subr.mxu0 0.0
        %5558 = vmatpush1.msra.mxu0 0.0
        %5559 = vmatprep.subr.mxu0 0.0
        %5560 = vmatpush1.msra.mxu0 0.0
        %5561 = vmatprep.subr.mxu0 0.0
        %5562 = vmatpush1.msra.mxu0 0.0
        %5563 = vmatprep.subr.mxu0 0.0
        %5564 = vmatpush1.msra.mxu0 0.0
        %5565 = vmatprep.subr.mxu0 0.0
        %5566 = vmatpush1.msra.mxu0 0.0
        %5567 = vmatprep.subr.mxu0 0.0
        %5568 = vmatpush1.msra.mxu0 0.0
        %5569 = vmatprep.subr.mxu0 0.0
        %5570 = vmatpush1.msra.mxu0 0.0
        %5571 = vmatprep.subr.mxu0 0.0
        %5572 = vmatpush1.msra.mxu0 0.0
        %5573 = vmatprep.subr.mxu0 0.0
        %5574 = vmatpush1.msra.mxu0 0.0
        %5575 = vmatprep.subr.mxu0 0.0
        %5576 = vmatpush1.msra.mxu0 0.0
        %5577 = vmatprep.subr.mxu0 0.0
        %5578 = vmatpush1.msra.mxu0 0.0
        %5579 = vmatprep.subr.mxu0 0.0
        %5580 = vmatpush1.msra.mxu0 0.0
        %5581 = vmatprep.subr.mxu0 0.0
        %5582 = vmatpush1.msra.mxu0 0.0
        %5583 = vmatprep.subr.mxu0 0.0
        %5584 = vmatpush1.msra.mxu0 0.0
        %5585 = vmatprep.subr.mxu0 0.0
        %5586 = vmatpush1.msra.mxu0 0.0
        %5587 = vmatprep.subr.mxu0 0.0
        %5588 = vmatpush1.msra.mxu0 0.0
        %5589 = vmatprep.subr.mxu0 0.0
        %5590 = vmatpush1.msra.mxu0 0.0
        %5591 = vmatprep.subr.mxu0 0.0
        %5592 = vmatpush1.msra.mxu0 0.0
        %5593 = vmatprep.subr.mxu0 0.0
        %5594 = vmatpush1.msra.mxu0 0.0
        %5595 = vmatprep.subr.mxu0 0.0
        %5596 = vmatpush1.msra.mxu0 0.0
        %5597 = vmatprep.subr.mxu0 0.0
        %5598 = vmatpush1.msra.mxu0 0.0
        %5599 = vmatprep.subr.mxu0 0.0
        %5600 = vmatpush1.msra.mxu0 0.0
        %5601 = vmatprep.subr.mxu0 0.0
        %5602 = vmatpush1.msra.mxu0 0.0
        %5603 = vmatprep.subr.mxu0 0.0
        %5604 = vmatpush1.msra.mxu0 0.0
        %5605 = vmatprep.subr.mxu0 0.0
        %5606 = vmatpush1.msra.mxu0 0.0
        %5607 = vmatprep.subr.mxu0 0.0
        %5608 = vmatpush1.msra.mxu0 0.0
        %5609 = vmatprep.subr.mxu0 0.0
        %5610 = vmatpush1.msra.mxu0 0.0
        %5611 = vmatprep.subr.mxu0 0.0
        %5612 = vmatpush1.msra.mxu0 0.0
        %5613 = vmatprep.subr.mxu0 0.0
        %5614 = vmatpush1.msra.mxu0 0.0
        %5615 = vmatprep.mubr.f32.mxu0 0.0
        %v5616 = vand.u32 %v5224, 4294901760
        %5617 = vmatmul.mubr.f32.gmra.mrb[0].mxu0 %v5616
        %v5618 = vpop.f32.mrb[0].mxu0
        %v5619 = vadd.f32 %v5541, %v5618
        %v5620 = vpop.f32.mrb[0].mxu0
        %v5621 = vadd.f32 %v5543, %v5620
        %5622 = vdwg.mxu0
        %v5623 = vand.u32 %v5230, 4294901760
        %5624 = vmatprep.subr.mxu0 %v5623
        %v5625 = vand.u32 %v5227, 4294901760
        %5626 = vmatpush1.msra.mxu0 %v5625
        %5627 = vmatprep.subr.mxu0 0.0
        %5628 = vmatpush1.msra.mxu0 0.0
        %5629 = vmatprep.subr.mxu0 0.0
        %5630 = vmatpush1.msra.mxu0 0.0
        %5631 = vmatprep.subr.mxu0 0.0
        %5632 = vmatpush1.msra.mxu0 0.0
        %5633 = vmatprep.subr.mxu0 0.0
        %5634 = vmatpush1.msra.mxu0 0.0
        %5635 = vmatprep.subr.mxu0 0.0
        %5636 = vmatpush1.msra.mxu0 0.0
        %5637 = vmatprep.subr.mxu0 0.0
        %5638 = vmatpush1.msra.mxu0 0.0
        %5639 = vmatprep.subr.mxu0 0.0
        %5640 = vmatpush1.msra.mxu0 0.0
        %5641 = vmatprep.subr.mxu0 0.0
        %5642 = vmatpush1.msra.mxu0 0.0
        %5643 = vmatprep.subr.mxu0 0.0
        %5644 = vmatpush1.msra.mxu0 0.0
        %5645 = vmatprep.subr.mxu0 0.0
        %5646 = vmatpush1.msra.mxu0 0.0
        %5647 = vmatprep.subr.mxu0 0.0
        %5648 = vmatpush1.msra.mxu0 0.0
        %5649 = vmatprep.subr.mxu0 0.0
        %5650 = vmatpush1.msra.mxu0 0.0
        %5651 = vmatprep.subr.mxu0 0.0
        %5652 = vmatpush1.msra.mxu0 0.0
        %5653 = vmatprep.subr.mxu0 0.0
        %5654 = vmatpush1.msra.mxu0 0.0
        %5655 = vmatprep.subr.mxu0 0.0
        %5656 = vmatpush1.msra.mxu0 0.0
        %5657 = vmatprep.subr.mxu0 0.0
        %5658 = vmatpush1.msra.mxu0 0.0
        %5659 = vmatprep.subr.mxu0 0.0
        %5660 = vmatpush1.msra.mxu0 0.0
        %5661 = vmatprep.subr.mxu0 0.0
        %5662 = vmatpush1.msra.mxu0 0.0
        %5663 = vmatprep.subr.mxu0 0.0
        %5664 = vmatpush1.msra.mxu0 0.0
        %5665 = vmatprep.subr.mxu0 0.0
        %5666 = vmatpush1.msra.mxu0 0.0
        %5667 = vmatprep.subr.mxu0 0.0
        %5668 = vmatpush1.msra.mxu0 0.0
        %5669 = vmatprep.subr.mxu0 0.0
        %5670 = vmatpush1.msra.mxu0 0.0
        %5671 = vmatprep.subr.mxu0 0.0
        %5672 = vmatpush1.msra.mxu0 0.0
        %5673 = vmatprep.subr.mxu0 0.0
        %5674 = vmatpush1.msra.mxu0 0.0
        %5675 = vmatprep.subr.mxu0 0.0
        %5676 = vmatpush1.msra.mxu0 0.0
        %5677 = vmatprep.subr.mxu0 0.0
        %5678 = vmatpush1.msra.mxu0 0.0
        %5679 = vmatprep.subr.mxu0 0.0
        %5680 = vmatpush1.msra.mxu0 0.0
        %5681 = vmatprep.subr.mxu0 0.0
        %5682 = vmatpush1.msra.mxu0 0.0
        %5683 = vmatprep.subr.mxu0 0.0
        %5684 = vmatpush1.msra.mxu0 0.0
        %5685 = vmatprep.subr.mxu0 0.0
        %5686 = vmatpush1.msra.mxu0 0.0
        %5687 = vmatprep.subr.mxu0 0.0
        %5688 = vmatpush1.msra.mxu0 0.0
        %5689 = vmatprep.mubr.f32.mxu0 0.0
        %v5690 = vand.u32 %v5224, 4294901760
        %5691 = vmatmul.mubr.f32.gmra.mrb[0].mxu0 %v5690
        %v5692 = vpop.f32.mrb[0].mxu0
        %v5693 = vadd.f32 %v5619, %v5692
        %v5694 = vpop.f32.mrb[0].mxu0
        %v5695 = vadd.f32 %v5621, %v5694
        %5696 = vdwg.mxu0
        %5697 = vrot.lane.b32.xlu0 %v4731, 15
        %v5698 = vpop.permute.xlu0 %5697
        %5699 = vrot.lane.b32.xlu0 %v4732, 15
        %v5700 = vpop.permute.xlu0 %5699
        %v5701 = vsel %vm1260, %v5698, %v5700
        %v5702 = vsel %vm1260, %v5700, %v5698
        %v5703 = vmul.f32 %v5702, %v1266
        %v5704 = vmul.f32 %v5701, %v1270
        %v5706 = vsel %vm308, %v261, 0
        %v5709 = vsel %vm311, %v5703, 0
        %v5712 = vsel %vm311, %v5704, 0
        %v5714 = vand.u32 %v5712, 4294901760
        %5715 = vmatprep.subr.mxu0 %v5714
        %v5716 = vand.u32 %v5709, 4294901760
        %5717 = vmatpush1.msra.mxu0 %v5716
        %5718 = vmatprep.subr.mxu0 0.0
        %5719 = vmatpush1.msra.mxu0 0.0
        %5720 = vmatprep.subr.mxu0 0.0
        %5721 = vmatpush1.msra.mxu0 0.0
        %5722 = vmatprep.subr.mxu0 0.0
        %5723 = vmatpush1.msra.mxu0 0.0
        %5724 = vmatprep.subr.mxu0 0.0
        %5725 = vmatpush1.msra.mxu0 0.0
        %5726 = vmatprep.subr.mxu0 0.0
        %5727 = vmatpush1.msra.mxu0 0.0
        %5728 = vmatprep.subr.mxu0 0.0
        %5729 = vmatpush1.msra.mxu0 0.0
        %5730 = vmatprep.subr.mxu0 0.0
        %5731 = vmatpush1.msra.mxu0 0.0
        %5732 = vmatprep.subr.mxu0 0.0
        %5733 = vmatpush1.msra.mxu0 0.0
        %5734 = vmatprep.subr.mxu0 0.0
        %5735 = vmatpush1.msra.mxu0 0.0
        %5736 = vmatprep.subr.mxu0 0.0
        %5737 = vmatpush1.msra.mxu0 0.0
        %5738 = vmatprep.subr.mxu0 0.0
        %5739 = vmatpush1.msra.mxu0 0.0
        %5740 = vmatprep.subr.mxu0 0.0
        %5741 = vmatpush1.msra.mxu0 0.0
        %5742 = vmatprep.subr.mxu0 0.0
        %5743 = vmatpush1.msra.mxu0 0.0
        %5744 = vmatprep.subr.mxu0 0.0
        %5745 = vmatpush1.msra.mxu0 0.0
        %5746 = vmatprep.subr.mxu0 0.0
        %5747 = vmatpush1.msra.mxu0 0.0
        %5748 = vmatprep.subr.mxu0 0.0
        %5749 = vmatpush1.msra.mxu0 0.0
        %5750 = vmatprep.subr.mxu0 0.0
        %5751 = vmatpush1.msra.mxu0 0.0
        %5752 = vmatprep.subr.mxu0 0.0
        %5753 = vmatpush1.msra.mxu0 0.0
        %5754 = vmatprep.subr.mxu0 0.0
        %5755 = vmatpush1.msra.mxu0 0.0
        %5756 = vmatprep.subr.mxu0 0.0
        %5757 = vmatpush1.msra.mxu0 0.0
        %5758 = vmatprep.subr.mxu0 0.0
        %5759 = vmatpush1.msra.mxu0 0.0
        %5760 = vmatprep.subr.mxu0 0.0
        %5761 = vmatpush1.msra.mxu0 0.0
        %5762 = vmatprep.subr.mxu0 0.0
        %5763 = vmatpush1.msra.mxu0 0.0
        %5764 = vmatprep.subr.mxu0 0.0
        %5765 = vmatpush1.msra.mxu0 0.0
        %5766 = vmatprep.subr.mxu0 0.0
        %5767 = vmatpush1.msra.mxu0 0.0
        %5768 = vmatprep.subr.mxu0 0.0
        %5769 = vmatpush1.msra.mxu0 0.0
        %5770 = vmatprep.subr.mxu0 0.0
        %5771 = vmatpush1.msra.mxu0 0.0
        %5772 = vmatprep.subr.mxu0 0.0
        %5773 = vmatpush1.msra.mxu0 0.0
        %5774 = vmatprep.subr.mxu0 0.0
        %5775 = vmatpush1.msra.mxu0 0.0
        %5776 = vmatprep.subr.mxu0 0.0
        %5777 = vmatpush1.msra.mxu0 0.0
        %5778 = vmatprep.subr.mxu0 0.0
        %5779 = vmatpush1.msra.mxu0 0.0
        %5780 = vmatprep.mubr.f32.mxu0 0.0
        %v5781 = vand.u32 %v5706, 4294901760
        %v5782 = vsub.f32 %v5706, %v5781
        %v5783 = vand.u32 %v5782, 4294901760
        %v5784 = vsub.f32 %v5782, %v5783
        %v5785 = vand.u32 %v5784, 4294901760
        %5786 = vmatmul.mubr.f32.gmra.mrb[0].mxu0 %v5785
        %v5787 = vpop.f32.mrb[0].mxu0
        %v5788 = vadd.f32 0.0, %v5787
        %v5789 = vpop.f32.mrb[0].mxu0
        %v5790 = vadd.f32 0.0, %v5789
        %5791 = vdwg.mxu0
        %v5792 = vand.u32 %v5712, 4294901760
        %v5793 = vsub.f32 %v5712, %v5792
        %v5794 = vand.u32 %v5793, 4294901760
        %v5795 = vsub.f32 %v5793, %v5794
        %v5796 = vand.u32 %v5795, 4294901760
        %5797 = vmatprep.subr.mxu0 %v5796
        %v5798 = vand.u32 %v5709, 4294901760
        %v5799 = vsub.f32 %v5709, %v5798
        %v5800 = vand.u32 %v5799, 4294901760
        %v5801 = vsub.f32 %v5799, %v5800
        %v5802 = vand.u32 %v5801, 4294901760
        %5803 = vmatpush1.msra.mxu0 %v5802
        %5804 = vmatprep.subr.mxu0 0.0
        %5805 = vmatpush1.msra.mxu0 0.0
        %5806 = vmatprep.subr.mxu0 0.0
        %5807 = vmatpush1.msra.mxu0 0.0
        %5808 = vmatprep.subr.mxu0 0.0
        %5809 = vmatpush1.msra.mxu0 0.0
        %5810 = vmatprep.subr.mxu0 0.0
        %5811 = vmatpush1.msra.mxu0 0.0
        %5812 = vmatprep.subr.mxu0 0.0
        %5813 = vmatpush1.msra.mxu0 0.0
        %5814 = vmatprep.subr.mxu0 0.0
        %5815 = vmatpush1.msra.mxu0 0.0
        %5816 = vmatprep.subr.mxu0 0.0
        %5817 = vmatpush1.msra.mxu0 0.0
        %5818 = vmatprep.subr.mxu0 0.0
        %5819 = vmatpush1.msra.mxu0 0.0
        %5820 = vmatprep.subr.mxu0 0.0
        %5821 = vmatpush1.msra.mxu0 0.0
        %5822 = vmatprep.subr.mxu0 0.0
        %5823 = vmatpush1.msra.mxu0 0.0
        %5824 = vmatprep.subr.mxu0 0.0
        %5825 = vmatpush1.msra.mxu0 0.0
        %5826 = vmatprep.subr.mxu0 0.0
        %5827 = vmatpush1.msra.mxu0 0.0
        %5828 = vmatprep.subr.mxu0 0.0
        %5829 = vmatpush1.msra.mxu0 0.0
        %5830 = vmatprep.subr.mxu0 0.0
        %5831 = vmatpush1.msra.mxu0 0.0
        %5832 = vmatprep.subr.mxu0 0.0
        %5833 = vmatpush1.msra.mxu0 0.0
        %5834 = vmatprep.subr.mxu0 0.0
        %5835 = vmatpush1.msra.mxu0 0.0
        %5836 = vmatprep.subr.mxu0 0.0
        %5837 = vmatpush1.msra.mxu0 0.0
        %5838 = vmatprep.subr.mxu0 0.0
        %5839 = vmatpush1.msra.mxu0 0.0
        %5840 = vmatprep.subr.mxu0 0.0
        %5841 = vmatpush1.msra.mxu0 0.0
        %5842 = vmatprep.subr.mxu0 0.0
        %5843 = vmatpush1.msra.mxu0 0.0
        %5844 = vmatprep.subr.mxu0 0.0
        %5845 = vmatpush1.msra.mxu0 0.0
        %5846 = vmatprep.subr.mxu0 0.0
        %5847 = vmatpush1.msra.mxu0 0.0
        %5848 = vmatprep.subr.mxu0 0.0
        %5849 = vmatpush1.msra.mxu0 0.0
        %5850 = vmatprep.subr.mxu0 0.0
        %5851 = vmatpush1.msra.mxu0 0.0
        %5852 = vmatprep.subr.mxu0 0.0
        %5853 = vmatpush1.msra.mxu0 0.0
        %5854 = vmatprep.subr.mxu0 0.0
        %5855 = vmatpush1.msra.mxu0 0.0
        %5856 = vmatprep.subr.mxu0 0.0
        %5857 = vmatpush1.msra.mxu0 0.0
        %5858 = vmatprep.subr.mxu0 0.0
        %5859 = vmatpush1.msra.mxu0 0.0
        %5860 = vmatprep.subr.mxu0 0.0
        %5861 = vmatpush1.msra.mxu0 0.0
        %5862 = vmatprep.subr.mxu0 0.0
        %5863 = vmatpush1.msra.mxu0 0.0
        %5864 = vmatprep.subr.mxu0 0.0
        %5865 = vmatpush1.msra.mxu0 0.0
        %5866 = vmatprep.mubr.f32.mxu0 0.0
        %v5867 = vand.u32 %v5706, 4294901760
        %5868 = vmatmul.mubr.f32.gmra.mrb[0].mxu0 %v5867
        %v5869 = vpop.f32.mrb[0].mxu0
        %v5870 = vadd.f32 %v5788, %v5869
        %v5871 = vpop.f32.mrb[0].mxu0
        %v5872 = vadd.f32 %v5790, %v5871
        %5873 = vdwg.mxu0
        %v5874 = vand.u32 %v5712, 4294901760
        %v5875 = vsub.f32 %v5712, %v5874
        %5876 = vmatprep.subr.mxu0 %v5875
        %v5877 = vand.u32 %v5709, 4294901760
        %v5878 = vsub.f32 %v5709, %v5877
        %5879 = vmatpush1.msra.mxu0 %v5878
        %5880 = vmatprep.subr.mxu0 0.0
        %5881 = vmatpush1.msra.mxu0 0.0
        %5882 = vmatprep.subr.mxu0 0.0
        %5883 = vmatpush1.msra.mxu0 0.0
        %5884 = vmatprep.subr.mxu0 0.0
        %5885 = vmatpush1.msra.mxu0 0.0
        %5886 = vmatprep.subr.mxu0 0.0
        %5887 = vmatpush1.msra.mxu0 0.0
        %5888 = vmatprep.subr.mxu0 0.0
        %5889 = vmatpush1.msra.mxu0 0.0
        %5890 = vmatprep.subr.mxu0 0.0
        %5891 = vmatpush1.msra.mxu0 0.0
        %5892 = vmatprep.subr.mxu0 0.0
        %5893 = vmatpush1.msra.mxu0 0.0
        %5894 = vmatprep.subr.mxu0 0.0
        %5895 = vmatpush1.msra.mxu0 0.0
        %5896 = vmatprep.subr.mxu0 0.0
        %5897 = vmatpush1.msra.mxu0 0.0
        %5898 = vmatprep.subr.mxu0 0.0
        %5899 = vmatpush1.msra.mxu0 0.0
        %5900 = vmatprep.subr.mxu0 0.0
        %5901 = vmatpush1.msra.mxu0 0.0
        %5902 = vmatprep.subr.mxu0 0.0
        %5903 = vmatpush1.msra.mxu0 0.0
        %5904 = vmatprep.subr.mxu0 0.0
        %5905 = vmatpush1.msra.mxu0 0.0
        %5906 = vmatprep.subr.mxu0 0.0
        %5907 = vmatpush1.msra.mxu0 0.0
        %5908 = vmatprep.subr.mxu0 0.0
        %5909 = vmatpush1.msra.mxu0 0.0
        %5910 = vmatprep.subr.mxu0 0.0
        %5911 = vmatpush1.msra.mxu0 0.0
        %5912 = vmatprep.subr.mxu0 0.0
        %5913 = vmatpush1.msra.mxu0 0.0
        %5914 = vmatprep.subr.mxu0 0.0
        %5915 = vmatpush1.msra.mxu0 0.0
        %5916 = vmatprep.subr.mxu0 0.0
        %5917 = vmatpush1.msra.mxu0 0.0
        %5918 = vmatprep.subr.mxu0 0.0
        %5919 = vmatpush1.msra.mxu0 0.0
        %5920 = vmatprep.subr.mxu0 0.0
        %5921 = vmatpush1.msra.mxu0 0.0
        %5922 = vmatprep.subr.mxu0 0.0
        %5923 = vmatpush1.msra.mxu0 0.0
        %5924 = vmatprep.subr.mxu0 0.0
        %5925 = vmatpush1.msra.mxu0 0.0
        %5926 = vmatprep.subr.mxu0 0.0
        %5927 = vmatpush1.msra.mxu0 0.0
        %5928 = vmatprep.subr.mxu0 0.0
        %5929 = vmatpush1.msra.mxu0 0.0
        %5930 = vmatprep.subr.mxu0 0.0
        %5931 = vmatpush1.msra.mxu0 0.0
        %5932 = vmatprep.subr.mxu0 0.0
        %5933 = vmatpush1.msra.mxu0 0.0
        %5934 = vmatprep.subr.mxu0 0.0
        %5935 = vmatpush1.msra.mxu0 0.0
        %5936 = vmatprep.subr.mxu0 0.0
        %5937 = vmatpush1.msra.mxu0 0.0
        %5938 = vmatprep.subr.mxu0 0.0
        %5939 = vmatpush1.msra.mxu0 0.0
        %5940 = vmatprep.subr.mxu0 0.0
        %5941 = vmatpush1.msra.mxu0 0.0
        %5942 = vmatprep.mubr.f32.mxu0 0.0
        %v5943 = vand.u32 %v5706, 4294901760
        %v5944 = vsub.f32 %v5706, %v5943
        %5945 = vmatmul.mubr.f32.gmra.mrb[0].mxu0 %v5944
        %v5946 = vpop.f32.mrb[0].mxu0
        %v5947 = vadd.f32 %v5870, %v5946
        %v5948 = vpop.f32.mrb[0].mxu0
        %v5949 = vadd.f32 %v5872, %v5948
        %5950 = vdwg.mxu0
        %v5951 = vand.u32 %v5712, 4294901760
        %5952 = vmatprep.subr.mxu0 %v5951
        %v5953 = vand.u32 %v5709, 4294901760
        %5954 = vmatpush1.msra.mxu0 %v5953
        %5955 = vmatprep.subr.mxu0 0.0
        %5956 = vmatpush1.msra.mxu0 0.0
        %5957 = vmatprep.subr.mxu0 0.0
        %5958 = vmatpush1.msra.mxu0 0.0
        %5959 = vmatprep.subr.mxu0 0.0
        %5960 = vmatpush1.msra.mxu0 0.0
        %5961 = vmatprep.subr.mxu0 0.0
        %5962 = vmatpush1.msra.mxu0 0.0
        %5963 = vmatprep.subr.mxu0 0.0
        %5964 = vmatpush1.msra.mxu0 0.0
        %5965 = vmatprep.subr.mxu0 0.0
        %5966 = vmatpush1.msra.mxu0 0.0
        %5967 = vmatprep.subr.mxu0 0.0
        %5968 = vmatpush1.msra.mxu0 0.0
        %5969 = vmatprep.subr.mxu0 0.0
        %5970 = vmatpush1.msra.mxu0 0.0
        %5971 = vmatprep.subr.mxu0 0.0
        %5972 = vmatpush1.msra.mxu0 0.0
        %5973 = vmatprep.subr.mxu0 0.0
        %5974 = vmatpush1.msra.mxu0 0.0
        %5975 = vmatprep.subr.mxu0 0.0
        %5976 = vmatpush1.msra.mxu0 0.0
        %5977 = vmatprep.subr.mxu0 0.0
        %5978 = vmatpush1.msra.mxu0 0.0
        %5979 = vmatprep.subr.mxu0 0.0
        %5980 = vmatpush1.msra.mxu0 0.0
        %5981 = vmatprep.subr.mxu0 0.0
        %5982 = vmatpush1.msra.mxu0 0.0
        %5983 = vmatprep.subr.mxu0 0.0
        %5984 = vmatpush1.msra.mxu0 0.0
        %5985 = vmatprep.subr.mxu0 0.0
        %5986 = vmatpush1.msra.mxu0 0.0
        %5987 = vmatprep.subr.mxu0 0.0
        %5988 = vmatpush1.msra.mxu0 0.0
        %5989 = vmatprep.subr.mxu0 0.0
        %5990 = vmatpush1.msra.mxu0 0.0
        %5991 = vmatprep.subr.mxu0 0.0
        %5992 = vmatpush1.msra.mxu0 0.0
        %5993 = vmatprep.subr.mxu0 0.0
        %5994 = vmatpush1.msra.mxu0 0.0
        %5995 = vmatprep.subr.mxu0 0.0
        %5996 = vmatpush1.msra.mxu0 0.0
        %5997 = vmatprep.subr.mxu0 0.0
        %5998 = vmatpush1.msra.mxu0 0.0
        %5999 = vmatprep.subr.mxu0 0.0
        %6000 = vmatpush1.msra.mxu0 0.0
        %6001 = vmatprep.subr.mxu0 0.0
        %6002 = vmatpush1.msra.mxu0 0.0
        %6003 = vmatprep.subr.mxu0 0.0
        %6004 = vmatpush1.msra.mxu0 0.0
        %6005 = vmatprep.subr.mxu0 0.0
        %6006 = vmatpush1.msra.mxu0 0.0
        %6007 = vmatprep.subr.mxu0 0.0
        %6008 = vmatpush1.msra.mxu0 0.0
        %6009 = vmatprep.subr.mxu0 0.0
        %6010 = vmatpush1.msra.mxu0 0.0
        %6011 = vmatprep.subr.mxu0 0.0
        %6012 = vmatpush1.msra.mxu0 0.0
        %6013 = vmatprep.subr.mxu0 0.0
        %6014 = vmatpush1.msra.mxu0 0.0
        %6015 = vmatprep.subr.mxu0 0.0
        %6016 = vmatpush1.msra.mxu0 0.0
        %6017 = vmatprep.mubr.f32.mxu0 0.0
        %v6018 = vand.u32 %v5706, 4294901760
        %v6019 = vsub.f32 %v5706, %v6018
        %v6020 = vand.u32 %v6019, 4294901760
        %6021 = vmatmul.mubr.f32.gmra.mrb[0].mxu0 %v6020
        %v6022 = vpop.f32.mrb[0].mxu0
        %v6023 = vadd.f32 %v5947, %v6022
        %v6024 = vpop.f32.mrb[0].mxu0
        %v6025 = vadd.f32 %v5949, %v6024
        %6026 = vdwg.mxu0
        %v6027 = vand.u32 %v5712, 4294901760
        %v6028 = vsub.f32 %v5712, %v6027
        %v6029 = vand.u32 %v6028, 4294901760
        %6030 = vmatprep.subr.mxu0 %v6029
        %v6031 = vand.u32 %v5709, 4294901760
        %v6032 = vsub.f32 %v5709, %v6031
        %v6033 = vand.u32 %v6032, 4294901760
        %6034 = vmatpush1.msra.mxu0 %v6033
        %6035 = vmatprep.subr.mxu0 0.0
        %6036 = vmatpush1.msra.mxu0 0.0
        %6037 = vmatprep.subr.mxu0 0.0
        %6038 = vmatpush1.msra.mxu0 0.0
        %6039 = vmatprep.subr.mxu0 0.0
        %6040 = vmatpush1.msra.mxu0 0.0
        %6041 = vmatprep.subr.mxu0 0.0
        %6042 = vmatpush1.msra.mxu0 0.0
        %6043 = vmatprep.subr.mxu0 0.0
        %6044 = vmatpush1.msra.mxu0 0.0
        %6045 = vmatprep.subr.mxu0 0.0
        %6046 = vmatpush1.msra.mxu0 0.0
        %6047 = vmatprep.subr.mxu0 0.0
        %6048 = vmatpush1.msra.mxu0 0.0
        %6049 = vmatprep.subr.mxu0 0.0
        %6050 = vmatpush1.msra.mxu0 0.0
        %6051 = vmatprep.subr.mxu0 0.0
        %6052 = vmatpush1.msra.mxu0 0.0
        %6053 = vmatprep.subr.mxu0 0.0
        %6054 = vmatpush1.msra.mxu0 0.0
        %6055 = vmatprep.subr.mxu0 0.0
        %6056 = vmatpush1.msra.mxu0 0.0
        %6057 = vmatprep.subr.mxu0 0.0
        %6058 = vmatpush1.msra.mxu0 0.0
        %6059 = vmatprep.subr.mxu0 0.0
        %6060 = vmatpush1.msra.mxu0 0.0
        %6061 = vmatprep.subr.mxu0 0.0
        %6062 = vmatpush1.msra.mxu0 0.0
        %6063 = vmatprep.subr.mxu0 0.0
        %6064 = vmatpush1.msra.mxu0 0.0
        %6065 = vmatprep.subr.mxu0 0.0
        %6066 = vmatpush1.msra.mxu0 0.0
        %6067 = vmatprep.subr.mxu0 0.0
        %6068 = vmatpush1.msra.mxu0 0.0
        %6069 = vmatprep.subr.mxu0 0.0
        %6070 = vmatpush1.msra.mxu0 0.0
        %6071 = vmatprep.subr.mxu0 0.0
        %6072 = vmatpush1.msra.mxu0 0.0
        %6073 = vmatprep.subr.mxu0 0.0
        %6074 = vmatpush1.msra.mxu0 0.0
        %6075 = vmatprep.subr.mxu0 0.0
        %6076 = vmatpush1.msra.mxu0 0.0
        %6077 = vmatprep.subr.mxu0 0.0
        %6078 = vmatpush1.msra.mxu0 0.0
        %6079 = vmatprep.subr.mxu0 0.0
        %6080 = vmatpush1.msra.mxu0 0.0
        %6081 = vmatprep.subr.mxu0 0.0
        %6082 = vmatpush1.msra.mxu0 0.0
        %6083 = vmatprep.subr.mxu0 0.0
        %6084 = vmatpush1.msra.mxu0 0.0
        %6085 = vmatprep.subr.mxu0 0.0
        %6086 = vmatpush1.msra.mxu0 0.0
        %6087 = vmatprep.subr.mxu0 0.0
        %6088 = vmatpush1.msra.mxu0 0.0
        %6089 = vmatprep.subr.mxu0 0.0
        %6090 = vmatpush1.msra.mxu0 0.0
        %6091 = vmatprep.subr.mxu0 0.0
        %6092 = vmatpush1.msra.mxu0 0.0
        %6093 = vmatprep.subr.mxu0 0.0
        %6094 = vmatpush1.msra.mxu0 0.0
        %6095 = vmatprep.subr.mxu0 0.0
        %6096 = vmatpush1.msra.mxu0 0.0
        %6097 = vmatprep.mubr.f32.mxu0 0.0
        %v6098 = vand.u32 %v5706, 4294901760
        %6099 = vmatmul.mubr.f32.gmra.mrb[0].mxu0 %v6098
        %v6100 = vpop.f32.mrb[0].mxu0
        %v6101 = vadd.f32 %v6023, %v6100
        %v6102 = vpop.f32.mrb[0].mxu0
        %v6103 = vadd.f32 %v6025, %v6102
        %6104 = vdwg.mxu0
        %v6105 = vand.u32 %v5712, 4294901760
        %6106 = vmatprep.subr.mxu0 %v6105
        %v6107 = vand.u32 %v5709, 4294901760
        %6108 = vmatpush1.msra.mxu0 %v6107
        %6109 = vmatprep.subr.mxu0 0.0
        %6110 = vmatpush1.msra.mxu0 0.0
        %6111 = vmatprep.subr.mxu0 0.0
        %6112 = vmatpush1.msra.mxu0 0.0
        %6113 = vmatprep.subr.mxu0 0.0
        %6114 = vmatpush1.msra.mxu0 0.0
        %6115 = vmatprep.subr.mxu0 0.0
        %6116 = vmatpush1.msra.mxu0 0.0
        %6117 = vmatprep.subr.mxu0 0.0
        %6118 = vmatpush1.msra.mxu0 0.0
        %6119 = vmatprep.subr.mxu0 0.0
        %6120 = vmatpush1.msra.mxu0 0.0
        %6121 = vmatprep.subr.mxu0 0.0
        %6122 = vmatpush1.msra.mxu0 0.0
        %6123 = vmatprep.subr.mxu0 0.0
        %6124 = vmatpush1.msra.mxu0 0.0
        %6125 = vmatprep.subr.mxu0 0.0
        %6126 = vmatpush1.msra.mxu0 0.0
        %6127 = vmatprep.subr.mxu0 0.0
        %6128 = vmatpush1.msra.mxu0 0.0
        %6129 = vmatprep.subr.mxu0 0.0
        %6130 = vmatpush1.msra.mxu0 0.0
        %6131 = vmatprep.subr.mxu0 0.0
        %6132 = vmatpush1.msra.mxu0 0.0
        %6133 = vmatprep.subr.mxu0 0.0
        %6134 = vmatpush1.msra.mxu0 0.0
        %6135 = vmatprep.subr.mxu0 0.0
        %6136 = vmatpush1.msra.mxu0 0.0
        %6137 = vmatprep.subr.mxu0 0.0
        %6138 = vmatpush1.msra.mxu0 0.0
        %6139 = vmatprep.subr.mxu0 0.0
        %6140 = vmatpush1.msra.mxu0 0.0
        %6141 = vmatprep.subr.mxu0 0.0
        %6142 = vmatpush1.msra.mxu0 0.0
        %6143 = vmatprep.subr.mxu0 0.0
        %6144 = vmatpush1.msra.mxu0 0.0
        %6145 = vmatprep.subr.mxu0 0.0
        %6146 = vmatpush1.msra.mxu0 0.0
        %6147 = vmatprep.subr.mxu0 0.0
        %6148 = vmatpush1.msra.mxu0 0.0
        %6149 = vmatprep.subr.mxu0 0.0
        %6150 = vmatpush1.msra.mxu0 0.0
        %6151 = vmatprep.subr.mxu0 0.0
        %6152 = vmatpush1.msra.mxu0 0.0
        %6153 = vmatprep.subr.mxu0 0.0
        %6154 = vmatpush1.msra.mxu0 0.0
        %6155 = vmatprep.subr.mxu0 0.0
        %6156 = vmatpush1.msra.mxu0 0.0
        %6157 = vmatprep.subr.mxu0 0.0
        %6158 = vmatpush1.msra.mxu0 0.0
        %6159 = vmatprep.subr.mxu0 0.0
        %6160 = vmatpush1.msra.mxu0 0.0
        %6161 = vmatprep.subr.mxu0 0.0
        %6162 = vmatpush1.msra.mxu0 0.0
        %6163 = vmatprep.subr.mxu0 0.0
        %6164 = vmatpush1.msra.mxu0 0.0
        %6165 = vmatprep.subr.mxu0 0.0
        %6166 = vmatpush1.msra.mxu0 0.0
        %6167 = vmatprep.subr.mxu0 0.0
        %6168 = vmatpush1.msra.mxu0 0.0
        %6169 = vmatprep.subr.mxu0 0.0
        %6170 = vmatpush1.msra.mxu0 0.0
        %6171 = vmatprep.mubr.f32.mxu0 0.0
        %v6172 = vand.u32 %v5706, 4294901760
        %6173 = vmatmul.mubr.f32.gmra.mrb[0].mxu0 %v6172
        %v6174 = vpop.f32.mrb[0].mxu0
        %v6175 = vadd.f32 %v6101, %v6174
        %v6176 = vpop.f32.mrb[0].mxu0
        %v6177 = vadd.f32 %v6103, %v6176
        %6178 = vdwg.mxu0
        %v6179 = vadd.f32 %v5693, %v6175
        %v6180 = vadd.f32 %v5695, %v6177
        %6181 = vrot.lane.b32.xlu0 %v4731, 1
        %v6182 = vpop.permute.xlu0 %6181
        %6183 = vrot.lane.b32.xlu0 %v4732, 1
        %v6184 = vpop.permute.xlu0 %6183
        %v6185 = vsel %vm1753, %v6182, %v6184
        %v6186 = vsel %vm1753, %v6184, %v6182
        %v6187 = vmul.f32 %v6186, %v1759
        %v6188 = vmul.f32 %v6185, %v1763
        %v6189 = vrot.slane %v261, 4
        %v6190 = vsel %vm308, %v6189, 0
        %v6193 = vsel %vm311, %v6187, 0
        %v6196 = vsel %vm311, %v6188, 0
        %v6198 = vand.u32 %v6196, 4294901760
        %6199 = vmatprep.subr.mxu0 %v6198
        %v6200 = vand.u32 %v6193, 4294901760
        %6201 = vmatpush1.msra.mxu0 %v6200
        %6202 = vmatprep.subr.mxu0 0.0
        %6203 = vmatpush1.msra.mxu0 0.0
        %6204 = vmatprep.subr.mxu0 0.0
        %6205 = vmatpush1.msra.mxu0 0.0
        %6206 = vmatprep.subr.mxu0 0.0
        %6207 = vmatpush1.msra.mxu0 0.0
        %6208 = vmatprep.subr.mxu0 0.0
        %6209 = vmatpush1.msra.mxu0 0.0
        %6210 = vmatprep.subr.mxu0 0.0
        %6211 = vmatpush1.msra.mxu0 0.0
        %6212 = vmatprep.subr.mxu0 0.0
        %6213 = vmatpush1.msra.mxu0 0.0
        %6214 = vmatprep.subr.mxu0 0.0
        %6215 = vmatpush1.msra.mxu0 0.0
        %6216 = vmatprep.subr.mxu0 0.0
        %6217 = vmatpush1.msra.mxu0 0.0
        %6218 = vmatprep.subr.mxu0 0.0
        %6219 = vmatpush1.msra.mxu0 0.0
        %6220 = vmatprep.subr.mxu0 0.0
        %6221 = vmatpush1.msra.mxu0 0.0
        %6222 = vmatprep.subr.mxu0 0.0
        %6223 = vmatpush1.msra.mxu0 0.0
        %6224 = vmatprep.subr.mxu0 0.0
        %6225 = vmatpush1.msra.mxu0 0.0
        %6226 = vmatprep.subr.mxu0 0.0
        %6227 = vmatpush1.msra.mxu0 0.0
        %6228 = vmatprep.subr.mxu0 0.0
        %6229 = vmatpush1.msra.mxu0 0.0
        %6230 = vmatprep.subr.mxu0 0.0
        %6231 = vmatpush1.msra.mxu0 0.0
        %6232 = vmatprep.subr.mxu0 0.0
        %6233 = vmatpush1.msra.mxu0 0.0
        %6234 = vmatprep.subr.mxu0 0.0
        %6235 = vmatpush1.msra.mxu0 0.0
        %6236 = vmatprep.subr.mxu0 0.0
        %6237 = vmatpush1.msra.mxu0 0.0
        %6238 = vmatprep.subr.mxu0 0.0
        %6239 = vmatpush1.msra.mxu0 0.0
        %6240 = vmatprep.subr.mxu0 0.0
        %6241 = vmatpush1.msra.mxu0 0.0
        %6242 = vmatprep.subr.mxu0 0.0
        %6243 = vmatpush1.msra.mxu0 0.0
        %6244 = vmatprep.subr.mxu0 0.0
        %6245 = vmatpush1.msra.mxu0 0.0
        %6246 = vmatprep.subr.mxu0 0.0
        %6247 = vmatpush1.msra.mxu0 0.0
        %6248 = vmatprep.subr.mxu0 0.0
        %6249 = vmatpush1.msra.mxu0 0.0
        %6250 = vmatprep.subr.mxu0 0.0
        %6251 = vmatpush1.msra.mxu0 0.0
        %6252 = vmatprep.subr.mxu0 0.0
        %6253 = vmatpush1.msra.mxu0 0.0
        %6254 = vmatprep.subr.mxu0 0.0
        %6255 = vmatpush1.msra.mxu0 0.0
        %6256 = vmatprep.subr.mxu0 0.0
        %6257 = vmatpush1.msra.mxu0 0.0
        %6258 = vmatprep.subr.mxu0 0.0
        %6259 = vmatpush1.msra.mxu0 0.0
        %6260 = vmatprep.subr.mxu0 0.0
        %6261 = vmatpush1.msra.mxu0 0.0
        %6262 = vmatprep.subr.mxu0 0.0
        %6263 = vmatpush1.msra.mxu0 0.0
        %6264 = vmatprep.mubr.f32.mxu0 0.0
        %v6265 = vand.u32 %v6190, 4294901760
        %v6266 = vsub.f32 %v6190, %v6265
        %v6267 = vand.u32 %v6266, 4294901760
        %v6268 = vsub.f32 %v6266, %v6267
        %v6269 = vand.u32 %v6268, 4294901760
        %6270 = vmatmul.mubr.f32.gmra.mrb[0].mxu0 %v6269
        %v6271 = vpop.f32.mrb[0].mxu0
        %v6272 = vadd.f32 0.0, %v6271
        %v6273 = vpop.f32.mrb[0].mxu0
        %v6274 = vadd.f32 0.0, %v6273
        %6275 = vdwg.mxu0
        %v6276 = vand.u32 %v6196, 4294901760
        %v6277 = vsub.f32 %v6196, %v6276
        %v6278 = vand.u32 %v6277, 4294901760
        %v6279 = vsub.f32 %v6277, %v6278
        %v6280 = vand.u32 %v6279, 4294901760
        %6281 = vmatprep.subr.mxu0 %v6280
        %v6282 = vand.u32 %v6193, 4294901760
        %v6283 = vsub.f32 %v6193, %v6282
        %v6284 = vand.u32 %v6283, 4294901760
        %v6285 = vsub.f32 %v6283, %v6284
        %v6286 = vand.u32 %v6285, 4294901760
        %6287 = vmatpush1.msra.mxu0 %v6286
        %6288 = vmatprep.subr.mxu0 0.0
        %6289 = vmatpush1.msra.mxu0 0.0
        %6290 = vmatprep.subr.mxu0 0.0
        %6291 = vmatpush1.msra.mxu0 0.0
        %6292 = vmatprep.subr.mxu0 0.0
        %6293 = vmatpush1.msra.mxu0 0.0
        %6294 = vmatprep.subr.mxu0 0.0
        %6295 = vmatpush1.msra.mxu0 0.0
        %6296 = vmatprep.subr.mxu0 0.0
        %6297 = vmatpush1.msra.mxu0 0.0
        %6298 = vmatprep.subr.mxu0 0.0
        %6299 = vmatpush1.msra.mxu0 0.0
        %6300 = vmatprep.subr.mxu0 0.0
        %6301 = vmatpush1.msra.mxu0 0.0
        %6302 = vmatprep.subr.mxu0 0.0
        %6303 = vmatpush1.msra.mxu0 0.0
        %6304 = vmatprep.subr.mxu0 0.0
        %6305 = vmatpush1.msra.mxu0 0.0
        %6306 = vmatprep.subr.mxu0 0.0
        %6307 = vmatpush1.msra.mxu0 0.0
        %6308 = vmatprep.subr.mxu0 0.0
        %6309 = vmatpush1.msra.mxu0 0.0
        %6310 = vmatprep.subr.mxu0 0.0
        %6311 = vmatpush1.msra.mxu0 0.0
        %6312 = vmatprep.subr.mxu0 0.0
        %6313 = vmatpush1.msra.mxu0 0.0
        %6314 = vmatprep.subr.mxu0 0.0
        %6315 = vmatpush1.msra.mxu0 0.0
        %6316 = vmatprep.subr.mxu0 0.0
        %6317 = vmatpush1.msra.mxu0 0.0
        %6318 = vmatprep.subr.mxu0 0.0
        %6319 = vmatpush1.msra.mxu0 0.0
        %6320 = vmatprep.subr.mxu0 0.0
        %6321 = vmatpush1.msra.mxu0 0.0
        %6322 = vmatprep.subr.mxu0 0.0
        %6323 = vmatpush1.msra.mxu0 0.0
        %6324 = vmatprep.subr.mxu0 0.0
        %6325 = vmatpush1.msra.mxu0 0.0
        %6326 = vmatprep.subr.mxu0 0.0
        %6327 = vmatpush1.msra.mxu0 0.0
        %6328 = vmatprep.subr.mxu0 0.0
        %6329 = vmatpush1.msra.mxu0 0.0
        %6330 = vmatprep.subr.mxu0 0.0
        %6331 = vmatpush1.msra.mxu0 0.0
        %6332 = vmatprep.subr.mxu0 0.0
        %6333 = vmatpush1.msra.mxu0 0.0
        %6334 = vmatprep.subr.mxu0 0.0
        %6335 = vmatpush1.msra.mxu0 0.0
        %6336 = vmatprep.subr.mxu0 0.0
        %6337 = vmatpush1.msra.mxu0 0.0
        %6338 = vmatprep.subr.mxu0 0.0
        %6339 = vmatpush1.msra.mxu0 0.0
        %6340 = vmatprep.subr.mxu0 0.0
        %6341 = vmatpush1.msra.mxu0 0.0
        %6342 = vmatprep.subr.mxu0 0.0
        %6343 = vmatpush1.msra.mxu0 0.0
        %6344 = vmatprep.subr.mxu0 0.0
        %6345 = vmatpush1.msra.mxu0 0.0
        %6346 = vmatprep.subr.mxu0 0.0
        %6347 = vmatpush1.msra.mxu0 0.0
        %6348 = vmatprep.subr.mxu0 0.0
        %6349 = vmatpush1.msra.mxu0 0.0
        %6350 = vmatprep.mubr.f32.mxu0 0.0
        %v6351 = vand.u32 %v6190, 4294901760
        %6352 = vmatmul.mubr.f32.gmra.mrb[0].mxu0 %v6351
        %v6353 = vpop.f32.mrb[0].mxu0
        %v6354 = vadd.f32 %v6272, %v6353
        %v6355 = vpop.f32.mrb[0].mxu0
        %v6356 = vadd.f32 %v6274, %v6355
        %6357 = vdwg.mxu0
        %v6358 = vand.u32 %v6196, 4294901760
        %v6359 = vsub.f32 %v6196, %v6358
        %6360 = vmatprep.subr.mxu0 %v6359
        %v6361 = vand.u32 %v6193, 4294901760
        %v6362 = vsub.f32 %v6193, %v6361
        %6363 = vmatpush1.msra.mxu0 %v6362
        %6364 = vmatprep.subr.mxu0 0.0
        %6365 = vmatpush1.msra.mxu0 0.0
        %6366 = vmatprep.subr.mxu0 0.0
        %6367 = vmatpush1.msra.mxu0 0.0
        %6368 = vmatprep.subr.mxu0 0.0
        %6369 = vmatpush1.msra.mxu0 0.0
        %6370 = vmatprep.subr.mxu0 0.0
        %6371 = vmatpush1.msra.mxu0 0.0
        %6372 = vmatprep.subr.mxu0 0.0
        %6373 = vmatpush1.msra.mxu0 0.0
        %6374 = vmatprep.subr.mxu0 0.0
        %6375 = vmatpush1.msra.mxu0 0.0
        %6376 = vmatprep.subr.mxu0 0.0
        %6377 = vmatpush1.msra.mxu0 0.0
        %6378 = vmatprep.subr.mxu0 0.0
        %6379 = vmatpush1.msra.mxu0 0.0
        %6380 = vmatprep.subr.mxu0 0.0
        %6381 = vmatpush1.msra.mxu0 0.0
        %6382 = vmatprep.subr.mxu0 0.0
        %6383 = vmatpush1.msra.mxu0 0.0
        %6384 = vmatprep.subr.mxu0 0.0
        %6385 = vmatpush1.msra.mxu0 0.0
        %6386 = vmatprep.subr.mxu0 0.0
        %6387 = vmatpush1.msra.mxu0 0.0
        %6388 = vmatprep.subr.mxu0 0.0
        %6389 = vmatpush1.msra.mxu0 0.0
        %6390 = vmatprep.subr.mxu0 0.0
        %6391 = vmatpush1.msra.mxu0 0.0
        %6392 = vmatprep.subr.mxu0 0.0
        %6393 = vmatpush1.msra.mxu0 0.0
        %6394 = vmatprep.subr.mxu0 0.0
        %6395 = vmatpush1.msra.mxu0 0.0
        %6396 = vmatprep.subr.mxu0 0.0
        %6397 = vmatpush1.msra.mxu0 0.0
        %6398 = vmatprep.subr.mxu0 0.0
        %6399 = vmatpush1.msra.mxu0 0.0
        %6400 = vmatprep.subr.mxu0 0.0
        %6401 = vmatpush1.msra.mxu0 0.0
        %6402 = vmatprep.subr.mxu0 0.0
        %6403 = vmatpush1.msra.mxu0 0.0
        %6404 = vmatprep.subr.mxu0 0.0
        %6405 = vmatpush1.msra.mxu0 0.0
        %6406 = vmatprep.subr.mxu0 0.0
        %6407 = vmatpush1.msra.mxu0 0.0
        %6408 = vmatprep.subr.mxu0 0.0
        %6409 = vmatpush1.msra.mxu0 0.0
        %6410 = vmatprep.subr.mxu0 0.0
        %6411 = vmatpush1.msra.mxu0 0.0
        %6412 = vmatprep.subr.mxu0 0.0
        %6413 = vmatpush1.msra.mxu0 0.0
        %6414 = vmatprep.subr.mxu0 0.0
        %6415 = vmatpush1.msra.mxu0 0.0
        %6416 = vmatprep.subr.mxu0 0.0
        %6417 = vmatpush1.msra.mxu0 0.0
        %6418 = vmatprep.subr.mxu0 0.0
        %6419 = vmatpush1.msra.mxu0 0.0
        %6420 = vmatprep.subr.mxu0 0.0
        %6421 = vmatpush1.msra.mxu0 0.0
        %6422 = vmatprep.subr.mxu0 0.0
        %6423 = vmatpush1.msra.mxu0 0.0
        %6424 = vmatprep.subr.mxu0 0.0
        %6425 = vmatpush1.msra.mxu0 0.0
        %6426 = vmatprep.mubr.f32.mxu0 0.0
        %v6427 = vand.u32 %v6190, 4294901760
        %v6428 = vsub.f32 %v6190, %v6427
        %6429 = vmatmul.mubr.f32.gmra.mrb[0].mxu0 %v6428
        %v6430 = vpop.f32.mrb[0].mxu0
        %v6431 = vadd.f32 %v6354, %v6430
        %v6432 = vpop.f32.mrb[0].mxu0
        %v6433 = vadd.f32 %v6356, %v6432
        %6434 = vdwg.mxu0
        %v6435 = vand.u32 %v6196, 4294901760
        %6436 = vmatprep.subr.mxu0 %v6435
        %v6437 = vand.u32 %v6193, 4294901760
        %6438 = vmatpush1.msra.mxu0 %v6437
        %6439 = vmatprep.subr.mxu0 0.0
        %6440 = vmatpush1.msra.mxu0 0.0
        %6441 = vmatprep.subr.mxu0 0.0
        %6442 = vmatpush1.msra.mxu0 0.0
        %6443 = vmatprep.subr.mxu0 0.0
        %6444 = vmatpush1.msra.mxu0 0.0
        %6445 = vmatprep.subr.mxu0 0.0
        %6446 = vmatpush1.msra.mxu0 0.0
        %6447 = vmatprep.subr.mxu0 0.0
        %6448 = vmatpush1.msra.mxu0 0.0
        %6449 = vmatprep.subr.mxu0 0.0
        %6450 = vmatpush1.msra.mxu0 0.0
        %6451 = vmatprep.subr.mxu0 0.0
        %6452 = vmatpush1.msra.mxu0 0.0
        %6453 = vmatprep.subr.mxu0 0.0
        %6454 = vmatpush1.msra.mxu0 0.0
        %6455 = vmatprep.subr.mxu0 0.0
        %6456 = vmatpush1.msra.mxu0 0.0
        %6457 = vmatprep.subr.mxu0 0.0
        %6458 = vmatpush1.msra.mxu0 0.0
        %6459 = vmatprep.subr.mxu0 0.0
        %6460 = vmatpush1.msra.mxu0 0.0
        %6461 = vmatprep.subr.mxu0 0.0
        %6462 = vmatpush1.msra.mxu0 0.0
        %6463 = vmatprep.subr.mxu0 0.0
        %6464 = vmatpush1.msra.mxu0 0.0
        %6465 = vmatprep.subr.mxu0 0.0
        %6466 = vmatpush1.msra.mxu0 0.0
        %6467 = vmatprep.subr.mxu0 0.0
        %6468 = vmatpush1.msra.mxu0 0.0
        %6469 = vmatprep.subr.mxu0 0.0
        %6470 = vmatpush1.msra.mxu0 0.0
        %6471 = vmatprep.subr.mxu0 0.0
        %6472 = vmatpush1.msra.mxu0 0.0
        %6473 = vmatprep.subr.mxu0 0.0
        %6474 = vmatpush1.msra.mxu0 0.0
        %6475 = vmatprep.subr.mxu0 0.0
        %6476 = vmatpush1.msra.mxu0 0.0
        %6477 = vmatprep.subr.mxu0 0.0
        %6478 = vmatpush1.msra.mxu0 0.0
        %6479 = vmatprep.subr.mxu0 0.0
        %6480 = vmatpush1.msra.mxu0 0.0
        %6481 = vmatprep.subr.mxu0 0.0
        %6482 = vmatpush1.msra.mxu0 0.0
        %6483 = vmatprep.subr.mxu0 0.0
        %6484 = vmatpush1.msra.mxu0 0.0
        %6485 = vmatprep.subr.mxu0 0.0
        %6486 = vmatpush1.msra.mxu0 0.0
        %6487 = vmatprep.subr.mxu0 0.0
        %6488 = vmatpush1.msra.mxu0 0.0
        %6489 = vmatprep.subr.mxu0 0.0
        %6490 = vmatpush1.msra.mxu0 0.0
        %6491 = vmatprep.subr.mxu0 0.0
        %6492 = vmatpush1.msra.mxu0 0.0
        %6493 = vmatprep.subr.mxu0 0.0
        %6494 = vmatpush1.msra.mxu0 0.0
        %6495 = vmatprep.subr.mxu0 0.0
        %6496 = vmatpush1.msra.mxu0 0.0
        %6497 = vmatprep.subr.mxu0 0.0
        %6498 = vmatpush1.msra.mxu0 0.0
        %6499 = vmatprep.subr.mxu0 0.0
        %6500 = vmatpush1.msra.mxu0 0.0
        %6501 = vmatprep.mubr.f32.mxu0 0.0
        %v6502 = vand.u32 %v6190, 4294901760
        %v6503 = vsub.f32 %v6190, %v6502
        %v6504 = vand.u32 %v6503, 4294901760
        %6505 = vmatmul.mubr.f32.gmra.mrb[0].mxu0 %v6504
        %v6506 = vpop.f32.mrb[0].mxu0
        %v6507 = vadd.f32 %v6431, %v6506
        %v6508 = vpop.f32.mrb[0].mxu0
        %v6509 = vadd.f32 %v6433, %v6508
        %6510 = vdwg.mxu0
        %v6511 = vand.u32 %v6196, 4294901760
        %v6512 = vsub.f32 %v6196, %v6511
        %v6513 = vand.u32 %v6512, 4294901760
        %6514 = vmatprep.subr.mxu0 %v6513
        %v6515 = vand.u32 %v6193, 4294901760
        %v6516 = vsub.f32 %v6193, %v6515
        %v6517 = vand.u32 %v6516, 4294901760
        %6518 = vmatpush1.msra.mxu0 %v6517
        %6519 = vmatprep.subr.mxu0 0.0
        %6520 = vmatpush1.msra.mxu0 0.0
        %6521 = vmatprep.subr.mxu0 0.0
        %6522 = vmatpush1.msra.mxu0 0.0
        %6523 = vmatprep.subr.mxu0 0.0
        %6524 = vmatpush1.msra.mxu0 0.0
        %6525 = vmatprep.subr.mxu0 0.0
        %6526 = vmatpush1.msra.mxu0 0.0
        %6527 = vmatprep.subr.mxu0 0.0
        %6528 = vmatpush1.msra.mxu0 0.0
        %6529 = vmatprep.subr.mxu0 0.0
        %6530 = vmatpush1.msra.mxu0 0.0
        %6531 = vmatprep.subr.mxu0 0.0
        %6532 = vmatpush1.msra.mxu0 0.0
        %6533 = vmatprep.subr.mxu0 0.0
        %6534 = vmatpush1.msra.mxu0 0.0
        %6535 = vmatprep.subr.mxu0 0.0
        %6536 = vmatpush1.msra.mxu0 0.0
        %6537 = vmatprep.subr.mxu0 0.0
        %6538 = vmatpush1.msra.mxu0 0.0
        %6539 = vmatprep.subr.mxu0 0.0
        %6540 = vmatpush1.msra.mxu0 0.0
        %6541 = vmatprep.subr.mxu0 0.0
        %6542 = vmatpush1.msra.mxu0 0.0
        %6543 = vmatprep.subr.mxu0 0.0
        %6544 = vmatpush1.msra.mxu0 0.0
        %6545 = vmatprep.subr.mxu0 0.0
        %6546 = vmatpush1.msra.mxu0 0.0
        %6547 = vmatprep.subr.mxu0 0.0
        %6548 = vmatpush1.msra.mxu0 0.0
        %6549 = vmatprep.subr.mxu0 0.0
        %6550 = vmatpush1.msra.mxu0 0.0
        %6551 = vmatprep.subr.mxu0 0.0
        %6552 = vmatpush1.msra.mxu0 0.0
        %6553 = vmatprep.subr.mxu0 0.0
        %6554 = vmatpush1.msra.mxu0 0.0
        %6555 = vmatprep.subr.mxu0 0.0
        %6556 = vmatpush1.msra.mxu0 0.0
        %6557 = vmatprep.subr.mxu0 0.0
        %6558 = vmatpush1.msra.mxu0 0.0
        %6559 = vmatprep.subr.mxu0 0.0
        %6560 = vmatpush1.msra.mxu0 0.0
        %6561 = vmatprep.subr.mxu0 0.0
        %6562 = vmatpush1.msra.mxu0 0.0
        %6563 = vmatprep.subr.mxu0 0.0
        %6564 = vmatpush1.msra.mxu0 0.0
        %6565 = vmatprep.subr.mxu0 0.0
        %6566 = vmatpush1.msra.mxu0 0.0
        %6567 = vmatprep.subr.mxu0 0.0
        %6568 = vmatpush1.msra.mxu0 0.0
        %6569 = vmatprep.subr.mxu0 0.0
        %6570 = vmatpush1.msra.mxu0 0.0
        %6571 = vmatprep.subr.mxu0 0.0
        %6572 = vmatpush1.msra.mxu0 0.0
        %6573 = vmatprep.subr.mxu0 0.0
        %6574 = vmatpush1.msra.mxu0 0.0
        %6575 = vmatprep.subr.mxu0 0.0
        %6576 = vmatpush1.msra.mxu0 0.0
        %6577 = vmatprep.subr.mxu0 0.0
        %6578 = vmatpush1.msra.mxu0 0.0
        %6579 = vmatprep.subr.mxu0 0.0
        %6580 = vmatpush1.msra.mxu0 0.0
        %6581 = vmatprep.mubr.f32.mxu0 0.0
        %v6582 = vand.u32 %v6190, 4294901760
        %6583 = vmatmul.mubr.f32.gmra.mrb[0].mxu0 %v6582
        %v6584 = vpop.f32.mrb[0].mxu0
        %v6585 = vadd.f32 %v6507, %v6584
        %v6586 = vpop.f32.mrb[0].mxu0
        %v6587 = vadd.f32 %v6509, %v6586
        %6588 = vdwg.mxu0
        %v6589 = vand.u32 %v6196, 4294901760
        %6590 = vmatprep.subr.mxu0 %v6589
        %v6591 = vand.u32 %v6193, 4294901760
        %6592 = vmatpush1.msra.mxu0 %v6591
        %6593 = vmatprep.subr.mxu0 0.0
        %6594 = vmatpush1.msra.mxu0 0.0
        %6595 = vmatprep.subr.mxu0 0.0
        %6596 = vmatpush1.msra.mxu0 0.0
        %6597 = vmatprep.subr.mxu0 0.0
        %6598 = vmatpush1.msra.mxu0 0.0
        %6599 = vmatprep.subr.mxu0 0.0
        %6600 = vmatpush1.msra.mxu0 0.0
        %6601 = vmatprep.subr.mxu0 0.0
        %6602 = vmatpush1.msra.mxu0 0.0
        %6603 = vmatprep.subr.mxu0 0.0
        %6604 = vmatpush1.msra.mxu0 0.0
        %6605 = vmatprep.subr.mxu0 0.0
        %6606 = vmatpush1.msra.mxu0 0.0
        %6607 = vmatprep.subr.mxu0 0.0
        %6608 = vmatpush1.msra.mxu0 0.0
        %6609 = vmatprep.subr.mxu0 0.0
        %6610 = vmatpush1.msra.mxu0 0.0
        %6611 = vmatprep.subr.mxu0 0.0
        %6612 = vmatpush1.msra.mxu0 0.0
        %6613 = vmatprep.subr.mxu0 0.0
        %6614 = vmatpush1.msra.mxu0 0.0
        %6615 = vmatprep.subr.mxu0 0.0
        %6616 = vmatpush1.msra.mxu0 0.0
        %6617 = vmatprep.subr.mxu0 0.0
        %6618 = vmatpush1.msra.mxu0 0.0
        %6619 = vmatprep.subr.mxu0 0.0
        %6620 = vmatpush1.msra.mxu0 0.0
        %6621 = vmatprep.subr.mxu0 0.0
        %6622 = vmatpush1.msra.mxu0 0.0
        %6623 = vmatprep.subr.mxu0 0.0
        %6624 = vmatpush1.msra.mxu0 0.0
        %6625 = vmatprep.subr.mxu0 0.0
        %6626 = vmatpush1.msra.mxu0 0.0
        %6627 = vmatprep.subr.mxu0 0.0
        %6628 = vmatpush1.msra.mxu0 0.0
        %6629 = vmatprep.subr.mxu0 0.0
        %6630 = vmatpush1.msra.mxu0 0.0
        %6631 = vmatprep.subr.mxu0 0.0
        %6632 = vmatpush1.msra.mxu0 0.0
        %6633 = vmatprep.subr.mxu0 0.0
        %6634 = vmatpush1.msra.mxu0 0.0
        %6635 = vmatprep.subr.mxu0 0.0
        %6636 = vmatpush1.msra.mxu0 0.0
        %6637 = vmatprep.subr.mxu0 0.0
        %6638 = vmatpush1.msra.mxu0 0.0
        %6639 = vmatprep.subr.mxu0 0.0
        %6640 = vmatpush1.msra.mxu0 0.0
        %6641 = vmatprep.subr.mxu0 0.0
        %6642 = vmatpush1.msra.mxu0 0.0
        %6643 = vmatprep.subr.mxu0 0.0
        %6644 = vmatpush1.msra.mxu0 0.0
        %6645 = vmatprep.subr.mxu0 0.0
        %6646 = vmatpush1.msra.mxu0 0.0
        %6647 = vmatprep.subr.mxu0 0.0
        %6648 = vmatpush1.msra.mxu0 0.0
        %6649 = vmatprep.subr.mxu0 0.0
        %6650 = vmatpush1.msra.mxu0 0.0
        %6651 = vmatprep.subr.mxu0 0.0
        %6652 = vmatpush1.msra.mxu0 0.0
        %6653 = vmatprep.subr.mxu0 0.0
        %6654 = vmatpush1.msra.mxu0 0.0
        %6655 = vmatprep.mubr.f32.mxu0 0.0
        %v6656 = vand.u32 %v6190, 4294901760
        %6657 = vmatmul.mubr.f32.gmra.mrb[0].mxu0 %v6656
        %v6658 = vpop.f32.mrb[0].mxu0
        %v6659 = vadd.f32 %v6585, %v6658
        %v6660 = vpop.f32.mrb[0].mxu0
        %v6661 = vadd.f32 %v6587, %v6660
        %6662 = vdwg.mxu0
        %v6663 = vadd.f32 %v6179, %v6659
        %v6664 = vadd.f32 %v6180, %v6661
        %v6665 = vmul.f32 %v4731, %v2245
        %v6666 = vmul.f32 %v4732, %v2249
        %v6668 = vsel %vm308, %v262, 0
        %v6671 = vsel %vm311, %v6665, 0
        %v6674 = vsel %vm311, %v6666, 0
        %v6676 = vand.u32 %v6674, 4294901760
        %6677 = vmatprep.subr.mxu0 %v6676
        %v6678 = vand.u32 %v6671, 4294901760
        %6679 = vmatpush1.msra.mxu0 %v6678
        %6680 = vmatprep.subr.mxu0 0.0
        %6681 = vmatpush1.msra.mxu0 0.0
        %6682 = vmatprep.subr.mxu0 0.0
        %6683 = vmatpush1.msra.mxu0 0.0
        %6684 = vmatprep.subr.mxu0 0.0
        %6685 = vmatpush1.msra.mxu0 0.0
        %6686 = vmatprep.subr.mxu0 0.0
        %6687 = vmatpush1.msra.mxu0 0.0
        %6688 = vmatprep.subr.mxu0 0.0
        %6689 = vmatpush1.msra.mxu0 0.0
        %6690 = vmatprep.subr.mxu0 0.0
        %6691 = vmatpush1.msra.mxu0 0.0
        %6692 = vmatprep.subr.mxu0 0.0
        %6693 = vmatpush1.msra.mxu0 0.0
        %6694 = vmatprep.subr.mxu0 0.0
        %6695 = vmatpush1.msra.mxu0 0.0
        %6696 = vmatprep.subr.mxu0 0.0
        %6697 = vmatpush1.msra.mxu0 0.0
        %6698 = vmatprep.subr.mxu0 0.0
        %6699 = vmatpush1.msra.mxu0 0.0
        %6700 = vmatprep.subr.mxu0 0.0
        %6701 = vmatpush1.msra.mxu0 0.0
        %6702 = vmatprep.subr.mxu0 0.0
        %6703 = vmatpush1.msra.mxu0 0.0
        %6704 = vmatprep.subr.mxu0 0.0
        %6705 = vmatpush1.msra.mxu0 0.0
        %6706 = vmatprep.subr.mxu0 0.0
        %6707 = vmatpush1.msra.mxu0 0.0
        %6708 = vmatprep.subr.mxu0 0.0
        %6709 = vmatpush1.msra.mxu0 0.0
        %6710 = vmatprep.subr.mxu0 0.0
        %6711 = vmatpush1.msra.mxu0 0.0
        %6712 = vmatprep.subr.mxu0 0.0
        %6713 = vmatpush1.msra.mxu0 0.0
        %6714 = vmatprep.subr.mxu0 0.0
        %6715 = vmatpush1.msra.mxu0 0.0
        %6716 = vmatprep.subr.mxu0 0.0
        %6717 = vmatpush1.msra.mxu0 0.0
        %6718 = vmatprep.subr.mxu0 0.0
        %6719 = vmatpush1.msra.mxu0 0.0
        %6720 = vmatprep.subr.mxu0 0.0
        %6721 = vmatpush1.msra.mxu0 0.0
        %6722 = vmatprep.subr.mxu0 0.0
        %6723 = vmatpush1.msra.mxu0 0.0
        %6724 = vmatprep.subr.mxu0 0.0
        %6725 = vmatpush1.msra.mxu0 0.0
        %6726 = vmatprep.subr.mxu0 0.0
        %6727 = vmatpush1.msra.mxu0 0.0
        %6728 = vmatprep.subr.mxu0 0.0
        %6729 = vmatpush1.msra.mxu0 0.0
        %6730 = vmatprep.subr.mxu0 0.0
        %6731 = vmatpush1.msra.mxu0 0.0
        %6732 = vmatprep.subr.mxu0 0.0
        %6733 = vmatpush1.msra.mxu0 0.0
        %6734 = vmatprep.subr.mxu0 0.0
        %6735 = vmatpush1.msra.mxu0 0.0
        %6736 = vmatprep.subr.mxu0 0.0
        %6737 = vmatpush1.msra.mxu0 0.0
        %6738 = vmatprep.subr.mxu0 0.0
        %6739 = vmatpush1.msra.mxu0 0.0
        %6740 = vmatprep.subr.mxu0 0.0
        %6741 = vmatpush1.msra.mxu0 0.0
        %6742 = vmatprep.mubr.f32.mxu0 0.0
        %v6743 = vand.u32 %v6668, 4294901760
        %v6744 = vsub.f32 %v6668, %v6743
        %v6745 = vand.u32 %v6744, 4294901760
        %v6746 = vsub.f32 %v6744, %v6745
        %v6747 = vand.u32 %v6746, 4294901760
        %6748 = vmatmul.mubr.f32.gmra.mrb[0].mxu0 %v6747
        %v6749 = vpop.f32.mrb[0].mxu0
        %v6750 = vadd.f32 0.0, %v6749
        %v6751 = vpop.f32.mrb[0].mxu0
        %v6752 = vadd.f32 0.0, %v6751
        %6753 = vdwg.mxu0
        %v6754 = vand.u32 %v6674, 4294901760
        %v6755 = vsub.f32 %v6674, %v6754
        %v6756 = vand.u32 %v6755, 4294901760
        %v6757 = vsub.f32 %v6755, %v6756
        %v6758 = vand.u32 %v6757, 4294901760
        %6759 = vmatprep.subr.mxu0 %v6758
        %v6760 = vand.u32 %v6671, 4294901760
        %v6761 = vsub.f32 %v6671, %v6760
        %v6762 = vand.u32 %v6761, 4294901760
        %v6763 = vsub.f32 %v6761, %v6762
        %v6764 = vand.u32 %v6763, 4294901760
        %6765 = vmatpush1.msra.mxu0 %v6764
        %6766 = vmatprep.subr.mxu0 0.0
        %6767 = vmatpush1.msra.mxu0 0.0
        %6768 = vmatprep.subr.mxu0 0.0
        %6769 = vmatpush1.msra.mxu0 0.0
        %6770 = vmatprep.subr.mxu0 0.0
        %6771 = vmatpush1.msra.mxu0 0.0
        %6772 = vmatprep.subr.mxu0 0.0
        %6773 = vmatpush1.msra.mxu0 0.0
        %6774 = vmatprep.subr.mxu0 0.0
        %6775 = vmatpush1.msra.mxu0 0.0
        %6776 = vmatprep.subr.mxu0 0.0
        %6777 = vmatpush1.msra.mxu0 0.0
        %6778 = vmatprep.subr.mxu0 0.0
        %6779 = vmatpush1.msra.mxu0 0.0
        %6780 = vmatprep.subr.mxu0 0.0
        %6781 = vmatpush1.msra.mxu0 0.0
        %6782 = vmatprep.subr.mxu0 0.0
        %6783 = vmatpush1.msra.mxu0 0.0
        %6784 = vmatprep.subr.mxu0 0.0
        %6785 = vmatpush1.msra.mxu0 0.0
        %6786 = vmatprep.subr.mxu0 0.0
        %6787 = vmatpush1.msra.mxu0 0.0
        %6788 = vmatprep.subr.mxu0 0.0
        %6789 = vmatpush1.msra.mxu0 0.0
        %6790 = vmatprep.subr.mxu0 0.0
        %6791 = vmatpush1.msra.mxu0 0.0
        %6792 = vmatprep.subr.mxu0 0.0
        %6793 = vmatpush1.msra.mxu0 0.0
        %6794 = vmatprep.subr.mxu0 0.0
        %6795 = vmatpush1.msra.mxu0 0.0
        %6796 = vmatprep.subr.mxu0 0.0
        %6797 = vmatpush1.msra.mxu0 0.0
        %6798 = vmatprep.subr.mxu0 0.0
        %6799 = vmatpush1.msra.mxu0 0.0
        %6800 = vmatprep.subr.mxu0 0.0
        %6801 = vmatpush1.msra.mxu0 0.0
        %6802 = vmatprep.subr.mxu0 0.0
        %6803 = vmatpush1.msra.mxu0 0.0
        %6804 = vmatprep.subr.mxu0 0.0
        %6805 = vmatpush1.msra.mxu0 0.0
        %6806 = vmatprep.subr.mxu0 0.0
        %6807 = vmatpush1.msra.mxu0 0.0
        %6808 = vmatprep.subr.mxu0 0.0
        %6809 = vmatpush1.msra.mxu0 0.0
        %6810 = vmatprep.subr.mxu0 0.0
        %6811 = vmatpush1.msra.mxu0 0.0
        %6812 = vmatprep.subr.mxu0 0.0
        %6813 = vmatpush1.msra.mxu0 0.0
        %6814 = vmatprep.subr.mxu0 0.0
        %6815 = vmatpush1.msra.mxu0 0.0
        %6816 = vmatprep.subr.mxu0 0.0
        %6817 = vmatpush1.msra.mxu0 0.0
        %6818 = vmatprep.subr.mxu0 0.0
        %6819 = vmatpush1.msra.mxu0 0.0
        %6820 = vmatprep.subr.mxu0 0.0
        %6821 = vmatpush1.msra.mxu0 0.0
        %6822 = vmatprep.subr.mxu0 0.0
        %6823 = vmatpush1.msra.mxu0 0.0
        %6824 = vmatprep.subr.mxu0 0.0
        %6825 = vmatpush1.msra.mxu0 0.0
        %6826 = vmatprep.subr.mxu0 0.0
        %6827 = vmatpush1.msra.mxu0 0.0
        %6828 = vmatprep.mubr.f32.mxu0 0.0
        %v6829 = vand.u32 %v6668, 4294901760
        %6830 = vmatmul.mubr.f32.gmra.mrb[0].mxu0 %v6829
        %v6831 = vpop.f32.mrb[0].mxu0
        %v6832 = vadd.f32 %v6750, %v6831
        %v6833 = vpop.f32.mrb[0].mxu0
        %v6834 = vadd.f32 %v6752, %v6833
        %6835 = vdwg.mxu0
        %v6836 = vand.u32 %v6674, 4294901760
        %v6837 = vsub.f32 %v6674, %v6836
        %6838 = vmatprep.subr.mxu0 %v6837
        %v6839 = vand.u32 %v6671, 4294901760
        %v6840 = vsub.f32 %v6671, %v6839
        %6841 = vmatpush1.msra.mxu0 %v6840
        %6842 = vmatprep.subr.mxu0 0.0
        %6843 = vmatpush1.msra.mxu0 0.0
        %6844 = vmatprep.subr.mxu0 0.0
        %6845 = vmatpush1.msra.mxu0 0.0
        %6846 = vmatprep.subr.mxu0 0.0
        %6847 = vmatpush1.msra.mxu0 0.0
        %6848 = vmatprep.subr.mxu0 0.0
        %6849 = vmatpush1.msra.mxu0 0.0
        %6850 = vmatprep.subr.mxu0 0.0
        %6851 = vmatpush1.msra.mxu0 0.0
        %6852 = vmatprep.subr.mxu0 0.0
        %6853 = vmatpush1.msra.mxu0 0.0
        %6854 = vmatprep.subr.mxu0 0.0
        %6855 = vmatpush1.msra.mxu0 0.0
        %6856 = vmatprep.subr.mxu0 0.0
        %6857 = vmatpush1.msra.mxu0 0.0
        %6858 = vmatprep.subr.mxu0 0.0
        %6859 = vmatpush1.msra.mxu0 0.0
        %6860 = vmatprep.subr.mxu0 0.0
        %6861 = vmatpush1.msra.mxu0 0.0
        %6862 = vmatprep.subr.mxu0 0.0
        %6863 = vmatpush1.msra.mxu0 0.0
        %6864 = vmatprep.subr.mxu0 0.0
        %6865 = vmatpush1.msra.mxu0 0.0
        %6866 = vmatprep.subr.mxu0 0.0
        %6867 = vmatpush1.msra.mxu0 0.0
        %6868 = vmatprep.subr.mxu0 0.0
        %6869 = vmatpush1.msra.mxu0 0.0
        %6870 = vmatprep.subr.mxu0 0.0
        %6871 = vmatpush1.msra.mxu0 0.0
        %6872 = vmatprep.subr.mxu0 0.0
        %6873 = vmatpush1.msra.mxu0 0.0
        %6874 = vmatprep.subr.mxu0 0.0
        %6875 = vmatpush1.msra.mxu0 0.0
        %6876 = vmatprep.subr.mxu0 0.0
        %6877 = vmatpush1.msra.mxu0 0.0
        %6878 = vmatprep.subr.mxu0 0.0
        %6879 = vmatpush1.msra.mxu0 0.0
        %6880 = vmatprep.subr.mxu0 0.0
        %6881 = vmatpush1.msra.mxu0 0.0
        %6882 = vmatprep.subr.mxu0 0.0
        %6883 = vmatpush1.msra.mxu0 0.0
        %6884 = vmatprep.subr.mxu0 0.0
        %6885 = vmatpush1.msra.mxu0 0.0
        %6886 = vmatprep.subr.mxu0 0.0
        %6887 = vmatpush1.msra.mxu0 0.0
        %6888 = vmatprep.subr.mxu0 0.0
        %6889 = vmatpush1.msra.mxu0 0.0
        %6890 = vmatprep.subr.mxu0 0.0
        %6891 = vmatpush1.msra.mxu0 0.0
        %6892 = vmatprep.subr.mxu0 0.0
        %6893 = vmatpush1.msra.mxu0 0.0
        %6894 = vmatprep.subr.mxu0 0.0
        %6895 = vmatpush1.msra.mxu0 0.0
        %6896 = vmatprep.subr.mxu0 0.0
        %6897 = vmatpush1.msra.mxu0 0.0
        %6898 = vmatprep.subr.mxu0 0.0
        %6899 = vmatpush1.msra.mxu0 0.0
        %6900 = vmatprep.subr.mxu0 0.0
        %6901 = vmatpush1.msra.mxu0 0.0
        %6902 = vmatprep.subr.mxu0 0.0
        %6903 = vmatpush1.msra.mxu0 0.0
        %6904 = vmatprep.mubr.f32.mxu0 0.0
        %v6905 = vand.u32 %v6668, 4294901760
        %v6906 = vsub.f32 %v6668, %v6905
        %6907 = vmatmul.mubr.f32.gmra.mrb[0].mxu0 %v6906
        %v6908 = vpop.f32.mrb[0].mxu0
        %v6909 = vadd.f32 %v6832, %v6908
        %v6910 = vpop.f32.mrb[0].mxu0
        %v6911 = vadd.f32 %v6834, %v6910
        %6912 = vdwg.mxu0
        %v6913 = vand.u32 %v6674, 4294901760
        %6914 = vmatprep.subr.mxu0 %v6913
        %v6915 = vand.u32 %v6671, 4294901760
        %6916 = vmatpush1.msra.mxu0 %v6915
        %6917 = vmatprep.subr.mxu0 0.0
        %6918 = vmatpush1.msra.mxu0 0.0
        %6919 = vmatprep.subr.mxu0 0.0
        %6920 = vmatpush1.msra.mxu0 0.0
        %6921 = vmatprep.subr.mxu0 0.0
        %6922 = vmatpush1.msra.mxu0 0.0
        %6923 = vmatprep.subr.mxu0 0.0
        %6924 = vmatpush1.msra.mxu0 0.0
        %6925 = vmatprep.subr.mxu0 0.0
        %6926 = vmatpush1.msra.mxu0 0.0
        %6927 = vmatprep.subr.mxu0 0.0
        %6928 = vmatpush1.msra.mxu0 0.0
        %6929 = vmatprep.subr.mxu0 0.0
        %6930 = vmatpush1.msra.mxu0 0.0
        %6931 = vmatprep.subr.mxu0 0.0
        %6932 = vmatpush1.msra.mxu0 0.0
        %6933 = vmatprep.subr.mxu0 0.0
        %6934 = vmatpush1.msra.mxu0 0.0
        %6935 = vmatprep.subr.mxu0 0.0
        %6936 = vmatpush1.msra.mxu0 0.0
        %6937 = vmatprep.subr.mxu0 0.0
        %6938 = vmatpush1.msra.mxu0 0.0
        %6939 = vmatprep.subr.mxu0 0.0
        %6940 = vmatpush1.msra.mxu0 0.0
        %6941 = vmatprep.subr.mxu0 0.0
        %6942 = vmatpush1.msra.mxu0 0.0
        %6943 = vmatprep.subr.mxu0 0.0
        %6944 = vmatpush1.msra.mxu0 0.0
        %6945 = vmatprep.subr.mxu0 0.0
        %6946 = vmatpush1.msra.mxu0 0.0
        %6947 = vmatprep.subr.mxu0 0.0
        %6948 = vmatpush1.msra.mxu0 0.0
        %6949 = vmatprep.subr.mxu0 0.0
        %6950 = vmatpush1.msra.mxu0 0.0
        %6951 = vmatprep.subr.mxu0 0.0
        %6952 = vmatpush1.msra.mxu0 0.0
        %6953 = vmatprep.subr.mxu0 0.0
        %6954 = vmatpush1.msra.mxu0 0.0
        %6955 = vmatprep.subr.mxu0 0.0
        %6956 = vmatpush1.msra.mxu0 0.0
        %6957 = vmatprep.subr.mxu0 0.0
        %6958 = vmatpush1.msra.mxu0 0.0
        %6959 = vmatprep.subr.mxu0 0.0
        %6960 = vmatpush1.msra.mxu0 0.0
        %6961 = vmatprep.subr.mxu0 0.0
        %6962 = vmatpush1.msra.mxu0 0.0
        %6963 = vmatprep.subr.mxu0 0.0
        %6964 = vmatpush1.msra.mxu0 0.0
        %6965 = vmatprep.subr.mxu0 0.0
        %6966 = vmatpush1.msra.mxu0 0.0
        %6967 = vmatprep.subr.mxu0 0.0
        %6968 = vmatpush1.msra.mxu0 0.0
        %6969 = vmatprep.subr.mxu0 0.0
        %6970 = vmatpush1.msra.mxu0 0.0
        %6971 = vmatprep.subr.mxu0 0.0
        %6972 = vmatpush1.msra.mxu0 0.0
        %6973 = vmatprep.subr.mxu0 0.0
        %6974 = vmatpush1.msra.mxu0 0.0
        %6975 = vmatprep.subr.mxu0 0.0
        %6976 = vmatpush1.msra.mxu0 0.0
        %6977 = vmatprep.subr.mxu0 0.0
        %6978 = vmatpush1.msra.mxu0 0.0
        %6979 = vmatprep.mubr.f32.mxu0 0.0
        %v6980 = vand.u32 %v6668, 4294901760
        %v6981 = vsub.f32 %v6668, %v6980
        %v6982 = vand.u32 %v6981, 4294901760
        %6983 = vmatmul.mubr.f32.gmra.mrb[0].mxu0 %v6982
        %v6984 = vpop.f32.mrb[0].mxu0
        %v6985 = vadd.f32 %v6909, %v6984
        %v6986 = vpop.f32.mrb[0].mxu0
        %v6987 = vadd.f32 %v6911, %v6986
        %6988 = vdwg.mxu0
        %v6989 = vand.u32 %v6674, 4294901760
        %v6990 = vsub.f32 %v6674, %v6989
        %v6991 = vand.u32 %v6990, 4294901760
        %6992 = vmatprep.subr.mxu0 %v6991
        %v6993 = vand.u32 %v6671, 4294901760
        %v6994 = vsub.f32 %v6671, %v6993
        %v6995 = vand.u32 %v6994, 4294901760
        %6996 = vmatpush1.msra.mxu0 %v6995
        %6997 = vmatprep.subr.mxu0 0.0
        %6998 = vmatpush1.msra.mxu0 0.0
        %6999 = vmatprep.subr.mxu0 0.0
        %7000 = vmatpush1.msra.mxu0 0.0
        %7001 = vmatprep.subr.mxu0 0.0
        %7002 = vmatpush1.msra.mxu0 0.0
        %7003 = vmatprep.subr.mxu0 0.0
        %7004 = vmatpush1.msra.mxu0 0.0
        %7005 = vmatprep.subr.mxu0 0.0
        %7006 = vmatpush1.msra.mxu0 0.0
        %7007 = vmatprep.subr.mxu0 0.0
        %7008 = vmatpush1.msra.mxu0 0.0
        %7009 = vmatprep.subr.mxu0 0.0
        %7010 = vmatpush1.msra.mxu0 0.0
        %7011 = vmatprep.subr.mxu0 0.0
        %7012 = vmatpush1.msra.mxu0 0.0
        %7013 = vmatprep.subr.mxu0 0.0
        %7014 = vmatpush1.msra.mxu0 0.0
        %7015 = vmatprep.subr.mxu0 0.0
        %7016 = vmatpush1.msra.mxu0 0.0
        %7017 = vmatprep.subr.mxu0 0.0
        %7018 = vmatpush1.msra.mxu0 0.0
        %7019 = vmatprep.subr.mxu0 0.0
        %7020 = vmatpush1.msra.mxu0 0.0
        %7021 = vmatprep.subr.mxu0 0.0
        %7022 = vmatpush1.msra.mxu0 0.0
        %7023 = vmatprep.subr.mxu0 0.0
        %7024 = vmatpush1.msra.mxu0 0.0
        %7025 = vmatprep.subr.mxu0 0.0
        %7026 = vmatpush1.msra.mxu0 0.0
        %7027 = vmatprep.subr.mxu0 0.0
        %7028 = vmatpush1.msra.mxu0 0.0
        %7029 = vmatprep.subr.mxu0 0.0
        %7030 = vmatpush1.msra.mxu0 0.0
        %7031 = vmatprep.subr.mxu0 0.0
        %7032 = vmatpush1.msra.mxu0 0.0
        %7033 = vmatprep.subr.mxu0 0.0
        %7034 = vmatpush1.msra.mxu0 0.0
        %7035 = vmatprep.subr.mxu0 0.0
        %7036 = vmatpush1.msra.mxu0 0.0
        %7037 = vmatprep.subr.mxu0 0.0
        %7038 = vmatpush1.msra.mxu0 0.0
        %7039 = vmatprep.subr.mxu0 0.0
        %7040 = vmatpush1.msra.mxu0 0.0
        %7041 = vmatprep.subr.mxu0 0.0
        %7042 = vmatpush1.msra.mxu0 0.0
        %7043 = vmatprep.subr.mxu0 0.0
        %7044 = vmatpush1.msra.mxu0 0.0
        %7045 = vmatprep.subr.mxu0 0.0
        %7046 = vmatpush1.msra.mxu0 0.0
        %7047 = vmatprep.subr.mxu0 0.0
        %7048 = vmatpush1.msra.mxu0 0.0
        %7049 = vmatprep.subr.mxu0 0.0
        %7050 = vmatpush1.msra.mxu0 0.0
        %7051 = vmatprep.subr.mxu0 0.0
        %7052 = vmatpush1.msra.mxu0 0.0
        %7053 = vmatprep.subr.mxu0 0.0
        %7054 = vmatpush1.msra.mxu0 0.0
        %7055 = vmatprep.subr.mxu0 0.0
        %7056 = vmatpush1.msra.mxu0 0.0
        %7057 = vmatprep.subr.mxu0 0.0
        %7058 = vmatpush1.msra.mxu0 0.0
        %7059 = vmatprep.mubr.f32.mxu0 0.0
        %v7060 = vand.u32 %v6668, 4294901760
        %7061 = vmatmul.mubr.f32.gmra.mrb[0].mxu0 %v7060
        %v7062 = vpop.f32.mrb[0].mxu0
        %v7063 = vadd.f32 %v6985, %v7062
        %v7064 = vpop.f32.mrb[0].mxu0
        %v7065 = vadd.f32 %v6987, %v7064
        %7066 = vdwg.mxu0
        %v7067 = vand.u32 %v6674, 4294901760
        %7068 = vmatprep.subr.mxu0 %v7067
        %v7069 = vand.u32 %v6671, 4294901760
        %7070 = vmatpush1.msra.mxu0 %v7069
        %7071 = vmatprep.subr.mxu0 0.0
        %7072 = vmatpush1.msra.mxu0 0.0
        %7073 = vmatprep.subr.mxu0 0.0
        %7074 = vmatpush1.msra.mxu0 0.0
        %7075 = vmatprep.subr.mxu0 0.0
        %7076 = vmatpush1.msra.mxu0 0.0
        %7077 = vmatprep.subr.mxu0 0.0
        %7078 = vmatpush1.msra.mxu0 0.0
        %7079 = vmatprep.subr.mxu0 0.0
        %7080 = vmatpush1.msra.mxu0 0.0
        %7081 = vmatprep.subr.mxu0 0.0
        %7082 = vmatpush1.msra.mxu0 0.0
        %7083 = vmatprep.subr.mxu0 0.0
        %7084 = vmatpush1.msra.mxu0 0.0
        %7085 = vmatprep.subr.mxu0 0.0
        %7086 = vmatpush1.msra.mxu0 0.0
        %7087 = vmatprep.subr.mxu0 0.0
        %7088 = vmatpush1.msra.mxu0 0.0
        %7089 = vmatprep.subr.mxu0 0.0
        %7090 = vmatpush1.msra.mxu0 0.0
        %7091 = vmatprep.subr.mxu0 0.0
        %7092 = vmatpush1.msra.mxu0 0.0
        %7093 = vmatprep.subr.mxu0 0.0
        %7094 = vmatpush1.msra.mxu0 0.0
        %7095 = vmatprep.subr.mxu0 0.0
        %7096 = vmatpush1.msra.mxu0 0.0
        %7097 = vmatprep.subr.mxu0 0.0
        %7098 = vmatpush1.msra.mxu0 0.0
        %7099 = vmatprep.subr.mxu0 0.0
        %7100 = vmatpush1.msra.mxu0 0.0
        %7101 = vmatprep.subr.mxu0 0.0
        %7102 = vmatpush1.msra.mxu0 0.0
        %7103 = vmatprep.subr.mxu0 0.0
        %7104 = vmatpush1.msra.mxu0 0.0
        %7105 = vmatprep.subr.mxu0 0.0
        %7106 = vmatpush1.msra.mxu0 0.0
        %7107 = vmatprep.subr.mxu0 0.0
        %7108 = vmatpush1.msra.mxu0 0.0
        %7109 = vmatprep.subr.mxu0 0.0
        %7110 = vmatpush1.msra.mxu0 0.0
        %7111 = vmatprep.subr.mxu0 0.0
        %7112 = vmatpush1.msra.mxu0 0.0
        %7113 = vmatprep.subr.mxu0 0.0
        %7114 = vmatpush1.msra.mxu0 0.0
        %7115 = vmatprep.subr.mxu0 0.0
        %7116 = vmatpush1.msra.mxu0 0.0
        %7117 = vmatprep.subr.mxu0 0.0
        %7118 = vmatpush1.msra.mxu0 0.0
        %7119 = vmatprep.subr.mxu0 0.0
        %7120 = vmatpush1.msra.mxu0 0.0
        %7121 = vmatprep.subr.mxu0 0.0
        %7122 = vmatpush1.msra.mxu0 0.0
        %7123 = vmatprep.subr.mxu0 0.0
        %7124 = vmatpush1.msra.mxu0 0.0
        %7125 = vmatprep.subr.mxu0 0.0
        %7126 = vmatpush1.msra.mxu0 0.0
        %7127 = vmatprep.subr.mxu0 0.0
        %7128 = vmatpush1.msra.mxu0 0.0
        %7129 = vmatprep.subr.mxu0 0.0
        %7130 = vmatpush1.msra.mxu0 0.0
        %7131 = vmatprep.subr.mxu0 0.0
        %7132 = vmatpush1.msra.mxu0 0.0
        %7133 = vmatprep.mubr.f32.mxu0 0.0
        %v7134 = vand.u32 %v6668, 4294901760
        %7135 = vmatmul.mubr.f32.gmra.mrb[0].mxu0 %v7134
        %v7136 = vpop.f32.mrb[0].mxu0
        %v7137 = vadd.f32 %v7063, %v7136
        %v7138 = vpop.f32.mrb[0].mxu0
        %v7139 = vadd.f32 %v7065, %v7138
        %7140 = vdwg.mxu0
        %v7141 = vadd.f32 %v6663, %v7137
        %v7142 = vadd.f32 %v6664, %v7139
        %7143 = vrot.lane.b32.xlu0 %v4731, 127
        %v7144 = vpop.permute.xlu0 %7143
        %7145 = vrot.lane.b32.xlu0 %v4732, 127
        %v7146 = vpop.permute.xlu0 %7145
        %v7147 = vsel %vm2735, %v7144, %v7146
        %v7148 = vsel %vm2735, %v7146, %v7144
        %v7149 = vmul.f32 %v7147, %v2741
        %v7150 = vmul.f32 %v7148, %v2745
        %v7151 = vrot.slane %v262, 4
        %v7152 = vsel %vm308, %v7151, 0
        %v7155 = vsel %vm311, %v7149, 0
        %v7158 = vsel %vm311, %v7150, 0
        %v7160 = vand.u32 %v7158, 4294901760
        %7161 = vmatprep.subr.mxu0 %v7160
        %v7162 = vand.u32 %v7155, 4294901760
        %7163 = vmatpush1.msra.mxu0 %v7162
        %7164 = vmatprep.subr.mxu0 0.0
        %7165 = vmatpush1.msra.mxu0 0.0
        %7166 = vmatprep.subr.mxu0 0.0
        %7167 = vmatpush1.msra.mxu0 0.0
        %7168 = vmatprep.subr.mxu0 0.0
        %7169 = vmatpush1.msra.mxu0 0.0
        %7170 = vmatprep.subr.mxu0 0.0
        %7171 = vmatpush1.msra.mxu0 0.0
        %7172 = vmatprep.subr.mxu0 0.0
        %7173 = vmatpush1.msra.mxu0 0.0
        %7174 = vmatprep.subr.mxu0 0.0
        %7175 = vmatpush1.msra.mxu0 0.0
        %7176 = vmatprep.subr.mxu0 0.0
        %7177 = vmatpush1.msra.mxu0 0.0
        %7178 = vmatprep.subr.mxu0 0.0
        %7179 = vmatpush1.msra.mxu0 0.0
        %7180 = vmatprep.subr.mxu0 0.0
        %7181 = vmatpush1.msra.mxu0 0.0
        %7182 = vmatprep.subr.mxu0 0.0
        %7183 = vmatpush1.msra.mxu0 0.0
        %7184 = vmatprep.subr.mxu0 0.0
        %7185 = vmatpush1.msra.mxu0 0.0
        %7186 = vmatprep.subr.mxu0 0.0
        %7187 = vmatpush1.msra.mxu0 0.0
        %7188 = vmatprep.subr.mxu0 0.0
        %7189 = vmatpush1.msra.mxu0 0.0
        %7190 = vmatprep.subr.mxu0 0.0
        %7191 = vmatpush1.msra.mxu0 0.0
        %7192 = vmatprep.subr.mxu0 0.0
        %7193 = vmatpush1.msra.mxu0 0.0
        %7194 = vmatprep.subr.mxu0 0.0
        %7195 = vmatpush1.msra.mxu0 0.0
        %7196 = vmatprep.subr.mxu0 0.0
        %7197 = vmatpush1.msra.mxu0 0.0
        %7198 = vmatprep.subr.mxu0 0.0
        %7199 = vmatpush1.msra.mxu0 0.0
        %7200 = vmatprep.subr.mxu0 0.0
        %7201 = vmatpush1.msra.mxu0 0.0
        %7202 = vmatprep.subr.mxu0 0.0
        %7203 = vmatpush1.msra.mxu0 0.0
        %7204 = vmatprep.subr.mxu0 0.0
        %7205 = vmatpush1.msra.mxu0 0.0
        %7206 = vmatprep.subr.mxu0 0.0
        %7207 = vmatpush1.msra.mxu0 0.0
        %7208 = vmatprep.subr.mxu0 0.0
        %7209 = vmatpush1.msra.mxu0 0.0
        %7210 = vmatprep.subr.mxu0 0.0
        %7211 = vmatpush1.msra.mxu0 0.0
        %7212 = vmatprep.subr.mxu0 0.0
        %7213 = vmatpush1.msra.mxu0 0.0
        %7214 = vmatprep.subr.mxu0 0.0
        %7215 = vmatpush1.msra.mxu0 0.0
        %7216 = vmatprep.subr.mxu0 0.0
        %7217 = vmatpush1.msra.mxu0 0.0
        %7218 = vmatprep.subr.mxu0 0.0
        %7219 = vmatpush1.msra.mxu0 0.0
        %7220 = vmatprep.subr.mxu0 0.0
        %7221 = vmatpush1.msra.mxu0 0.0
        %7222 = vmatprep.subr.mxu0 0.0
        %7223 = vmatpush1.msra.mxu0 0.0
        %7224 = vmatprep.subr.mxu0 0.0
        %7225 = vmatpush1.msra.mxu0 0.0
        %7226 = vmatprep.mubr.f32.mxu0 0.0
        %v7227 = vand.u32 %v7152, 4294901760
        %v7228 = vsub.f32 %v7152, %v7227
        %v7229 = vand.u32 %v7228, 4294901760
        %v7230 = vsub.f32 %v7228, %v7229
        %v7231 = vand.u32 %v7230, 4294901760
        %7232 = vmatmul.mubr.f32.gmra.mrb[0].mxu0 %v7231
        %v7233 = vpop.f32.mrb[0].mxu0
        %v7234 = vadd.f32 0.0, %v7233
        %v7235 = vpop.f32.mrb[0].mxu0
        %v7236 = vadd.f32 0.0, %v7235
        %7237 = vdwg.mxu0
        %v7238 = vand.u32 %v7158, 4294901760
        %v7239 = vsub.f32 %v7158, %v7238
        %v7240 = vand.u32 %v7239, 4294901760
        %v7241 = vsub.f32 %v7239, %v7240
        %v7242 = vand.u32 %v7241, 4294901760
        %7243 = vmatprep.subr.mxu0 %v7242
        %v7244 = vand.u32 %v7155, 4294901760
        %v7245 = vsub.f32 %v7155, %v7244
        %v7246 = vand.u32 %v7245, 4294901760
        %v7247 = vsub.f32 %v7245, %v7246
        %v7248 = vand.u32 %v7247, 4294901760
        %7249 = vmatpush1.msra.mxu0 %v7248
        %7250 = vmatprep.subr.mxu0 0.0
        %7251 = vmatpush1.msra.mxu0 0.0
        %7252 = vmatprep.subr.mxu0 0.0
        %7253 = vmatpush1.msra.mxu0 0.0
        %7254 = vmatprep.subr.mxu0 0.0
        %7255 = vmatpush1.msra.mxu0 0.0
        %7256 = vmatprep.subr.mxu0 0.0
        %7257 = vmatpush1.msra.mxu0 0.0
        %7258 = vmatprep.subr.mxu0 0.0
        %7259 = vmatpush1.msra.mxu0 0.0
        %7260 = vmatprep.subr.mxu0 0.0
        %7261 = vmatpush1.msra.mxu0 0.0
        %7262 = vmatprep.subr.mxu0 0.0
        %7263 = vmatpush1.msra.mxu0 0.0
        %7264 = vmatprep.subr.mxu0 0.0
        %7265 = vmatpush1.msra.mxu0 0.0
        %7266 = vmatprep.subr.mxu0 0.0
        %7267 = vmatpush1.msra.mxu0 0.0
        %7268 = vmatprep.subr.mxu0 0.0
        %7269 = vmatpush1.msra.mxu0 0.0
        %7270 = vmatprep.subr.mxu0 0.0
        %7271 = vmatpush1.msra.mxu0 0.0
        %7272 = vmatprep.subr.mxu0 0.0
        %7273 = vmatpush1.msra.mxu0 0.0
        %7274 = vmatprep.subr.mxu0 0.0
        %7275 = vmatpush1.msra.mxu0 0.0
        %7276 = vmatprep.subr.mxu0 0.0
        %7277 = vmatpush1.msra.mxu0 0.0
        %7278 = vmatprep.subr.mxu0 0.0
        %7279 = vmatpush1.msra.mxu0 0.0
        %7280 = vmatprep.subr.mxu0 0.0
        %7281 = vmatpush1.msra.mxu0 0.0
        %7282 = vmatprep.subr.mxu0 0.0
        %7283 = vmatpush1.msra.mxu0 0.0
        %7284 = vmatprep.subr.mxu0 0.0
        %7285 = vmatpush1.msra.mxu0 0.0
        %7286 = vmatprep.subr.mxu0 0.0
        %7287 = vmatpush1.msra.mxu0 0.0
        %7288 = vmatprep.subr.mxu0 0.0
        %7289 = vmatpush1.msra.mxu0 0.0
        %7290 = vmatprep.subr.mxu0 0.0
        %7291 = vmatpush1.msra.mxu0 0.0
        %7292 = vmatprep.subr.mxu0 0.0
        %7293 = vmatpush1.msra.mxu0 0.0
        %7294 = vmatprep.subr.mxu0 0.0
        %7295 = vmatpush1.msra.mxu0 0.0
        %7296 = vmatprep.subr.mxu0 0.0
        %7297 = vmatpush1.msra.mxu0 0.0
        %7298 = vmatprep.subr.mxu0 0.0
        %7299 = vmatpush1.msra.mxu0 0.0
        %7300 = vmatprep.subr.mxu0 0.0
        %7301 = vmatpush1.msra.mxu0 0.0
        %7302 = vmatprep.subr.mxu0 0.0
        %7303 = vmatpush1.msra.mxu0 0.0
        %7304 = vmatprep.subr.mxu0 0.0
        %7305 = vmatpush1.msra.mxu0 0.0
        %7306 = vmatprep.subr.mxu0 0.0
        %7307 = vmatpush1.msra.mxu0 0.0
        %7308 = vmatprep.subr.mxu0 0.0
        %7309 = vmatpush1.msra.mxu0 0.0
        %7310 = vmatprep.subr.mxu0 0.0
        %7311 = vmatpush1.msra.mxu0 0.0
        %7312 = vmatprep.mubr.f32.mxu0 0.0
        %v7313 = vand.u32 %v7152, 4294901760
        %7314 = vmatmul.mubr.f32.gmra.mrb[0].mxu0 %v7313
        %v7315 = vpop.f32.mrb[0].mxu0
        %v7316 = vadd.f32 %v7234, %v7315
        %v7317 = vpop.f32.mrb[0].mxu0
        %v7318 = vadd.f32 %v7236, %v7317
        %7319 = vdwg.mxu0
        %v7320 = vand.u32 %v7158, 4294901760
        %v7321 = vsub.f32 %v7158, %v7320
        %7322 = vmatprep.subr.mxu0 %v7321
        %v7323 = vand.u32 %v7155, 4294901760
        %v7324 = vsub.f32 %v7155, %v7323
        %7325 = vmatpush1.msra.mxu0 %v7324
        %7326 = vmatprep.subr.mxu0 0.0
        %7327 = vmatpush1.msra.mxu0 0.0
        %7328 = vmatprep.subr.mxu0 0.0
        %7329 = vmatpush1.msra.mxu0 0.0
        %7330 = vmatprep.subr.mxu0 0.0
        %7331 = vmatpush1.msra.mxu0 0.0
        %7332 = vmatprep.subr.mxu0 0.0
        %7333 = vmatpush1.msra.mxu0 0.0
        %7334 = vmatprep.subr.mxu0 0.0
        %7335 = vmatpush1.msra.mxu0 0.0
        %7336 = vmatprep.subr.mxu0 0.0
        %7337 = vmatpush1.msra.mxu0 0.0
        %7338 = vmatprep.subr.mxu0 0.0
        %7339 = vmatpush1.msra.mxu0 0.0
        %7340 = vmatprep.subr.mxu0 0.0
        %7341 = vmatpush1.msra.mxu0 0.0
        %7342 = vmatprep.subr.mxu0 0.0
        %7343 = vmatpush1.msra.mxu0 0.0
        %7344 = vmatprep.subr.mxu0 0.0
        %7345 = vmatpush1.msra.mxu0 0.0
        %7346 = vmatprep.subr.mxu0 0.0
        %7347 = vmatpush1.msra.mxu0 0.0
        %7348 = vmatprep.subr.mxu0 0.0
        %7349 = vmatpush1.msra.mxu0 0.0
        %7350 = vmatprep.subr.mxu0 0.0
        %7351 = vmatpush1.msra.mxu0 0.0
        %7352 = vmatprep.subr.mxu0 0.0
        %7353 = vmatpush1.msra.mxu0 0.0
        %7354 = vmatprep.subr.mxu0 0.0
        %7355 = vmatpush1.msra.mxu0 0.0
        %7356 = vmatprep.subr.mxu0 0.0
        %7357 = vmatpush1.msra.mxu0 0.0
        %7358 = vmatprep.subr.mxu0 0.0
        %7359 = vmatpush1.msra.mxu0 0.0
        %7360 = vmatprep.subr.mxu0 0.0
        %7361 = vmatpush1.msra.mxu0 0.0
        %7362 = vmatprep.subr.mxu0 0.0
        %7363 = vmatpush1.msra.mxu0 0.0
        %7364 = vmatprep.subr.mxu0 0.0
        %7365 = vmatpush1.msra.mxu0 0.0
        %7366 = vmatprep.subr.mxu0 0.0
        %7367 = vmatpush1.msra.mxu0 0.0
        %7368 = vmatprep.subr.mxu0 0.0
        %7369 = vmatpush1.msra.mxu0 0.0
        %7370 = vmatprep.subr.mxu0 0.0
        %7371 = vmatpush1.msra.mxu0 0.0
        %7372 = vmatprep.subr.mxu0 0.0
        %7373 = vmatpush1.msra.mxu0 0.0
        %7374 = vmatprep.subr.mxu0 0.0
        %7375 = vmatpush1.msra.mxu0 0.0
        %7376 = vmatprep.subr.mxu0 0.0
        %7377 = vmatpush1.msra.mxu0 0.0
        %7378 = vmatprep.subr.mxu0 0.0
        %7379 = vmatpush1.msra.mxu0 0.0
        %7380 = vmatprep.subr.mxu0 0.0
        %7381 = vmatpush1.msra.mxu0 0.0
        %7382 = vmatprep.subr.mxu0 0.0
        %7383 = vmatpush1.msra.mxu0 0.0
        %7384 = vmatprep.subr.mxu0 0.0
        %7385 = vmatpush1.msra.mxu0 0.0
        %7386 = vmatprep.subr.mxu0 0.0
        %7387 = vmatpush1.msra.mxu0 0.0
        %7388 = vmatprep.mubr.f32.mxu0 0.0
        %v7389 = vand.u32 %v7152, 4294901760
        %v7390 = vsub.f32 %v7152, %v7389
        %7391 = vmatmul.mubr.f32.gmra.mrb[0].mxu0 %v7390
        %v7392 = vpop.f32.mrb[0].mxu0
        %v7393 = vadd.f32 %v7316, %v7392
        %v7394 = vpop.f32.mrb[0].mxu0
        %v7395 = vadd.f32 %v7318, %v7394
        %7396 = vdwg.mxu0
        %v7397 = vand.u32 %v7158, 4294901760
        %7398 = vmatprep.subr.mxu0 %v7397
        %v7399 = vand.u32 %v7155, 4294901760
        %7400 = vmatpush1.msra.mxu0 %v7399
        %7401 = vmatprep.subr.mxu0 0.0
        %7402 = vmatpush1.msra.mxu0 0.0
        %7403 = vmatprep.subr.mxu0 0.0
        %7404 = vmatpush1.msra.mxu0 0.0
        %7405 = vmatprep.subr.mxu0 0.0
        %7406 = vmatpush1.msra.mxu0 0.0
        %7407 = vmatprep.subr.mxu0 0.0
        %7408 = vmatpush1.msra.mxu0 0.0
        %7409 = vmatprep.subr.mxu0 0.0
        %7410 = vmatpush1.msra.mxu0 0.0
        %7411 = vmatprep.subr.mxu0 0.0
        %7412 = vmatpush1.msra.mxu0 0.0
        %7413 = vmatprep.subr.mxu0 0.0
        %7414 = vmatpush1.msra.mxu0 0.0
        %7415 = vmatprep.subr.mxu0 0.0
        %7416 = vmatpush1.msra.mxu0 0.0
        %7417 = vmatprep.subr.mxu0 0.0
        %7418 = vmatpush1.msra.mxu0 0.0
        %7419 = vmatprep.subr.mxu0 0.0
        %7420 = vmatpush1.msra.mxu0 0.0
        %7421 = vmatprep.subr.mxu0 0.0
        %7422 = vmatpush1.msra.mxu0 0.0
        %7423 = vmatprep.subr.mxu0 0.0
        %7424 = vmatpush1.msra.mxu0 0.0
        %7425 = vmatprep.subr.mxu0 0.0
        %7426 = vmatpush1.msra.mxu0 0.0
        %7427 = vmatprep.subr.mxu0 0.0
        %7428 = vmatpush1.msra.mxu0 0.0
        %7429 = vmatprep.subr.mxu0 0.0
        %7430 = vmatpush1.msra.mxu0 0.0
        %7431 = vmatprep.subr.mxu0 0.0
        %7432 = vmatpush1.msra.mxu0 0.0
        %7433 = vmatprep.subr.mxu0 0.0
        %7434 = vmatpush1.msra.mxu0 0.0
        %7435 = vmatprep.subr.mxu0 0.0
        %7436 = vmatpush1.msra.mxu0 0.0
        %7437 = vmatprep.subr.mxu0 0.0
        %7438 = vmatpush1.msra.mxu0 0.0
        %7439 = vmatprep.subr.mxu0 0.0
        %7440 = vmatpush1.msra.mxu0 0.0
        %7441 = vmatprep.subr.mxu0 0.0
        %7442 = vmatpush1.msra.mxu0 0.0
        %7443 = vmatprep.subr.mxu0 0.0
        %7444 = vmatpush1.msra.mxu0 0.0
        %7445 = vmatprep.subr.mxu0 0.0
        %7446 = vmatpush1.msra.mxu0 0.0
        %7447 = vmatprep.subr.mxu0 0.0
        %7448 = vmatpush1.msra.mxu0 0.0
        %7449 = vmatprep.subr.mxu0 0.0
        %7450 = vmatpush1.msra.mxu0 0.0
        %7451 = vmatprep.subr.mxu0 0.0
        %7452 = vmatpush1.msra.mxu0 0.0
        %7453 = vmatprep.subr.mxu0 0.0
        %7454 = vmatpush1.msra.mxu0 0.0
        %7455 = vmatprep.subr.mxu0 0.0
        %7456 = vmatpush1.msra.mxu0 0.0
        %7457 = vmatprep.subr.mxu0 0.0
        %7458 = vmatpush1.msra.mxu0 0.0
        %7459 = vmatprep.subr.mxu0 0.0
        %7460 = vmatpush1.msra.mxu0 0.0
        %7461 = vmatprep.subr.mxu0 0.0
        %7462 = vmatpush1.msra.mxu0 0.0
        %7463 = vmatprep.mubr.f32.mxu0 0.0
        %v7464 = vand.u32 %v7152, 4294901760
        %v7465 = vsub.f32 %v7152, %v7464
        %v7466 = vand.u32 %v7465, 4294901760
        %7467 = vmatmul.mubr.f32.gmra.mrb[0].mxu0 %v7466
        %v7468 = vpop.f32.mrb[0].mxu0
        %v7469 = vadd.f32 %v7393, %v7468
        %v7470 = vpop.f32.mrb[0].mxu0
        %v7471 = vadd.f32 %v7395, %v7470
        %7472 = vdwg.mxu0
        %v7473 = vand.u32 %v7158, 4294901760
        %v7474 = vsub.f32 %v7158, %v7473
        %v7475 = vand.u32 %v7474, 4294901760
        %7476 = vmatprep.subr.mxu0 %v7475
        %v7477 = vand.u32 %v7155, 4294901760
        %v7478 = vsub.f32 %v7155, %v7477
        %v7479 = vand.u32 %v7478, 4294901760
        %7480 = vmatpush1.msra.mxu0 %v7479
        %7481 = vmatprep.subr.mxu0 0.0
        %7482 = vmatpush1.msra.mxu0 0.0
        %7483 = vmatprep.subr.mxu0 0.0
        %7484 = vmatpush1.msra.mxu0 0.0
        %7485 = vmatprep.subr.mxu0 0.0
        %7486 = vmatpush1.msra.mxu0 0.0
        %7487 = vmatprep.subr.mxu0 0.0
        %7488 = vmatpush1.msra.mxu0 0.0
        %7489 = vmatprep.subr.mxu0 0.0
        %7490 = vmatpush1.msra.mxu0 0.0
        %7491 = vmatprep.subr.mxu0 0.0
        %7492 = vmatpush1.msra.mxu0 0.0
        %7493 = vmatprep.subr.mxu0 0.0
        %7494 = vmatpush1.msra.mxu0 0.0
        %7495 = vmatprep.subr.mxu0 0.0
        %7496 = vmatpush1.msra.mxu0 0.0
        %7497 = vmatprep.subr.mxu0 0.0
        %7498 = vmatpush1.msra.mxu0 0.0
        %7499 = vmatprep.subr.mxu0 0.0
        %7500 = vmatpush1.msra.mxu0 0.0
        %7501 = vmatprep.subr.mxu0 0.0
        %7502 = vmatpush1.msra.mxu0 0.0
        %7503 = vmatprep.subr.mxu0 0.0
        %7504 = vmatpush1.msra.mxu0 0.0
        %7505 = vmatprep.subr.mxu0 0.0
        %7506 = vmatpush1.msra.mxu0 0.0
        %7507 = vmatprep.subr.mxu0 0.0
        %7508 = vmatpush1.msra.mxu0 0.0
        %7509 = vmatprep.subr.mxu0 0.0
        %7510 = vmatpush1.msra.mxu0 0.0
        %7511 = vmatprep.subr.mxu0 0.0
        %7512 = vmatpush1.msra.mxu0 0.0
        %7513 = vmatprep.subr.mxu0 0.0
        %7514 = vmatpush1.msra.mxu0 0.0
        %7515 = vmatprep.subr.mxu0 0.0
        %7516 = vmatpush1.msra.mxu0 0.0
        %7517 = vmatprep.subr.mxu0 0.0
        %7518 = vmatpush1.msra.mxu0 0.0
        %7519 = vmatprep.subr.mxu0 0.0
        %7520 = vmatpush1.msra.mxu0 0.0
        %7521 = vmatprep.subr.mxu0 0.0
        %7522 = vmatpush1.msra.mxu0 0.0
        %7523 = vmatprep.subr.mxu0 0.0
        %7524 = vmatpush1.msra.mxu0 0.0
        %7525 = vmatprep.subr.mxu0 0.0
        %7526 = vmatpush1.msra.mxu0 0.0
        %7527 = vmatprep.subr.mxu0 0.0
        %7528 = vmatpush1.msra.mxu0 0.0
        %7529 = vmatprep.subr.mxu0 0.0
        %7530 = vmatpush1.msra.mxu0 0.0
        %7531 = vmatprep.subr.mxu0 0.0
        %7532 = vmatpush1.msra.mxu0 0.0
        %7533 = vmatprep.subr.mxu0 0.0
        %7534 = vmatpush1.msra.mxu0 0.0
        %7535 = vmatprep.subr.mxu0 0.0
        %7536 = vmatpush1.msra.mxu0 0.0
        %7537 = vmatprep.subr.mxu0 0.0
        %7538 = vmatpush1.msra.mxu0 0.0
        %7539 = vmatprep.subr.mxu0 0.0
        %7540 = vmatpush1.msra.mxu0 0.0
        %7541 = vmatprep.subr.mxu0 0.0
        %7542 = vmatpush1.msra.mxu0 0.0
        %7543 = vmatprep.mubr.f32.mxu0 0.0
        %v7544 = vand.u32 %v7152, 4294901760
        %7545 = vmatmul.mubr.f32.gmra.mrb[0].mxu0 %v7544
        %v7546 = vpop.f32.mrb[0].mxu0
        %v7547 = vadd.f32 %v7469, %v7546
        %v7548 = vpop.f32.mrb[0].mxu0
        %v7549 = vadd.f32 %v7471, %v7548
        %7550 = vdwg.mxu0
        %v7551 = vand.u32 %v7158, 4294901760
        %7552 = vmatprep.subr.mxu0 %v7551
        %v7553 = vand.u32 %v7155, 4294901760
        %7554 = vmatpush1.msra.mxu0 %v7553
        %7555 = vmatprep.subr.mxu0 0.0
        %7556 = vmatpush1.msra.mxu0 0.0
        %7557 = vmatprep.subr.mxu0 0.0
        %7558 = vmatpush1.msra.mxu0 0.0
        %7559 = vmatprep.subr.mxu0 0.0
        %7560 = vmatpush1.msra.mxu0 0.0
        %7561 = vmatprep.subr.mxu0 0.0
        %7562 = vmatpush1.msra.mxu0 0.0
        %7563 = vmatprep.subr.mxu0 0.0
        %7564 = vmatpush1.msra.mxu0 0.0
        %7565 = vmatprep.subr.mxu0 0.0
        %7566 = vmatpush1.msra.mxu0 0.0
        %7567 = vmatprep.subr.mxu0 0.0
        %7568 = vmatpush1.msra.mxu0 0.0
        %7569 = vmatprep.subr.mxu0 0.0
        %7570 = vmatpush1.msra.mxu0 0.0
        %7571 = vmatprep.subr.mxu0 0.0
        %7572 = vmatpush1.msra.mxu0 0.0
        %7573 = vmatprep.subr.mxu0 0.0
        %7574 = vmatpush1.msra.mxu0 0.0
        %7575 = vmatprep.subr.mxu0 0.0
        %7576 = vmatpush1.msra.mxu0 0.0
        %7577 = vmatprep.subr.mxu0 0.0
        %7578 = vmatpush1.msra.mxu0 0.0
        %7579 = vmatprep.subr.mxu0 0.0
        %7580 = vmatpush1.msra.mxu0 0.0
        %7581 = vmatprep.subr.mxu0 0.0
        %7582 = vmatpush1.msra.mxu0 0.0
        %7583 = vmatprep.subr.mxu0 0.0
        %7584 = vmatpush1.msra.mxu0 0.0
        %7585 = vmatprep.subr.mxu0 0.0
        %7586 = vmatpush1.msra.mxu0 0.0
        %7587 = vmatprep.subr.mxu0 0.0
        %7588 = vmatpush1.msra.mxu0 0.0
        %7589 = vmatprep.subr.mxu0 0.0
        %7590 = vmatpush1.msra.mxu0 0.0
        %7591 = vmatprep.subr.mxu0 0.0
        %7592 = vmatpush1.msra.mxu0 0.0
        %7593 = vmatprep.subr.mxu0 0.0
        %7594 = vmatpush1.msra.mxu0 0.0
        %7595 = vmatprep.subr.mxu0 0.0
        %7596 = vmatpush1.msra.mxu0 0.0
        %7597 = vmatprep.subr.mxu0 0.0
        %7598 = vmatpush1.msra.mxu0 0.0
        %7599 = vmatprep.subr.mxu0 0.0
        %7600 = vmatpush1.msra.mxu0 0.0
        %7601 = vmatprep.subr.mxu0 0.0
        %7602 = vmatpush1.msra.mxu0 0.0
        %7603 = vmatprep.subr.mxu0 0.0
        %7604 = vmatpush1.msra.mxu0 0.0
        %7605 = vmatprep.subr.mxu0 0.0
        %7606 = vmatpush1.msra.mxu0 0.0
        %7607 = vmatprep.subr.mxu0 0.0
        %7608 = vmatpush1.msra.mxu0 0.0
        %7609 = vmatprep.subr.mxu0 0.0
        %7610 = vmatpush1.msra.mxu0 0.0
        %7611 = vmatprep.subr.mxu0 0.0
        %7612 = vmatpush1.msra.mxu0 0.0
        %7613 = vmatprep.subr.mxu0 0.0
        %7614 = vmatpush1.msra.mxu0 0.0
        %7615 = vmatprep.subr.mxu0 0.0
        %7616 = vmatpush1.msra.mxu0 0.0
        %7617 = vmatprep.mubr.f32.mxu0 0.0
        %v7618 = vand.u32 %v7152, 4294901760
        %7619 = vmatmul.mubr.f32.gmra.mrb[0].mxu0 %v7618
        %v7620 = vpop.f32.mrb[0].mxu0
        %v7621 = vadd.f32 %v7547, %v7620
        %v7622 = vpop.f32.mrb[0].mxu0
        %v7623 = vadd.f32 %v7549, %v7622
        %7624 = vdwg.mxu0
        %v7625 = vadd.f32 %v7141, %v7621
        %v7626 = vadd.f32 %v7142, %v7623
        %7627 = vrot.lane.b32.xlu0 %v4731, 113
        %v7628 = vpop.permute.xlu0 %7627
        %7629 = vrot.lane.b32.xlu0 %v4732, 113
        %v7630 = vpop.permute.xlu0 %7629
        %v7631 = vsel %vm3228, %v7628, %v7630
        %v7632 = vsel %vm3228, %v7630, %v7628
        %v7633 = vmul.f32 %v7631, %v3234
        %v7634 = vmul.f32 %v7632, %v3238
        %v7636 = vsel %vm308, %v263, 0
        %v7639 = vsel %vm311, %v7633, 0
        %v7642 = vsel %vm311, %v7634, 0
        %v7644 = vand.u32 %v7642, 4294901760
        %7645 = vmatprep.subr.mxu0 %v7644
        %v7646 = vand.u32 %v7639, 4294901760
        %7647 = vmatpush1.msra.mxu0 %v7646
        %7648 = vmatprep.subr.mxu0 0.0
        %7649 = vmatpush1.msra.mxu0 0.0
        %7650 = vmatprep.subr.mxu0 0.0
        %7651 = vmatpush1.msra.mxu0 0.0
        %7652 = vmatprep.subr.mxu0 0.0
        %7653 = vmatpush1.msra.mxu0 0.0
        %7654 = vmatprep.subr.mxu0 0.0
        %7655 = vmatpush1.msra.mxu0 0.0
        %7656 = vmatprep.subr.mxu0 0.0
        %7657 = vmatpush1.msra.mxu0 0.0
        %7658 = vmatprep.subr.mxu0 0.0
        %7659 = vmatpush1.msra.mxu0 0.0
        %7660 = vmatprep.subr.mxu0 0.0
        %7661 = vmatpush1.msra.mxu0 0.0
        %7662 = vmatprep.subr.mxu0 0.0
        %7663 = vmatpush1.msra.mxu0 0.0
        %7664 = vmatprep.subr.mxu0 0.0
        %7665 = vmatpush1.msra.mxu0 0.0
        %7666 = vmatprep.subr.mxu0 0.0
        %7667 = vmatpush1.msra.mxu0 0.0
        %7668 = vmatprep.subr.mxu0 0.0
        %7669 = vmatpush1.msra.mxu0 0.0
        %7670 = vmatprep.subr.mxu0 0.0
        %7671 = vmatpush1.msra.mxu0 0.0
        %7672 = vmatprep.subr.mxu0 0.0
        %7673 = vmatpush1.msra.mxu0 0.0
        %7674 = vmatprep.subr.mxu0 0.0
        %7675 = vmatpush1.msra.mxu0 0.0
        %7676 = vmatprep.subr.mxu0 0.0
        %7677 = vmatpush1.msra.mxu0 0.0
        %7678 = vmatprep.subr.mxu0 0.0
        %7679 = vmatpush1.msra.mxu0 0.0
        %7680 = vmatprep.subr.mxu0 0.0
        %7681 = vmatpush1.msra.mxu0 0.0
        %7682 = vmatprep.subr.mxu0 0.0
        %7683 = vmatpush1.msra.mxu0 0.0
        %7684 = vmatprep.subr.mxu0 0.0
        %7685 = vmatpush1.msra.mxu0 0.0
        %7686 = vmatprep.subr.mxu0 0.0
        %7687 = vmatpush1.msra.mxu0 0.0
        %7688 = vmatprep.subr.mxu0 0.0
        %7689 = vmatpush1.msra.mxu0 0.0
        %7690 = vmatprep.subr.mxu0 0.0
        %7691 = vmatpush1.msra.mxu0 0.0
        %7692 = vmatprep.subr.mxu0 0.0
        %7693 = vmatpush1.msra.mxu0 0.0
        %7694 = vmatprep.subr.mxu0 0.0
        %7695 = vmatpush1.msra.mxu0 0.0
        %7696 = vmatprep.subr.mxu0 0.0
        %7697 = vmatpush1.msra.mxu0 0.0
        %7698 = vmatprep.subr.mxu0 0.0
        %7699 = vmatpush1.msra.mxu0 0.0
        %7700 = vmatprep.subr.mxu0 0.0
        %7701 = vmatpush1.msra.mxu0 0.0
        %7702 = vmatprep.subr.mxu0 0.0
        %7703 = vmatpush1.msra.mxu0 0.0
        %7704 = vmatprep.subr.mxu0 0.0
        %7705 = vmatpush1.msra.mxu0 0.0
        %7706 = vmatprep.subr.mxu0 0.0
        %7707 = vmatpush1.msra.mxu0 0.0
        %7708 = vmatprep.subr.mxu0 0.0
        %7709 = vmatpush1.msra.mxu0 0.0
        %7710 = vmatprep.mubr.f32.mxu0 0.0
        %v7711 = vand.u32 %v7636, 4294901760
        %v7712 = vsub.f32 %v7636, %v7711
        %v7713 = vand.u32 %v7712, 4294901760
        %v7714 = vsub.f32 %v7712, %v7713
        %v7715 = vand.u32 %v7714, 4294901760
        %7716 = vmatmul.mubr.f32.gmra.mrb[0].mxu0 %v7715
        %v7717 = vpop.f32.mrb[0].mxu0
        %v7718 = vadd.f32 0.0, %v7717
        %v7719 = vpop.f32.mrb[0].mxu0
        %v7720 = vadd.f32 0.0, %v7719
        %7721 = vdwg.mxu0
        %v7722 = vand.u32 %v7642, 4294901760
        %v7723 = vsub.f32 %v7642, %v7722
        %v7724 = vand.u32 %v7723, 4294901760
        %v7725 = vsub.f32 %v7723, %v7724
        %v7726 = vand.u32 %v7725, 4294901760
        %7727 = vmatprep.subr.mxu0 %v7726
        %v7728 = vand.u32 %v7639, 4294901760
        %v7729 = vsub.f32 %v7639, %v7728
        %v7730 = vand.u32 %v7729, 4294901760
        %v7731 = vsub.f32 %v7729, %v7730
        %v7732 = vand.u32 %v7731, 4294901760
        %7733 = vmatpush1.msra.mxu0 %v7732
        %7734 = vmatprep.subr.mxu0 0.0
        %7735 = vmatpush1.msra.mxu0 0.0
        %7736 = vmatprep.subr.mxu0 0.0
        %7737 = vmatpush1.msra.mxu0 0.0
        %7738 = vmatprep.subr.mxu0 0.0
        %7739 = vmatpush1.msra.mxu0 0.0
        %7740 = vmatprep.subr.mxu0 0.0
        %7741 = vmatpush1.msra.mxu0 0.0
        %7742 = vmatprep.subr.mxu0 0.0
        %7743 = vmatpush1.msra.mxu0 0.0
        %7744 = vmatprep.subr.mxu0 0.0
        %7745 = vmatpush1.msra.mxu0 0.0
        %7746 = vmatprep.subr.mxu0 0.0
        %7747 = vmatpush1.msra.mxu0 0.0
        %7748 = vmatprep.subr.mxu0 0.0
        %7749 = vmatpush1.msra.mxu0 0.0
        %7750 = vmatprep.subr.mxu0 0.0
        %7751 = vmatpush1.msra.mxu0 0.0
        %7752 = vmatprep.subr.mxu0 0.0
        %7753 = vmatpush1.msra.mxu0 0.0
        %7754 = vmatprep.subr.mxu0 0.0
        %7755 = vmatpush1.msra.mxu0 0.0
        %7756 = vmatprep.subr.mxu0 0.0
        %7757 = vmatpush1.msra.mxu0 0.0
        %7758 = vmatprep.subr.mxu0 0.0
        %7759 = vmatpush1.msra.mxu0 0.0
        %7760 = vmatprep.subr.mxu0 0.0
        %7761 = vmatpush1.msra.mxu0 0.0
        %7762 = vmatprep.subr.mxu0 0.0
        %7763 = vmatpush1.msra.mxu0 0.0
        %7764 = vmatprep.subr.mxu0 0.0
        %7765 = vmatpush1.msra.mxu0 0.0
        %7766 = vmatprep.subr.mxu0 0.0
        %7767 = vmatpush1.msra.mxu0 0.0
        %7768 = vmatprep.subr.mxu0 0.0
        %7769 = vmatpush1.msra.mxu0 0.0
        %7770 = vmatprep.subr.mxu0 0.0
        %7771 = vmatpush1.msra.mxu0 0.0
        %7772 = vmatprep.subr.mxu0 0.0
        %7773 = vmatpush1.msra.mxu0 0.0
        %7774 = vmatprep.subr.mxu0 0.0
        %7775 = vmatpush1.msra.mxu0 0.0
        %7776 = vmatprep.subr.mxu0 0.0
        %7777 = vmatpush1.msra.mxu0 0.0
        %7778 = vmatprep.subr.mxu0 0.0
        %7779 = vmatpush1.msra.mxu0 0.0
        %7780 = vmatprep.subr.mxu0 0.0
        %7781 = vmatpush1.msra.mxu0 0.0
        %7782 = vmatprep.subr.mxu0 0.0
        %7783 = vmatpush1.msra.mxu0 0.0
        %7784 = vmatprep.subr.mxu0 0.0
        %7785 = vmatpush1.msra.mxu0 0.0
        %7786 = vmatprep.subr.mxu0 0.0
        %7787 = vmatpush1.msra.mxu0 0.0
        %7788 = vmatprep.subr.mxu0 0.0
        %7789 = vmatpush1.msra.mxu0 0.0
        %7790 = vmatprep.subr.mxu0 0.0
        %7791 = vmatpush1.msra.mxu0 0.0
        %7792 = vmatprep.subr.mxu0 0.0
        %7793 = vmatpush1.msra.mxu0 0.0
        %7794 = vmatprep.subr.mxu0 0.0
        %7795 = vmatpush1.msra.mxu0 0.0
        %7796 = vmatprep.mubr.f32.mxu0 0.0
        %v7797 = vand.u32 %v7636, 4294901760
        %7798 = vmatmul.mubr.f32.gmra.mrb[0].mxu0 %v7797
        %v7799 = vpop.f32.mrb[0].mxu0
        %v7800 = vadd.f32 %v7718, %v7799
        %v7801 = vpop.f32.mrb[0].mxu0
        %v7802 = vadd.f32 %v7720, %v7801
        %7803 = vdwg.mxu0
        %v7804 = vand.u32 %v7642, 4294901760
        %v7805 = vsub.f32 %v7642, %v7804
        %7806 = vmatprep.subr.mxu0 %v7805
        %v7807 = vand.u32 %v7639, 4294901760
        %v7808 = vsub.f32 %v7639, %v7807
        %7809 = vmatpush1.msra.mxu0 %v7808
        %7810 = vmatprep.subr.mxu0 0.0
        %7811 = vmatpush1.msra.mxu0 0.0
        %7812 = vmatprep.subr.mxu0 0.0
        %7813 = vmatpush1.msra.mxu0 0.0
        %7814 = vmatprep.subr.mxu0 0.0
        %7815 = vmatpush1.msra.mxu0 0.0
        %7816 = vmatprep.subr.mxu0 0.0
        %7817 = vmatpush1.msra.mxu0 0.0
        %7818 = vmatprep.subr.mxu0 0.0
        %7819 = vmatpush1.msra.mxu0 0.0
        %7820 = vmatprep.subr.mxu0 0.0
        %7821 = vmatpush1.msra.mxu0 0.0
        %7822 = vmatprep.subr.mxu0 0.0
        %7823 = vmatpush1.msra.mxu0 0.0
        %7824 = vmatprep.subr.mxu0 0.0
        %7825 = vmatpush1.msra.mxu0 0.0
        %7826 = vmatprep.subr.mxu0 0.0
        %7827 = vmatpush1.msra.mxu0 0.0
        %7828 = vmatprep.subr.mxu0 0.0
        %7829 = vmatpush1.msra.mxu0 0.0
        %7830 = vmatprep.subr.mxu0 0.0
        %7831 = vmatpush1.msra.mxu0 0.0
        %7832 = vmatprep.subr.mxu0 0.0
        %7833 = vmatpush1.msra.mxu0 0.0
        %7834 = vmatprep.subr.mxu0 0.0
        %7835 = vmatpush1.msra.mxu0 0.0
        %7836 = vmatprep.subr.mxu0 0.0
        %7837 = vmatpush1.msra.mxu0 0.0
        %7838 = vmatprep.subr.mxu0 0.0
        %7839 = vmatpush1.msra.mxu0 0.0
        %7840 = vmatprep.subr.mxu0 0.0
        %7841 = vmatpush1.msra.mxu0 0.0
        %7842 = vmatprep.subr.mxu0 0.0
        %7843 = vmatpush1.msra.mxu0 0.0
        %7844 = vmatprep.subr.mxu0 0.0
        %7845 = vmatpush1.msra.mxu0 0.0
        %7846 = vmatprep.subr.mxu0 0.0
        %7847 = vmatpush1.msra.mxu0 0.0
        %7848 = vmatprep.subr.mxu0 0.0
        %7849 = vmatpush1.msra.mxu0 0.0
        %7850 = vmatprep.subr.mxu0 0.0
        %7851 = vmatpush1.msra.mxu0 0.0
        %7852 = vmatprep.subr.mxu0 0.0
        %7853 = vmatpush1.msra.mxu0 0.0
        %7854 = vmatprep.subr.mxu0 0.0
        %7855 = vmatpush1.msra.mxu0 0.0
        %7856 = vmatprep.subr.mxu0 0.0
        %7857 = vmatpush1.msra.mxu0 0.0
        %7858 = vmatprep.subr.mxu0 0.0
        %7859 = vmatpush1.msra.mxu0 0.0
        %7860 = vmatprep.subr.mxu0 0.0
        %7861 = vmatpush1.msra.mxu0 0.0
        %7862 = vmatprep.subr.mxu0 0.0
        %7863 = vmatpush1.msra.mxu0 0.0
        %7864 = vmatprep.subr.mxu0 0.0
        %7865 = vmatpush1.msra.mxu0 0.0
        %7866 = vmatprep.subr.mxu0 0.0
        %7867 = vmatpush1.msra.mxu0 0.0
        %7868 = vmatprep.subr.mxu0 0.0
        %7869 = vmatpush1.msra.mxu0 0.0
        %7870 = vmatprep.subr.mxu0 0.0
        %7871 = vmatpush1.msra.mxu0 0.0
        %7872 = vmatprep.mubr.f32.mxu0 0.0
        %v7873 = vand.u32 %v7636, 4294901760
        %v7874 = vsub.f32 %v7636, %v7873
        %7875 = vmatmul.mubr.f32.gmra.mrb[0].mxu0 %v7874
        %v7876 = vpop.f32.mrb[0].mxu0
        %v7877 = vadd.f32 %v7800, %v7876
        %v7878 = vpop.f32.mrb[0].mxu0
        %v7879 = vadd.f32 %v7802, %v7878
        %7880 = vdwg.mxu0
        %v7881 = vand.u32 %v7642, 4294901760
        %7882 = vmatprep.subr.mxu0 %v7881
        %v7883 = vand.u32 %v7639, 4294901760
        %7884 = vmatpush1.msra.mxu0 %v7883
        %7885 = vmatprep.subr.mxu0 0.0
        %7886 = vmatpush1.msra.mxu0 0.0
        %7887 = vmatprep.subr.mxu0 0.0
        %7888 = vmatpush1.msra.mxu0 0.0
        %7889 = vmatprep.subr.mxu0 0.0
        %7890 = vmatpush1.msra.mxu0 0.0
        %7891 = vmatprep.subr.mxu0 0.0
        %7892 = vmatpush1.msra.mxu0 0.0
        %7893 = vmatprep.subr.mxu0 0.0
        %7894 = vmatpush1.msra.mxu0 0.0
        %7895 = vmatprep.subr.mxu0 0.0
        %7896 = vmatpush1.msra.mxu0 0.0
        %7897 = vmatprep.subr.mxu0 0.0
        %7898 = vmatpush1.msra.mxu0 0.0
        %7899 = vmatprep.subr.mxu0 0.0
        %7900 = vmatpush1.msra.mxu0 0.0
        %7901 = vmatprep.subr.mxu0 0.0
        %7902 = vmatpush1.msra.mxu0 0.0
        %7903 = vmatprep.subr.mxu0 0.0
        %7904 = vmatpush1.msra.mxu0 0.0
        %7905 = vmatprep.subr.mxu0 0.0
        %7906 = vmatpush1.msra.mxu0 0.0
        %7907 = vmatprep.subr.mxu0 0.0
        %7908 = vmatpush1.msra.mxu0 0.0
        %7909 = vmatprep.subr.mxu0 0.0
        %7910 = vmatpush1.msra.mxu0 0.0
        %7911 = vmatprep.subr.mxu0 0.0
        %7912 = vmatpush1.msra.mxu0 0.0
        %7913 = vmatprep.subr.mxu0 0.0
        %7914 = vmatpush1.msra.mxu0 0.0
        %7915 = vmatprep.subr.mxu0 0.0
        %7916 = vmatpush1.msra.mxu0 0.0
        %7917 = vmatprep.subr.mxu0 0.0
        %7918 = vmatpush1.msra.mxu0 0.0
        %7919 = vmatprep.subr.mxu0 0.0
        %7920 = vmatpush1.msra.mxu0 0.0
        %7921 = vmatprep.subr.mxu0 0.0
        %7922 = vmatpush1.msra.mxu0 0.0
        %7923 = vmatprep.subr.mxu0 0.0
        %7924 = vmatpush1.msra.mxu0 0.0
        %7925 = vmatprep.subr.mxu0 0.0
        %7926 = vmatpush1.msra.mxu0 0.0
        %7927 = vmatprep.subr.mxu0 0.0
        %7928 = vmatpush1.msra.mxu0 0.0
        %7929 = vmatprep.subr.mxu0 0.0
        %7930 = vmatpush1.msra.mxu0 0.0
        %7931 = vmatprep.subr.mxu0 0.0
        %7932 = vmatpush1.msra.mxu0 0.0
        %7933 = vmatprep.subr.mxu0 0.0
        %7934 = vmatpush1.msra.mxu0 0.0
        %7935 = vmatprep.subr.mxu0 0.0
        %7936 = vmatpush1.msra.mxu0 0.0
        %7937 = vmatprep.subr.mxu0 0.0
        %7938 = vmatpush1.msra.mxu0 0.0
        %7939 = vmatprep.subr.mxu0 0.0
        %7940 = vmatpush1.msra.mxu0 0.0
        %7941 = vmatprep.subr.mxu0 0.0
        %7942 = vmatpush1.msra.mxu0 0.0
        %7943 = vmatprep.subr.mxu0 0.0
        %7944 = vmatpush1.msra.mxu0 0.0
        %7945 = vmatprep.subr.mxu0 0.0
        %7946 = vmatpush1.msra.mxu0 0.0
        %7947 = vmatprep.mubr.f32.mxu0 0.0
        %v7948 = vand.u32 %v7636, 4294901760
        %v7949 = vsub.f32 %v7636, %v7948
        %v7950 = vand.u32 %v7949, 4294901760
        %7951 = vmatmul.mubr.f32.gmra.mrb[0].mxu0 %v7950
        %v7952 = vpop.f32.mrb[0].mxu0
        %v7953 = vadd.f32 %v7877, %v7952
        %v7954 = vpop.f32.mrb[0].mxu0
        %v7955 = vadd.f32 %v7879, %v7954
        %7956 = vdwg.mxu0
        %v7957 = vand.u32 %v7642, 4294901760
        %v7958 = vsub.f32 %v7642, %v7957
        %v7959 = vand.u32 %v7958, 4294901760
        %7960 = vmatprep.subr.mxu0 %v7959
        %v7961 = vand.u32 %v7639, 4294901760
        %v7962 = vsub.f32 %v7639, %v7961
        %v7963 = vand.u32 %v7962, 4294901760
        %7964 = vmatpush1.msra.mxu0 %v7963
        %7965 = vmatprep.subr.mxu0 0.0
        %7966 = vmatpush1.msra.mxu0 0.0
        %7967 = vmatprep.subr.mxu0 0.0
        %7968 = vmatpush1.msra.mxu0 0.0
        %7969 = vmatprep.subr.mxu0 0.0
        %7970 = vmatpush1.msra.mxu0 0.0
        %7971 = vmatprep.subr.mxu0 0.0
        %7972 = vmatpush1.msra.mxu0 0.0
        %7973 = vmatprep.subr.mxu0 0.0
        %7974 = vmatpush1.msra.mxu0 0.0
        %7975 = vmatprep.subr.mxu0 0.0
        %7976 = vmatpush1.msra.mxu0 0.0
        %7977 = vmatprep.subr.mxu0 0.0
        %7978 = vmatpush1.msra.mxu0 0.0
        %7979 = vmatprep.subr.mxu0 0.0
        %7980 = vmatpush1.msra.mxu0 0.0
        %7981 = vmatprep.subr.mxu0 0.0
        %7982 = vmatpush1.msra.mxu0 0.0
        %7983 = vmatprep.subr.mxu0 0.0
        %7984 = vmatpush1.msra.mxu0 0.0
        %7985 = vmatprep.subr.mxu0 0.0
        %7986 = vmatpush1.msra.mxu0 0.0
        %7987 = vmatprep.subr.mxu0 0.0
        %7988 = vmatpush1.msra.mxu0 0.0
        %7989 = vmatprep.subr.mxu0 0.0
        %7990 = vmatpush1.msra.mxu0 0.0
        %7991 = vmatprep.subr.mxu0 0.0
        %7992 = vmatpush1.msra.mxu0 0.0
        %7993 = vmatprep.subr.mxu0 0.0
        %7994 = vmatpush1.msra.mxu0 0.0
        %7995 = vmatprep.subr.mxu0 0.0
        %7996 = vmatpush1.msra.mxu0 0.0
        %7997 = vmatprep.subr.mxu0 0.0
        %7998 = vmatpush1.msra.mxu0 0.0
        %7999 = vmatprep.subr.mxu0 0.0
        %8000 = vmatpush1.msra.mxu0 0.0
        %8001 = vmatprep.subr.mxu0 0.0
        %8002 = vmatpush1.msra.mxu0 0.0
        %8003 = vmatprep.subr.mxu0 0.0
        %8004 = vmatpush1.msra.mxu0 0.0
        %8005 = vmatprep.subr.mxu0 0.0
        %8006 = vmatpush1.msra.mxu0 0.0
        %8007 = vmatprep.subr.mxu0 0.0
        %8008 = vmatpush1.msra.mxu0 0.0
        %8009 = vmatprep.subr.mxu0 0.0
        %8010 = vmatpush1.msra.mxu0 0.0
        %8011 = vmatprep.subr.mxu0 0.0
        %8012 = vmatpush1.msra.mxu0 0.0
        %8013 = vmatprep.subr.mxu0 0.0
        %8014 = vmatpush1.msra.mxu0 0.0
        %8015 = vmatprep.subr.mxu0 0.0
        %8016 = vmatpush1.msra.mxu0 0.0
        %8017 = vmatprep.subr.mxu0 0.0
        %8018 = vmatpush1.msra.mxu0 0.0
        %8019 = vmatprep.subr.mxu0 0.0
        %8020 = vmatpush1.msra.mxu0 0.0
        %8021 = vmatprep.subr.mxu0 0.0
        %8022 = vmatpush1.msra.mxu0 0.0
        %8023 = vmatprep.subr.mxu0 0.0
        %8024 = vmatpush1.msra.mxu0 0.0
        %8025 = vmatprep.subr.mxu0 0.0
        %8026 = vmatpush1.msra.mxu0 0.0
        %8027 = vmatprep.mubr.f32.mxu0 0.0
        %v8028 = vand.u32 %v7636, 4294901760
        %8029 = vmatmul.mubr.f32.gmra.mrb[0].mxu0 %v8028
        %v8030 = vpop.f32.mrb[0].mxu0
        %v8031 = vadd.f32 %v7953, %v8030
        %v8032 = vpop.f32.mrb[0].mxu0
        %v8033 = vadd.f32 %v7955, %v8032
        %8034 = vdwg.mxu0
        %v8035 = vand.u32 %v7642, 4294901760
        %8036 = vmatprep.subr.mxu0 %v8035
        %v8037 = vand.u32 %v7639, 4294901760
        %8038 = vmatpush1.msra.mxu0 %v8037
        %8039 = vmatprep.subr.mxu0 0.0
        %8040 = vmatpush1.msra.mxu0 0.0
        %8041 = vmatprep.subr.mxu0 0.0
        %8042 = vmatpush1.msra.mxu0 0.0
        %8043 = vmatprep.subr.mxu0 0.0
        %8044 = vmatpush1.msra.mxu0 0.0
        %8045 = vmatprep.subr.mxu0 0.0
        %8046 = vmatpush1.msra.mxu0 0.0
        %8047 = vmatprep.subr.mxu0 0.0
        %8048 = vmatpush1.msra.mxu0 0.0
        %8049 = vmatprep.subr.mxu0 0.0
        %8050 = vmatpush1.msra.mxu0 0.0
        %8051 = vmatprep.subr.mxu0 0.0
        %8052 = vmatpush1.msra.mxu0 0.0
        %8053 = vmatprep.subr.mxu0 0.0
        %8054 = vmatpush1.msra.mxu0 0.0
        %8055 = vmatprep.subr.mxu0 0.0
        %8056 = vmatpush1.msra.mxu0 0.0
        %8057 = vmatprep.subr.mxu0 0.0
        %8058 = vmatpush1.msra.mxu0 0.0
        %8059 = vmatprep.subr.mxu0 0.0
        %8060 = vmatpush1.msra.mxu0 0.0
        %8061 = vmatprep.subr.mxu0 0.0
        %8062 = vmatpush1.msra.mxu0 0.0
        %8063 = vmatprep.subr.mxu0 0.0
        %8064 = vmatpush1.msra.mxu0 0.0
        %8065 = vmatprep.subr.mxu0 0.0
        %8066 = vmatpush1.msra.mxu0 0.0
        %8067 = vmatprep.subr.mxu0 0.0
        %8068 = vmatpush1.msra.mxu0 0.0
        %8069 = vmatprep.subr.mxu0 0.0
        %8070 = vmatpush1.msra.mxu0 0.0
        %8071 = vmatprep.subr.mxu0 0.0
        %8072 = vmatpush1.msra.mxu0 0.0
        %8073 = vmatprep.subr.mxu0 0.0
        %8074 = vmatpush1.msra.mxu0 0.0
        %8075 = vmatprep.subr.mxu0 0.0
        %8076 = vmatpush1.msra.mxu0 0.0
        %8077 = vmatprep.subr.mxu0 0.0
        %8078 = vmatpush1.msra.mxu0 0.0
        %8079 = vmatprep.subr.mxu0 0.0
        %8080 = vmatpush1.msra.mxu0 0.0
        %8081 = vmatprep.subr.mxu0 0.0
        %8082 = vmatpush1.msra.mxu0 0.0
        %8083 = vmatprep.subr.mxu0 0.0
        %8084 = vmatpush1.msra.mxu0 0.0
        %8085 = vmatprep.subr.mxu0 0.0
        %8086 = vmatpush1.msra.mxu0 0.0
        %8087 = vmatprep.subr.mxu0 0.0
        %8088 = vmatpush1.msra.mxu0 0.0
        %8089 = vmatprep.subr.mxu0 0.0
        %8090 = vmatpush1.msra.mxu0 0.0
        %8091 = vmatprep.subr.mxu0 0.0
        %8092 = vmatpush1.msra.mxu0 0.0
        %8093 = vmatprep.subr.mxu0 0.0
        %8094 = vmatpush1.msra.mxu0 0.0
        %8095 = vmatprep.subr.mxu0 0.0
        %8096 = vmatpush1.msra.mxu0 0.0
        %8097 = vmatprep.subr.mxu0 0.0
        %8098 = vmatpush1.msra.mxu0 0.0
        %8099 = vmatprep.subr.mxu0 0.0
        %8100 = vmatpush1.msra.mxu0 0.0
        %8101 = vmatprep.mubr.f32.mxu0 0.0
        %v8102 = vand.u32 %v7636, 4294901760
        %8103 = vmatmul.mubr.f32.gmra.mrb[0].mxu0 %v8102
        %v8104 = vpop.f32.mrb[0].mxu0
        %v8105 = vadd.f32 %v8031, %v8104
        %v8106 = vpop.f32.mrb[0].mxu0
        %v8107 = vadd.f32 %v8033, %v8106
        %8108 = vdwg.mxu0
        %v8109 = vadd.f32 %v7625, %v8105
        %v8110 = vadd.f32 %v7626, %v8107
        %8111 = vrot.lane.b32.xlu0 %v4731, 112
        %v8112 = vpop.permute.xlu0 %8111
        %8113 = vrot.lane.b32.xlu0 %v4732, 112
        %v8114 = vpop.permute.xlu0 %8113
        %v8115 = vsel %vm3721, %v8112, %v8114
        %v8116 = vsel %vm3721, %v8114, %v8112
        %v8117 = vmul.f32 %v8115, %v3727
        %v8118 = vmul.f32 %v8116, %v3731
        %v8119 = vrot.slane %v263, 4
        %v8120 = vsel %vm308, %v8119, 0
        %v8123 = vsel %vm311, %v8117, 0
        %v8126 = vsel %vm311, %v8118, 0
        %v8128 = vand.u32 %v8126, 4294901760
        %8129 = vmatprep.subr.mxu0 %v8128
        %v8130 = vand.u32 %v8123, 4294901760
        %8131 = vmatpush1.msra.mxu0 %v8130
        %8132 = vmatprep.subr.mxu0 0.0
        %8133 = vmatpush1.msra.mxu0 0.0
        %8134 = vmatprep.subr.mxu0 0.0
        %8135 = vmatpush1.msra.mxu0 0.0
        %8136 = vmatprep.subr.mxu0 0.0
        %8137 = vmatpush1.msra.mxu0 0.0
        %8138 = vmatprep.subr.mxu0 0.0
        %8139 = vmatpush1.msra.mxu0 0.0
        %8140 = vmatprep.subr.mxu0 0.0
        %8141 = vmatpush1.msra.mxu0 0.0
        %8142 = vmatprep.subr.mxu0 0.0
        %8143 = vmatpush1.msra.mxu0 0.0
        %8144 = vmatprep.subr.mxu0 0.0
        %8145 = vmatpush1.msra.mxu0 0.0
        %8146 = vmatprep.subr.mxu0 0.0
        %8147 = vmatpush1.msra.mxu0 0.0
        %8148 = vmatprep.subr.mxu0 0.0
        %8149 = vmatpush1.msra.mxu0 0.0
        %8150 = vmatprep.subr.mxu0 0.0
        %8151 = vmatpush1.msra.mxu0 0.0
        %8152 = vmatprep.subr.mxu0 0.0
        %8153 = vmatpush1.msra.mxu0 0.0
        %8154 = vmatprep.subr.mxu0 0.0
        %8155 = vmatpush1.msra.mxu0 0.0
        %8156 = vmatprep.subr.mxu0 0.0
        %8157 = vmatpush1.msra.mxu0 0.0
        %8158 = vmatprep.subr.mxu0 0.0
        %8159 = vmatpush1.msra.mxu0 0.0
        %8160 = vmatprep.subr.mxu0 0.0
        %8161 = vmatpush1.msra.mxu0 0.0
        %8162 = vmatprep.subr.mxu0 0.0
        %8163 = vmatpush1.msra.mxu0 0.0
        %8164 = vmatprep.subr.mxu0 0.0
        %8165 = vmatpush1.msra.mxu0 0.0
        %8166 = vmatprep.subr.mxu0 0.0
        %8167 = vmatpush1.msra.mxu0 0.0
        %8168 = vmatprep.subr.mxu0 0.0
        %8169 = vmatpush1.msra.mxu0 0.0
        %8170 = vmatprep.subr.mxu0 0.0
        %8171 = vmatpush1.msra.mxu0 0.0
        %8172 = vmatprep.subr.mxu0 0.0
        %8173 = vmatpush1.msra.mxu0 0.0
        %8174 = vmatprep.subr.mxu0 0.0
        %8175 = vmatpush1.msra.mxu0 0.0
        %8176 = vmatprep.subr.mxu0 0.0
        %8177 = vmatpush1.msra.mxu0 0.0
        %8178 = vmatprep.subr.mxu0 0.0
        %8179 = vmatpush1.msra.mxu0 0.0
        %8180 = vmatprep.subr.mxu0 0.0
        %8181 = vmatpush1.msra.mxu0 0.0
        %8182 = vmatprep.subr.mxu0 0.0
        %8183 = vmatpush1.msra.mxu0 0.0
        %8184 = vmatprep.subr.mxu0 0.0
        %8185 = vmatpush1.msra.mxu0 0.0
        %8186 = vmatprep.subr.mxu0 0.0
        %8187 = vmatpush1.msra.mxu0 0.0
        %8188 = vmatprep.subr.mxu0 0.0
        %8189 = vmatpush1.msra.mxu0 0.0
        %8190 = vmatprep.subr.mxu0 0.0
        %8191 = vmatpush1.msra.mxu0 0.0
        %8192 = vmatprep.subr.mxu0 0.0
        %8193 = vmatpush1.msra.mxu0 0.0
        %8194 = vmatprep.mubr.f32.mxu0 0.0
        %v8195 = vand.u32 %v8120, 4294901760
        %v8196 = vsub.f32 %v8120, %v8195
        %v8197 = vand.u32 %v8196, 4294901760
        %v8198 = vsub.f32 %v8196, %v8197
        %v8199 = vand.u32 %v8198, 4294901760
        %8200 = vmatmul.mubr.f32.gmra.mrb[0].mxu0 %v8199
        %v8201 = vpop.f32.mrb[0].mxu0
        %v8202 = vadd.f32 0.0, %v8201
        %v8203 = vpop.f32.mrb[0].mxu0
        %v8204 = vadd.f32 0.0, %v8203
        %8205 = vdwg.mxu0
        %v8206 = vand.u32 %v8126, 4294901760
        %v8207 = vsub.f32 %v8126, %v8206
        %v8208 = vand.u32 %v8207, 4294901760
        %v8209 = vsub.f32 %v8207, %v8208
        %v8210 = vand.u32 %v8209, 4294901760
        %8211 = vmatprep.subr.mxu0 %v8210
        %v8212 = vand.u32 %v8123, 4294901760
        %v8213 = vsub.f32 %v8123, %v8212
        %v8214 = vand.u32 %v8213, 4294901760
        %v8215 = vsub.f32 %v8213, %v8214
        %v8216 = vand.u32 %v8215, 4294901760
        %8217 = vmatpush1.msra.mxu0 %v8216
        %8218 = vmatprep.subr.mxu0 0.0
        %8219 = vmatpush1.msra.mxu0 0.0
        %8220 = vmatprep.subr.mxu0 0.0
        %8221 = vmatpush1.msra.mxu0 0.0
        %8222 = vmatprep.subr.mxu0 0.0
        %8223 = vmatpush1.msra.mxu0 0.0
        %8224 = vmatprep.subr.mxu0 0.0
        %8225 = vmatpush1.msra.mxu0 0.0
        %8226 = vmatprep.subr.mxu0 0.0
        %8227 = vmatpush1.msra.mxu0 0.0
        %8228 = vmatprep.subr.mxu0 0.0
        %8229 = vmatpush1.msra.mxu0 0.0
        %8230 = vmatprep.subr.mxu0 0.0
        %8231 = vmatpush1.msra.mxu0 0.0
        %8232 = vmatprep.subr.mxu0 0.0
        %8233 = vmatpush1.msra.mxu0 0.0
        %8234 = vmatprep.subr.mxu0 0.0
        %8235 = vmatpush1.msra.mxu0 0.0
        %8236 = vmatprep.subr.mxu0 0.0
        %8237 = vmatpush1.msra.mxu0 0.0
        %8238 = vmatprep.subr.mxu0 0.0
        %8239 = vmatpush1.msra.mxu0 0.0
        %8240 = vmatprep.subr.mxu0 0.0
        %8241 = vmatpush1.msra.mxu0 0.0
        %8242 = vmatprep.subr.mxu0 0.0
        %8243 = vmatpush1.msra.mxu0 0.0
        %8244 = vmatprep.subr.mxu0 0.0
        %8245 = vmatpush1.msra.mxu0 0.0
        %8246 = vmatprep.subr.mxu0 0.0
        %8247 = vmatpush1.msra.mxu0 0.0
        %8248 = vmatprep.subr.mxu0 0.0
        %8249 = vmatpush1.msra.mxu0 0.0
        %8250 = vmatprep.subr.mxu0 0.0
        %8251 = vmatpush1.msra.mxu0 0.0
        %8252 = vmatprep.subr.mxu0 0.0
        %8253 = vmatpush1.msra.mxu0 0.0
        %8254 = vmatprep.subr.mxu0 0.0
        %8255 = vmatpush1.msra.mxu0 0.0
        %8256 = vmatprep.subr.mxu0 0.0
        %8257 = vmatpush1.msra.mxu0 0.0
        %8258 = vmatprep.subr.mxu0 0.0
        %8259 = vmatpush1.msra.mxu0 0.0
        %8260 = vmatprep.subr.mxu0 0.0
        %8261 = vmatpush1.msra.mxu0 0.0
        %8262 = vmatprep.subr.mxu0 0.0
        %8263 = vmatpush1.msra.mxu0 0.0
        %8264 = vmatprep.subr.mxu0 0.0
        %8265 = vmatpush1.msra.mxu0 0.0
        %8266 = vmatprep.subr.mxu0 0.0
        %8267 = vmatpush1.msra.mxu0 0.0
        %8268 = vmatprep.subr.mxu0 0.0
        %8269 = vmatpush1.msra.mxu0 0.0
        %8270 = vmatprep.subr.mxu0 0.0
        %8271 = vmatpush1.msra.mxu0 0.0
        %8272 = vmatprep.subr.mxu0 0.0
        %8273 = vmatpush1.msra.mxu0 0.0
        %8274 = vmatprep.subr.mxu0 0.0
        %8275 = vmatpush1.msra.mxu0 0.0
        %8276 = vmatprep.subr.mxu0 0.0
        %8277 = vmatpush1.msra.mxu0 0.0
        %8278 = vmatprep.subr.mxu0 0.0
        %8279 = vmatpush1.msra.mxu0 0.0
        %8280 = vmatprep.mubr.f32.mxu0 0.0
        %v8281 = vand.u32 %v8120, 4294901760
        %8282 = vmatmul.mubr.f32.gmra.mrb[0].mxu0 %v8281
        %v8283 = vpop.f32.mrb[0].mxu0
        %v8284 = vadd.f32 %v8202, %v8283
        %v8285 = vpop.f32.mrb[0].mxu0
        %v8286 = vadd.f32 %v8204, %v8285
        %8287 = vdwg.mxu0
        %v8288 = vand.u32 %v8126, 4294901760
        %v8289 = vsub.f32 %v8126, %v8288
        %8290 = vmatprep.subr.mxu0 %v8289
        %v8291 = vand.u32 %v8123, 4294901760
        %v8292 = vsub.f32 %v8123, %v8291
        %8293 = vmatpush1.msra.mxu0 %v8292
        %8294 = vmatprep.subr.mxu0 0.0
        %8295 = vmatpush1.msra.mxu0 0.0
        %8296 = vmatprep.subr.mxu0 0.0
        %8297 = vmatpush1.msra.mxu0 0.0
        %8298 = vmatprep.subr.mxu0 0.0
        %8299 = vmatpush1.msra.mxu0 0.0
        %8300 = vmatprep.subr.mxu0 0.0
        %8301 = vmatpush1.msra.mxu0 0.0
        %8302 = vmatprep.subr.mxu0 0.0
        %8303 = vmatpush1.msra.mxu0 0.0
        %8304 = vmatprep.subr.mxu0 0.0
        %8305 = vmatpush1.msra.mxu0 0.0
        %8306 = vmatprep.subr.mxu0 0.0
        %8307 = vmatpush1.msra.mxu0 0.0
        %8308 = vmatprep.subr.mxu0 0.0
        %8309 = vmatpush1.msra.mxu0 0.0
        %8310 = vmatprep.subr.mxu0 0.0
        %8311 = vmatpush1.msra.mxu0 0.0
        %8312 = vmatprep.subr.mxu0 0.0
        %8313 = vmatpush1.msra.mxu0 0.0
        %8314 = vmatprep.subr.mxu0 0.0
        %8315 = vmatpush1.msra.mxu0 0.0
        %8316 = vmatprep.subr.mxu0 0.0
        %8317 = vmatpush1.msra.mxu0 0.0
        %8318 = vmatprep.subr.mxu0 0.0
        %8319 = vmatpush1.msra.mxu0 0.0
        %8320 = vmatprep.subr.mxu0 0.0
        %8321 = vmatpush1.msra.mxu0 0.0
        %8322 = vmatprep.subr.mxu0 0.0
        %8323 = vmatpush1.msra.mxu0 0.0
        %8324 = vmatprep.subr.mxu0 0.0
        %8325 = vmatpush1.msra.mxu0 0.0
        %8326 = vmatprep.subr.mxu0 0.0
        %8327 = vmatpush1.msra.mxu0 0.0
        %8328 = vmatprep.subr.mxu0 0.0
        %8329 = vmatpush1.msra.mxu0 0.0
        %8330 = vmatprep.subr.mxu0 0.0
        %8331 = vmatpush1.msra.mxu0 0.0
        %8332 = vmatprep.subr.mxu0 0.0
        %8333 = vmatpush1.msra.mxu0 0.0
        %8334 = vmatprep.subr.mxu0 0.0
        %8335 = vmatpush1.msra.mxu0 0.0
        %8336 = vmatprep.subr.mxu0 0.0
        %8337 = vmatpush1.msra.mxu0 0.0
        %8338 = vmatprep.subr.mxu0 0.0
        %8339 = vmatpush1.msra.mxu0 0.0
        %8340 = vmatprep.subr.mxu0 0.0
        %8341 = vmatpush1.msra.mxu0 0.0
        %8342 = vmatprep.subr.mxu0 0.0
        %8343 = vmatpush1.msra.mxu0 0.0
        %8344 = vmatprep.subr.mxu0 0.0
        %8345 = vmatpush1.msra.mxu0 0.0
        %8346 = vmatprep.subr.mxu0 0.0
        %8347 = vmatpush1.msra.mxu0 0.0
        %8348 = vmatprep.subr.mxu0 0.0
        %8349 = vmatpush1.msra.mxu0 0.0
        %8350 = vmatprep.subr.mxu0 0.0
        %8351 = vmatpush1.msra.mxu0 0.0
        %8352 = vmatprep.subr.mxu0 0.0
        %8353 = vmatpush1.msra.mxu0 0.0
        %8354 = vmatprep.subr.mxu0 0.0
        %8355 = vmatpush1.msra.mxu0 0.0
        %8356 = vmatprep.mubr.f32.mxu0 0.0
        %v8357 = vand.u32 %v8120, 4294901760
        %v8358 = vsub.f32 %v8120, %v8357
        %8359 = vmatmul.mubr.f32.gmra.mrb[0].mxu0 %v8358
        %v8360 = vpop.f32.mrb[0].mxu0
        %v8361 = vadd.f32 %v8284, %v8360
        %v8362 = vpop.f32.mrb[0].mxu0
        %v8363 = vadd.f32 %v8286, %v8362
        %8364 = vdwg.mxu0
        %v8365 = vand.u32 %v8126, 4294901760
        %8366 = vmatprep.subr.mxu0 %v8365
        %v8367 = vand.u32 %v8123, 4294901760
        %8368 = vmatpush1.msra.mxu0 %v8367
        %8369 = vmatprep.subr.mxu0 0.0
        %8370 = vmatpush1.msra.mxu0 0.0
        %8371 = vmatprep.subr.mxu0 0.0
        %8372 = vmatpush1.msra.mxu0 0.0
        %8373 = vmatprep.subr.mxu0 0.0
        %8374 = vmatpush1.msra.mxu0 0.0
        %8375 = vmatprep.subr.mxu0 0.0
        %8376 = vmatpush1.msra.mxu0 0.0
        %8377 = vmatprep.subr.mxu0 0.0
        %8378 = vmatpush1.msra.mxu0 0.0
        %8379 = vmatprep.subr.mxu0 0.0
        %8380 = vmatpush1.msra.mxu0 0.0
        %8381 = vmatprep.subr.mxu0 0.0
        %8382 = vmatpush1.msra.mxu0 0.0
        %8383 = vmatprep.subr.mxu0 0.0
        %8384 = vmatpush1.msra.mxu0 0.0
        %8385 = vmatprep.subr.mxu0 0.0
        %8386 = vmatpush1.msra.mxu0 0.0
        %8387 = vmatprep.subr.mxu0 0.0
        %8388 = vmatpush1.msra.mxu0 0.0
        %8389 = vmatprep.subr.mxu0 0.0
        %8390 = vmatpush1.msra.mxu0 0.0
        %8391 = vmatprep.subr.mxu0 0.0
        %8392 = vmatpush1.msra.mxu0 0.0
        %8393 = vmatprep.subr.mxu0 0.0
        %8394 = vmatpush1.msra.mxu0 0.0
        %8395 = vmatprep.subr.mxu0 0.0
        %8396 = vmatpush1.msra.mxu0 0.0
        %8397 = vmatprep.subr.mxu0 0.0
        %8398 = vmatpush1.msra.mxu0 0.0
        %8399 = vmatprep.subr.mxu0 0.0
        %8400 = vmatpush1.msra.mxu0 0.0
        %8401 = vmatprep.subr.mxu0 0.0
        %8402 = vmatpush1.msra.mxu0 0.0
        %8403 = vmatprep.subr.mxu0 0.0
        %8404 = vmatpush1.msra.mxu0 0.0
        %8405 = vmatprep.subr.mxu0 0.0
        %8406 = vmatpush1.msra.mxu0 0.0
        %8407 = vmatprep.subr.mxu0 0.0
        %8408 = vmatpush1.msra.mxu0 0.0
        %8409 = vmatprep.subr.mxu0 0.0
        %8410 = vmatpush1.msra.mxu0 0.0
        %8411 = vmatprep.subr.mxu0 0.0
        %8412 = vmatpush1.msra.mxu0 0.0
        %8413 = vmatprep.subr.mxu0 0.0
        %8414 = vmatpush1.msra.mxu0 0.0
        %8415 = vmatprep.subr.mxu0 0.0
        %8416 = vmatpush1.msra.mxu0 0.0
        %8417 = vmatprep.subr.mxu0 0.0
        %8418 = vmatpush1.msra.mxu0 0.0
        %8419 = vmatprep.subr.mxu0 0.0
        %8420 = vmatpush1.msra.mxu0 0.0
        %8421 = vmatprep.subr.mxu0 0.0
        %8422 = vmatpush1.msra.mxu0 0.0
        %8423 = vmatprep.subr.mxu0 0.0
        %8424 = vmatpush1.msra.mxu0 0.0
        %8425 = vmatprep.subr.mxu0 0.0
        %8426 = vmatpush1.msra.mxu0 0.0
        %8427 = vmatprep.subr.mxu0 0.0
        %8428 = vmatpush1.msra.mxu0 0.0
        %8429 = vmatprep.subr.mxu0 0.0
        %8430 = vmatpush1.msra.mxu0 0.0
        %8431 = vmatprep.mubr.f32.mxu0 0.0
        %v8432 = vand.u32 %v8120, 4294901760
        %v8433 = vsub.f32 %v8120, %v8432
        %v8434 = vand.u32 %v8433, 4294901760
        %8435 = vmatmul.mubr.f32.gmra.mrb[0].mxu0 %v8434
        %v8436 = vpop.f32.mrb[0].mxu0
        %v8437 = vadd.f32 %v8361, %v8436
        %v8438 = vpop.f32.mrb[0].mxu0
        %v8439 = vadd.f32 %v8363, %v8438
        %8440 = vdwg.mxu0
        %v8441 = vand.u32 %v8126, 4294901760
        %v8442 = vsub.f32 %v8126, %v8441
        %v8443 = vand.u32 %v8442, 4294901760
        %8444 = vmatprep.subr.mxu0 %v8443
        %v8445 = vand.u32 %v8123, 4294901760
        %v8446 = vsub.f32 %v8123, %v8445
        %v8447 = vand.u32 %v8446, 4294901760
        %8448 = vmatpush1.msra.mxu0 %v8447
        %8449 = vmatprep.subr.mxu0 0.0
        %8450 = vmatpush1.msra.mxu0 0.0
        %8451 = vmatprep.subr.mxu0 0.0
        %8452 = vmatpush1.msra.mxu0 0.0
        %8453 = vmatprep.subr.mxu0 0.0
        %8454 = vmatpush1.msra.mxu0 0.0
        %8455 = vmatprep.subr.mxu0 0.0
        %8456 = vmatpush1.msra.mxu0 0.0
        %8457 = vmatprep.subr.mxu0 0.0
        %8458 = vmatpush1.msra.mxu0 0.0
        %8459 = vmatprep.subr.mxu0 0.0
        %8460 = vmatpush1.msra.mxu0 0.0
        %8461 = vmatprep.subr.mxu0 0.0
        %8462 = vmatpush1.msra.mxu0 0.0
        %8463 = vmatprep.subr.mxu0 0.0
        %8464 = vmatpush1.msra.mxu0 0.0
        %8465 = vmatprep.subr.mxu0 0.0
        %8466 = vmatpush1.msra.mxu0 0.0
        %8467 = vmatprep.subr.mxu0 0.0
        %8468 = vmatpush1.msra.mxu0 0.0
        %8469 = vmatprep.subr.mxu0 0.0
        %8470 = vmatpush1.msra.mxu0 0.0
        %8471 = vmatprep.subr.mxu0 0.0
        %8472 = vmatpush1.msra.mxu0 0.0
        %8473 = vmatprep.subr.mxu0 0.0
        %8474 = vmatpush1.msra.mxu0 0.0
        %8475 = vmatprep.subr.mxu0 0.0
        %8476 = vmatpush1.msra.mxu0 0.0
        %8477 = vmatprep.subr.mxu0 0.0
        %8478 = vmatpush1.msra.mxu0 0.0
        %8479 = vmatprep.subr.mxu0 0.0
        %8480 = vmatpush1.msra.mxu0 0.0
        %8481 = vmatprep.subr.mxu0 0.0
        %8482 = vmatpush1.msra.mxu0 0.0
        %8483 = vmatprep.subr.mxu0 0.0
        %8484 = vmatpush1.msra.mxu0 0.0
        %8485 = vmatprep.subr.mxu0 0.0
        %8486 = vmatpush1.msra.mxu0 0.0
        %8487 = vmatprep.subr.mxu0 0.0
        %8488 = vmatpush1.msra.mxu0 0.0
        %8489 = vmatprep.subr.mxu0 0.0
        %8490 = vmatpush1.msra.mxu0 0.0
        %8491 = vmatprep.subr.mxu0 0.0
        %8492 = vmatpush1.msra.mxu0 0.0
        %8493 = vmatprep.subr.mxu0 0.0
        %8494 = vmatpush1.msra.mxu0 0.0
        %8495 = vmatprep.subr.mxu0 0.0
        %8496 = vmatpush1.msra.mxu0 0.0
        %8497 = vmatprep.subr.mxu0 0.0
        %8498 = vmatpush1.msra.mxu0 0.0
        %8499 = vmatprep.subr.mxu0 0.0
        %8500 = vmatpush1.msra.mxu0 0.0
        %8501 = vmatprep.subr.mxu0 0.0
        %8502 = vmatpush1.msra.mxu0 0.0
        %8503 = vmatprep.subr.mxu0 0.0
        %8504 = vmatpush1.msra.mxu0 0.0
        %8505 = vmatprep.subr.mxu0 0.0
        %8506 = vmatpush1.msra.mxu0 0.0
        %8507 = vmatprep.subr.mxu0 0.0
        %8508 = vmatpush1.msra.mxu0 0.0
        %8509 = vmatprep.subr.mxu0 0.0
        %8510 = vmatpush1.msra.mxu0 0.0
        %8511 = vmatprep.mubr.f32.mxu0 0.0
        %v8512 = vand.u32 %v8120, 4294901760
        %8513 = vmatmul.mubr.f32.gmra.mrb[0].mxu0 %v8512
        %v8514 = vpop.f32.mrb[0].mxu0
        %v8515 = vadd.f32 %v8437, %v8514
        %v8516 = vpop.f32.mrb[0].mxu0
        %v8517 = vadd.f32 %v8439, %v8516
        %8518 = vdwg.mxu0
        %v8519 = vand.u32 %v8126, 4294901760
        %8520 = vmatprep.subr.mxu0 %v8519
        %v8521 = vand.u32 %v8123, 4294901760
        %8522 = vmatpush1.msra.mxu0 %v8521
        %8523 = vmatprep.subr.mxu0 0.0
        %8524 = vmatpush1.msra.mxu0 0.0
        %8525 = vmatprep.subr.mxu0 0.0
        %8526 = vmatpush1.msra.mxu0 0.0
        %8527 = vmatprep.subr.mxu0 0.0
        %8528 = vmatpush1.msra.mxu0 0.0
        %8529 = vmatprep.subr.mxu0 0.0
        %8530 = vmatpush1.msra.mxu0 0.0
        %8531 = vmatprep.subr.mxu0 0.0
        %8532 = vmatpush1.msra.mxu0 0.0
        %8533 = vmatprep.subr.mxu0 0.0
        %8534 = vmatpush1.msra.mxu0 0.0
        %8535 = vmatprep.subr.mxu0 0.0
        %8536 = vmatpush1.msra.mxu0 0.0
        %8537 = vmatprep.subr.mxu0 0.0
        %8538 = vmatpush1.msra.mxu0 0.0
        %8539 = vmatprep.subr.mxu0 0.0
        %8540 = vmatpush1.msra.mxu0 0.0
        %8541 = vmatprep.subr.mxu0 0.0
        %8542 = vmatpush1.msra.mxu0 0.0
        %8543 = vmatprep.subr.mxu0 0.0
        %8544 = vmatpush1.msra.mxu0 0.0
        %8545 = vmatprep.subr.mxu0 0.0
        %8546 = vmatpush1.msra.mxu0 0.0
        %8547 = vmatprep.subr.mxu0 0.0
        %8548 = vmatpush1.msra.mxu0 0.0
        %8549 = vmatprep.subr.mxu0 0.0
        %8550 = vmatpush1.msra.mxu0 0.0
        %8551 = vmatprep.subr.mxu0 0.0
        %8552 = vmatpush1.msra.mxu0 0.0
        %8553 = vmatprep.subr.mxu0 0.0
        %8554 = vmatpush1.msra.mxu0 0.0
        %8555 = vmatprep.subr.mxu0 0.0
        %8556 = vmatpush1.msra.mxu0 0.0
        %8557 = vmatprep.subr.mxu0 0.0
        %8558 = vmatpush1.msra.mxu0 0.0
        %8559 = vmatprep.subr.mxu0 0.0
        %8560 = vmatpush1.msra.mxu0 0.0
        %8561 = vmatprep.subr.mxu0 0.0
        %8562 = vmatpush1.msra.mxu0 0.0
        %8563 = vmatprep.subr.mxu0 0.0
        %8564 = vmatpush1.msra.mxu0 0.0
        %8565 = vmatprep.subr.mxu0 0.0
        %8566 = vmatpush1.msra.mxu0 0.0
        %8567 = vmatprep.subr.mxu0 0.0
        %8568 = vmatpush1.msra.mxu0 0.0
        %8569 = vmatprep.subr.mxu0 0.0
        %8570 = vmatpush1.msra.mxu0 0.0
        %8571 = vmatprep.subr.mxu0 0.0
        %8572 = vmatpush1.msra.mxu0 0.0
        %8573 = vmatprep.subr.mxu0 0.0
        %8574 = vmatpush1.msra.mxu0 0.0
        %8575 = vmatprep.subr.mxu0 0.0
        %8576 = vmatpush1.msra.mxu0 0.0
        %8577 = vmatprep.subr.mxu0 0.0
        %8578 = vmatpush1.msra.mxu0 0.0
        %8579 = vmatprep.subr.mxu0 0.0
        %8580 = vmatpush1.msra.mxu0 0.0
        %8581 = vmatprep.subr.mxu0 0.0
        %8582 = vmatpush1.msra.mxu0 0.0
        %8583 = vmatprep.subr.mxu0 0.0
        %8584 = vmatpush1.msra.mxu0 0.0
        %8585 = vmatprep.mubr.f32.mxu0 0.0
        %v8586 = vand.u32 %v8120, 4294901760
        %8587 = vmatmul.mubr.f32.gmra.mrb[0].mxu0 %v8586
        %v8588 = vpop.f32.mrb[0].mxu0
        %v8589 = vadd.f32 %v8515, %v8588
        %v8590 = vpop.f32.mrb[0].mxu0
        %v8591 = vadd.f32 %v8517, %v8590
        %8592 = vdwg.mxu0
        %v8593 = vadd.f32 %v8109, %v8589
        %v8594 = vadd.f32 %v8110, %v8591
        %8595 = vrot.lane.b32.xlu0 %v4731, 111
        %v8596 = vpop.permute.xlu0 %8595
        %8597 = vrot.lane.b32.xlu0 %v4732, 111
        %v8598 = vpop.permute.xlu0 %8597
        %v8599 = vsel %vm4214, %v8596, %v8598
        %v8600 = vsel %vm4214, %v8598, %v8596
        %v8601 = vmul.f32 %v8599, %v4220
        %v8602 = vmul.f32 %v8600, %v4224
        %v8604 = vsel %vm308, %v264, 0
        %v8607 = vsel %vm311, %v8601, 0
        %v8610 = vsel %vm311, %v8602, 0
        %v8612 = vand.u32 %v8610, 4294901760
        %8613 = vmatprep.subr.mxu0 %v8612
        %v8614 = vand.u32 %v8607, 4294901760
        %8615 = vmatpush1.msra.mxu0 %v8614
        %8616 = vmatprep.subr.mxu0 0.0
        %8617 = vmatpush1.msra.mxu0 0.0
        %8618 = vmatprep.subr.mxu0 0.0
        %8619 = vmatpush1.msra.mxu0 0.0
        %8620 = vmatprep.subr.mxu0 0.0
        %8621 = vmatpush1.msra.mxu0 0.0
        %8622 = vmatprep.subr.mxu0 0.0
        %8623 = vmatpush1.msra.mxu0 0.0
        %8624 = vmatprep.subr.mxu0 0.0
        %8625 = vmatpush1.msra.mxu0 0.0
        %8626 = vmatprep.subr.mxu0 0.0
        %8627 = vmatpush1.msra.mxu0 0.0
        %8628 = vmatprep.subr.mxu0 0.0
        %8629 = vmatpush1.msra.mxu0 0.0
        %8630 = vmatprep.subr.mxu0 0.0
        %8631 = vmatpush1.msra.mxu0 0.0
        %8632 = vmatprep.subr.mxu0 0.0
        %8633 = vmatpush1.msra.mxu0 0.0
        %8634 = vmatprep.subr.mxu0 0.0
        %8635 = vmatpush1.msra.mxu0 0.0
        %8636 = vmatprep.subr.mxu0 0.0
        %8637 = vmatpush1.msra.mxu0 0.0
        %8638 = vmatprep.subr.mxu0 0.0
        %8639 = vmatpush1.msra.mxu0 0.0
        %8640 = vmatprep.subr.mxu0 0.0
        %8641 = vmatpush1.msra.mxu0 0.0
        %8642 = vmatprep.subr.mxu0 0.0
        %8643 = vmatpush1.msra.mxu0 0.0
        %8644 = vmatprep.subr.mxu0 0.0
        %8645 = vmatpush1.msra.mxu0 0.0
        %8646 = vmatprep.subr.mxu0 0.0
        %8647 = vmatpush1.msra.mxu0 0.0
        %8648 = vmatprep.subr.mxu0 0.0
        %8649 = vmatpush1.msra.mxu0 0.0
        %8650 = vmatprep.subr.mxu0 0.0
        %8651 = vmatpush1.msra.mxu0 0.0
        %8652 = vmatprep.subr.mxu0 0.0
        %8653 = vmatpush1.msra.mxu0 0.0
        %8654 = vmatprep.subr.mxu0 0.0
        %8655 = vmatpush1.msra.mxu0 0.0
        %8656 = vmatprep.subr.mxu0 0.0
        %8657 = vmatpush1.msra.mxu0 0.0
        %8658 = vmatprep.subr.mxu0 0.0
        %8659 = vmatpush1.msra.mxu0 0.0
        %8660 = vmatprep.subr.mxu0 0.0
        %8661 = vmatpush1.msra.mxu0 0.0
        %8662 = vmatprep.subr.mxu0 0.0
        %8663 = vmatpush1.msra.mxu0 0.0
        %8664 = vmatprep.subr.mxu0 0.0
        %8665 = vmatpush1.msra.mxu0 0.0
        %8666 = vmatprep.subr.mxu0 0.0
        %8667 = vmatpush1.msra.mxu0 0.0
        %8668 = vmatprep.subr.mxu0 0.0
        %8669 = vmatpush1.msra.mxu0 0.0
        %8670 = vmatprep.subr.mxu0 0.0
        %8671 = vmatpush1.msra.mxu0 0.0
        %8672 = vmatprep.subr.mxu0 0.0
        %8673 = vmatpush1.msra.mxu0 0.0
        %8674 = vmatprep.subr.mxu0 0.0
        %8675 = vmatpush1.msra.mxu0 0.0
        %8676 = vmatprep.subr.mxu0 0.0
        %8677 = vmatpush1.msra.mxu0 0.0
        %8678 = vmatprep.mubr.f32.mxu0 0.0
        %v8679 = vand.u32 %v8604, 4294901760
        %v8680 = vsub.f32 %v8604, %v8679
        %v8681 = vand.u32 %v8680, 4294901760
        %v8682 = vsub.f32 %v8680, %v8681
        %v8683 = vand.u32 %v8682, 4294901760
        %8684 = vmatmul.mubr.f32.gmra.mrb[0].mxu0 %v8683
        %v8685 = vpop.f32.mrb[0].mxu0
        %v8686 = vadd.f32 0.0, %v8685
        %v8687 = vpop.f32.mrb[0].mxu0
        %v8688 = vadd.f32 0.0, %v8687
        %8689 = vdwg.mxu0
        %v8690 = vand.u32 %v8610, 4294901760
        %v8691 = vsub.f32 %v8610, %v8690
        %v8692 = vand.u32 %v8691, 4294901760
        %v8693 = vsub.f32 %v8691, %v8692
        %v8694 = vand.u32 %v8693, 4294901760
        %8695 = vmatprep.subr.mxu0 %v8694
        %v8696 = vand.u32 %v8607, 4294901760
        %v8697 = vsub.f32 %v8607, %v8696
        %v8698 = vand.u32 %v8697, 4294901760
        %v8699 = vsub.f32 %v8697, %v8698
        %v8700 = vand.u32 %v8699, 4294901760
        %8701 = vmatpush1.msra.mxu0 %v8700
        %8702 = vmatprep.subr.mxu0 0.0
        %8703 = vmatpush1.msra.mxu0 0.0
        %8704 = vmatprep.subr.mxu0 0.0
        %8705 = vmatpush1.msra.mxu0 0.0
        %8706 = vmatprep.subr.mxu0 0.0
        %8707 = vmatpush1.msra.mxu0 0.0
        %8708 = vmatprep.subr.mxu0 0.0
        %8709 = vmatpush1.msra.mxu0 0.0
        %8710 = vmatprep.subr.mxu0 0.0
        %8711 = vmatpush1.msra.mxu0 0.0
        %8712 = vmatprep.subr.mxu0 0.0
        %8713 = vmatpush1.msra.mxu0 0.0
        %8714 = vmatprep.subr.mxu0 0.0
        %8715 = vmatpush1.msra.mxu0 0.0
        %8716 = vmatprep.subr.mxu0 0.0
        %8717 = vmatpush1.msra.mxu0 0.0
        %8718 = vmatprep.subr.mxu0 0.0
        %8719 = vmatpush1.msra.mxu0 0.0
        %8720 = vmatprep.subr.mxu0 0.0
        %8721 = vmatpush1.msra.mxu0 0.0
        %8722 = vmatprep.subr.mxu0 0.0
        %8723 = vmatpush1.msra.mxu0 0.0
        %8724 = vmatprep.subr.mxu0 0.0
        %8725 = vmatpush1.msra.mxu0 0.0
        %8726 = vmatprep.subr.mxu0 0.0
        %8727 = vmatpush1.msra.mxu0 0.0
        %8728 = vmatprep.subr.mxu0 0.0
        %8729 = vmatpush1.msra.mxu0 0.0
        %8730 = vmatprep.subr.mxu0 0.0
        %8731 = vmatpush1.msra.mxu0 0.0
        %8732 = vmatprep.subr.mxu0 0.0
        %8733 = vmatpush1.msra.mxu0 0.0
        %8734 = vmatprep.subr.mxu0 0.0
        %8735 = vmatpush1.msra.mxu0 0.0
        %8736 = vmatprep.subr.mxu0 0.0
        %8737 = vmatpush1.msra.mxu0 0.0
        %8738 = vmatprep.subr.mxu0 0.0
        %8739 = vmatpush1.msra.mxu0 0.0
        %8740 = vmatprep.subr.mxu0 0.0
        %8741 = vmatpush1.msra.mxu0 0.0
        %8742 = vmatprep.subr.mxu0 0.0
        %8743 = vmatpush1.msra.mxu0 0.0
        %8744 = vmatprep.subr.mxu0 0.0
        %8745 = vmatpush1.msra.mxu0 0.0
        %8746 = vmatprep.subr.mxu0 0.0
        %8747 = vmatpush1.msra.mxu0 0.0
        %8748 = vmatprep.subr.mxu0 0.0
        %8749 = vmatpush1.msra.mxu0 0.0
        %8750 = vmatprep.subr.mxu0 0.0
        %8751 = vmatpush1.msra.mxu0 0.0
        %8752 = vmatprep.subr.mxu0 0.0
        %8753 = vmatpush1.msra.mxu0 0.0
        %8754 = vmatprep.subr.mxu0 0.0
        %8755 = vmatpush1.msra.mxu0 0.0
        %8756 = vmatprep.subr.mxu0 0.0
        %8757 = vmatpush1.msra.mxu0 0.0
        %8758 = vmatprep.subr.mxu0 0.0
        %8759 = vmatpush1.msra.mxu0 0.0
        %8760 = vmatprep.subr.mxu0 0.0
        %8761 = vmatpush1.msra.mxu0 0.0
        %8762 = vmatprep.subr.mxu0 0.0
        %8763 = vmatpush1.msra.mxu0 0.0
        %8764 = vmatprep.mubr.f32.mxu0 0.0
        %v8765 = vand.u32 %v8604, 4294901760
        %8766 = vmatmul.mubr.f32.gmra.mrb[0].mxu0 %v8765
        %v8767 = vpop.f32.mrb[0].mxu0
        %v8768 = vadd.f32 %v8686, %v8767
        %v8769 = vpop.f32.mrb[0].mxu0
        %v8770 = vadd.f32 %v8688, %v8769
        %8771 = vdwg.mxu0
        %v8772 = vand.u32 %v8610, 4294901760
        %v8773 = vsub.f32 %v8610, %v8772
        %8774 = vmatprep.subr.mxu0 %v8773
        %v8775 = vand.u32 %v8607, 4294901760
        %v8776 = vsub.f32 %v8607, %v8775
        %8777 = vmatpush1.msra.mxu0 %v8776
        %8778 = vmatprep.subr.mxu0 0.0
        %8779 = vmatpush1.msra.mxu0 0.0
        %8780 = vmatprep.subr.mxu0 0.0
        %8781 = vmatpush1.msra.mxu0 0.0
        %8782 = vmatprep.subr.mxu0 0.0
        %8783 = vmatpush1.msra.mxu0 0.0
        %8784 = vmatprep.subr.mxu0 0.0
        %8785 = vmatpush1.msra.mxu0 0.0
        %8786 = vmatprep.subr.mxu0 0.0
        %8787 = vmatpush1.msra.mxu0 0.0
        %8788 = vmatprep.subr.mxu0 0.0
        %8789 = vmatpush1.msra.mxu0 0.0
        %8790 = vmatprep.subr.mxu0 0.0
        %8791 = vmatpush1.msra.mxu0 0.0
        %8792 = vmatprep.subr.mxu0 0.0
        %8793 = vmatpush1.msra.mxu0 0.0
        %8794 = vmatprep.subr.mxu0 0.0
        %8795 = vmatpush1.msra.mxu0 0.0
        %8796 = vmatprep.subr.mxu0 0.0
        %8797 = vmatpush1.msra.mxu0 0.0
        %8798 = vmatprep.subr.mxu0 0.0
        %8799 = vmatpush1.msra.mxu0 0.0
        %8800 = vmatprep.subr.mxu0 0.0
        %8801 = vmatpush1.msra.mxu0 0.0
        %8802 = vmatprep.subr.mxu0 0.0
        %8803 = vmatpush1.msra.mxu0 0.0
        %8804 = vmatprep.subr.mxu0 0.0
        %8805 = vmatpush1.msra.mxu0 0.0
        %8806 = vmatprep.subr.mxu0 0.0
        %8807 = vmatpush1.msra.mxu0 0.0
        %8808 = vmatprep.subr.mxu0 0.0
        %8809 = vmatpush1.msra.mxu0 0.0
        %8810 = vmatprep.subr.mxu0 0.0
        %8811 = vmatpush1.msra.mxu0 0.0
        %8812 = vmatprep.subr.mxu0 0.0
        %8813 = vmatpush1.msra.mxu0 0.0
        %8814 = vmatprep.subr.mxu0 0.0
        %8815 = vmatpush1.msra.mxu0 0.0
        %8816 = vmatprep.subr.mxu0 0.0
        %8817 = vmatpush1.msra.mxu0 0.0
        %8818 = vmatprep.subr.mxu0 0.0
        %8819 = vmatpush1.msra.mxu0 0.0
        %8820 = vmatprep.subr.mxu0 0.0
        %8821 = vmatpush1.msra.mxu0 0.0
        %8822 = vmatprep.subr.mxu0 0.0
        %8823 = vmatpush1.msra.mxu0 0.0
        %8824 = vmatprep.subr.mxu0 0.0
        %8825 = vmatpush1.msra.mxu0 0.0
        %8826 = vmatprep.subr.mxu0 0.0
        %8827 = vmatpush1.msra.mxu0 0.0
        %8828 = vmatprep.subr.mxu0 0.0
        %8829 = vmatpush1.msra.mxu0 0.0
        %8830 = vmatprep.subr.mxu0 0.0
        %8831 = vmatpush1.msra.mxu0 0.0
        %8832 = vmatprep.subr.mxu0 0.0
        %8833 = vmatpush1.msra.mxu0 0.0
        %8834 = vmatprep.subr.mxu0 0.0
        %8835 = vmatpush1.msra.mxu0 0.0
        %8836 = vmatprep.subr.mxu0 0.0
        %8837 = vmatpush1.msra.mxu0 0.0
        %8838 = vmatprep.subr.mxu0 0.0
        %8839 = vmatpush1.msra.mxu0 0.0
        %8840 = vmatprep.mubr.f32.mxu0 0.0
        %v8841 = vand.u32 %v8604, 4294901760
        %v8842 = vsub.f32 %v8604, %v8841
        %8843 = vmatmul.mubr.f32.gmra.mrb[0].mxu0 %v8842
        %v8844 = vpop.f32.mrb[0].mxu0
        %v8845 = vadd.f32 %v8768, %v8844
        %v8846 = vpop.f32.mrb[0].mxu0
        %v8847 = vadd.f32 %v8770, %v8846
        %8848 = vdwg.mxu0
        %v8849 = vand.u32 %v8610, 4294901760
        %8850 = vmatprep.subr.mxu0 %v8849
        %v8851 = vand.u32 %v8607, 4294901760
        %8852 = vmatpush1.msra.mxu0 %v8851
        %8853 = vmatprep.subr.mxu0 0.0
        %8854 = vmatpush1.msra.mxu0 0.0
        %8855 = vmatprep.subr.mxu0 0.0
        %8856 = vmatpush1.msra.mxu0 0.0
        %8857 = vmatprep.subr.mxu0 0.0
        %8858 = vmatpush1.msra.mxu0 0.0
        %8859 = vmatprep.subr.mxu0 0.0
        %8860 = vmatpush1.msra.mxu0 0.0
        %8861 = vmatprep.subr.mxu0 0.0
        %8862 = vmatpush1.msra.mxu0 0.0
        %8863 = vmatprep.subr.mxu0 0.0
        %8864 = vmatpush1.msra.mxu0 0.0
        %8865 = vmatprep.subr.mxu0 0.0
        %8866 = vmatpush1.msra.mxu0 0.0
        %8867 = vmatprep.subr.mxu0 0.0
        %8868 = vmatpush1.msra.mxu0 0.0
        %8869 = vmatprep.subr.mxu0 0.0
        %8870 = vmatpush1.msra.mxu0 0.0
        %8871 = vmatprep.subr.mxu0 0.0
        %8872 = vmatpush1.msra.mxu0 0.0
        %8873 = vmatprep.subr.mxu0 0.0
        %8874 = vmatpush1.msra.mxu0 0.0
        %8875 = vmatprep.subr.mxu0 0.0
        %8876 = vmatpush1.msra.mxu0 0.0
        %8877 = vmatprep.subr.mxu0 0.0
        %8878 = vmatpush1.msra.mxu0 0.0
        %8879 = vmatprep.subr.mxu0 0.0
        %8880 = vmatpush1.msra.mxu0 0.0
        %8881 = vmatprep.subr.mxu0 0.0
        %8882 = vmatpush1.msra.mxu0 0.0
        %8883 = vmatprep.subr.mxu0 0.0
        %8884 = vmatpush1.msra.mxu0 0.0
        %8885 = vmatprep.subr.mxu0 0.0
        %8886 = vmatpush1.msra.mxu0 0.0
        %8887 = vmatprep.subr.mxu0 0.0
        %8888 = vmatpush1.msra.mxu0 0.0
        %8889 = vmatprep.subr.mxu0 0.0
        %8890 = vmatpush1.msra.mxu0 0.0
        %8891 = vmatprep.subr.mxu0 0.0
        %8892 = vmatpush1.msra.mxu0 0.0
        %8893 = vmatprep.subr.mxu0 0.0
        %8894 = vmatpush1.msra.mxu0 0.0
        %8895 = vmatprep.subr.mxu0 0.0
        %8896 = vmatpush1.msra.mxu0 0.0
        %8897 = vmatprep.subr.mxu0 0.0
        %8898 = vmatpush1.msra.mxu0 0.0
        %8899 = vmatprep.subr.mxu0 0.0
        %8900 = vmatpush1.msra.mxu0 0.0
        %8901 = vmatprep.subr.mxu0 0.0
        %8902 = vmatpush1.msra.mxu0 0.0
        %8903 = vmatprep.subr.mxu0 0.0
        %8904 = vmatpush1.msra.mxu0 0.0
        %8905 = vmatprep.subr.mxu0 0.0
        %8906 = vmatpush1.msra.mxu0 0.0
        %8907 = vmatprep.subr.mxu0 0.0
        %8908 = vmatpush1.msra.mxu0 0.0
        %8909 = vmatprep.subr.mxu0 0.0
        %8910 = vmatpush1.msra.mxu0 0.0
        %8911 = vmatprep.subr.mxu0 0.0
        %8912 = vmatpush1.msra.mxu0 0.0
        %8913 = vmatprep.subr.mxu0 0.0
        %8914 = vmatpush1.msra.mxu0 0.0
        %8915 = vmatprep.mubr.f32.mxu0 0.0
        %v8916 = vand.u32 %v8604, 4294901760
        %v8917 = vsub.f32 %v8604, %v8916
        %v8918 = vand.u32 %v8917, 4294901760
        %8919 = vmatmul.mubr.f32.gmra.mrb[0].mxu0 %v8918
        %v8920 = vpop.f32.mrb[0].mxu0
        %v8921 = vadd.f32 %v8845, %v8920
        %v8922 = vpop.f32.mrb[0].mxu0
        %v8923 = vadd.f32 %v8847, %v8922
        %8924 = vdwg.mxu0
        %v8925 = vand.u32 %v8610, 4294901760
        %v8926 = vsub.f32 %v8610, %v8925
        %v8927 = vand.u32 %v8926, 4294901760
        %8928 = vmatprep.subr.mxu0 %v8927
        %v8929 = vand.u32 %v8607, 4294901760
        %v8930 = vsub.f32 %v8607, %v8929
        %v8931 = vand.u32 %v8930, 4294901760
        %8932 = vmatpush1.msra.mxu0 %v8931
        %8933 = vmatprep.subr.mxu0 0.0
        %8934 = vmatpush1.msra.mxu0 0.0
        %8935 = vmatprep.subr.mxu0 0.0
        %8936 = vmatpush1.msra.mxu0 0.0
        %8937 = vmatprep.subr.mxu0 0.0
        %8938 = vmatpush1.msra.mxu0 0.0
        %8939 = vmatprep.subr.mxu0 0.0
        %8940 = vmatpush1.msra.mxu0 0.0
        %8941 = vmatprep.subr.mxu0 0.0
        %8942 = vmatpush1.msra.mxu0 0.0
        %8943 = vmatprep.subr.mxu0 0.0
        %8944 = vmatpush1.msra.mxu0 0.0
        %8945 = vmatprep.subr.mxu0 0.0
        %8946 = vmatpush1.msra.mxu0 0.0
        %8947 = vmatprep.subr.mxu0 0.0
        %8948 = vmatpush1.msra.mxu0 0.0
        %8949 = vmatprep.subr.mxu0 0.0
        %8950 = vmatpush1.msra.mxu0 0.0
        %8951 = vmatprep.subr.mxu0 0.0
        %8952 = vmatpush1.msra.mxu0 0.0
        %8953 = vmatprep.subr.mxu0 0.0
        %8954 = vmatpush1.msra.mxu0 0.0
        %8955 = vmatprep.subr.mxu0 0.0
        %8956 = vmatpush1.msra.mxu0 0.0
        %8957 = vmatprep.subr.mxu0 0.0
        %8958 = vmatpush1.msra.mxu0 0.0
        %8959 = vmatprep.subr.mxu0 0.0
        %8960 = vmatpush1.msra.mxu0 0.0
        %8961 = vmatprep.subr.mxu0 0.0
        %8962 = vmatpush1.msra.mxu0 0.0
        %8963 = vmatprep.subr.mxu0 0.0
        %8964 = vmatpush1.msra.mxu0 0.0
        %8965 = vmatprep.subr.mxu0 0.0
        %8966 = vmatpush1.msra.mxu0 0.0
        %8967 = vmatprep.subr.mxu0 0.0
        %8968 = vmatpush1.msra.mxu0 0.0
        %8969 = vmatprep.subr.mxu0 0.0
        %8970 = vmatpush1.msra.mxu0 0.0
        %8971 = vmatprep.subr.mxu0 0.0
        %8972 = vmatpush1.msra.mxu0 0.0
        %8973 = vmatprep.subr.mxu0 0.0
        %8974 = vmatpush1.msra.mxu0 0.0
        %8975 = vmatprep.subr.mxu0 0.0
        %8976 = vmatpush1.msra.mxu0 0.0
        %8977 = vmatprep.subr.mxu0 0.0
        %8978 = vmatpush1.msra.mxu0 0.0
        %8979 = vmatprep.subr.mxu0 0.0
        %8980 = vmatpush1.msra.mxu0 0.0
        %8981 = vmatprep.subr.mxu0 0.0
        %8982 = vmatpush1.msra.mxu0 0.0
        %8983 = vmatprep.subr.mxu0 0.0
        %8984 = vmatpush1.msra.mxu0 0.0
        %8985 = vmatprep.subr.mxu0 0.0
        %8986 = vmatpush1.msra.mxu0 0.0
        %8987 = vmatprep.subr.mxu0 0.0
        %8988 = vmatpush1.msra.mxu0 0.0
        %8989 = vmatprep.subr.mxu0 0.0
        %8990 = vmatpush1.msra.mxu0 0.0
        %8991 = vmatprep.subr.mxu0 0.0
        %8992 = vmatpush1.msra.mxu0 0.0
        %8993 = vmatprep.subr.mxu0 0.0
        %8994 = vmatpush1.msra.mxu0 0.0
        %8995 = vmatprep.mubr.f32.mxu0 0.0
        %v8996 = vand.u32 %v8604, 4294901760
        %8997 = vmatmul.mubr.f32.gmra.mrb[0].mxu0 %v8996
        %v8998 = vpop.f32.mrb[0].mxu0
        %v8999 = vadd.f32 %v8921, %v8998
        %v9000 = vpop.f32.mrb[0].mxu0
        %v9001 = vadd.f32 %v8923, %v9000
        %9002 = vdwg.mxu0
        %v9003 = vand.u32 %v8610, 4294901760
        %9004 = vmatprep.subr.mxu0 %v9003
        %v9005 = vand.u32 %v8607, 4294901760
        %9006 = vmatpush1.msra.mxu0 %v9005
        %9007 = vmatprep.subr.mxu0 0.0
        %9008 = vmatpush1.msra.mxu0 0.0
        %9009 = vmatprep.subr.mxu0 0.0
        %9010 = vmatpush1.msra.mxu0 0.0
        %9011 = vmatprep.subr.mxu0 0.0
        %9012 = vmatpush1.msra.mxu0 0.0
        %9013 = vmatprep.subr.mxu0 0.0
        %9014 = vmatpush1.msra.mxu0 0.0
        %9015 = vmatprep.subr.mxu0 0.0
        %9016 = vmatpush1.msra.mxu0 0.0
        %9017 = vmatprep.subr.mxu0 0.0
        %9018 = vmatpush1.msra.mxu0 0.0
        %9019 = vmatprep.subr.mxu0 0.0
        %9020 = vmatpush1.msra.mxu0 0.0
        %9021 = vmatprep.subr.mxu0 0.0
        %9022 = vmatpush1.msra.mxu0 0.0
        %9023 = vmatprep.subr.mxu0 0.0
        %9024 = vmatpush1.msra.mxu0 0.0
        %9025 = vmatprep.subr.mxu0 0.0
        %9026 = vmatpush1.msra.mxu0 0.0
        %9027 = vmatprep.subr.mxu0 0.0
        %9028 = vmatpush1.msra.mxu0 0.0
        %9029 = vmatprep.subr.mxu0 0.0
        %9030 = vmatpush1.msra.mxu0 0.0
        %9031 = vmatprep.subr.mxu0 0.0
        %9032 = vmatpush1.msra.mxu0 0.0
        %9033 = vmatprep.subr.mxu0 0.0
        %9034 = vmatpush1.msra.mxu0 0.0
        %9035 = vmatprep.subr.mxu0 0.0
        %9036 = vmatpush1.msra.mxu0 0.0
        %9037 = vmatprep.subr.mxu0 0.0
        %9038 = vmatpush1.msra.mxu0 0.0
        %9039 = vmatprep.subr.mxu0 0.0
        %9040 = vmatpush1.msra.mxu0 0.0
        %9041 = vmatprep.subr.mxu0 0.0
        %9042 = vmatpush1.msra.mxu0 0.0
        %9043 = vmatprep.subr.mxu0 0.0
        %9044 = vmatpush1.msra.mxu0 0.0
        %9045 = vmatprep.subr.mxu0 0.0
        %9046 = vmatpush1.msra.mxu0 0.0
        %9047 = vmatprep.subr.mxu0 0.0
        %9048 = vmatpush1.msra.mxu0 0.0
        %9049 = vmatprep.subr.mxu0 0.0
        %9050 = vmatpush1.msra.mxu0 0.0
        %9051 = vmatprep.subr.mxu0 0.0
        %9052 = vmatpush1.msra.mxu0 0.0
        %9053 = vmatprep.subr.mxu0 0.0
        %9054 = vmatpush1.msra.mxu0 0.0
        %9055 = vmatprep.subr.mxu0 0.0
        %9056 = vmatpush1.msra.mxu0 0.0
        %9057 = vmatprep.subr.mxu0 0.0
        %9058 = vmatpush1.msra.mxu0 0.0
        %9059 = vmatprep.subr.mxu0 0.0
        %9060 = vmatpush1.msra.mxu0 0.0
        %9061 = vmatprep.subr.mxu0 0.0
        %9062 = vmatpush1.msra.mxu0 0.0
        %9063 = vmatprep.subr.mxu0 0.0
        %9064 = vmatpush1.msra.mxu0 0.0
        %9065 = vmatprep.subr.mxu0 0.0
        %9066 = vmatpush1.msra.mxu0 0.0
        %9067 = vmatprep.subr.mxu0 0.0
        %9068 = vmatpush1.msra.mxu0 0.0
        %9069 = vmatprep.mubr.f32.mxu0 0.0
        %v9070 = vand.u32 %v8604, 4294901760
        %9071 = vmatmul.mubr.f32.gmra.mrb[0].mxu0 %v9070
        %v9072 = vpop.f32.mrb[0].mxu0
        %v9073 = vadd.f32 %v8999, %v9072
        %v9074 = vpop.f32.mrb[0].mxu0
        %v9075 = vadd.f32 %v9001, %v9074
        %9076 = vdwg.mxu0
        %v9077 = vadd.f32 %v8593, %v9073
        %v9078 = vadd.f32 %v8594, %v9075
        %9080 = vset.pattern.permute.xlu0 0
        %9081 = vperm.xlu0 %9080, %v266
        %v9082 = vpop.permute.xlu0 %9081
        %v9084 = vadd.f32 %v9077, %v9082
        %v9085 = vadd.f32 %v9078, %v9082
        %v9086 = vsel %vm311, %v9084, 0.0
        %v9087 = vsel %vm311, %v9085, 0.0
        %v9088 = vadd.f32 %v9086, %v9087
        %9089 = vadd.xlane.f32.xlu0 %v9088
        %v9090 = vpop.xlane.xlu0 %9089
        %v9091 = vmul.f32 %v9090, %v4715
        %v9092 = vsub.f32 %v9084, %v9091
        %v9093 = vsub.f32 %v9085, %v9091
        %v9094 = vmul.f32 %v9092, %v9092
        %v9095 = vmul.f32 %v9093, %v9093
        %v9096 = vsel %vm311, %v9094, 0.0
        %v9097 = vsel %vm311, %v9095, 0.0
        %v9098 = vadd.f32 %v9096, %v9097
        %9099 = vadd.xlane.f32.xlu0 %v9098
        %v9100 = vpop.xlane.xlu0 %9099
        %v9101 = vmul.f32 %v9100, %v4715
        %v9102 = vadd.f32 %v9101, 1e-05
        %v9103 = vrsqrt.pop %v9102
        %v9104 = vmul.f32 %v9092, %v9103
        %v9105 = vmul.f32 %v9093, %v9103
        %v9108 = vcombine.low %v9104, %v9105
        %v9110 = vadd.f32 %v250, %v9108
        %9111 = vst [vmem:[%s244] sm:$0xff] %v9110
        %s9112 = sand.u32 %s159, 1
        %s9113 = scalar_lea.sflag [#allocation3], %s9112
        %s9114 = sand.u32 %s159, 1
        %s9115 = smul.addr %s9114, 8
        %s9116 = scalar_lea.vmem [#allocation2], %s9115
        // Predicated region
        $region45: #{tpu_custom_call.1} parent=43 // pred_check
          %p9117 = pneg %p169
        $region46: #{tpu_custom_call.1} parent=43 // pred_check_branch
          %9119 = sbr.rel (%p9117) target = $region48
        $region47: #{tpu_custom_call.1} parent=43 // pred_region
          %s9121 = ssub.s32 128, 128
          %9122 = vsyncadd %s9113, %s9121
          %s9123 = smul.addr %s20, 2
          %s9124 = smul.addr %s9123, 64
          %s9125 = scalar_lea.hbm %s6, %s9124
          %s9127 = sshll.u32 %s9116, 4
          %s9128 = int_to_ptr.vmem [resolvable:$true] %s9127
          %9130 = dma.vmem_to_hbm [thread:$0]  %s9128, 128, %s9125, %s9113
        $region48: #{tpu_custom_call.1} parent=43 // pred_fallthru
          _
      $region44: #{tpu_custom_call.1} parent=5 // pred_fallthru
        _
      %p9131 = scmp.le.s32.totalorder 2, %s15
      // Predicated region
      $region49: #{tpu_custom_call.1} parent=5 // pred_check
        %p9132 = pneg %p9131
      $region50: #{tpu_custom_call.1} parent=5 // pred_check_branch
        %9134 = sbr.rel (%p9132) target = $region52
      $region51: #{tpu_custom_call.1} parent=5 // pred_region
        %s9135 = ssub.s32 %s15, 2
        // Predicated region
        $region53: #{tpu_custom_call.1} parent=51 // pred_check
          %p9136 = pneg %p175
        $region54: #{tpu_custom_call.1} parent=51 // pred_check_branch
          %9138 = sbr.rel (%p9136) target = $region56
        $region55: #{tpu_custom_call.1} parent=51 // pred_region
          %s9139 = sand.u32 %s160, 1
          %s9140 = scalar_lea.sflag [#allocation3], %s9139
          %s9141 = sand.u32 %s160, 1
          %s9142 = smul.addr %s9141, 8
          %s9143 = scalar_lea.vmem [#allocation2], %s9142
          %9144 = dma.done %s9140, 128
        $region56: #{tpu_custom_call.1} parent=51 // pred_fallthru
          _
      $region52: #{tpu_custom_call.1} parent=5 // pred_fallthru
        _
    $region6: #{tpu_custom_call.1} parent=1 // loop_footer
      %s19 = sadd.s32 1, %s15
    $region7: #{tpu_custom_call.1} parent=1 // loop_footer_branch
      %14 = sbr.rel target = $region3
    $region8: #{tpu_custom_call.1} parent=1 // loop_exit
      _
    %9145 = vsyncpa [#allocation3], 1
    %s9146 = scalar_lea.sflag [#allocation3], 1
    %9147 = vsyncpa %s9146, 1

</llo_original>
